<compile_context>
chip_gen: v6e
topology: v6e:2x2x1
jax: 0.10.0
libtpu: 0.0.40
codegen_flags: <defaults>
</compile_context>

<pallas_src>
import jax
import jax.numpy as jnp
import numpy as np
from jax import lax
from jax.experimental import pallas as pl
from jax.experimental.pallas import tpu as pltpu

IN_FEATS = 7
H1, H2, H3 = 64, 32, 16


def _lstm_model_kernel(x_ref,
                       wih1_ref, whh1_ref, b1_ref,
                       wih2_ref, whh2_ref, b2_ref,
                       wih3_ref, whh3_ref, b3_ref,
                       wfc1_ref, bfc1_ref, wfc2_ref, bfc2_ref,
                       out_ref,
                       xg1_ref, xg2_ref, xg3_ref):
    B = out_ref.shape[0] // 2
    T = x_ref.shape[0] // B

    def run_layer(x_seq, wih_ref, whh_ref, b_ref, xg_ref):
        H = whh_ref.shape[-1]
        # Batched per-gate input projection + fused bias (b_ih + b_hh) for ALL
        # timesteps: 4 matmuls per layer, off the serial critical path.
        for g in range(4):
            xg_ref[g, :, :] = (
                jnp.dot(x_seq, wih_ref[g], preferred_element_type=jnp.float32)
                + b_ref[g])
        # Hoist the (exact-size, unpadded) recurrent weights out of the loop:
        # loaded once per layer, not once per step.
        w_i, w_f, w_g, w_o = whh_ref[0], whh_ref[1], whh_ref[2], whh_ref[3]

        h = jnp.zeros((B, H), jnp.float32)
        c = jnp.zeros((B, H), jnp.float32)
        hs = []
        for t in range(T):  # fully unrolled: T is static, all indices static
            r0, r1 = t * B, (t + 1) * B
            i_g = jax.nn.sigmoid(
                xg_ref[0, r0:r1, :]
                + jnp.dot(h, w_i, preferred_element_type=jnp.float32))
            f_g = jax.nn.sigmoid(
                xg_ref[1, r0:r1, :]
                + jnp.dot(h, w_f, preferred_element_type=jnp.float32))
            g_g = jnp.tanh(
                xg_ref[2, r0:r1, :]
                + jnp.dot(h, w_g, preferred_element_type=jnp.float32))
            o_g = jax.nn.sigmoid(
                xg_ref[3, r0:r1, :]
                + jnp.dot(h, w_o, preferred_element_type=jnp.float32))
            c = f_g * c + i_g * g_g
            h = o_g * jnp.tanh(c)
            hs.append(h)  # kept in registers; stored/used as one dense block
        return hs

    hs1 = run_layer(x_ref[...], wih1_ref, whh1_ref, b1_ref, xg1_ref)
    hs2 = run_layer(jnp.concatenate(hs1, axis=0), wih2_ref, whh2_ref, b2_ref, xg2_ref)
    hs3 = run_layer(jnp.concatenate(hs2, axis=0), wih3_ref, whh3_ref, b3_ref, xg3_ref)

    # Batched head: rows [0:B] = timestep T-2, rows [B:2B] = timestep T-1.
    hh = jnp.concatenate([hs3[-2], hs3[-1]], axis=0)                   # (2B, 16)
    z = jnp.maximum(
        jnp.dot(hh, wfc1_ref[...], preferred_element_type=jnp.float32)
        + bfc1_ref[...], 0.0)                                          # (2B, 8)
    out_ref[...] = (jnp.dot(z, wfc2_ref[...],
                            preferred_element_type=jnp.float32)
                    + bfc2_ref[...])                                   # (2B, 1)


# ---------------- one-time host-side weight packing --------------------------
def _pack_lstm(wih, whh, bih, bhh):
    """PyTorch (4H,in),(4H,H),(4H,),(4H,) -> stacked per-gate, exact-size:
    (4,in,H), (4,H,H), (4,1,H) with PyTorch gate order [i, f, g, o]."""
    four_h, din = wih.shape
    H = four_h // 4
    wih_s = np.asarray(wih, np.float32).reshape(4, H, din).transpose(0, 2, 1)
    whh_s = np.asarray(whh, np.float32).reshape(4, H, H).transpose(0, 2, 1)
    b_s = (np.asarray(bih, np.float32) + np.asarray(bhh, np.float32)).reshape(4, 1, H)
    return jnp.asarray(wih_s), jnp.asarray(whh_s), jnp.asarray(b_s)


def pack_params(lstm_params, fc_params):
    """Host-side (numpy) packing, called ONCE outside the jitted forward."""
    packed = []
    for p in lstm_params:
        packed += list(_pack_lstm(*p))
    wfc1, bfc1, wfc2, bfc2 = fc_params
    packed += [jnp.asarray(np.asarray(wfc1, np.float32).T),
               jnp.asarray(np.asarray(bfc1, np.float32)[None, :]),
               jnp.asarray(np.asarray(wfc2, np.float32).T),
               jnp.asarray(np.asarray(bfc2, np.float32)[None, :])]
    return tuple(packed)


# ---------------- forward wrapper --------------------------------------------
def lstm_model_forward(x, packed_params):
    """x: (B, T, 7) float32 -> (B, 2, 1) float32 (same as the PyTorch module)."""
    B, T, F = x.shape
    # Time-major, flattened to a dense (T*B, F) operand for the batched
    # input-projection matmuls; row t*B + b <-> (timestep t, batch b).
    x_flat = jnp.transpose(x, (1, 0, 2)).reshape(T * B, F).astype(jnp.float32)
    args = (x_flat,) + tuple(packed_params)

    out_flat = pl.pallas_call(
        _lstm_model_kernel,
        out_shape=jax.ShapeDtypeStruct((2 * B, 1), jnp.float32),
        in_specs=[pl.BlockSpec(memory_space=pltpu.MemorySpace.VMEM)] * len(args),
        out_specs=pl.BlockSpec(memory_space=pltpu.MemorySpace.VMEM),
        scratch_shapes=[
            pltpu.VMEM((4, T * B, H1), jnp.float32),  # layer-1 per-gate x-proj
            pltpu.VMEM((4, T * B, H2), jnp.float32),  # layer-2 per-gate x-proj
            pltpu.VMEM((4, T * B, H3), jnp.float32),  # layer-3 per-gate x-proj
        ],
    )(*args)

    # rows [0:B] -> timestep T-2, rows [B:2B] -> timestep T-1
    return jnp.transpose(out_flat.reshape(2, B, 1), (1, 0, 2))


# ---------------- parameter init (deterministic, PyTorch-style uniform) ------
def init_params(key):
    def uni(k, shape, bound):
        return jax.random.uniform(k, shape, jnp.float32, -bound, bound)

    keys = iter(jax.random.split(key, 16))
    lstm = []
    for din, h in [(IN_FEATS, H1), (H1, H2), (H2, H3)]:
        bound = 1.0 / np.sqrt(h)
        wih = uni(next(keys), (4 * h, din), bound)
        whh = uni(next(keys), (4 * h, h), bound)
        bih = uni(next(keys), (4 * h,), bound)
        bhh = uni(next(keys), (4 * h,), bound)
        lstm.append((wih, whh, bih, bhh))
    b1 = 1.0 / np.sqrt(16)
    wfc1 = uni(next(keys), (8, 16), b1)
    bfc1 = uni(next(keys), (8,), b1)
    b2 = 1.0 / np.sqrt(8)
    wfc2 = uni(next(keys), (1, 8), b2)
    bfc2 = uni(next(keys), (1,), b2)
    return lstm, (wfc1, bfc1, wfc2, bfc2)


# ---------------- pure-JAX reference (matches torch.nn.LSTM semantics) -------
def _lstm_layer_ref(x, wih, whh, bih, bhh):
    B = x.shape[0]
    H = whh.shape[1]

    def step(carry, x_t):
        h, c = carry
        gates = x_t @ wih.T + bih + h @ whh.T + bhh
        i, f, g, o = jnp.split(gates, 4, axis=-1)
        i, f, o = jax.nn.sigmoid(i), jax.nn.sigmoid(f), jax.nn.sigmoid(o)
        g = jnp.tanh(g)
        c = f * c + i * g
        h = o * jnp.tanh(c)
        return (h, c), h

    h0 = jnp.zeros((B, H), jnp.float32)
    (_, _), ys = lax.scan(step, (h0, h0), jnp.transpose(x, (1, 0, 2)))
    return jnp.transpose(ys, (1, 0, 2))


def ref_forward(x, lstm_params, fc_params):
    for p in lstm_params:
        x = _lstm_layer_ref(x, *p)
    x = x[:, -2:, :]
    wfc1, bfc1, wfc2, bfc2 = fc_params
    x = jnp.maximum(x @ wfc1.T + bfc1, 0.0)
    return x @ wfc2.T + bfc2


if __name__ == "__main__":
    key = jax.random.PRNGKey(0)
    kx, kp = jax.random.split(key)
    B, T = 2, 8
    x = jax.random.normal(kx, (B, T, IN_FEATS), jnp.float32)
    lstm_params, fc_params = init_params(kp)

    packed = pack_params(lstm_params, fc_params)       # one-time, host side
    fwd = jax.jit(lstm_model_forward)
    out = jax.block_until_ready(fwd(x, packed))
    ref = ref_forward(x, lstm_params, fc_params)

    assert out.shape == (B, 2, 1)
    np.testing.assert_allclose(np.asarray(out), np.asarray(ref),
                               rtol=1e-4, atol=1e-5)
    print("KERNEL_OK")
</pallas_src>

<mosaic_0001>
module attributes {stable_mosaic.version = 11 : i64} {
  func.func @_lstm_model_kernel(%arg0: memref<16x7xf32, #tpu.memory_space<vmem>>, %arg1: memref<4x7x64xf32, #tpu.memory_space<vmem>>, %arg2: memref<4x64x64xf32, #tpu.memory_space<vmem>>, %arg3: memref<4x1x64xf32, #tpu.memory_space<vmem>>, %arg4: memref<4x64x32xf32, #tpu.memory_space<vmem>>, %arg5: memref<4x32x32xf32, #tpu.memory_space<vmem>>, %arg6: memref<4x1x32xf32, #tpu.memory_space<vmem>>, %arg7: memref<4x32x16xf32, #tpu.memory_space<vmem>>, %arg8: memref<4x16x16xf32, #tpu.memory_space<vmem>>, %arg9: memref<4x1x16xf32, #tpu.memory_space<vmem>>, %arg10: memref<16x8xf32, #tpu.memory_space<vmem>>, %arg11: memref<1x8xf32, #tpu.memory_space<vmem>>, %arg12: memref<8x1xf32, #tpu.memory_space<vmem>>, %arg13: memref<1x1xf32, #tpu.memory_space<vmem>>, %arg14: memref<4x1xf32, #tpu.memory_space<vmem>>, %arg15: memref<4x16x64xf32, #tpu.memory_space<vmem>>, %arg16: memref<4x16x32xf32, #tpu.memory_space<vmem>>, %arg17: memref<4x16x16xf32, #tpu.memory_space<vmem>>) attributes {dimension_semantics = [], scalar_prefetch = 0 : i64, scratch_operands = 3 : i64, tpu.core_type = #tpu.core_type<tc>} {
    %c0 = arith.constant 0 : index
    %c0_0 = arith.constant 0 : index
    %0 = vector.load %arg0[%c0, %c0_0] : memref<16x7xf32, #tpu.memory_space<vmem>>, vector<16x7xf32>
    %c0_1 = arith.constant 0 : index
    %c0_2 = arith.constant 0 : index
    %c0_3 = arith.constant 0 : index
    %1 = vector.load %arg1[%c0_1, %c0_2, %c0_3] : memref<4x7x64xf32, #tpu.memory_space<vmem>>, vector<1x7x64xf32>
    %2 = vector.shape_cast %1 : vector<1x7x64xf32> to vector<7x64xf32>
    %cst = arith.constant dense<0.000000e+00> : vector<16x64xf32>
    %3 = tpu.matmul %0, %2, %cst {dimension_numbers = #tpu.dot_dimension_numbers<[1], [0], [0], [1], [0, 0, 1, 1], [], []>} : vector<16x7xf32>, vector<7x64xf32>, vector<16x64xf32> -> vector<16x64xf32>
    %c0_4 = arith.constant 0 : index
    %c0_5 = arith.constant 0 : index
    %c0_6 = arith.constant 0 : index
    %4 = vector.load %arg3[%c0_4, %c0_5, %c0_6] : memref<4x1x64xf32, #tpu.memory_space<vmem>>, vector<1x1x64xf32>
    %5 = vector.shape_cast %4 : vector<1x1x64xf32> to vector<1x64xf32>
    %6 = vector.broadcast %5 : vector<1x64xf32> to vector<16x64xf32>
    %7 = arith.addf %3, %6 : vector<16x64xf32>
    %c0_7 = arith.constant 0 : index
    %c0_8 = arith.constant 0 : index
    %c0_9 = arith.constant 0 : index
    %8 = vector.load %arg15[%c0_7, %c0_8, %c0_9] : memref<4x16x64xf32, #tpu.memory_space<vmem>>, vector<1x16x64xf32>
    %9 = vector.shape_cast %8 : vector<1x16x64xf32> to vector<16x64xf32>
    %10 = vector.shape_cast %7 : vector<16x64xf32> to vector<1x16x64xf32>
    tpu.vector_store %arg15[%c0_7, %c0_8, %c0_9], %10 {strides = array<i32>} : memref<4x16x64xf32, #tpu.memory_space<vmem>>, vector<1x16x64xf32>,
    %c1 = arith.constant 1 : index
    %c0_10 = arith.constant 0 : index
    %c0_11 = arith.constant 0 : index
    %11 = vector.load %arg1[%c1, %c0_10, %c0_11] : memref<4x7x64xf32, #tpu.memory_space<vmem>>, vector<1x7x64xf32>
    %12 = vector.shape_cast %11 : vector<1x7x64xf32> to vector<7x64xf32>
    %cst_12 = arith.constant dense<0.000000e+00> : vector<16x64xf32>
    %13 = tpu.matmul %0, %12, %cst_12 {dimension_numbers = #tpu.dot_dimension_numbers<[1], [0], [0], [1], [0, 0, 1, 1], [], []>} : vector<16x7xf32>, vector<7x64xf32>, vector<16x64xf32> -> vector<16x64xf32>
    %c1_13 = arith.constant 1 : index
    %c0_14 = arith.constant 0 : index
    %c0_15 = arith.constant 0 : index
    %14 = vector.load %arg3[%c1_13, %c0_14, %c0_15] : memref<4x1x64xf32, #tpu.memory_space<vmem>>, vector<1x1x64xf32>
    %15 = vector.shape_cast %14 : vector<1x1x64xf32> to vector<1x64xf32>
    %16 = vector.broadcast %15 : vector<1x64xf32> to vector<16x64xf32>
    %17 = arith.addf %13, %16 : vector<16x64xf32>
    %c1_16 = arith.constant 1 : index
    %c0_17 = arith.constant 0 : index
    %c0_18 = arith.constant 0 : index
    %18 = vector.load %arg15[%c1_16, %c0_17, %c0_18] : memref<4x16x64xf32, #tpu.memory_space<vmem>>, vector<1x16x64xf32>
    %19 = vector.shape_cast %18 : vector<1x16x64xf32> to vector<16x64xf32>
    %20 = vector.shape_cast %17 : vector<16x64xf32> to vector<1x16x64xf32>
    tpu.vector_store %arg15[%c1_16, %c0_17, %c0_18], %20 {strides = array<i32>} : memref<4x16x64xf32, #tpu.memory_space<vmem>>, vector<1x16x64xf32>,
    %c2 = arith.constant 2 : index
    %c0_19 = arith.constant 0 : index
    %c0_20 = arith.constant 0 : index
    %21 = vector.load %arg1[%c2, %c0_19, %c0_20] : memref<4x7x64xf32, #tpu.memory_space<vmem>>, vector<1x7x64xf32>
    %22 = vector.shape_cast %21 : vector<1x7x64xf32> to vector<7x64xf32>
    %cst_21 = arith.constant dense<0.000000e+00> : vector<16x64xf32>
    %23 = tpu.matmul %0, %22, %cst_21 {dimension_numbers = #tpu.dot_dimension_numbers<[1], [0], [0], [1], [0, 0, 1, 1], [], []>} : vector<16x7xf32>, vector<7x64xf32>, vector<16x64xf32> -> vector<16x64xf32>
    %c2_22 = arith.constant 2 : index
    %c0_23 = arith.constant 0 : index
    %c0_24 = arith.constant 0 : index
    %24 = vector.load %arg3[%c2_22, %c0_23, %c0_24] : memref<4x1x64xf32, #tpu.memory_space<vmem>>, vector<1x1x64xf32>
    %25 = vector.shape_cast %24 : vector<1x1x64xf32> to vector<1x64xf32>
    %26 = vector.broadcast %25 : vector<1x64xf32> to vector<16x64xf32>
    %27 = arith.addf %23, %26 : vector<16x64xf32>
    %c2_25 = arith.constant 2 : index
    %c0_26 = arith.constant 0 : index
    %c0_27 = arith.constant 0 : index
    %28 = vector.load %arg15[%c2_25, %c0_26, %c0_27] : memref<4x16x64xf32, #tpu.memory_space<vmem>>, vector<1x16x64xf32>
    %29 = vector.shape_cast %28 : vector<1x16x64xf32> to vector<16x64xf32>
    %30 = vector.shape_cast %27 : vector<16x64xf32> to vector<1x16x64xf32>
    tpu.vector_store %arg15[%c2_25, %c0_26, %c0_27], %30 {strides = array<i32>} : memref<4x16x64xf32, #tpu.memory_space<vmem>>, vector<1x16x64xf32>,
    %c3 = arith.constant 3 : index
    %c0_28 = arith.constant 0 : index
    %c0_29 = arith.constant 0 : index
    %31 = vector.load %arg1[%c3, %c0_28, %c0_29] : memref<4x7x64xf32, #tpu.memory_space<vmem>>, vector<1x7x64xf32>
    %32 = vector.shape_cast %31 : vector<1x7x64xf32> to vector<7x64xf32>
    %cst_30 = arith.constant dense<0.000000e+00> : vector<16x64xf32>
    %33 = tpu.matmul %0, %32, %cst_30 {dimension_numbers = #tpu.dot_dimension_numbers<[1], [0], [0], [1], [0, 0, 1, 1], [], []>} : vector<16x7xf32>, vector<7x64xf32>, vector<16x64xf32> -> vector<16x64xf32>
    %c3_31 = arith.constant 3 : index
    %c0_32 = arith.constant 0 : index
    %c0_33 = arith.constant 0 : index
    %34 = vector.load %arg3[%c3_31, %c0_32, %c0_33] : memref<4x1x64xf32, #tpu.memory_space<vmem>>, vector<1x1x64xf32>
    %35 = vector.shape_cast %34 : vector<1x1x64xf32> to vector<1x64xf32>
    %36 = vector.broadcast %35 : vector<1x64xf32> to vector<16x64xf32>
    %37 = arith.addf %33, %36 : vector<16x64xf32>
    %c3_34 = arith.constant 3 : index
    %c0_35 = arith.constant 0 : index
    %c0_36 = arith.constant 0 : index
    %38 = vector.load %arg15[%c3_34, %c0_35, %c0_36] : memref<4x16x64xf32, #tpu.memory_space<vmem>>, vector<1x16x64xf32>
    %39 = vector.shape_cast %38 : vector<1x16x64xf32> to vector<16x64xf32>
    %40 = vector.shape_cast %37 : vector<16x64xf32> to vector<1x16x64xf32>
    tpu.vector_store %arg15[%c3_34, %c0_35, %c0_36], %40 {strides = array<i32>} : memref<4x16x64xf32, #tpu.memory_space<vmem>>, vector<1x16x64xf32>,
    %c0_37 = arith.constant 0 : index
    %c0_38 = arith.constant 0 : index
    %c0_39 = arith.constant 0 : index
    %41 = vector.load %arg2[%c0_37, %c0_38, %c0_39] : memref<4x64x64xf32, #tpu.memory_space<vmem>>, vector<1x64x64xf32>
    %42 = vector.shape_cast %41 : vector<1x64x64xf32> to vector<64x64xf32>
    %c1_40 = arith.constant 1 : index
    %c0_41 = arith.constant 0 : index
    %c0_42 = arith.constant 0 : index
    %43 = vector.load %arg2[%c1_40, %c0_41, %c0_42] : memref<4x64x64xf32, #tpu.memory_space<vmem>>, vector<1x64x64xf32>
    %44 = vector.shape_cast %43 : vector<1x64x64xf32> to vector<64x64xf32>
    %c2_43 = arith.constant 2 : index
    %c0_44 = arith.constant 0 : index
    %c0_45 = arith.constant 0 : index
    %45 = vector.load %arg2[%c2_43, %c0_44, %c0_45] : memref<4x64x64xf32, #tpu.memory_space<vmem>>, vector<1x64x64xf32>
    %46 = vector.shape_cast %45 : vector<1x64x64xf32> to vector<64x64xf32>
    %c3_46 = arith.constant 3 : index
    %c0_47 = arith.constant 0 : index
    %c0_48 = arith.constant 0 : index
    %47 = vector.load %arg2[%c3_46, %c0_47, %c0_48] : memref<4x64x64xf32, #tpu.memory_space<vmem>>, vector<1x64x64xf32>
    %48 = vector.shape_cast %47 : vector<1x64x64xf32> to vector<64x64xf32>
    %cst_49 = arith.constant 0.000000e+00 : f32
    %49 = vector.broadcast %cst_49 : f32 to vector<2x64xf32>
    %cst_50 = arith.constant 0.000000e+00 : f32
    %50 = vector.broadcast %cst_50 : f32 to vector<2x64xf32>
    %c0_51 = arith.constant 0 : index
    %c0_52 = arith.constant 0 : index
    %c0_53 = arith.constant 0 : index
    %51 = vector.load %arg15[%c0_51, %c0_52, %c0_53] : memref<4x16x64xf32, #tpu.memory_space<vmem>>, vector<1x2x64xf32>
    %52 = vector.shape_cast %51 : vector<1x2x64xf32> to vector<2x64xf32>
    %cst_54 = arith.constant dense<0.000000e+00> : vector<2x64xf32>
    %53 = tpu.matmul %49, %42, %cst_54 {dimension_numbers = #tpu.dot_dimension_numbers<[1], [0], [0], [1], [0, 0, 1, 1], [], []>} : vector<2x64xf32>, vector<64x64xf32>, vector<2x64xf32> -> vector<2x64xf32>
    %54 = arith.addf %52, %53 : vector<2x64xf32>
    %55 = arith.negf %54 : vector<2x64xf32>
    %56 = math.exp %55 : vector<2x64xf32>
    %cst_55 = arith.constant 1.000000e+00 : f32
    %57 = vector.broadcast %cst_55 : f32 to vector<2x64xf32>
    %58 = arith.addf %57, %56 : vector<2x64xf32>
    %59 = arith.divf %57, %58 : vector<2x64xf32>
    %c1_56 = arith.constant 1 : index
    %c0_57 = arith.constant 0 : index
    %c0_58 = arith.constant 0 : index
    %60 = vector.load %arg15[%c1_56, %c0_57, %c0_58] : memref<4x16x64xf32, #tpu.memory_space<vmem>>, vector<1x2x64xf32>
    %61 = vector.shape_cast %60 : vector<1x2x64xf32> to vector<2x64xf32>
    %cst_59 = arith.constant dense<0.000000e+00> : vector<2x64xf32>
    %62 = tpu.matmul %49, %44, %cst_59 {dimension_numbers = #tpu.dot_dimension_numbers<[1], [0], [0], [1], [0, 0, 1, 1], [], []>} : vector<2x64xf32>, vector<64x64xf32>, vector<2x64xf32> -> vector<2x64xf32>
    %63 = arith.addf %61, %62 : vector<2x64xf32>
    %64 = arith.negf %63 : vector<2x64xf32>
    %65 = math.exp %64 : vector<2x64xf32>
    %cst_60 = arith.constant 1.000000e+00 : f32
    %66 = vector.broadcast %cst_60 : f32 to vector<2x64xf32>
    %67 = arith.addf %66, %65 : vector<2x64xf32>
    %68 = arith.divf %66, %67 : vector<2x64xf32>
    %c2_61 = arith.constant 2 : index
    %c0_62 = arith.constant 0 : index
    %c0_63 = arith.constant 0 : index
    %69 = vector.load %arg15[%c2_61, %c0_62, %c0_63] : memref<4x16x64xf32, #tpu.memory_space<vmem>>, vector<1x2x64xf32>
    %70 = vector.shape_cast %69 : vector<1x2x64xf32> to vector<2x64xf32>
    %cst_64 = arith.constant dense<0.000000e+00> : vector<2x64xf32>
    %71 = tpu.matmul %49, %46, %cst_64 {dimension_numbers = #tpu.dot_dimension_numbers<[1], [0], [0], [1], [0, 0, 1, 1], [], []>} : vector<2x64xf32>, vector<64x64xf32>, vector<2x64xf32> -> vector<2x64xf32>
    %72 = arith.addf %70, %71 : vector<2x64xf32>
    %73 = math.tanh %72 : vector<2x64xf32>
    %c3_65 = arith.constant 3 : index
    %c0_66 = arith.constant 0 : index
    %c0_67 = arith.constant 0 : index
    %74 = vector.load %arg15[%c3_65, %c0_66, %c0_67] : memref<4x16x64xf32, #tpu.memory_space<vmem>>, vector<1x2x64xf32>
    %75 = vector.shape_cast %74 : vector<1x2x64xf32> to vector<2x64xf32>
    %cst_68 = arith.constant dense<0.000000e+00> : vector<2x64xf32>
    %76 = tpu.matmul %49, %48, %cst_68 {dimension_numbers = #tpu.dot_dimension_numbers<[1], [0], [0], [1], [0, 0, 1, 1], [], []>} : vector<2x64xf32>, vector<64x64xf32>, vector<2x64xf32> -> vector<2x64xf32>
    %77 = arith.addf %75, %76 : vector<2x64xf32>
    %78 = arith.negf %77 : vector<2x64xf32>
    %79 = math.exp %78 : vector<2x64xf32>
    %cst_69 = arith.constant 1.000000e+00 : f32
    %80 = vector.broadcast %cst_69 : f32 to vector<2x64xf32>
    %81 = arith.addf %80, %79 : vector<2x64xf32>
    %82 = arith.divf %80, %81 : vector<2x64xf32>
    %83 = arith.mulf %68, %50 : vector<2x64xf32>
    %84 = arith.mulf %59, %73 : vector<2x64xf32>
    %85 = arith.addf %83, %84 : vector<2x64xf32>
    %86 = math.tanh %85 : vector<2x64xf32>
    %87 = arith.mulf %82, %86 : vector<2x64xf32>
    %c0_70 = arith.constant 0 : index
    %c2_71 = arith.constant 2 : index
    %c0_72 = arith.constant 0 : index
    %88 = vector.load %arg15[%c0_70, %c2_71, %c0_72] : memref<4x16x64xf32, #tpu.memory_space<vmem>>, vector<1x2x64xf32>
    %89 = vector.shape_cast %88 : vector<1x2x64xf32> to vector<2x64xf32>
    %cst_73 = arith.constant dense<0.000000e+00> : vector<2x64xf32>
    %90 = tpu.matmul %87, %42, %cst_73 {dimension_numbers = #tpu.dot_dimension_numbers<[1], [0], [0], [1], [0, 0, 1, 1], [], []>} : vector<2x64xf32>, vector<64x64xf32>, vector<2x64xf32> -> vector<2x64xf32>
    %91 = arith.addf %89, %90 : vector<2x64xf32>
    %92 = arith.negf %91 : vector<2x64xf32>
    %93 = math.exp %92 : vector<2x64xf32>
    %cst_74 = arith.constant 1.000000e+00 : f32
    %94 = vector.broadcast %cst_74 : f32 to vector<2x64xf32>
    %95 = arith.addf %94, %93 : vector<2x64xf32>
    %96 = arith.divf %94, %95 : vector<2x64xf32>
    %c1_75 = arith.constant 1 : index
    %c2_76 = arith.constant 2 : index
    %c0_77 = arith.constant 0 : index
    %97 = vector.load %arg15[%c1_75, %c2_76, %c0_77] : memref<4x16x64xf32, #tpu.memory_space<vmem>>, vector<1x2x64xf32>
    %98 = vector.shape_cast %97 : vector<1x2x64xf32> to vector<2x64xf32>
    %cst_78 = arith.constant dense<0.000000e+00> : vector<2x64xf32>
    %99 = tpu.matmul %87, %44, %cst_78 {dimension_numbers = #tpu.dot_dimension_numbers<[1], [0], [0], [1], [0, 0, 1, 1], [], []>} : vector<2x64xf32>, vector<64x64xf32>, vector<2x64xf32> -> vector<2x64xf32>
    %100 = arith.addf %98, %99 : vector<2x64xf32>
    %101 = arith.negf %100 : vector<2x64xf32>
    %102 = math.exp %101 : vector<2x64xf32>
    %cst_79 = arith.constant 1.000000e+00 : f32
    %103 = vector.broadcast %cst_79 : f32 to vector<2x64xf32>
    %104 = arith.addf %103, %102 : vector<2x64xf32>
    %105 = arith.divf %103, %104 : vector<2x64xf32>
    %c2_80 = arith.constant 2 : index
    %c2_81 = arith.constant 2 : index
    %c0_82 = arith.constant 0 : index
    %106 = vector.load %arg15[%c2_80, %c2_81, %c0_82] : memref<4x16x64xf32, #tpu.memory_space<vmem>>, vector<1x2x64xf32>
    %107 = vector.shape_cast %106 : vector<1x2x64xf32> to vector<2x64xf32>
    %cst_83 = arith.constant dense<0.000000e+00> : vector<2x64xf32>
    %108 = tpu.matmul %87, %46, %cst_83 {dimension_numbers = #tpu.dot_dimension_numbers<[1], [0], [0], [1], [0, 0, 1, 1], [], []>} : vector<2x64xf32>, vector<64x64xf32>, vector<2x64xf32> -> vector<2x64xf32>
    %109 = arith.addf %107, %108 : vector<2x64xf32>
    %110 = math.tanh %109 : vector<2x64xf32>
    %c3_84 = arith.constant 3 : index
    %c2_85 = arith.constant 2 : index
    %c0_86 = arith.constant 0 : index
    %111 = vector.load %arg15[%c3_84, %c2_85, %c0_86] : memref<4x16x64xf32, #tpu.memory_space<vmem>>, vector<1x2x64xf32>
    %112 = vector.shape_cast %111 : vector<1x2x64xf32> to vector<2x64xf32>
    %cst_87 = arith.constant dense<0.000000e+00> : vector<2x64xf32>
    %113 = tpu.matmul %87, %48, %cst_87 {dimension_numbers = #tpu.dot_dimension_numbers<[1], [0], [0], [1], [0, 0, 1, 1], [], []>} : vector<2x64xf32>, vector<64x64xf32>, vector<2x64xf32> -> vector<2x64xf32>
    %114 = arith.addf %112, %113 : vector<2x64xf32>
    %115 = arith.negf %114 : vector<2x64xf32>
    %116 = math.exp %115 : vector<2x64xf32>
    %cst_88 = arith.constant 1.000000e+00 : f32
    %117 = vector.broadcast %cst_88 : f32 to vector<2x64xf32>
    %118 = arith.addf %117, %116 : vector<2x64xf32>
    %119 = arith.divf %117, %118 : vector<2x64xf32>
    %120 = arith.mulf %105, %85 : vector<2x64xf32>
    %121 = arith.mulf %96, %110 : vector<2x64xf32>
    %122 = arith.addf %120, %121 : vector<2x64xf32>
    %123 = math.tanh %122 : vector<2x64xf32>
    %124 = arith.mulf %119, %123 : vector<2x64xf32>
    %c0_89 = arith.constant 0 : index
    %c4 = arith.constant 4 : index
    %c0_90 = arith.constant 0 : index
    %125 = vector.load %arg15[%c0_89, %c4, %c0_90] : memref<4x16x64xf32, #tpu.memory_space<vmem>>, vector<1x2x64xf32>
    %126 = vector.shape_cast %125 : vector<1x2x64xf32> to vector<2x64xf32>
    %cst_91 = arith.constant dense<0.000000e+00> : vector<2x64xf32>
    %127 = tpu.matmul %124, %42, %cst_91 {dimension_numbers = #tpu.dot_dimension_numbers<[1], [0], [0], [1], [0, 0, 1, 1], [], []>} : vector<2x64xf32>, vector<64x64xf32>, vector<2x64xf32> -> vector<2x64xf32>
    %128 = arith.addf %126, %127 : vector<2x64xf32>
    %129 = arith.negf %128 : vector<2x64xf32>
    %130 = math.exp %129 : vector<2x64xf32>
    %cst_92 = arith.constant 1.000000e+00 : f32
    %131 = vector.broadcast %cst_92 : f32 to vector<2x64xf32>
    %132 = arith.addf %131, %130 : vector<2x64xf32>
    %133 = arith.divf %131, %132 : vector<2x64xf32>
    %c1_93 = arith.constant 1 : index
    %c4_94 = arith.constant 4 : index
    %c0_95 = arith.constant 0 : index
    %134 = vector.load %arg15[%c1_93, %c4_94, %c0_95] : memref<4x16x64xf32, #tpu.memory_space<vmem>>, vector<1x2x64xf32>
    %135 = vector.shape_cast %134 : vector<1x2x64xf32> to vector<2x64xf32>
    %cst_96 = arith.constant dense<0.000000e+00> : vector<2x64xf32>
    %136 = tpu.matmul %124, %44, %cst_96 {dimension_numbers = #tpu.dot_dimension_numbers<[1], [0], [0], [1], [0, 0, 1, 1], [], []>} : vector<2x64xf32>, vector<64x64xf32>, vector<2x64xf32> -> vector<2x64xf32>
    %137 = arith.addf %135, %136 : vector<2x64xf32>
    %138 = arith.negf %137 : vector<2x64xf32>
    %139 = math.exp %138 : vector<2x64xf32>
    %cst_97 = arith.constant 1.000000e+00 : f32
    %140 = vector.broadcast %cst_97 : f32 to vector<2x64xf32>
    %141 = arith.addf %140, %139 : vector<2x64xf32>
    %142 = arith.divf %140, %141 : vector<2x64xf32>
    %c2_98 = arith.constant 2 : index
    %c4_99 = arith.constant 4 : index
    %c0_100 = arith.constant 0 : index
    %143 = vector.load %arg15[%c2_98, %c4_99, %c0_100] : memref<4x16x64xf32, #tpu.memory_space<vmem>>, vector<1x2x64xf32>
    %144 = vector.shape_cast %143 : vector<1x2x64xf32> to vector<2x64xf32>
    %cst_101 = arith.constant dense<0.000000e+00> : vector<2x64xf32>
    %145 = tpu.matmul %124, %46, %cst_101 {dimension_numbers = #tpu.dot_dimension_numbers<[1], [0], [0], [1], [0, 0, 1, 1], [], []>} : vector<2x64xf32>, vector<64x64xf32>, vector<2x64xf32> -> vector<2x64xf32>
    %146 = arith.addf %144, %145 : vector<2x64xf32>
    %147 = math.tanh %146 : vector<2x64xf32>
    %c3_102 = arith.constant 3 : index
    %c4_103 = arith.constant 4 : index
    %c0_104 = arith.constant 0 : index
    %148 = vector.load %arg15[%c3_102, %c4_103, %c0_104] : memref<4x16x64xf32, #tpu.memory_space<vmem>>, vector<1x2x64xf32>
    %149 = vector.shape_cast %148 : vector<1x2x64xf32> to vector<2x64xf32>
    %cst_105 = arith.constant dense<0.000000e+00> : vector<2x64xf32>
    %150 = tpu.matmul %124, %48, %cst_105 {dimension_numbers = #tpu.dot_dimension_numbers<[1], [0], [0], [1], [0, 0, 1, 1], [], []>} : vector<2x64xf32>, vector<64x64xf32>, vector<2x64xf32> -> vector<2x64xf32>
    %151 = arith.addf %149, %150 : vector<2x64xf32>
    %152 = arith.negf %151 : vector<2x64xf32>
    %153 = math.exp %152 : vector<2x64xf32>
    %cst_106 = arith.constant 1.000000e+00 : f32
    %154 = vector.broadcast %cst_106 : f32 to vector<2x64xf32>
    %155 = arith.addf %154, %153 : vector<2x64xf32>
    %156 = arith.divf %154, %155 : vector<2x64xf32>
    %157 = arith.mulf %142, %122 : vector<2x64xf32>
    %158 = arith.mulf %133, %147 : vector<2x64xf32>
    %159 = arith.addf %157, %158 : vector<2x64xf32>
    %160 = math.tanh %159 : vector<2x64xf32>
    %161 = arith.mulf %156, %160 : vector<2x64xf32>
    %c0_107 = arith.constant 0 : index
    %c6 = arith.constant 6 : index
    %c0_108 = arith.constant 0 : index
    %162 = vector.load %arg15[%c0_107, %c6, %c0_108] : memref<4x16x64xf32, #tpu.memory_space<vmem>>, vector<1x2x64xf32>
    %163 = vector.shape_cast %162 : vector<1x2x64xf32> to vector<2x64xf32>
    %cst_109 = arith.constant dense<0.000000e+00> : vector<2x64xf32>
    %164 = tpu.matmul %161, %42, %cst_109 {dimension_numbers = #tpu.dot_dimension_numbers<[1], [0], [0], [1], [0, 0, 1, 1], [], []>} : vector<2x64xf32>, vector<64x64xf32>, vector<2x64xf32> -> vector<2x64xf32>
    %165 = arith.addf %163, %164 : vector<2x64xf32>
    %166 = arith.negf %165 : vector<2x64xf32>
    %167 = math.exp %166 : vector<2x64xf32>
    %cst_110 = arith.constant 1.000000e+00 : f32
    %168 = vector.broadcast %cst_110 : f32 to vector<2x64xf32>
    %169 = arith.addf %168, %167 : vector<2x64xf32>
    %170 = arith.divf %168, %169 : vector<2x64xf32>
    %c1_111 = arith.constant 1 : index
    %c6_112 = arith.constant 6 : index
    %c0_113 = arith.constant 0 : index
    %171 = vector.load %arg15[%c1_111, %c6_112, %c0_113] : memref<4x16x64xf32, #tpu.memory_space<vmem>>, vector<1x2x64xf32>
    %172 = vector.shape_cast %171 : vector<1x2x64xf32> to vector<2x64xf32>
    %cst_114 = arith.constant dense<0.000000e+00> : vector<2x64xf32>
    %173 = tpu.matmul %161, %44, %cst_114 {dimension_numbers = #tpu.dot_dimension_numbers<[1], [0], [0], [1], [0, 0, 1, 1], [], []>} : vector<2x64xf32>, vector<64x64xf32>, vector<2x64xf32> -> vector<2x64xf32>
    %174 = arith.addf %172, %173 : vector<2x64xf32>
    %175 = arith.negf %174 : vector<2x64xf32>
    %176 = math.exp %175 : vector<2x64xf32>
    %cst_115 = arith.constant 1.000000e+00 : f32
    %177 = vector.broadcast %cst_115 : f32 to vector<2x64xf32>
    %178 = arith.addf %177, %176 : vector<2x64xf32>
    %179 = arith.divf %177, %178 : vector<2x64xf32>
    %c2_116 = arith.constant 2 : index
    %c6_117 = arith.constant 6 : index
    %c0_118 = arith.constant 0 : index
    %180 = vector.load %arg15[%c2_116, %c6_117, %c0_118] : memref<4x16x64xf32, #tpu.memory_space<vmem>>, vector<1x2x64xf32>
    %181 = vector.shape_cast %180 : vector<1x2x64xf32> to vector<2x64xf32>
    %cst_119 = arith.constant dense<0.000000e+00> : vector<2x64xf32>
    %182 = tpu.matmul %161, %46, %cst_119 {dimension_numbers = #tpu.dot_dimension_numbers<[1], [0], [0], [1], [0, 0, 1, 1], [], []>} : vector<2x64xf32>, vector<64x64xf32>, vector<2x64xf32> -> vector<2x64xf32>
    %183 = arith.addf %181, %182 : vector<2x64xf32>
    %184 = math.tanh %183 : vector<2x64xf32>
    %c3_120 = arith.constant 3 : index
    %c6_121 = arith.constant 6 : index
    %c0_122 = arith.constant 0 : index
    %185 = vector.load %arg15[%c3_120, %c6_121, %c0_122] : memref<4x16x64xf32, #tpu.memory_space<vmem>>, vector<1x2x64xf32>
    %186 = vector.shape_cast %185 : vector<1x2x64xf32> to vector<2x64xf32>
    %cst_123 = arith.constant dense<0.000000e+00> : vector<2x64xf32>
    %187 = tpu.matmul %161, %48, %cst_123 {dimension_numbers = #tpu.dot_dimension_numbers<[1], [0], [0], [1], [0, 0, 1, 1], [], []>} : vector<2x64xf32>, vector<64x64xf32>, vector<2x64xf32> -> vector<2x64xf32>
    %188 = arith.addf %186, %187 : vector<2x64xf32>
    %189 = arith.negf %188 : vector<2x64xf32>
    %190 = math.exp %189 : vector<2x64xf32>
    %cst_124 = arith.constant 1.000000e+00 : f32
    %191 = vector.broadcast %cst_124 : f32 to vector<2x64xf32>
    %192 = arith.addf %191, %190 : vector<2x64xf32>
    %193 = arith.divf %191, %192 : vector<2x64xf32>
    %194 = arith.mulf %179, %159 : vector<2x64xf32>
    %195 = arith.mulf %170, %184 : vector<2x64xf32>
    %196 = arith.addf %194, %195 : vector<2x64xf32>
    %197 = math.tanh %196 : vector<2x64xf32>
    %198 = arith.mulf %193, %197 : vector<2x64xf32>
    %c0_125 = arith.constant 0 : index
    %c8 = arith.constant 8 : index
    %c0_126 = arith.constant 0 : index
    %199 = vector.load %arg15[%c0_125, %c8, %c0_126] : memref<4x16x64xf32, #tpu.memory_space<vmem>>, vector<1x2x64xf32>
    %200 = vector.shape_cast %199 : vector<1x2x64xf32> to vector<2x64xf32>
    %cst_127 = arith.constant dense<0.000000e+00> : vector<2x64xf32>
    %201 = tpu.matmul %198, %42, %cst_127 {dimension_numbers = #tpu.dot_dimension_numbers<[1], [0], [0], [1], [0, 0, 1, 1], [], []>} : vector<2x64xf32>, vector<64x64xf32>, vector<2x64xf32> -> vector<2x64xf32>
    %202 = arith.addf %200, %201 : vector<2x64xf32>
    %203 = arith.negf %202 : vector<2x64xf32>
    %204 = math.exp %203 : vector<2x64xf32>
    %cst_128 = arith.constant 1.000000e+00 : f32
    %205 = vector.broadcast %cst_128 : f32 to vector<2x64xf32>
    %206 = arith.addf %205, %204 : vector<2x64xf32>
    %207 = arith.divf %205, %206 : vector<2x64xf32>
    %c1_129 = arith.constant 1 : index
    %c8_130 = arith.constant 8 : index
    %c0_131 = arith.constant 0 : index
    %208 = vector.load %arg15[%c1_129, %c8_130, %c0_131] : memref<4x16x64xf32, #tpu.memory_space<vmem>>, vector<1x2x64xf32>
    %209 = vector.shape_cast %208 : vector<1x2x64xf32> to vector<2x64xf32>
    %cst_132 = arith.constant dense<0.000000e+00> : vector<2x64xf32>
    %210 = tpu.matmul %198, %44, %cst_132 {dimension_numbers = #tpu.dot_dimension_numbers<[1], [0], [0], [1], [0, 0, 1, 1], [], []>} : vector<2x64xf32>, vector<64x64xf32>, vector<2x64xf32> -> vector<2x64xf32>
    %211 = arith.addf %209, %210 : vector<2x64xf32>
    %212 = arith.negf %211 : vector<2x64xf32>
    %213 = math.exp %212 : vector<2x64xf32>
    %cst_133 = arith.constant 1.000000e+00 : f32
    %214 = vector.broadcast %cst_133 : f32 to vector<2x64xf32>
    %215 = arith.addf %214, %213 : vector<2x64xf32>
    %216 = arith.divf %214, %215 : vector<2x64xf32>
    %c2_134 = arith.constant 2 : index
    %c8_135 = arith.constant 8 : index
    %c0_136 = arith.constant 0 : index
    %217 = vector.load %arg15[%c2_134, %c8_135, %c0_136] : memref<4x16x64xf32, #tpu.memory_space<vmem>>, vector<1x2x64xf32>
    %218 = vector.shape_cast %217 : vector<1x2x64xf32> to vector<2x64xf32>
    %cst_137 = arith.constant dense<0.000000e+00> : vector<2x64xf32>
    %219 = tpu.matmul %198, %46, %cst_137 {dimension_numbers = #tpu.dot_dimension_numbers<[1], [0], [0], [1], [0, 0, 1, 1], [], []>} : vector<2x64xf32>, vector<64x64xf32>, vector<2x64xf32> -> vector<2x64xf32>
    %220 = arith.addf %218, %219 : vector<2x64xf32>
    %221 = math.tanh %220 : vector<2x64xf32>
    %c3_138 = arith.constant 3 : index
    %c8_139 = arith.constant 8 : index
    %c0_140 = arith.constant 0 : index
    %222 = vector.load %arg15[%c3_138, %c8_139, %c0_140] : memref<4x16x64xf32, #tpu.memory_space<vmem>>, vector<1x2x64xf32>
    %223 = vector.shape_cast %222 : vector<1x2x64xf32> to vector<2x64xf32>
    %cst_141 = arith.constant dense<0.000000e+00> : vector<2x64xf32>
    %224 = tpu.matmul %198, %48, %cst_141 {dimension_numbers = #tpu.dot_dimension_numbers<[1], [0], [0], [1], [0, 0, 1, 1], [], []>} : vector<2x64xf32>, vector<64x64xf32>, vector<2x64xf32> -> vector<2x64xf32>
    %225 = arith.addf %223, %224 : vector<2x64xf32>
    %226 = arith.negf %225 : vector<2x64xf32>
    %227 = math.exp %226 : vector<2x64xf32>
    %cst_142 = arith.constant 1.000000e+00 : f32
    %228 = vector.broadcast %cst_142 : f32 to vector<2x64xf32>
    %229 = arith.addf %228, %227 : vector<2x64xf32>
    %230 = arith.divf %228, %229 : vector<2x64xf32>
    %231 = arith.mulf %216, %196 : vector<2x64xf32>
    %232 = arith.mulf %207, %221 : vector<2x64xf32>
    %233 = arith.addf %231, %232 : vector<2x64xf32>
    %234 = math.tanh %233 : vector<2x64xf32>
    %235 = arith.mulf %230, %234 : vector<2x64xf32>
    %c0_143 = arith.constant 0 : index
    %c10 = arith.constant 10 : index
    %c0_144 = arith.constant 0 : index
    %236 = vector.load %arg15[%c0_143, %c10, %c0_144] : memref<4x16x64xf32, #tpu.memory_space<vmem>>, vector<1x2x64xf32>
    %237 = vector.shape_cast %236 : vector<1x2x64xf32> to vector<2x64xf32>
    %cst_145 = arith.constant dense<0.000000e+00> : vector<2x64xf32>
    %238 = tpu.matmul %235, %42, %cst_145 {dimension_numbers = #tpu.dot_dimension_numbers<[1], [0], [0], [1], [0, 0, 1, 1], [], []>} : vector<2x64xf32>, vector<64x64xf32>, vector<2x64xf32> -> vector<2x64xf32>
    %239 = arith.addf %237, %238 : vector<2x64xf32>
    %240 = arith.negf %239 : vector<2x64xf32>
    %241 = math.exp %240 : vector<2x64xf32>
    %cst_146 = arith.constant 1.000000e+00 : f32
    %242 = vector.broadcast %cst_146 : f32 to vector<2x64xf32>
    %243 = arith.addf %242, %241 : vector<2x64xf32>
    %244 = arith.divf %242, %243 : vector<2x64xf32>
    %c1_147 = arith.constant 1 : index
    %c10_148 = arith.constant 10 : index
    %c0_149 = arith.constant 0 : index
    %245 = vector.load %arg15[%c1_147, %c10_148, %c0_149] : memref<4x16x64xf32, #tpu.memory_space<vmem>>, vector<1x2x64xf32>
    %246 = vector.shape_cast %245 : vector<1x2x64xf32> to vector<2x64xf32>
    %cst_150 = arith.constant dense<0.000000e+00> : vector<2x64xf32>
    %247 = tpu.matmul %235, %44, %cst_150 {dimension_numbers = #tpu.dot_dimension_numbers<[1], [0], [0], [1], [0, 0, 1, 1], [], []>} : vector<2x64xf32>, vector<64x64xf32>, vector<2x64xf32> -> vector<2x64xf32>
    %248 = arith.addf %246, %247 : vector<2x64xf32>
    %249 = arith.negf %248 : vector<2x64xf32>
    %250 = math.exp %249 : vector<2x64xf32>
    %cst_151 = arith.constant 1.000000e+00 : f32
    %251 = vector.broadcast %cst_151 : f32 to vector<2x64xf32>
    %252 = arith.addf %251, %250 : vector<2x64xf32>
    %253 = arith.divf %251, %252 : vector<2x64xf32>
    %c2_152 = arith.constant 2 : index
    %c10_153 = arith.constant 10 : index
    %c0_154 = arith.constant 0 : index
    %254 = vector.load %arg15[%c2_152, %c10_153, %c0_154] : memref<4x16x64xf32, #tpu.memory_space<vmem>>, vector<1x2x64xf32>
    %255 = vector.shape_cast %254 : vector<1x2x64xf32> to vector<2x64xf32>
    %cst_155 = arith.constant dense<0.000000e+00> : vector<2x64xf32>
    %256 = tpu.matmul %235, %46, %cst_155 {dimension_numbers = #tpu.dot_dimension_numbers<[1], [0], [0], [1], [0, 0, 1, 1], [], []>} : vector<2x64xf32>, vector<64x64xf32>, vector<2x64xf32> -> vector<2x64xf32>
    %257 = arith.addf %255, %256 : vector<2x64xf32>
    %258 = math.tanh %257 : vector<2x64xf32>
    %c3_156 = arith.constant 3 : index
    %c10_157 = arith.constant 10 : index
    %c0_158 = arith.constant 0 : index
    %259 = vector.load %arg15[%c3_156, %c10_157, %c0_158] : memref<4x16x64xf32, #tpu.memory_space<vmem>>, vector<1x2x64xf32>
    %260 = vector.shape_cast %259 : vector<1x2x64xf32> to vector<2x64xf32>
    %cst_159 = arith.constant dense<0.000000e+00> : vector<2x64xf32>
    %261 = tpu.matmul %235, %48, %cst_159 {dimension_numbers = #tpu.dot_dimension_numbers<[1], [0], [0], [1], [0, 0, 1, 1], [], []>} : vector<2x64xf32>, vector<64x64xf32>, vector<2x64xf32> -> vector<2x64xf32>
    %262 = arith.addf %260, %261 : vector<2x64xf32>
    %263 = arith.negf %262 : vector<2x64xf32>
    %264 = math.exp %263 : vector<2x64xf32>
    %cst_160 = arith.constant 1.000000e+00 : f32
    %265 = vector.broadcast %cst_160 : f32 to vector<2x64xf32>
    %266 = arith.addf %265, %264 : vector<2x64xf32>
    %267 = arith.divf %265, %266 : vector<2x64xf32>
    %268 = arith.mulf %253, %233 : vector<2x64xf32>
    %269 = arith.mulf %244, %258 : vector<2x64xf32>
    %270 = arith.addf %268, %269 : vector<2x64xf32>
    %271 = math.tanh %270 : vector<2x64xf32>
    %272 = arith.mulf %267, %271 : vector<2x64xf32>
    %c0_161 = arith.constant 0 : index
    %c12 = arith.constant 12 : index
    %c0_162 = arith.constant 0 : index
    %273 = vector.load %arg15[%c0_161, %c12, %c0_162] : memref<4x16x64xf32, #tpu.memory_space<vmem>>, vector<1x2x64xf32>
    %274 = vector.shape_cast %273 : vector<1x2x64xf32> to vector<2x64xf32>
    %cst_163 = arith.constant dense<0.000000e+00> : vector<2x64xf32>
    %275 = tpu.matmul %272, %42, %cst_163 {dimension_numbers = #tpu.dot_dimension_numbers<[1], [0], [0], [1], [0, 0, 1, 1], [], []>} : vector<2x64xf32>, vector<64x64xf32>, vector<2x64xf32> -> vector<2x64xf32>
    %276 = arith.addf %274, %275 : vector<2x64xf32>
    %277 = arith.negf %276 : vector<2x64xf32>
    %278 = math.exp %277 : vector<2x64xf32>
    %cst_164 = arith.constant 1.000000e+00 : f32
    %279 = vector.broadcast %cst_164 : f32 to vector<2x64xf32>
    %280 = arith.addf %279, %278 : vector<2x64xf32>
    %281 = arith.divf %279, %280 : vector<2x64xf32>
    %c1_165 = arith.constant 1 : index
    %c12_166 = arith.constant 12 : index
    %c0_167 = arith.constant 0 : index
    %282 = vector.load %arg15[%c1_165, %c12_166, %c0_167] : memref<4x16x64xf32, #tpu.memory_space<vmem>>, vector<1x2x64xf32>
    %283 = vector.shape_cast %282 : vector<1x2x64xf32> to vector<2x64xf32>
    %cst_168 = arith.constant dense<0.000000e+00> : vector<2x64xf32>
    %284 = tpu.matmul %272, %44, %cst_168 {dimension_numbers = #tpu.dot_dimension_numbers<[1], [0], [0], [1], [0, 0, 1, 1], [], []>} : vector<2x64xf32>, vector<64x64xf32>, vector<2x64xf32> -> vector<2x64xf32>
    %285 = arith.addf %283, %284 : vector<2x64xf32>
    %286 = arith.negf %285 : vector<2x64xf32>
    %287 = math.exp %286 : vector<2x64xf32>
    %cst_169 = arith.constant 1.000000e+00 : f32
    %288 = vector.broadcast %cst_169 : f32 to vector<2x64xf32>
    %289 = arith.addf %288, %287 : vector<2x64xf32>
    %290 = arith.divf %288, %289 : vector<2x64xf32>
    %c2_170 = arith.constant 2 : index
    %c12_171 = arith.constant 12 : index
    %c0_172 = arith.constant 0 : index
    %291 = vector.load %arg15[%c2_170, %c12_171, %c0_172] : memref<4x16x64xf32, #tpu.memory_space<vmem>>, vector<1x2x64xf32>
    %292 = vector.shape_cast %291 : vector<1x2x64xf32> to vector<2x64xf32>
    %cst_173 = arith.constant dense<0.000000e+00> : vector<2x64xf32>
    %293 = tpu.matmul %272, %46, %cst_173 {dimension_numbers = #tpu.dot_dimension_numbers<[1], [0], [0], [1], [0, 0, 1, 1], [], []>} : vector<2x64xf32>, vector<64x64xf32>, vector<2x64xf32> -> vector<2x64xf32>
    %294 = arith.addf %292, %293 : vector<2x64xf32>
    %295 = math.tanh %294 : vector<2x64xf32>
    %c3_174 = arith.constant 3 : index
    %c12_175 = arith.constant 12 : index
    %c0_176 = arith.constant 0 : index
    %296 = vector.load %arg15[%c3_174, %c12_175, %c0_176] : memref<4x16x64xf32, #tpu.memory_space<vmem>>, vector<1x2x64xf32>
    %297 = vector.shape_cast %296 : vector<1x2x64xf32> to vector<2x64xf32>
    %cst_177 = arith.constant dense<0.000000e+00> : vector<2x64xf32>
    %298 = tpu.matmul %272, %48, %cst_177 {dimension_numbers = #tpu.dot_dimension_numbers<[1], [0], [0], [1], [0, 0, 1, 1], [], []>} : vector<2x64xf32>, vector<64x64xf32>, vector<2x64xf32> -> vector<2x64xf32>
    %299 = arith.addf %297, %298 : vector<2x64xf32>
    %300 = arith.negf %299 : vector<2x64xf32>
    %301 = math.exp %300 : vector<2x64xf32>
    %cst_178 = arith.constant 1.000000e+00 : f32
    %302 = vector.broadcast %cst_178 : f32 to vector<2x64xf32>
    %303 = arith.addf %302, %301 : vector<2x64xf32>
    %304 = arith.divf %302, %303 : vector<2x64xf32>
    %305 = arith.mulf %290, %270 : vector<2x64xf32>
    %306 = arith.mulf %281, %295 : vector<2x64xf32>
    %307 = arith.addf %305, %306 : vector<2x64xf32>
    %308 = math.tanh %307 : vector<2x64xf32>
    %309 = arith.mulf %304, %308 : vector<2x64xf32>
    %c0_179 = arith.constant 0 : index
    %c14 = arith.constant 14 : index
    %c0_180 = arith.constant 0 : index
    %310 = vector.load %arg15[%c0_179, %c14, %c0_180] : memref<4x16x64xf32, #tpu.memory_space<vmem>>, vector<1x2x64xf32>
    %311 = vector.shape_cast %310 : vector<1x2x64xf32> to vector<2x64xf32>
    %cst_181 = arith.constant dense<0.000000e+00> : vector<2x64xf32>
    %312 = tpu.matmul %309, %42, %cst_181 {dimension_numbers = #tpu.dot_dimension_numbers<[1], [0], [0], [1], [0, 0, 1, 1], [], []>} : vector<2x64xf32>, vector<64x64xf32>, vector<2x64xf32> -> vector<2x64xf32>
    %313 = arith.addf %311, %312 : vector<2x64xf32>
    %314 = arith.negf %313 : vector<2x64xf32>
    %315 = math.exp %314 : vector<2x64xf32>
    %cst_182 = arith.constant 1.000000e+00 : f32
    %316 = vector.broadcast %cst_182 : f32 to vector<2x64xf32>
    %317 = arith.addf %316, %315 : vector<2x64xf32>
    %318 = arith.divf %316, %317 : vector<2x64xf32>
    %c1_183 = arith.constant 1 : index
    %c14_184 = arith.constant 14 : index
    %c0_185 = arith.constant 0 : index
    %319 = vector.load %arg15[%c1_183, %c14_184, %c0_185] : memref<4x16x64xf32, #tpu.memory_space<vmem>>, vector<1x2x64xf32>
    %320 = vector.shape_cast %319 : vector<1x2x64xf32> to vector<2x64xf32>
    %cst_186 = arith.constant dense<0.000000e+00> : vector<2x64xf32>
    %321 = tpu.matmul %309, %44, %cst_186 {dimension_numbers = #tpu.dot_dimension_numbers<[1], [0], [0], [1], [0, 0, 1, 1], [], []>} : vector<2x64xf32>, vector<64x64xf32>, vector<2x64xf32> -> vector<2x64xf32>
    %322 = arith.addf %320, %321 : vector<2x64xf32>
    %323 = arith.negf %322 : vector<2x64xf32>
    %324 = math.exp %323 : vector<2x64xf32>
    %cst_187 = arith.constant 1.000000e+00 : f32
    %325 = vector.broadcast %cst_187 : f32 to vector<2x64xf32>
    %326 = arith.addf %325, %324 : vector<2x64xf32>
    %327 = arith.divf %325, %326 : vector<2x64xf32>
    %c2_188 = arith.constant 2 : index
    %c14_189 = arith.constant 14 : index
    %c0_190 = arith.constant 0 : index
    %328 = vector.load %arg15[%c2_188, %c14_189, %c0_190] : memref<4x16x64xf32, #tpu.memory_space<vmem>>, vector<1x2x64xf32>
    %329 = vector.shape_cast %328 : vector<1x2x64xf32> to vector<2x64xf32>
    %cst_191 = arith.constant dense<0.000000e+00> : vector<2x64xf32>
    %330 = tpu.matmul %309, %46, %cst_191 {dimension_numbers = #tpu.dot_dimension_numbers<[1], [0], [0], [1], [0, 0, 1, 1], [], []>} : vector<2x64xf32>, vector<64x64xf32>, vector<2x64xf32> -> vector<2x64xf32>
    %331 = arith.addf %329, %330 : vector<2x64xf32>
    %332 = math.tanh %331 : vector<2x64xf32>
    %c3_192 = arith.constant 3 : index
    %c14_193 = arith.constant 14 : index
    %c0_194 = arith.constant 0 : index
    %333 = vector.load %arg15[%c3_192, %c14_193, %c0_194] : memref<4x16x64xf32, #tpu.memory_space<vmem>>, vector<1x2x64xf32>
    %334 = vector.shape_cast %333 : vector<1x2x64xf32> to vector<2x64xf32>
    %cst_195 = arith.constant dense<0.000000e+00> : vector<2x64xf32>
    %335 = tpu.matmul %309, %48, %cst_195 {dimension_numbers = #tpu.dot_dimension_numbers<[1], [0], [0], [1], [0, 0, 1, 1], [], []>} : vector<2x64xf32>, vector<64x64xf32>, vector<2x64xf32> -> vector<2x64xf32>
    %336 = arith.addf %334, %335 : vector<2x64xf32>
    %337 = arith.negf %336 : vector<2x64xf32>
    %338 = math.exp %337 : vector<2x64xf32>
    %cst_196 = arith.constant 1.000000e+00 : f32
    %339 = vector.broadcast %cst_196 : f32 to vector<2x64xf32>
    %340 = arith.addf %339, %338 : vector<2x64xf32>
    %341 = arith.divf %339, %340 : vector<2x64xf32>
    %342 = arith.mulf %327, %307 : vector<2x64xf32>
    %343 = arith.mulf %318, %332 : vector<2x64xf32>
    %344 = arith.addf %342, %343 : vector<2x64xf32>
    %345 = math.tanh %344 : vector<2x64xf32>
    %346 = arith.mulf %341, %345 : vector<2x64xf32>
    %347 = tpu.concatenate %87, %124, %161, %198, %235, %272, %309, %346 in 0 : vector<2x64xf32>, vector<2x64xf32>, vector<2x64xf32>, vector<2x64xf32>, vector<2x64xf32>, vector<2x64xf32>, vector<2x64xf32>, vector<2x64xf32> -> vector<16x64xf32>
    %c0_197 = arith.constant 0 : index
    %c0_198 = arith.constant 0 : index
    %c0_199 = arith.constant 0 : index
    %348 = vector.load %arg4[%c0_197, %c0_198, %c0_199] : memref<4x64x32xf32, #tpu.memory_space<vmem>>, vector<1x64x32xf32>
    %349 = vector.shape_cast %348 : vector<1x64x32xf32> to vector<64x32xf32>
    %cst_200 = arith.constant dense<0.000000e+00> : vector<16x32xf32>
    %350 = tpu.matmul %347, %349, %cst_200 {dimension_numbers = #tpu.dot_dimension_numbers<[1], [0], [0], [1], [0, 0, 1, 1], [], []>} : vector<16x64xf32>, vector<64x32xf32>, vector<16x32xf32> -> vector<16x32xf32>
    %c0_201 = arith.constant 0 : index
    %c0_202 = arith.constant 0 : index
    %c0_203 = arith.constant 0 : index
    %351 = vector.load %arg6[%c0_201, %c0_202, %c0_203] : memref<4x1x32xf32, #tpu.memory_space<vmem>>, vector<1x1x32xf32>
    %352 = vector.shape_cast %351 : vector<1x1x32xf32> to vector<1x32xf32>
    %353 = vector.broadcast %352 : vector<1x32xf32> to vector<16x32xf32>
    %354 = arith.addf %350, %353 : vector<16x32xf32>
    %c0_204 = arith.constant 0 : index
    %c0_205 = arith.constant 0 : index
    %c0_206 = arith.constant 0 : index
    %355 = vector.load %arg16[%c0_204, %c0_205, %c0_206] : memref<4x16x32xf32, #tpu.memory_space<vmem>>, vector<1x16x32xf32>
    %356 = vector.shape_cast %355 : vector<1x16x32xf32> to vector<16x32xf32>
    %357 = vector.shape_cast %354 : vector<16x32xf32> to vector<1x16x32xf32>
    tpu.vector_store %arg16[%c0_204, %c0_205, %c0_206], %357 {strides = array<i32>} : memref<4x16x32xf32, #tpu.memory_space<vmem>>, vector<1x16x32xf32>,
    %c1_207 = arith.constant 1 : index
    %c0_208 = arith.constant 0 : index
    %c0_209 = arith.constant 0 : index
    %358 = vector.load %arg4[%c1_207, %c0_208, %c0_209] : memref<4x64x32xf32, #tpu.memory_space<vmem>>, vector<1x64x32xf32>
    %359 = vector.shape_cast %358 : vector<1x64x32xf32> to vector<64x32xf32>
    %cst_210 = arith.constant dense<0.000000e+00> : vector<16x32xf32>
    %360 = tpu.matmul %347, %359, %cst_210 {dimension_numbers = #tpu.dot_dimension_numbers<[1], [0], [0], [1], [0, 0, 1, 1], [], []>} : vector<16x64xf32>, vector<64x32xf32>, vector<16x32xf32> -> vector<16x32xf32>
    %c1_211 = arith.constant 1 : index
    %c0_212 = arith.constant 0 : index
    %c0_213 = arith.constant 0 : index
    %361 = vector.load %arg6[%c1_211, %c0_212, %c0_213] : memref<4x1x32xf32, #tpu.memory_space<vmem>>, vector<1x1x32xf32>
    %362 = vector.shape_cast %361 : vector<1x1x32xf32> to vector<1x32xf32>
    %363 = vector.broadcast %362 : vector<1x32xf32> to vector<16x32xf32>
    %364 = arith.addf %360, %363 : vector<16x32xf32>
    %c1_214 = arith.constant 1 : index
    %c0_215 = arith.constant 0 : index
    %c0_216 = arith.constant 0 : index
    %365 = vector.load %arg16[%c1_214, %c0_215, %c0_216] : memref<4x16x32xf32, #tpu.memory_space<vmem>>, vector<1x16x32xf32>
    %366 = vector.shape_cast %365 : vector<1x16x32xf32> to vector<16x32xf32>
    %367 = vector.shape_cast %364 : vector<16x32xf32> to vector<1x16x32xf32>
    tpu.vector_store %arg16[%c1_214, %c0_215, %c0_216], %367 {strides = array<i32>} : memref<4x16x32xf32, #tpu.memory_space<vmem>>, vector<1x16x32xf32>,
    %c2_217 = arith.constant 2 : index
    %c0_218 = arith.constant 0 : index
    %c0_219 = arith.constant 0 : index
    %368 = vector.load %arg4[%c2_217, %c0_218, %c0_219] : memref<4x64x32xf32, #tpu.memory_space<vmem>>, vector<1x64x32xf32>
    %369 = vector.shape_cast %368 : vector<1x64x32xf32> to vector<64x32xf32>
    %cst_220 = arith.constant dense<0.000000e+00> : vector<16x32xf32>
    %370 = tpu.matmul %347, %369, %cst_220 {dimension_numbers = #tpu.dot_dimension_numbers<[1], [0], [0], [1], [0, 0, 1, 1], [], []>} : vector<16x64xf32>, vector<64x32xf32>, vector<16x32xf32> -> vector<16x32xf32>
    %c2_221 = arith.constant 2 : index
    %c0_222 = arith.constant 0 : index
    %c0_223 = arith.constant 0 : index
    %371 = vector.load %arg6[%c2_221, %c0_222, %c0_223] : memref<4x1x32xf32, #tpu.memory_space<vmem>>, vector<1x1x32xf32>
    %372 = vector.shape_cast %371 : vector<1x1x32xf32> to vector<1x32xf32>
    %373 = vector.broadcast %372 : vector<1x32xf32> to vector<16x32xf32>
    %374 = arith.addf %370, %373 : vector<16x32xf32>
    %c2_224 = arith.constant 2 : index
    %c0_225 = arith.constant 0 : index
    %c0_226 = arith.constant 0 : index
    %375 = vector.load %arg16[%c2_224, %c0_225, %c0_226] : memref<4x16x32xf32, #tpu.memory_space<vmem>>, vector<1x16x32xf32>
    %376 = vector.shape_cast %375 : vector<1x16x32xf32> to vector<16x32xf32>
    %377 = vector.shape_cast %374 : vector<16x32xf32> to vector<1x16x32xf32>
    tpu.vector_store %arg16[%c2_224, %c0_225, %c0_226], %377 {strides = array<i32>} : memref<4x16x32xf32, #tpu.memory_space<vmem>>, vector<1x16x32xf32>,
    %c3_227 = arith.constant 3 : index
    %c0_228 = arith.constant 0 : index
    %c0_229 = arith.constant 0 : index
    %378 = vector.load %arg4[%c3_227, %c0_228, %c0_229] : memref<4x64x32xf32, #tpu.memory_space<vmem>>, vector<1x64x32xf32>
    %379 = vector.shape_cast %378 : vector<1x64x32xf32> to vector<64x32xf32>
    %cst_230 = arith.constant dense<0.000000e+00> : vector<16x32xf32>
    %380 = tpu.matmul %347, %379, %cst_230 {dimension_numbers = #tpu.dot_dimension_numbers<[1], [0], [0], [1], [0, 0, 1, 1], [], []>} : vector<16x64xf32>, vector<64x32xf32>, vector<16x32xf32> -> vector<16x32xf32>
    %c3_231 = arith.constant 3 : index
    %c0_232 = arith.constant 0 : index
    %c0_233 = arith.constant 0 : index
    %381 = vector.load %arg6[%c3_231, %c0_232, %c0_233] : memref<4x1x32xf32, #tpu.memory_space<vmem>>, vector<1x1x32xf32>
    %382 = vector.shape_cast %381 : vector<1x1x32xf32> to vector<1x32xf32>
    %383 = vector.broadcast %382 : vector<1x32xf32> to vector<16x32xf32>
    %384 = arith.addf %380, %383 : vector<16x32xf32>
    %c3_234 = arith.constant 3 : index
    %c0_235 = arith.constant 0 : index
    %c0_236 = arith.constant 0 : index
    %385 = vector.load %arg16[%c3_234, %c0_235, %c0_236] : memref<4x16x32xf32, #tpu.memory_space<vmem>>, vector<1x16x32xf32>
    %386 = vector.shape_cast %385 : vector<1x16x32xf32> to vector<16x32xf32>
    %387 = vector.shape_cast %384 : vector<16x32xf32> to vector<1x16x32xf32>
    tpu.vector_store %arg16[%c3_234, %c0_235, %c0_236], %387 {strides = array<i32>} : memref<4x16x32xf32, #tpu.memory_space<vmem>>, vector<1x16x32xf32>,
    %c0_237 = arith.constant 0 : index
    %c0_238 = arith.constant 0 : index
    %c0_239 = arith.constant 0 : index
    %388 = vector.load %arg5[%c0_237, %c0_238, %c0_239] : memref<4x32x32xf32, #tpu.memory_space<vmem>>, vector<1x32x32xf32>
    %389 = vector.shape_cast %388 : vector<1x32x32xf32> to vector<32x32xf32>
    %c1_240 = arith.constant 1 : index
    %c0_241 = arith.constant 0 : index
    %c0_242 = arith.constant 0 : index
    %390 = vector.load %arg5[%c1_240, %c0_241, %c0_242] : memref<4x32x32xf32, #tpu.memory_space<vmem>>, vector<1x32x32xf32>
    %391 = vector.shape_cast %390 : vector<1x32x32xf32> to vector<32x32xf32>
    %c2_243 = arith.constant 2 : index
    %c0_244 = arith.constant 0 : index
    %c0_245 = arith.constant 0 : index
    %392 = vector.load %arg5[%c2_243, %c0_244, %c0_245] : memref<4x32x32xf32, #tpu.memory_space<vmem>>, vector<1x32x32xf32>
    %393 = vector.shape_cast %392 : vector<1x32x32xf32> to vector<32x32xf32>
    %c3_246 = arith.constant 3 : index
    %c0_247 = arith.constant 0 : index
    %c0_248 = arith.constant 0 : index
    %394 = vector.load %arg5[%c3_246, %c0_247, %c0_248] : memref<4x32x32xf32, #tpu.memory_space<vmem>>, vector<1x32x32xf32>
    %395 = vector.shape_cast %394 : vector<1x32x32xf32> to vector<32x32xf32>
    %cst_249 = arith.constant 0.000000e+00 : f32
    %396 = vector.broadcast %cst_249 : f32 to vector<2x32xf32>
    %cst_250 = arith.constant 0.000000e+00 : f32
    %397 = vector.broadcast %cst_250 : f32 to vector<2x32xf32>
    %c0_251 = arith.constant 0 : index
    %c0_252 = arith.constant 0 : index
    %c0_253 = arith.constant 0 : index
    %398 = vector.load %arg16[%c0_251, %c0_252, %c0_253] : memref<4x16x32xf32, #tpu.memory_space<vmem>>, vector<1x2x32xf32>
    %399 = vector.shape_cast %398 : vector<1x2x32xf32> to vector<2x32xf32>
    %cst_254 = arith.constant dense<0.000000e+00> : vector<2x32xf32>
    %400 = tpu.matmul %396, %389, %cst_254 {dimension_numbers = #tpu.dot_dimension_numbers<[1], [0], [0], [1], [0, 0, 1, 1], [], []>} : vector<2x32xf32>, vector<32x32xf32>, vector<2x32xf32> -> vector<2x32xf32>
    %401 = arith.addf %399, %400 : vector<2x32xf32>
    %402 = arith.negf %401 : vector<2x32xf32>
    %403 = math.exp %402 : vector<2x32xf32>
    %cst_255 = arith.constant 1.000000e+00 : f32
    %404 = vector.broadcast %cst_255 : f32 to vector<2x32xf32>
    %405 = arith.addf %404, %403 : vector<2x32xf32>
    %406 = arith.divf %404, %405 : vector<2x32xf32>
    %c1_256 = arith.constant 1 : index
    %c0_257 = arith.constant 0 : index
    %c0_258 = arith.constant 0 : index
    %407 = vector.load %arg16[%c1_256, %c0_257, %c0_258] : memref<4x16x32xf32, #tpu.memory_space<vmem>>, vector<1x2x32xf32>
    %408 = vector.shape_cast %407 : vector<1x2x32xf32> to vector<2x32xf32>
    %cst_259 = arith.constant dense<0.000000e+00> : vector<2x32xf32>
    %409 = tpu.matmul %396, %391, %cst_259 {dimension_numbers = #tpu.dot_dimension_numbers<[1], [0], [0], [1], [0, 0, 1, 1], [], []>} : vector<2x32xf32>, vector<32x32xf32>, vector<2x32xf32> -> vector<2x32xf32>
    %410 = arith.addf %408, %409 : vector<2x32xf32>
    %411 = arith.negf %410 : vector<2x32xf32>
    %412 = math.exp %411 : vector<2x32xf32>
    %cst_260 = arith.constant 1.000000e+00 : f32
    %413 = vector.broadcast %cst_260 : f32 to vector<2x32xf32>
    %414 = arith.addf %413, %412 : vector<2x32xf32>
    %415 = arith.divf %413, %414 : vector<2x32xf32>
    %c2_261 = arith.constant 2 : index
    %c0_262 = arith.constant 0 : index
    %c0_263 = arith.constant 0 : index
    %416 = vector.load %arg16[%c2_261, %c0_262, %c0_263] : memref<4x16x32xf32, #tpu.memory_space<vmem>>, vector<1x2x32xf32>
    %417 = vector.shape_cast %416 : vector<1x2x32xf32> to vector<2x32xf32>
    %cst_264 = arith.constant dense<0.000000e+00> : vector<2x32xf32>
    %418 = tpu.matmul %396, %393, %cst_264 {dimension_numbers = #tpu.dot_dimension_numbers<[1], [0], [0], [1], [0, 0, 1, 1], [], []>} : vector<2x32xf32>, vector<32x32xf32>, vector<2x32xf32> -> vector<2x32xf32>
    %419 = arith.addf %417, %418 : vector<2x32xf32>
    %420 = math.tanh %419 : vector<2x32xf32>
    %c3_265 = arith.constant 3 : index
    %c0_266 = arith.constant 0 : index
    %c0_267 = arith.constant 0 : index
    %421 = vector.load %arg16[%c3_265, %c0_266, %c0_267] : memref<4x16x32xf32, #tpu.memory_space<vmem>>, vector<1x2x32xf32>
    %422 = vector.shape_cast %421 : vector<1x2x32xf32> to vector<2x32xf32>
    %cst_268 = arith.constant dense<0.000000e+00> : vector<2x32xf32>
    %423 = tpu.matmul %396, %395, %cst_268 {dimension_numbers = #tpu.dot_dimension_numbers<[1], [0], [0], [1], [0, 0, 1, 1], [], []>} : vector<2x32xf32>, vector<32x32xf32>, vector<2x32xf32> -> vector<2x32xf32>
    %424 = arith.addf %422, %423 : vector<2x32xf32>
    %425 = arith.negf %424 : vector<2x32xf32>
    %426 = math.exp %425 : vector<2x32xf32>
    %cst_269 = arith.constant 1.000000e+00 : f32
    %427 = vector.broadcast %cst_269 : f32 to vector<2x32xf32>
    %428 = arith.addf %427, %426 : vector<2x32xf32>
    %429 = arith.divf %427, %428 : vector<2x32xf32>
    %430 = arith.mulf %415, %397 : vector<2x32xf32>
    %431 = arith.mulf %406, %420 : vector<2x32xf32>
    %432 = arith.addf %430, %431 : vector<2x32xf32>
    %433 = math.tanh %432 : vector<2x32xf32>
    %434 = arith.mulf %429, %433 : vector<2x32xf32>
    %c0_270 = arith.constant 0 : index
    %c2_271 = arith.constant 2 : index
    %c0_272 = arith.constant 0 : index
    %435 = vector.load %arg16[%c0_270, %c2_271, %c0_272] : memref<4x16x32xf32, #tpu.memory_space<vmem>>, vector<1x2x32xf32>
    %436 = vector.shape_cast %435 : vector<1x2x32xf32> to vector<2x32xf32>
    %cst_273 = arith.constant dense<0.000000e+00> : vector<2x32xf32>
    %437 = tpu.matmul %434, %389, %cst_273 {dimension_numbers = #tpu.dot_dimension_numbers<[1], [0], [0], [1], [0, 0, 1, 1], [], []>} : vector<2x32xf32>, vector<32x32xf32>, vector<2x32xf32> -> vector<2x32xf32>
    %438 = arith.addf %436, %437 : vector<2x32xf32>
    %439 = arith.negf %438 : vector<2x32xf32>
    %440 = math.exp %439 : vector<2x32xf32>
    %cst_274 = arith.constant 1.000000e+00 : f32
    %441 = vector.broadcast %cst_274 : f32 to vector<2x32xf32>
    %442 = arith.addf %441, %440 : vector<2x32xf32>
    %443 = arith.divf %441, %442 : vector<2x32xf32>
    %c1_275 = arith.constant 1 : index
    %c2_276 = arith.constant 2 : index
    %c0_277 = arith.constant 0 : index
    %444 = vector.load %arg16[%c1_275, %c2_276, %c0_277] : memref<4x16x32xf32, #tpu.memory_space<vmem>>, vector<1x2x32xf32>
    %445 = vector.shape_cast %444 : vector<1x2x32xf32> to vector<2x32xf32>
    %cst_278 = arith.constant dense<0.000000e+00> : vector<2x32xf32>
    %446 = tpu.matmul %434, %391, %cst_278 {dimension_numbers = #tpu.dot_dimension_numbers<[1], [0], [0], [1], [0, 0, 1, 1], [], []>} : vector<2x32xf32>, vector<32x32xf32>, vector<2x32xf32> -> vector<2x32xf32>
    %447 = arith.addf %445, %446 : vector<2x32xf32>
    %448 = arith.negf %447 : vector<2x32xf32>
    %449 = math.exp %448 : vector<2x32xf32>
    %cst_279 = arith.constant 1.000000e+00 : f32
    %450 = vector.broadcast %cst_279 : f32 to vector<2x32xf32>
    %451 = arith.addf %450, %449 : vector<2x32xf32>
    %452 = arith.divf %450, %451 : vector<2x32xf32>
    %c2_280 = arith.constant 2 : index
    %c2_281 = arith.constant 2 : index
    %c0_282 = arith.constant 0 : index
    %453 = vector.load %arg16[%c2_280, %c2_281, %c0_282] : memref<4x16x32xf32, #tpu.memory_space<vmem>>, vector<1x2x32xf32>
    %454 = vector.shape_cast %453 : vector<1x2x32xf32> to vector<2x32xf32>
    %cst_283 = arith.constant dense<0.000000e+00> : vector<2x32xf32>
    %455 = tpu.matmul %434, %393, %cst_283 {dimension_numbers = #tpu.dot_dimension_numbers<[1], [0], [0], [1], [0, 0, 1, 1], [], []>} : vector<2x32xf32>, vector<32x32xf32>, vector<2x32xf32> -> vector<2x32xf32>
    %456 = arith.addf %454, %455 : vector<2x32xf32>
    %457 = math.tanh %456 : vector<2x32xf32>
    %c3_284 = arith.constant 3 : index
    %c2_285 = arith.constant 2 : index
    %c0_286 = arith.constant 0 : index
    %458 = vector.load %arg16[%c3_284, %c2_285, %c0_286] : memref<4x16x32xf32, #tpu.memory_space<vmem>>, vector<1x2x32xf32>
    %459 = vector.shape_cast %458 : vector<1x2x32xf32> to vector<2x32xf32>
    %cst_287 = arith.constant dense<0.000000e+00> : vector<2x32xf32>
    %460 = tpu.matmul %434, %395, %cst_287 {dimension_numbers = #tpu.dot_dimension_numbers<[1], [0], [0], [1], [0, 0, 1, 1], [], []>} : vector<2x32xf32>, vector<32x32xf32>, vector<2x32xf32> -> vector<2x32xf32>
    %461 = arith.addf %459, %460 : vector<2x32xf32>
    %462 = arith.negf %461 : vector<2x32xf32>
    %463 = math.exp %462 : vector<2x32xf32>
    %cst_288 = arith.constant 1.000000e+00 : f32
    %464 = vector.broadcast %cst_288 : f32 to vector<2x32xf32>
    %465 = arith.addf %464, %463 : vector<2x32xf32>
    %466 = arith.divf %464, %465 : vector<2x32xf32>
    %467 = arith.mulf %452, %432 : vector<2x32xf32>
    %468 = arith.mulf %443, %457 : vector<2x32xf32>
    %469 = arith.addf %467, %468 : vector<2x32xf32>
    %470 = math.tanh %469 : vector<2x32xf32>
    %471 = arith.mulf %466, %470 : vector<2x32xf32>
    %c0_289 = arith.constant 0 : index
    %c4_290 = arith.constant 4 : index
    %c0_291 = arith.constant 0 : index
    %472 = vector.load %arg16[%c0_289, %c4_290, %c0_291] : memref<4x16x32xf32, #tpu.memory_space<vmem>>, vector<1x2x32xf32>
    %473 = vector.shape_cast %472 : vector<1x2x32xf32> to vector<2x32xf32>
    %cst_292 = arith.constant dense<0.000000e+00> : vector<2x32xf32>
    %474 = tpu.matmul %471, %389, %cst_292 {dimension_numbers = #tpu.dot_dimension_numbers<[1], [0], [0], [1], [0, 0, 1, 1], [], []>} : vector<2x32xf32>, vector<32x32xf32>, vector<2x32xf32> -> vector<2x32xf32>
    %475 = arith.addf %473, %474 : vector<2x32xf32>
    %476 = arith.negf %475 : vector<2x32xf32>
    %477 = math.exp %476 : vector<2x32xf32>
    %cst_293 = arith.constant 1.000000e+00 : f32
    %478 = vector.broadcast %cst_293 : f32 to vector<2x32xf32>
    %479 = arith.addf %478, %477 : vector<2x32xf32>
    %480 = arith.divf %478, %479 : vector<2x32xf32>
    %c1_294 = arith.constant 1 : index
    %c4_295 = arith.constant 4 : index
    %c0_296 = arith.constant 0 : index
    %481 = vector.load %arg16[%c1_294, %c4_295, %c0_296] : memref<4x16x32xf32, #tpu.memory_space<vmem>>, vector<1x2x32xf32>
    %482 = vector.shape_cast %481 : vector<1x2x32xf32> to vector<2x32xf32>
    %cst_297 = arith.constant dense<0.000000e+00> : vector<2x32xf32>
    %483 = tpu.matmul %471, %391, %cst_297 {dimension_numbers = #tpu.dot_dimension_numbers<[1], [0], [0], [1], [0, 0, 1, 1], [], []>} : vector<2x32xf32>, vector<32x32xf32>, vector<2x32xf32> -> vector<2x32xf32>
    %484 = arith.addf %482, %483 : vector<2x32xf32>
    %485 = arith.negf %484 : vector<2x32xf32>
    %486 = math.exp %485 : vector<2x32xf32>
    %cst_298 = arith.constant 1.000000e+00 : f32
    %487 = vector.broadcast %cst_298 : f32 to vector<2x32xf32>
    %488 = arith.addf %487, %486 : vector<2x32xf32>
    %489 = arith.divf %487, %488 : vector<2x32xf32>
    %c2_299 = arith.constant 2 : index
    %c4_300 = arith.constant 4 : index
    %c0_301 = arith.constant 0 : index
    %490 = vector.load %arg16[%c2_299, %c4_300, %c0_301] : memref<4x16x32xf32, #tpu.memory_space<vmem>>, vector<1x2x32xf32>
    %491 = vector.shape_cast %490 : vector<1x2x32xf32> to vector<2x32xf32>
    %cst_302 = arith.constant dense<0.000000e+00> : vector<2x32xf32>
    %492 = tpu.matmul %471, %393, %cst_302 {dimension_numbers = #tpu.dot_dimension_numbers<[1], [0], [0], [1], [0, 0, 1, 1], [], []>} : vector<2x32xf32>, vector<32x32xf32>, vector<2x32xf32> -> vector<2x32xf32>
    %493 = arith.addf %491, %492 : vector<2x32xf32>
    %494 = math.tanh %493 : vector<2x32xf32>
    %c3_303 = arith.constant 3 : index
    %c4_304 = arith.constant 4 : index
    %c0_305 = arith.constant 0 : index
    %495 = vector.load %arg16[%c3_303, %c4_304, %c0_305] : memref<4x16x32xf32, #tpu.memory_space<vmem>>, vector<1x2x32xf32>
    %496 = vector.shape_cast %495 : vector<1x2x32xf32> to vector<2x32xf32>
    %cst_306 = arith.constant dense<0.000000e+00> : vector<2x32xf32>
    %497 = tpu.matmul %471, %395, %cst_306 {dimension_numbers = #tpu.dot_dimension_numbers<[1], [0], [0], [1], [0, 0, 1, 1], [], []>} : vector<2x32xf32>, vector<32x32xf32>, vector<2x32xf32> -> vector<2x32xf32>
    %498 = arith.addf %496, %497 : vector<2x32xf32>
    %499 = arith.negf %498 : vector<2x32xf32>
    %500 = math.exp %499 : vector<2x32xf32>
    %cst_307 = arith.constant 1.000000e+00 : f32
    %501 = vector.broadcast %cst_307 : f32 to vector<2x32xf32>
    %502 = arith.addf %501, %500 : vector<2x32xf32>
    %503 = arith.divf %501, %502 : vector<2x32xf32>
    %504 = arith.mulf %489, %469 : vector<2x32xf32>
    %505 = arith.mulf %480, %494 : vector<2x32xf32>
    %506 = arith.addf %504, %505 : vector<2x32xf32>
    %507 = math.tanh %506 : vector<2x32xf32>
    %508 = arith.mulf %503, %507 : vector<2x32xf32>
    %c0_308 = arith.constant 0 : index
    %c6_309 = arith.constant 6 : index
    %c0_310 = arith.constant 0 : index
    %509 = vector.load %arg16[%c0_308, %c6_309, %c0_310] : memref<4x16x32xf32, #tpu.memory_space<vmem>>, vector<1x2x32xf32>
    %510 = vector.shape_cast %509 : vector<1x2x32xf32> to vector<2x32xf32>
    %cst_311 = arith.constant dense<0.000000e+00> : vector<2x32xf32>
    %511 = tpu.matmul %508, %389, %cst_311 {dimension_numbers = #tpu.dot_dimension_numbers<[1], [0], [0], [1], [0, 0, 1, 1], [], []>} : vector<2x32xf32>, vector<32x32xf32>, vector<2x32xf32> -> vector<2x32xf32>
    %512 = arith.addf %510, %511 : vector<2x32xf32>
    %513 = arith.negf %512 : vector<2x32xf32>
    %514 = math.exp %513 : vector<2x32xf32>
    %cst_312 = arith.constant 1.000000e+00 : f32
    %515 = vector.broadcast %cst_312 : f32 to vector<2x32xf32>
    %516 = arith.addf %515, %514 : vector<2x32xf32>
    %517 = arith.divf %515, %516 : vector<2x32xf32>
    %c1_313 = arith.constant 1 : index
    %c6_314 = arith.constant 6 : index
    %c0_315 = arith.constant 0 : index
    %518 = vector.load %arg16[%c1_313, %c6_314, %c0_315] : memref<4x16x32xf32, #tpu.memory_space<vmem>>, vector<1x2x32xf32>
    %519 = vector.shape_cast %518 : vector<1x2x32xf32> to vector<2x32xf32>
    %cst_316 = arith.constant dense<0.000000e+00> : vector<2x32xf32>
    %520 = tpu.matmul %508, %391, %cst_316 {dimension_numbers = #tpu.dot_dimension_numbers<[1], [0], [0], [1], [0, 0, 1, 1], [], []>} : vector<2x32xf32>, vector<32x32xf32>, vector<2x32xf32> -> vector<2x32xf32>
    %521 = arith.addf %519, %520 : vector<2x32xf32>
    %522 = arith.negf %521 : vector<2x32xf32>
    %523 = math.exp %522 : vector<2x32xf32>
    %cst_317 = arith.constant 1.000000e+00 : f32
    %524 = vector.broadcast %cst_317 : f32 to vector<2x32xf32>
    %525 = arith.addf %524, %523 : vector<2x32xf32>
    %526 = arith.divf %524, %525 : vector<2x32xf32>
    %c2_318 = arith.constant 2 : index
    %c6_319 = arith.constant 6 : index
    %c0_320 = arith.constant 0 : index
    %527 = vector.load %arg16[%c2_318, %c6_319, %c0_320] : memref<4x16x32xf32, #tpu.memory_space<vmem>>, vector<1x2x32xf32>
    %528 = vector.shape_cast %527 : vector<1x2x32xf32> to vector<2x32xf32>
    %cst_321 = arith.constant dense<0.000000e+00> : vector<2x32xf32>
    %529 = tpu.matmul %508, %393, %cst_321 {dimension_numbers = #tpu.dot_dimension_numbers<[1], [0], [0], [1], [0, 0, 1, 1], [], []>} : vector<2x32xf32>, vector<32x32xf32>, vector<2x32xf32> -> vector<2x32xf32>
    %530 = arith.addf %528, %529 : vector<2x32xf32>
    %531 = math.tanh %530 : vector<2x32xf32>
    %c3_322 = arith.constant 3 : index
    %c6_323 = arith.constant 6 : index
    %c0_324 = arith.constant 0 : index
    %532 = vector.load %arg16[%c3_322, %c6_323, %c0_324] : memref<4x16x32xf32, #tpu.memory_space<vmem>>, vector<1x2x32xf32>
    %533 = vector.shape_cast %532 : vector<1x2x32xf32> to vector<2x32xf32>
    %cst_325 = arith.constant dense<0.000000e+00> : vector<2x32xf32>
    %534 = tpu.matmul %508, %395, %cst_325 {dimension_numbers = #tpu.dot_dimension_numbers<[1], [0], [0], [1], [0, 0, 1, 1], [], []>} : vector<2x32xf32>, vector<32x32xf32>, vector<2x32xf32> -> vector<2x32xf32>
    %535 = arith.addf %533, %534 : vector<2x32xf32>
    %536 = arith.negf %535 : vector<2x32xf32>
    %537 = math.exp %536 : vector<2x32xf32>
    %cst_326 = arith.constant 1.000000e+00 : f32
    %538 = vector.broadcast %cst_326 : f32 to vector<2x32xf32>
    %539 = arith.addf %538, %537 : vector<2x32xf32>
    %540 = arith.divf %538, %539 : vector<2x32xf32>
    %541 = arith.mulf %526, %506 : vector<2x32xf32>
    %542 = arith.mulf %517, %531 : vector<2x32xf32>
    %543 = arith.addf %541, %542 : vector<2x32xf32>
    %544 = math.tanh %543 : vector<2x32xf32>
    %545 = arith.mulf %540, %544 : vector<2x32xf32>
    %c0_327 = arith.constant 0 : index
    %c8_328 = arith.constant 8 : index
    %c0_329 = arith.constant 0 : index
    %546 = vector.load %arg16[%c0_327, %c8_328, %c0_329] : memref<4x16x32xf32, #tpu.memory_space<vmem>>, vector<1x2x32xf32>
    %547 = vector.shape_cast %546 : vector<1x2x32xf32> to vector<2x32xf32>
    %cst_330 = arith.constant dense<0.000000e+00> : vector<2x32xf32>
    %548 = tpu.matmul %545, %389, %cst_330 {dimension_numbers = #tpu.dot_dimension_numbers<[1], [0], [0], [1], [0, 0, 1, 1], [], []>} : vector<2x32xf32>, vector<32x32xf32>, vector<2x32xf32> -> vector<2x32xf32>
    %549 = arith.addf %547, %548 : vector<2x32xf32>
    %550 = arith.negf %549 : vector<2x32xf32>
    %551 = math.exp %550 : vector<2x32xf32>
    %cst_331 = arith.constant 1.000000e+00 : f32
    %552 = vector.broadcast %cst_331 : f32 to vector<2x32xf32>
    %553 = arith.addf %552, %551 : vector<2x32xf32>
    %554 = arith.divf %552, %553 : vector<2x32xf32>
    %c1_332 = arith.constant 1 : index
    %c8_333 = arith.constant 8 : index
    %c0_334 = arith.constant 0 : index
    %555 = vector.load %arg16[%c1_332, %c8_333, %c0_334] : memref<4x16x32xf32, #tpu.memory_space<vmem>>, vector<1x2x32xf32>
    %556 = vector.shape_cast %555 : vector<1x2x32xf32> to vector<2x32xf32>
    %cst_335 = arith.constant dense<0.000000e+00> : vector<2x32xf32>
    %557 = tpu.matmul %545, %391, %cst_335 {dimension_numbers = #tpu.dot_dimension_numbers<[1], [0], [0], [1], [0, 0, 1, 1], [], []>} : vector<2x32xf32>, vector<32x32xf32>, vector<2x32xf32> -> vector<2x32xf32>
    %558 = arith.addf %556, %557 : vector<2x32xf32>
    %559 = arith.negf %558 : vector<2x32xf32>
    %560 = math.exp %559 : vector<2x32xf32>
    %cst_336 = arith.constant 1.000000e+00 : f32
    %561 = vector.broadcast %cst_336 : f32 to vector<2x32xf32>
    %562 = arith.addf %561, %560 : vector<2x32xf32>
    %563 = arith.divf %561, %562 : vector<2x32xf32>
    %c2_337 = arith.constant 2 : index
    %c8_338 = arith.constant 8 : index
    %c0_339 = arith.constant 0 : index
    %564 = vector.load %arg16[%c2_337, %c8_338, %c0_339] : memref<4x16x32xf32, #tpu.memory_space<vmem>>, vector<1x2x32xf32>
    %565 = vector.shape_cast %564 : vector<1x2x32xf32> to vector<2x32xf32>
    %cst_340 = arith.constant dense<0.000000e+00> : vector<2x32xf32>
    %566 = tpu.matmul %545, %393, %cst_340 {dimension_numbers = #tpu.dot_dimension_numbers<[1], [0], [0], [1], [0, 0, 1, 1], [], []>} : vector<2x32xf32>, vector<32x32xf32>, vector<2x32xf32> -> vector<2x32xf32>
    %567 = arith.addf %565, %566 : vector<2x32xf32>
    %568 = math.tanh %567 : vector<2x32xf32>
    %c3_341 = arith.constant 3 : index
    %c8_342 = arith.constant 8 : index
    %c0_343 = arith.constant 0 : index
    %569 = vector.load %arg16[%c3_341, %c8_342, %c0_343] : memref<4x16x32xf32, #tpu.memory_space<vmem>>, vector<1x2x32xf32>
    %570 = vector.shape_cast %569 : vector<1x2x32xf32> to vector<2x32xf32>
    %cst_344 = arith.constant dense<0.000000e+00> : vector<2x32xf32>
    %571 = tpu.matmul %545, %395, %cst_344 {dimension_numbers = #tpu.dot_dimension_numbers<[1], [0], [0], [1], [0, 0, 1, 1], [], []>} : vector<2x32xf32>, vector<32x32xf32>, vector<2x32xf32> -> vector<2x32xf32>
    %572 = arith.addf %570, %571 : vector<2x32xf32>
    %573 = arith.negf %572 : vector<2x32xf32>
    %574 = math.exp %573 : vector<2x32xf32>
    %cst_345 = arith.constant 1.000000e+00 : f32
    %575 = vector.broadcast %cst_345 : f32 to vector<2x32xf32>
    %576 = arith.addf %575, %574 : vector<2x32xf32>
    %577 = arith.divf %575, %576 : vector<2x32xf32>
    %578 = arith.mulf %563, %543 : vector<2x32xf32>
    %579 = arith.mulf %554, %568 : vector<2x32xf32>
    %580 = arith.addf %578, %579 : vector<2x32xf32>
    %581 = math.tanh %580 : vector<2x32xf32>
    %582 = arith.mulf %577, %581 : vector<2x32xf32>
    %c0_346 = arith.constant 0 : index
    %c10_347 = arith.constant 10 : index
    %c0_348 = arith.constant 0 : index
    %583 = vector.load %arg16[%c0_346, %c10_347, %c0_348] : memref<4x16x32xf32, #tpu.memory_space<vmem>>, vector<1x2x32xf32>
    %584 = vector.shape_cast %583 : vector<1x2x32xf32> to vector<2x32xf32>
    %cst_349 = arith.constant dense<0.000000e+00> : vector<2x32xf32>
    %585 = tpu.matmul %582, %389, %cst_349 {dimension_numbers = #tpu.dot_dimension_numbers<[1], [0], [0], [1], [0, 0, 1, 1], [], []>} : vector<2x32xf32>, vector<32x32xf32>, vector<2x32xf32> -> vector<2x32xf32>
    %586 = arith.addf %584, %585 : vector<2x32xf32>
    %587 = arith.negf %586 : vector<2x32xf32>
    %588 = math.exp %587 : vector<2x32xf32>
    %cst_350 = arith.constant 1.000000e+00 : f32
    %589 = vector.broadcast %cst_350 : f32 to vector<2x32xf32>
    %590 = arith.addf %589, %588 : vector<2x32xf32>
    %591 = arith.divf %589, %590 : vector<2x32xf32>
    %c1_351 = arith.constant 1 : index
    %c10_352 = arith.constant 10 : index
    %c0_353 = arith.constant 0 : index
    %592 = vector.load %arg16[%c1_351, %c10_352, %c0_353] : memref<4x16x32xf32, #tpu.memory_space<vmem>>, vector<1x2x32xf32>
    %593 = vector.shape_cast %592 : vector<1x2x32xf32> to vector<2x32xf32>
    %cst_354 = arith.constant dense<0.000000e+00> : vector<2x32xf32>
    %594 = tpu.matmul %582, %391, %cst_354 {dimension_numbers = #tpu.dot_dimension_numbers<[1], [0], [0], [1], [0, 0, 1, 1], [], []>} : vector<2x32xf32>, vector<32x32xf32>, vector<2x32xf32> -> vector<2x32xf32>
    %595 = arith.addf %593, %594 : vector<2x32xf32>
    %596 = arith.negf %595 : vector<2x32xf32>
    %597 = math.exp %596 : vector<2x32xf32>
    %cst_355 = arith.constant 1.000000e+00 : f32
    %598 = vector.broadcast %cst_355 : f32 to vector<2x32xf32>
    %599 = arith.addf %598, %597 : vector<2x32xf32>
    %600 = arith.divf %598, %599 : vector<2x32xf32>
    %c2_356 = arith.constant 2 : index
    %c10_357 = arith.constant 10 : index
    %c0_358 = arith.constant 0 : index
    %601 = vector.load %arg16[%c2_356, %c10_357, %c0_358] : memref<4x16x32xf32, #tpu.memory_space<vmem>>, vector<1x2x32xf32>
    %602 = vector.shape_cast %601 : vector<1x2x32xf32> to vector<2x32xf32>
    %cst_359 = arith.constant dense<0.000000e+00> : vector<2x32xf32>
    %603 = tpu.matmul %582, %393, %cst_359 {dimension_numbers = #tpu.dot_dimension_numbers<[1], [0], [0], [1], [0, 0, 1, 1], [], []>} : vector<2x32xf32>, vector<32x32xf32>, vector<2x32xf32> -> vector<2x32xf32>
    %604 = arith.addf %602, %603 : vector<2x32xf32>
    %605 = math.tanh %604 : vector<2x32xf32>
    %c3_360 = arith.constant 3 : index
    %c10_361 = arith.constant 10 : index
    %c0_362 = arith.constant 0 : index
    %606 = vector.load %arg16[%c3_360, %c10_361, %c0_362] : memref<4x16x32xf32, #tpu.memory_space<vmem>>, vector<1x2x32xf32>
    %607 = vector.shape_cast %606 : vector<1x2x32xf32> to vector<2x32xf32>
    %cst_363 = arith.constant dense<0.000000e+00> : vector<2x32xf32>
    %608 = tpu.matmul %582, %395, %cst_363 {dimension_numbers = #tpu.dot_dimension_numbers<[1], [0], [0], [1], [0, 0, 1, 1], [], []>} : vector<2x32xf32>, vector<32x32xf32>, vector<2x32xf32> -> vector<2x32xf32>
    %609 = arith.addf %607, %608 : vector<2x32xf32>
    %610 = arith.negf %609 : vector<2x32xf32>
    %611 = math.exp %610 : vector<2x32xf32>
    %cst_364 = arith.constant 1.000000e+00 : f32
    %612 = vector.broadcast %cst_364 : f32 to vector<2x32xf32>
    %613 = arith.addf %612, %611 : vector<2x32xf32>
    %614 = arith.divf %612, %613 : vector<2x32xf32>
    %615 = arith.mulf %600, %580 : vector<2x32xf32>
    %616 = arith.mulf %591, %605 : vector<2x32xf32>
    %617 = arith.addf %615, %616 : vector<2x32xf32>
    %618 = math.tanh %617 : vector<2x32xf32>
    %619 = arith.mulf %614, %618 : vector<2x32xf32>
    %c0_365 = arith.constant 0 : index
    %c12_366 = arith.constant 12 : index
    %c0_367 = arith.constant 0 : index
    %620 = vector.load %arg16[%c0_365, %c12_366, %c0_367] : memref<4x16x32xf32, #tpu.memory_space<vmem>>, vector<1x2x32xf32>
    %621 = vector.shape_cast %620 : vector<1x2x32xf32> to vector<2x32xf32>
    %cst_368 = arith.constant dense<0.000000e+00> : vector<2x32xf32>
    %622 = tpu.matmul %619, %389, %cst_368 {dimension_numbers = #tpu.dot_dimension_numbers<[1], [0], [0], [1], [0, 0, 1, 1], [], []>} : vector<2x32xf32>, vector<32x32xf32>, vector<2x32xf32> -> vector<2x32xf32>
    %623 = arith.addf %621, %622 : vector<2x32xf32>
    %624 = arith.negf %623 : vector<2x32xf32>
    %625 = math.exp %624 : vector<2x32xf32>
    %cst_369 = arith.constant 1.000000e+00 : f32
    %626 = vector.broadcast %cst_369 : f32 to vector<2x32xf32>
    %627 = arith.addf %626, %625 : vector<2x32xf32>
    %628 = arith.divf %626, %627 : vector<2x32xf32>
    %c1_370 = arith.constant 1 : index
    %c12_371 = arith.constant 12 : index
    %c0_372 = arith.constant 0 : index
    %629 = vector.load %arg16[%c1_370, %c12_371, %c0_372] : memref<4x16x32xf32, #tpu.memory_space<vmem>>, vector<1x2x32xf32>
    %630 = vector.shape_cast %629 : vector<1x2x32xf32> to vector<2x32xf32>
    %cst_373 = arith.constant dense<0.000000e+00> : vector<2x32xf32>
    %631 = tpu.matmul %619, %391, %cst_373 {dimension_numbers = #tpu.dot_dimension_numbers<[1], [0], [0], [1], [0, 0, 1, 1], [], []>} : vector<2x32xf32>, vector<32x32xf32>, vector<2x32xf32> -> vector<2x32xf32>
    %632 = arith.addf %630, %631 : vector<2x32xf32>
    %633 = arith.negf %632 : vector<2x32xf32>
    %634 = math.exp %633 : vector<2x32xf32>
    %cst_374 = arith.constant 1.000000e+00 : f32
    %635 = vector.broadcast %cst_374 : f32 to vector<2x32xf32>
    %636 = arith.addf %635, %634 : vector<2x32xf32>
    %637 = arith.divf %635, %636 : vector<2x32xf32>
    %c2_375 = arith.constant 2 : index
    %c12_376 = arith.constant 12 : index
    %c0_377 = arith.constant 0 : index
    %638 = vector.load %arg16[%c2_375, %c12_376, %c0_377] : memref<4x16x32xf32, #tpu.memory_space<vmem>>, vector<1x2x32xf32>
    %639 = vector.shape_cast %638 : vector<1x2x32xf32> to vector<2x32xf32>
    %cst_378 = arith.constant dense<0.000000e+00> : vector<2x32xf32>
    %640 = tpu.matmul %619, %393, %cst_378 {dimension_numbers = #tpu.dot_dimension_numbers<[1], [0], [0], [1], [0, 0, 1, 1], [], []>} : vector<2x32xf32>, vector<32x32xf32>, vector<2x32xf32> -> vector<2x32xf32>
    %641 = arith.addf %639, %640 : vector<2x32xf32>
    %642 = math.tanh %641 : vector<2x32xf32>
    %c3_379 = arith.constant 3 : index
    %c12_380 = arith.constant 12 : index
    %c0_381 = arith.constant 0 : index
    %643 = vector.load %arg16[%c3_379, %c12_380, %c0_381] : memref<4x16x32xf32, #tpu.memory_space<vmem>>, vector<1x2x32xf32>
    %644 = vector.shape_cast %643 : vector<1x2x32xf32> to vector<2x32xf32>
    %cst_382 = arith.constant dense<0.000000e+00> : vector<2x32xf32>
    %645 = tpu.matmul %619, %395, %cst_382 {dimension_numbers = #tpu.dot_dimension_numbers<[1], [0], [0], [1], [0, 0, 1, 1], [], []>} : vector<2x32xf32>, vector<32x32xf32>, vector<2x32xf32> -> vector<2x32xf32>
    %646 = arith.addf %644, %645 : vector<2x32xf32>
    %647 = arith.negf %646 : vector<2x32xf32>
    %648 = math.exp %647 : vector<2x32xf32>
    %cst_383 = arith.constant 1.000000e+00 : f32
    %649 = vector.broadcast %cst_383 : f32 to vector<2x32xf32>
    %650 = arith.addf %649, %648 : vector<2x32xf32>
    %651 = arith.divf %649, %650 : vector<2x32xf32>
    %652 = arith.mulf %637, %617 : vector<2x32xf32>
    %653 = arith.mulf %628, %642 : vector<2x32xf32>
    %654 = arith.addf %652, %653 : vector<2x32xf32>
    %655 = math.tanh %654 : vector<2x32xf32>
    %656 = arith.mulf %651, %655 : vector<2x32xf32>
    %c0_384 = arith.constant 0 : index
    %c14_385 = arith.constant 14 : index
    %c0_386 = arith.constant 0 : index
    %657 = vector.load %arg16[%c0_384, %c14_385, %c0_386] : memref<4x16x32xf32, #tpu.memory_space<vmem>>, vector<1x2x32xf32>
    %658 = vector.shape_cast %657 : vector<1x2x32xf32> to vector<2x32xf32>
    %cst_387 = arith.constant dense<0.000000e+00> : vector<2x32xf32>
    %659 = tpu.matmul %656, %389, %cst_387 {dimension_numbers = #tpu.dot_dimension_numbers<[1], [0], [0], [1], [0, 0, 1, 1], [], []>} : vector<2x32xf32>, vector<32x32xf32>, vector<2x32xf32> -> vector<2x32xf32>
    %660 = arith.addf %658, %659 : vector<2x32xf32>
    %661 = arith.negf %660 : vector<2x32xf32>
    %662 = math.exp %661 : vector<2x32xf32>
    %cst_388 = arith.constant 1.000000e+00 : f32
    %663 = vector.broadcast %cst_388 : f32 to vector<2x32xf32>
    %664 = arith.addf %663, %662 : vector<2x32xf32>
    %665 = arith.divf %663, %664 : vector<2x32xf32>
    %c1_389 = arith.constant 1 : index
    %c14_390 = arith.constant 14 : index
    %c0_391 = arith.constant 0 : index
    %666 = vector.load %arg16[%c1_389, %c14_390, %c0_391] : memref<4x16x32xf32, #tpu.memory_space<vmem>>, vector<1x2x32xf32>
    %667 = vector.shape_cast %666 : vector<1x2x32xf32> to vector<2x32xf32>
    %cst_392 = arith.constant dense<0.000000e+00> : vector<2x32xf32>
    %668 = tpu.matmul %656, %391, %cst_392 {dimension_numbers = #tpu.dot_dimension_numbers<[1], [0], [0], [1], [0, 0, 1, 1], [], []>} : vector<2x32xf32>, vector<32x32xf32>, vector<2x32xf32> -> vector<2x32xf32>
    %669 = arith.addf %667, %668 : vector<2x32xf32>
    %670 = arith.negf %669 : vector<2x32xf32>
    %671 = math.exp %670 : vector<2x32xf32>
    %cst_393 = arith.constant 1.000000e+00 : f32
    %672 = vector.broadcast %cst_393 : f32 to vector<2x32xf32>
    %673 = arith.addf %672, %671 : vector<2x32xf32>
    %674 = arith.divf %672, %673 : vector<2x32xf32>
    %c2_394 = arith.constant 2 : index
    %c14_395 = arith.constant 14 : index
    %c0_396 = arith.constant 0 : index
    %675 = vector.load %arg16[%c2_394, %c14_395, %c0_396] : memref<4x16x32xf32, #tpu.memory_space<vmem>>, vector<1x2x32xf32>
    %676 = vector.shape_cast %675 : vector<1x2x32xf32> to vector<2x32xf32>
    %cst_397 = arith.constant dense<0.000000e+00> : vector<2x32xf32>
    %677 = tpu.matmul %656, %393, %cst_397 {dimension_numbers = #tpu.dot_dimension_numbers<[1], [0], [0], [1], [0, 0, 1, 1], [], []>} : vector<2x32xf32>, vector<32x32xf32>, vector<2x32xf32> -> vector<2x32xf32>
    %678 = arith.addf %676, %677 : vector<2x32xf32>
    %679 = math.tanh %678 : vector<2x32xf32>
    %c3_398 = arith.constant 3 : index
    %c14_399 = arith.constant 14 : index
    %c0_400 = arith.constant 0 : index
    %680 = vector.load %arg16[%c3_398, %c14_399, %c0_400] : memref<4x16x32xf32, #tpu.memory_space<vmem>>, vector<1x2x32xf32>
    %681 = vector.shape_cast %680 : vector<1x2x32xf32> to vector<2x32xf32>
    %cst_401 = arith.constant dense<0.000000e+00> : vector<2x32xf32>
    %682 = tpu.matmul %656, %395, %cst_401 {dimension_numbers = #tpu.dot_dimension_numbers<[1], [0], [0], [1], [0, 0, 1, 1], [], []>} : vector<2x32xf32>, vector<32x32xf32>, vector<2x32xf32> -> vector<2x32xf32>
    %683 = arith.addf %681, %682 : vector<2x32xf32>
    %684 = arith.negf %683 : vector<2x32xf32>
    %685 = math.exp %684 : vector<2x32xf32>
    %cst_402 = arith.constant 1.000000e+00 : f32
    %686 = vector.broadcast %cst_402 : f32 to vector<2x32xf32>
    %687 = arith.addf %686, %685 : vector<2x32xf32>
    %688 = arith.divf %686, %687 : vector<2x32xf32>
    %689 = arith.mulf %674, %654 : vector<2x32xf32>
    %690 = arith.mulf %665, %679 : vector<2x32xf32>
    %691 = arith.addf %689, %690 : vector<2x32xf32>
    %692 = math.tanh %691 : vector<2x32xf32>
    %693 = arith.mulf %688, %692 : vector<2x32xf32>
    %694 = tpu.concatenate %434, %471, %508, %545, %582, %619, %656, %693 in 0 : vector<2x32xf32>, vector<2x32xf32>, vector<2x32xf32>, vector<2x32xf32>, vector<2x32xf32>, vector<2x32xf32>, vector<2x32xf32>, vector<2x32xf32> -> vector<16x32xf32>
    %c0_403 = arith.constant 0 : index
    %c0_404 = arith.constant 0 : index
    %c0_405 = arith.constant 0 : index
    %695 = vector.load %arg7[%c0_403, %c0_404, %c0_405] : memref<4x32x16xf32, #tpu.memory_space<vmem>>, vector<1x32x16xf32>
    %696 = vector.shape_cast %695 : vector<1x32x16xf32> to vector<32x16xf32>
    %cst_406 = arith.constant dense<0.000000e+00> : vector<16x16xf32>
    %697 = tpu.matmul %694, %696, %cst_406 {dimension_numbers = #tpu.dot_dimension_numbers<[1], [0], [0], [1], [0, 0, 1, 1], [], []>} : vector<16x32xf32>, vector<32x16xf32>, vector<16x16xf32> -> vector<16x16xf32>
    %c0_407 = arith.constant 0 : index
    %c0_408 = arith.constant 0 : index
    %c0_409 = arith.constant 0 : index
    %698 = vector.load %arg9[%c0_407, %c0_408, %c0_409] : memref<4x1x16xf32, #tpu.memory_space<vmem>>, vector<1x1x16xf32>
    %699 = vector.shape_cast %698 : vector<1x1x16xf32> to vector<1x16xf32>
    %700 = vector.broadcast %699 : vector<1x16xf32> to vector<16x16xf32>
    %701 = arith.addf %697, %700 : vector<16x16xf32>
    %c0_410 = arith.constant 0 : index
    %c0_411 = arith.constant 0 : index
    %c0_412 = arith.constant 0 : index
    %702 = vector.load %arg17[%c0_410, %c0_411, %c0_412] : memref<4x16x16xf32, #tpu.memory_space<vmem>>, vector<1x16x16xf32>
    %703 = vector.shape_cast %702 : vector<1x16x16xf32> to vector<16x16xf32>
    %704 = vector.shape_cast %701 : vector<16x16xf32> to vector<1x16x16xf32>
    tpu.vector_store %arg17[%c0_410, %c0_411, %c0_412], %704 {strides = array<i32>} : memref<4x16x16xf32, #tpu.memory_space<vmem>>, vector<1x16x16xf32>,
    %c1_413 = arith.constant 1 : index
    %c0_414 = arith.constant 0 : index
    %c0_415 = arith.constant 0 : index
    %705 = vector.load %arg7[%c1_413, %c0_414, %c0_415] : memref<4x32x16xf32, #tpu.memory_space<vmem>>, vector<1x32x16xf32>
    %706 = vector.shape_cast %705 : vector<1x32x16xf32> to vector<32x16xf32>
    %cst_416 = arith.constant dense<0.000000e+00> : vector<16x16xf32>
    %707 = tpu.matmul %694, %706, %cst_416 {dimension_numbers = #tpu.dot_dimension_numbers<[1], [0], [0], [1], [0, 0, 1, 1], [], []>} : vector<16x32xf32>, vector<32x16xf32>, vector<16x16xf32> -> vector<16x16xf32>
    %c1_417 = arith.constant 1 : index
    %c0_418 = arith.constant 0 : index
    %c0_419 = arith.constant 0 : index
    %708 = vector.load %arg9[%c1_417, %c0_418, %c0_419] : memref<4x1x16xf32, #tpu.memory_space<vmem>>, vector<1x1x16xf32>
    %709 = vector.shape_cast %708 : vector<1x1x16xf32> to vector<1x16xf32>
    %710 = vector.broadcast %709 : vector<1x16xf32> to vector<16x16xf32>
    %711 = arith.addf %707, %710 : vector<16x16xf32>
    %c1_420 = arith.constant 1 : index
    %c0_421 = arith.constant 0 : index
    %c0_422 = arith.constant 0 : index
    %712 = vector.load %arg17[%c1_420, %c0_421, %c0_422] : memref<4x16x16xf32, #tpu.memory_space<vmem>>, vector<1x16x16xf32>
    %713 = vector.shape_cast %712 : vector<1x16x16xf32> to vector<16x16xf32>
    %714 = vector.shape_cast %711 : vector<16x16xf32> to vector<1x16x16xf32>
    tpu.vector_store %arg17[%c1_420, %c0_421, %c0_422], %714 {strides = array<i32>} : memref<4x16x16xf32, #tpu.memory_space<vmem>>, vector<1x16x16xf32>,
    %c2_423 = arith.constant 2 : index
    %c0_424 = arith.constant 0 : index
    %c0_425 = arith.constant 0 : index
    %715 = vector.load %arg7[%c2_423, %c0_424, %c0_425] : memref<4x32x16xf32, #tpu.memory_space<vmem>>, vector<1x32x16xf32>
    %716 = vector.shape_cast %715 : vector<1x32x16xf32> to vector<32x16xf32>
    %cst_426 = arith.constant dense<0.000000e+00> : vector<16x16xf32>
    %717 = tpu.matmul %694, %716, %cst_426 {dimension_numbers = #tpu.dot_dimension_numbers<[1], [0], [0], [1], [0, 0, 1, 1], [], []>} : vector<16x32xf32>, vector<32x16xf32>, vector<16x16xf32> -> vector<16x16xf32>
    %c2_427 = arith.constant 2 : index
    %c0_428 = arith.constant 0 : index
    %c0_429 = arith.constant 0 : index
    %718 = vector.load %arg9[%c2_427, %c0_428, %c0_429] : memref<4x1x16xf32, #tpu.memory_space<vmem>>, vector<1x1x16xf32>
    %719 = vector.shape_cast %718 : vector<1x1x16xf32> to vector<1x16xf32>
    %720 = vector.broadcast %719 : vector<1x16xf32> to vector<16x16xf32>
    %721 = arith.addf %717, %720 : vector<16x16xf32>
    %c2_430 = arith.constant 2 : index
    %c0_431 = arith.constant 0 : index
    %c0_432 = arith.constant 0 : index
    %722 = vector.load %arg17[%c2_430, %c0_431, %c0_432] : memref<4x16x16xf32, #tpu.memory_space<vmem>>, vector<1x16x16xf32>
    %723 = vector.shape_cast %722 : vector<1x16x16xf32> to vector<16x16xf32>
    %724 = vector.shape_cast %721 : vector<16x16xf32> to vector<1x16x16xf32>
    tpu.vector_store %arg17[%c2_430, %c0_431, %c0_432], %724 {strides = array<i32>} : memref<4x16x16xf32, #tpu.memory_space<vmem>>, vector<1x16x16xf32>,
    %c3_433 = arith.constant 3 : index
    %c0_434 = arith.constant 0 : index
    %c0_435 = arith.constant 0 : index
    %725 = vector.load %arg7[%c3_433, %c0_434, %c0_435] : memref<4x32x16xf32, #tpu.memory_space<vmem>>, vector<1x32x16xf32>
    %726 = vector.shape_cast %725 : vector<1x32x16xf32> to vector<32x16xf32>
    %cst_436 = arith.constant dense<0.000000e+00> : vector<16x16xf32>
    %727 = tpu.matmul %694, %726, %cst_436 {dimension_numbers = #tpu.dot_dimension_numbers<[1], [0], [0], [1], [0, 0, 1, 1], [], []>} : vector<16x32xf32>, vector<32x16xf32>, vector<16x16xf32> -> vector<16x16xf32>
    %c3_437 = arith.constant 3 : index
    %c0_438 = arith.constant 0 : index
    %c0_439 = arith.constant 0 : index
    %728 = vector.load %arg9[%c3_437, %c0_438, %c0_439] : memref<4x1x16xf32, #tpu.memory_space<vmem>>, vector<1x1x16xf32>
    %729 = vector.shape_cast %728 : vector<1x1x16xf32> to vector<1x16xf32>
    %730 = vector.broadcast %729 : vector<1x16xf32> to vector<16x16xf32>
    %731 = arith.addf %727, %730 : vector<16x16xf32>
    %c3_440 = arith.constant 3 : index
    %c0_441 = arith.constant 0 : index
    %c0_442 = arith.constant 0 : index
    %732 = vector.load %arg17[%c3_440, %c0_441, %c0_442] : memref<4x16x16xf32, #tpu.memory_space<vmem>>, vector<1x16x16xf32>
    %733 = vector.shape_cast %732 : vector<1x16x16xf32> to vector<16x16xf32>
    %734 = vector.shape_cast %731 : vector<16x16xf32> to vector<1x16x16xf32>
    tpu.vector_store %arg17[%c3_440, %c0_441, %c0_442], %734 {strides = array<i32>} : memref<4x16x16xf32, #tpu.memory_space<vmem>>, vector<1x16x16xf32>,
    %c0_443 = arith.constant 0 : index
    %c0_444 = arith.constant 0 : index
    %c0_445 = arith.constant 0 : index
    %735 = vector.load %arg8[%c0_443, %c0_444, %c0_445] : memref<4x16x16xf32, #tpu.memory_space<vmem>>, vector<1x16x16xf32>
    %736 = vector.shape_cast %735 : vector<1x16x16xf32> to vector<16x16xf32>
    %c1_446 = arith.constant 1 : index
    %c0_447 = arith.constant 0 : index
    %c0_448 = arith.constant 0 : index
    %737 = vector.load %arg8[%c1_446, %c0_447, %c0_448] : memref<4x16x16xf32, #tpu.memory_space<vmem>>, vector<1x16x16xf32>
    %738 = vector.shape_cast %737 : vector<1x16x16xf32> to vector<16x16xf32>
    %c2_449 = arith.constant 2 : index
    %c0_450 = arith.constant 0 : index
    %c0_451 = arith.constant 0 : index
    %739 = vector.load %arg8[%c2_449, %c0_450, %c0_451] : memref<4x16x16xf32, #tpu.memory_space<vmem>>, vector<1x16x16xf32>
    %740 = vector.shape_cast %739 : vector<1x16x16xf32> to vector<16x16xf32>
    %c3_452 = arith.constant 3 : index
    %c0_453 = arith.constant 0 : index
    %c0_454 = arith.constant 0 : index
    %741 = vector.load %arg8[%c3_452, %c0_453, %c0_454] : memref<4x16x16xf32, #tpu.memory_space<vmem>>, vector<1x16x16xf32>
    %742 = vector.shape_cast %741 : vector<1x16x16xf32> to vector<16x16xf32>
    %cst_455 = arith.constant 0.000000e+00 : f32
    %743 = vector.broadcast %cst_455 : f32 to vector<2x16xf32>
    %cst_456 = arith.constant 0.000000e+00 : f32
    %744 = vector.broadcast %cst_456 : f32 to vector<2x16xf32>
    %c0_457 = arith.constant 0 : index
    %c0_458 = arith.constant 0 : index
    %c0_459 = arith.constant 0 : index
    %745 = vector.load %arg17[%c0_457, %c0_458, %c0_459] : memref<4x16x16xf32, #tpu.memory_space<vmem>>, vector<1x2x16xf32>
    %746 = vector.shape_cast %745 : vector<1x2x16xf32> to vector<2x16xf32>
    %cst_460 = arith.constant dense<0.000000e+00> : vector<2x16xf32>
    %747 = tpu.matmul %743, %736, %cst_460 {dimension_numbers = #tpu.dot_dimension_numbers<[1], [0], [0], [1], [0, 0, 1, 1], [], []>} : vector<2x16xf32>, vector<16x16xf32>, vector<2x16xf32> -> vector<2x16xf32>
    %748 = arith.addf %746, %747 : vector<2x16xf32>
    %749 = arith.negf %748 : vector<2x16xf32>
    %750 = math.exp %749 : vector<2x16xf32>
    %cst_461 = arith.constant 1.000000e+00 : f32
    %751 = vector.broadcast %cst_461 : f32 to vector<2x16xf32>
    %752 = arith.addf %751, %750 : vector<2x16xf32>
    %753 = arith.divf %751, %752 : vector<2x16xf32>
    %c1_462 = arith.constant 1 : index
    %c0_463 = arith.constant 0 : index
    %c0_464 = arith.constant 0 : index
    %754 = vector.load %arg17[%c1_462, %c0_463, %c0_464] : memref<4x16x16xf32, #tpu.memory_space<vmem>>, vector<1x2x16xf32>
    %755 = vector.shape_cast %754 : vector<1x2x16xf32> to vector<2x16xf32>
    %cst_465 = arith.constant dense<0.000000e+00> : vector<2x16xf32>
    %756 = tpu.matmul %743, %738, %cst_465 {dimension_numbers = #tpu.dot_dimension_numbers<[1], [0], [0], [1], [0, 0, 1, 1], [], []>} : vector<2x16xf32>, vector<16x16xf32>, vector<2x16xf32> -> vector<2x16xf32>
    %757 = arith.addf %755, %756 : vector<2x16xf32>
    %758 = arith.negf %757 : vector<2x16xf32>
    %759 = math.exp %758 : vector<2x16xf32>
    %cst_466 = arith.constant 1.000000e+00 : f32
    %760 = vector.broadcast %cst_466 : f32 to vector<2x16xf32>
    %761 = arith.addf %760, %759 : vector<2x16xf32>
    %762 = arith.divf %760, %761 : vector<2x16xf32>
    %c2_467 = arith.constant 2 : index
    %c0_468 = arith.constant 0 : index
    %c0_469 = arith.constant 0 : index
    %763 = vector.load %arg17[%c2_467, %c0_468, %c0_469] : memref<4x16x16xf32, #tpu.memory_space<vmem>>, vector<1x2x16xf32>
    %764 = vector.shape_cast %763 : vector<1x2x16xf32> to vector<2x16xf32>
    %cst_470 = arith.constant dense<0.000000e+00> : vector<2x16xf32>
    %765 = tpu.matmul %743, %740, %cst_470 {dimension_numbers = #tpu.dot_dimension_numbers<[1], [0], [0], [1], [0, 0, 1, 1], [], []>} : vector<2x16xf32>, vector<16x16xf32>, vector<2x16xf32> -> vector<2x16xf32>
    %766 = arith.addf %764, %765 : vector<2x16xf32>
    %767 = math.tanh %766 : vector<2x16xf32>
    %c3_471 = arith.constant 3 : index
    %c0_472 = arith.constant 0 : index
    %c0_473 = arith.constant 0 : index
    %768 = vector.load %arg17[%c3_471, %c0_472, %c0_473] : memref<4x16x16xf32, #tpu.memory_space<vmem>>, vector<1x2x16xf32>
    %769 = vector.shape_cast %768 : vector<1x2x16xf32> to vector<2x16xf32>
    %cst_474 = arith.constant dense<0.000000e+00> : vector<2x16xf32>
    %770 = tpu.matmul %743, %742, %cst_474 {dimension_numbers = #tpu.dot_dimension_numbers<[1], [0], [0], [1], [0, 0, 1, 1], [], []>} : vector<2x16xf32>, vector<16x16xf32>, vector<2x16xf32> -> vector<2x16xf32>
    %771 = arith.addf %769, %770 : vector<2x16xf32>
    %772 = arith.negf %771 : vector<2x16xf32>
    %773 = math.exp %772 : vector<2x16xf32>
    %cst_475 = arith.constant 1.000000e+00 : f32
    %774 = vector.broadcast %cst_475 : f32 to vector<2x16xf32>
    %775 = arith.addf %774, %773 : vector<2x16xf32>
    %776 = arith.divf %774, %775 : vector<2x16xf32>
    %777 = arith.mulf %762, %744 : vector<2x16xf32>
    %778 = arith.mulf %753, %767 : vector<2x16xf32>
    %779 = arith.addf %777, %778 : vector<2x16xf32>
    %780 = math.tanh %779 : vector<2x16xf32>
    %781 = arith.mulf %776, %780 : vector<2x16xf32>
    %c0_476 = arith.constant 0 : index
    %c2_477 = arith.constant 2 : index
    %c0_478 = arith.constant 0 : index
    %782 = vector.load %arg17[%c0_476, %c2_477, %c0_478] : memref<4x16x16xf32, #tpu.memory_space<vmem>>, vector<1x2x16xf32>
    %783 = vector.shape_cast %782 : vector<1x2x16xf32> to vector<2x16xf32>
    %cst_479 = arith.constant dense<0.000000e+00> : vector<2x16xf32>
    %784 = tpu.matmul %781, %736, %cst_479 {dimension_numbers = #tpu.dot_dimension_numbers<[1], [0], [0], [1], [0, 0, 1, 1], [], []>} : vector<2x16xf32>, vector<16x16xf32>, vector<2x16xf32> -> vector<2x16xf32>
    %785 = arith.addf %783, %784 : vector<2x16xf32>
    %786 = arith.negf %785 : vector<2x16xf32>
    %787 = math.exp %786 : vector<2x16xf32>
    %cst_480 = arith.constant 1.000000e+00 : f32
    %788 = vector.broadcast %cst_480 : f32 to vector<2x16xf32>
    %789 = arith.addf %788, %787 : vector<2x16xf32>
    %790 = arith.divf %788, %789 : vector<2x16xf32>
    %c1_481 = arith.constant 1 : index
    %c2_482 = arith.constant 2 : index
    %c0_483 = arith.constant 0 : index
    %791 = vector.load %arg17[%c1_481, %c2_482, %c0_483] : memref<4x16x16xf32, #tpu.memory_space<vmem>>, vector<1x2x16xf32>
    %792 = vector.shape_cast %791 : vector<1x2x16xf32> to vector<2x16xf32>
    %cst_484 = arith.constant dense<0.000000e+00> : vector<2x16xf32>
    %793 = tpu.matmul %781, %738, %cst_484 {dimension_numbers = #tpu.dot_dimension_numbers<[1], [0], [0], [1], [0, 0, 1, 1], [], []>} : vector<2x16xf32>, vector<16x16xf32>, vector<2x16xf32> -> vector<2x16xf32>
    %794 = arith.addf %792, %793 : vector<2x16xf32>
    %795 = arith.negf %794 : vector<2x16xf32>
    %796 = math.exp %795 : vector<2x16xf32>
    %cst_485 = arith.constant 1.000000e+00 : f32
    %797 = vector.broadcast %cst_485 : f32 to vector<2x16xf32>
    %798 = arith.addf %797, %796 : vector<2x16xf32>
    %799 = arith.divf %797, %798 : vector<2x16xf32>
    %c2_486 = arith.constant 2 : index
    %c2_487 = arith.constant 2 : index
    %c0_488 = arith.constant 0 : index
    %800 = vector.load %arg17[%c2_486, %c2_487, %c0_488] : memref<4x16x16xf32, #tpu.memory_space<vmem>>, vector<1x2x16xf32>
    %801 = vector.shape_cast %800 : vector<1x2x16xf32> to vector<2x16xf32>
    %cst_489 = arith.constant dense<0.000000e+00> : vector<2x16xf32>
    %802 = tpu.matmul %781, %740, %cst_489 {dimension_numbers = #tpu.dot_dimension_numbers<[1], [0], [0], [1], [0, 0, 1, 1], [], []>} : vector<2x16xf32>, vector<16x16xf32>, vector<2x16xf32> -> vector<2x16xf32>
    %803 = arith.addf %801, %802 : vector<2x16xf32>
    %804 = math.tanh %803 : vector<2x16xf32>
    %c3_490 = arith.constant 3 : index
    %c2_491 = arith.constant 2 : index
    %c0_492 = arith.constant 0 : index
    %805 = vector.load %arg17[%c3_490, %c2_491, %c0_492] : memref<4x16x16xf32, #tpu.memory_space<vmem>>, vector<1x2x16xf32>
    %806 = vector.shape_cast %805 : vector<1x2x16xf32> to vector<2x16xf32>
    %cst_493 = arith.constant dense<0.000000e+00> : vector<2x16xf32>
    %807 = tpu.matmul %781, %742, %cst_493 {dimension_numbers = #tpu.dot_dimension_numbers<[1], [0], [0], [1], [0, 0, 1, 1], [], []>} : vector<2x16xf32>, vector<16x16xf32>, vector<2x16xf32> -> vector<2x16xf32>
    %808 = arith.addf %806, %807 : vector<2x16xf32>
    %809 = arith.negf %808 : vector<2x16xf32>
    %810 = math.exp %809 : vector<2x16xf32>
    %cst_494 = arith.constant 1.000000e+00 : f32
    %811 = vector.broadcast %cst_494 : f32 to vector<2x16xf32>
    %812 = arith.addf %811, %810 : vector<2x16xf32>
    %813 = arith.divf %811, %812 : vector<2x16xf32>
    %814 = arith.mulf %799, %779 : vector<2x16xf32>
    %815 = arith.mulf %790, %804 : vector<2x16xf32>
    %816 = arith.addf %814, %815 : vector<2x16xf32>
    %817 = math.tanh %816 : vector<2x16xf32>
    %818 = arith.mulf %813, %817 : vector<2x16xf32>
    %c0_495 = arith.constant 0 : index
    %c4_496 = arith.constant 4 : index
    %c0_497 = arith.constant 0 : index
    %819 = vector.load %arg17[%c0_495, %c4_496, %c0_497] : memref<4x16x16xf32, #tpu.memory_space<vmem>>, vector<1x2x16xf32>
    %820 = vector.shape_cast %819 : vector<1x2x16xf32> to vector<2x16xf32>
    %cst_498 = arith.constant dense<0.000000e+00> : vector<2x16xf32>
    %821 = tpu.matmul %818, %736, %cst_498 {dimension_numbers = #tpu.dot_dimension_numbers<[1], [0], [0], [1], [0, 0, 1, 1], [], []>} : vector<2x16xf32>, vector<16x16xf32>, vector<2x16xf32> -> vector<2x16xf32>
    %822 = arith.addf %820, %821 : vector<2x16xf32>
    %823 = arith.negf %822 : vector<2x16xf32>
    %824 = math.exp %823 : vector<2x16xf32>
    %cst_499 = arith.constant 1.000000e+00 : f32
    %825 = vector.broadcast %cst_499 : f32 to vector<2x16xf32>
    %826 = arith.addf %825, %824 : vector<2x16xf32>
    %827 = arith.divf %825, %826 : vector<2x16xf32>
    %c1_500 = arith.constant 1 : index
    %c4_501 = arith.constant 4 : index
    %c0_502 = arith.constant 0 : index
    %828 = vector.load %arg17[%c1_500, %c4_501, %c0_502] : memref<4x16x16xf32, #tpu.memory_space<vmem>>, vector<1x2x16xf32>
    %829 = vector.shape_cast %828 : vector<1x2x16xf32> to vector<2x16xf32>
    %cst_503 = arith.constant dense<0.000000e+00> : vector<2x16xf32>
    %830 = tpu.matmul %818, %738, %cst_503 {dimension_numbers = #tpu.dot_dimension_numbers<[1], [0], [0], [1], [0, 0, 1, 1], [], []>} : vector<2x16xf32>, vector<16x16xf32>, vector<2x16xf32> -> vector<2x16xf32>
    %831 = arith.addf %829, %830 : vector<2x16xf32>
    %832 = arith.negf %831 : vector<2x16xf32>
    %833 = math.exp %832 : vector<2x16xf32>
    %cst_504 = arith.constant 1.000000e+00 : f32
    %834 = vector.broadcast %cst_504 : f32 to vector<2x16xf32>
    %835 = arith.addf %834, %833 : vector<2x16xf32>
    %836 = arith.divf %834, %835 : vector<2x16xf32>
    %c2_505 = arith.constant 2 : index
    %c4_506 = arith.constant 4 : index
    %c0_507 = arith.constant 0 : index
    %837 = vector.load %arg17[%c2_505, %c4_506, %c0_507] : memref<4x16x16xf32, #tpu.memory_space<vmem>>, vector<1x2x16xf32>
    %838 = vector.shape_cast %837 : vector<1x2x16xf32> to vector<2x16xf32>
    %cst_508 = arith.constant dense<0.000000e+00> : vector<2x16xf32>
    %839 = tpu.matmul %818, %740, %cst_508 {dimension_numbers = #tpu.dot_dimension_numbers<[1], [0], [0], [1], [0, 0, 1, 1], [], []>} : vector<2x16xf32>, vector<16x16xf32>, vector<2x16xf32> -> vector<2x16xf32>
    %840 = arith.addf %838, %839 : vector<2x16xf32>
    %841 = math.tanh %840 : vector<2x16xf32>
    %c3_509 = arith.constant 3 : index
    %c4_510 = arith.constant 4 : index
    %c0_511 = arith.constant 0 : index
    %842 = vector.load %arg17[%c3_509, %c4_510, %c0_511] : memref<4x16x16xf32, #tpu.memory_space<vmem>>, vector<1x2x16xf32>
    %843 = vector.shape_cast %842 : vector<1x2x16xf32> to vector<2x16xf32>
    %cst_512 = arith.constant dense<0.000000e+00> : vector<2x16xf32>
    %844 = tpu.matmul %818, %742, %cst_512 {dimension_numbers = #tpu.dot_dimension_numbers<[1], [0], [0], [1], [0, 0, 1, 1], [], []>} : vector<2x16xf32>, vector<16x16xf32>, vector<2x16xf32> -> vector<2x16xf32>
    %845 = arith.addf %843, %844 : vector<2x16xf32>
    %846 = arith.negf %845 : vector<2x16xf32>
    %847 = math.exp %846 : vector<2x16xf32>
    %cst_513 = arith.constant 1.000000e+00 : f32
    %848 = vector.broadcast %cst_513 : f32 to vector<2x16xf32>
    %849 = arith.addf %848, %847 : vector<2x16xf32>
    %850 = arith.divf %848, %849 : vector<2x16xf32>
    %851 = arith.mulf %836, %816 : vector<2x16xf32>
    %852 = arith.mulf %827, %841 : vector<2x16xf32>
    %853 = arith.addf %851, %852 : vector<2x16xf32>
    %854 = math.tanh %853 : vector<2x16xf32>
    %855 = arith.mulf %850, %854 : vector<2x16xf32>
    %c0_514 = arith.constant 0 : index
    %c6_515 = arith.constant 6 : index
    %c0_516 = arith.constant 0 : index
    %856 = vector.load %arg17[%c0_514, %c6_515, %c0_516] : memref<4x16x16xf32, #tpu.memory_space<vmem>>, vector<1x2x16xf32>
    %857 = vector.shape_cast %856 : vector<1x2x16xf32> to vector<2x16xf32>
    %cst_517 = arith.constant dense<0.000000e+00> : vector<2x16xf32>
    %858 = tpu.matmul %855, %736, %cst_517 {dimension_numbers = #tpu.dot_dimension_numbers<[1], [0], [0], [1], [0, 0, 1, 1], [], []>} : vector<2x16xf32>, vector<16x16xf32>, vector<2x16xf32> -> vector<2x16xf32>
    %859 = arith.addf %857, %858 : vector<2x16xf32>
    %860 = arith.negf %859 : vector<2x16xf32>
    %861 = math.exp %860 : vector<2x16xf32>
    %cst_518 = arith.constant 1.000000e+00 : f32
    %862 = vector.broadcast %cst_518 : f32 to vector<2x16xf32>
    %863 = arith.addf %862, %861 : vector<2x16xf32>
    %864 = arith.divf %862, %863 : vector<2x16xf32>
    %c1_519 = arith.constant 1 : index
    %c6_520 = arith.constant 6 : index
    %c0_521 = arith.constant 0 : index
    %865 = vector.load %arg17[%c1_519, %c6_520, %c0_521] : memref<4x16x16xf32, #tpu.memory_space<vmem>>, vector<1x2x16xf32>
    %866 = vector.shape_cast %865 : vector<1x2x16xf32> to vector<2x16xf32>
    %cst_522 = arith.constant dense<0.000000e+00> : vector<2x16xf32>
    %867 = tpu.matmul %855, %738, %cst_522 {dimension_numbers = #tpu.dot_dimension_numbers<[1], [0], [0], [1], [0, 0, 1, 1], [], []>} : vector<2x16xf32>, vector<16x16xf32>, vector<2x16xf32> -> vector<2x16xf32>
    %868 = arith.addf %866, %867 : vector<2x16xf32>
    %869 = arith.negf %868 : vector<2x16xf32>
    %870 = math.exp %869 : vector<2x16xf32>
    %cst_523 = arith.constant 1.000000e+00 : f32
    %871 = vector.broadcast %cst_523 : f32 to vector<2x16xf32>
    %872 = arith.addf %871, %870 : vector<2x16xf32>
    %873 = arith.divf %871, %872 : vector<2x16xf32>
    %c2_524 = arith.constant 2 : index
    %c6_525 = arith.constant 6 : index
    %c0_526 = arith.constant 0 : index
    %874 = vector.load %arg17[%c2_524, %c6_525, %c0_526] : memref<4x16x16xf32, #tpu.memory_space<vmem>>, vector<1x2x16xf32>
    %875 = vector.shape_cast %874 : vector<1x2x16xf32> to vector<2x16xf32>
    %cst_527 = arith.constant dense<0.000000e+00> : vector<2x16xf32>
    %876 = tpu.matmul %855, %740, %cst_527 {dimension_numbers = #tpu.dot_dimension_numbers<[1], [0], [0], [1], [0, 0, 1, 1], [], []>} : vector<2x16xf32>, vector<16x16xf32>, vector<2x16xf32> -> vector<2x16xf32>
    %877 = arith.addf %875, %876 : vector<2x16xf32>
    %878 = math.tanh %877 : vector<2x16xf32>
    %c3_528 = arith.constant 3 : index
    %c6_529 = arith.constant 6 : index
    %c0_530 = arith.constant 0 : index
    %879 = vector.load %arg17[%c3_528, %c6_529, %c0_530] : memref<4x16x16xf32, #tpu.memory_space<vmem>>, vector<1x2x16xf32>
    %880 = vector.shape_cast %879 : vector<1x2x16xf32> to vector<2x16xf32>
    %cst_531 = arith.constant dense<0.000000e+00> : vector<2x16xf32>
    %881 = tpu.matmul %855, %742, %cst_531 {dimension_numbers = #tpu.dot_dimension_numbers<[1], [0], [0], [1], [0, 0, 1, 1], [], []>} : vector<2x16xf32>, vector<16x16xf32>, vector<2x16xf32> -> vector<2x16xf32>
    %882 = arith.addf %880, %881 : vector<2x16xf32>
    %883 = arith.negf %882 : vector<2x16xf32>
    %884 = math.exp %883 : vector<2x16xf32>
    %cst_532 = arith.constant 1.000000e+00 : f32
    %885 = vector.broadcast %cst_532 : f32 to vector<2x16xf32>
    %886 = arith.addf %885, %884 : vector<2x16xf32>
    %887 = arith.divf %885, %886 : vector<2x16xf32>
    %888 = arith.mulf %873, %853 : vector<2x16xf32>
    %889 = arith.mulf %864, %878 : vector<2x16xf32>
    %890 = arith.addf %888, %889 : vector<2x16xf32>
    %891 = math.tanh %890 : vector<2x16xf32>
    %892 = arith.mulf %887, %891 : vector<2x16xf32>
    %c0_533 = arith.constant 0 : index
    %c8_534 = arith.constant 8 : index
    %c0_535 = arith.constant 0 : index
    %893 = vector.load %arg17[%c0_533, %c8_534, %c0_535] : memref<4x16x16xf32, #tpu.memory_space<vmem>>, vector<1x2x16xf32>
    %894 = vector.shape_cast %893 : vector<1x2x16xf32> to vector<2x16xf32>
    %cst_536 = arith.constant dense<0.000000e+00> : vector<2x16xf32>
    %895 = tpu.matmul %892, %736, %cst_536 {dimension_numbers = #tpu.dot_dimension_numbers<[1], [0], [0], [1], [0, 0, 1, 1], [], []>} : vector<2x16xf32>, vector<16x16xf32>, vector<2x16xf32> -> vector<2x16xf32>
    %896 = arith.addf %894, %895 : vector<2x16xf32>
    %897 = arith.negf %896 : vector<2x16xf32>
    %898 = math.exp %897 : vector<2x16xf32>
    %cst_537 = arith.constant 1.000000e+00 : f32
    %899 = vector.broadcast %cst_537 : f32 to vector<2x16xf32>
    %900 = arith.addf %899, %898 : vector<2x16xf32>
    %901 = arith.divf %899, %900 : vector<2x16xf32>
    %c1_538 = arith.constant 1 : index
    %c8_539 = arith.constant 8 : index
    %c0_540 = arith.constant 0 : index
    %902 = vector.load %arg17[%c1_538, %c8_539, %c0_540] : memref<4x16x16xf32, #tpu.memory_space<vmem>>, vector<1x2x16xf32>
    %903 = vector.shape_cast %902 : vector<1x2x16xf32> to vector<2x16xf32>
    %cst_541 = arith.constant dense<0.000000e+00> : vector<2x16xf32>
    %904 = tpu.matmul %892, %738, %cst_541 {dimension_numbers = #tpu.dot_dimension_numbers<[1], [0], [0], [1], [0, 0, 1, 1], [], []>} : vector<2x16xf32>, vector<16x16xf32>, vector<2x16xf32> -> vector<2x16xf32>
    %905 = arith.addf %903, %904 : vector<2x16xf32>
    %906 = arith.negf %905 : vector<2x16xf32>
    %907 = math.exp %906 : vector<2x16xf32>
    %cst_542 = arith.constant 1.000000e+00 : f32
    %908 = vector.broadcast %cst_542 : f32 to vector<2x16xf32>
    %909 = arith.addf %908, %907 : vector<2x16xf32>
    %910 = arith.divf %908, %909 : vector<2x16xf32>
    %c2_543 = arith.constant 2 : index
    %c8_544 = arith.constant 8 : index
    %c0_545 = arith.constant 0 : index
    %911 = vector.load %arg17[%c2_543, %c8_544, %c0_545] : memref<4x16x16xf32, #tpu.memory_space<vmem>>, vector<1x2x16xf32>
    %912 = vector.shape_cast %911 : vector<1x2x16xf32> to vector<2x16xf32>
    %cst_546 = arith.constant dense<0.000000e+00> : vector<2x16xf32>
    %913 = tpu.matmul %892, %740, %cst_546 {dimension_numbers = #tpu.dot_dimension_numbers<[1], [0], [0], [1], [0, 0, 1, 1], [], []>} : vector<2x16xf32>, vector<16x16xf32>, vector<2x16xf32> -> vector<2x16xf32>
    %914 = arith.addf %912, %913 : vector<2x16xf32>
    %915 = math.tanh %914 : vector<2x16xf32>
    %c3_547 = arith.constant 3 : index
    %c8_548 = arith.constant 8 : index
    %c0_549 = arith.constant 0 : index
    %916 = vector.load %arg17[%c3_547, %c8_548, %c0_549] : memref<4x16x16xf32, #tpu.memory_space<vmem>>, vector<1x2x16xf32>
    %917 = vector.shape_cast %916 : vector<1x2x16xf32> to vector<2x16xf32>
    %cst_550 = arith.constant dense<0.000000e+00> : vector<2x16xf32>
    %918 = tpu.matmul %892, %742, %cst_550 {dimension_numbers = #tpu.dot_dimension_numbers<[1], [0], [0], [1], [0, 0, 1, 1], [], []>} : vector<2x16xf32>, vector<16x16xf32>, vector<2x16xf32> -> vector<2x16xf32>
    %919 = arith.addf %917, %918 : vector<2x16xf32>
    %920 = arith.negf %919 : vector<2x16xf32>
    %921 = math.exp %920 : vector<2x16xf32>
    %cst_551 = arith.constant 1.000000e+00 : f32
    %922 = vector.broadcast %cst_551 : f32 to vector<2x16xf32>
    %923 = arith.addf %922, %921 : vector<2x16xf32>
    %924 = arith.divf %922, %923 : vector<2x16xf32>
    %925 = arith.mulf %910, %890 : vector<2x16xf32>
    %926 = arith.mulf %901, %915 : vector<2x16xf32>
    %927 = arith.addf %925, %926 : vector<2x16xf32>
    %928 = math.tanh %927 : vector<2x16xf32>
    %929 = arith.mulf %924, %928 : vector<2x16xf32>
    %c0_552 = arith.constant 0 : index
    %c10_553 = arith.constant 10 : index
    %c0_554 = arith.constant 0 : index
    %930 = vector.load %arg17[%c0_552, %c10_553, %c0_554] : memref<4x16x16xf32, #tpu.memory_space<vmem>>, vector<1x2x16xf32>
    %931 = vector.shape_cast %930 : vector<1x2x16xf32> to vector<2x16xf32>
    %cst_555 = arith.constant dense<0.000000e+00> : vector<2x16xf32>
    %932 = tpu.matmul %929, %736, %cst_555 {dimension_numbers = #tpu.dot_dimension_numbers<[1], [0], [0], [1], [0, 0, 1, 1], [], []>} : vector<2x16xf32>, vector<16x16xf32>, vector<2x16xf32> -> vector<2x16xf32>
    %933 = arith.addf %931, %932 : vector<2x16xf32>
    %934 = arith.negf %933 : vector<2x16xf32>
    %935 = math.exp %934 : vector<2x16xf32>
    %cst_556 = arith.constant 1.000000e+00 : f32
    %936 = vector.broadcast %cst_556 : f32 to vector<2x16xf32>
    %937 = arith.addf %936, %935 : vector<2x16xf32>
    %938 = arith.divf %936, %937 : vector<2x16xf32>
    %c1_557 = arith.constant 1 : index
    %c10_558 = arith.constant 10 : index
    %c0_559 = arith.constant 0 : index
    %939 = vector.load %arg17[%c1_557, %c10_558, %c0_559] : memref<4x16x16xf32, #tpu.memory_space<vmem>>, vector<1x2x16xf32>
    %940 = vector.shape_cast %939 : vector<1x2x16xf32> to vector<2x16xf32>
    %cst_560 = arith.constant dense<0.000000e+00> : vector<2x16xf32>
    %941 = tpu.matmul %929, %738, %cst_560 {dimension_numbers = #tpu.dot_dimension_numbers<[1], [0], [0], [1], [0, 0, 1, 1], [], []>} : vector<2x16xf32>, vector<16x16xf32>, vector<2x16xf32> -> vector<2x16xf32>
    %942 = arith.addf %940, %941 : vector<2x16xf32>
    %943 = arith.negf %942 : vector<2x16xf32>
    %944 = math.exp %943 : vector<2x16xf32>
    %cst_561 = arith.constant 1.000000e+00 : f32
    %945 = vector.broadcast %cst_561 : f32 to vector<2x16xf32>
    %946 = arith.addf %945, %944 : vector<2x16xf32>
    %947 = arith.divf %945, %946 : vector<2x16xf32>
    %c2_562 = arith.constant 2 : index
    %c10_563 = arith.constant 10 : index
    %c0_564 = arith.constant 0 : index
    %948 = vector.load %arg17[%c2_562, %c10_563, %c0_564] : memref<4x16x16xf32, #tpu.memory_space<vmem>>, vector<1x2x16xf32>
    %949 = vector.shape_cast %948 : vector<1x2x16xf32> to vector<2x16xf32>
    %cst_565 = arith.constant dense<0.000000e+00> : vector<2x16xf32>
    %950 = tpu.matmul %929, %740, %cst_565 {dimension_numbers = #tpu.dot_dimension_numbers<[1], [0], [0], [1], [0, 0, 1, 1], [], []>} : vector<2x16xf32>, vector<16x16xf32>, vector<2x16xf32> -> vector<2x16xf32>
    %951 = arith.addf %949, %950 : vector<2x16xf32>
    %952 = math.tanh %951 : vector<2x16xf32>
    %c3_566 = arith.constant 3 : index
    %c10_567 = arith.constant 10 : index
    %c0_568 = arith.constant 0 : index
    %953 = vector.load %arg17[%c3_566, %c10_567, %c0_568] : memref<4x16x16xf32, #tpu.memory_space<vmem>>, vector<1x2x16xf32>
    %954 = vector.shape_cast %953 : vector<1x2x16xf32> to vector<2x16xf32>
    %cst_569 = arith.constant dense<0.000000e+00> : vector<2x16xf32>
    %955 = tpu.matmul %929, %742, %cst_569 {dimension_numbers = #tpu.dot_dimension_numbers<[1], [0], [0], [1], [0, 0, 1, 1], [], []>} : vector<2x16xf32>, vector<16x16xf32>, vector<2x16xf32> -> vector<2x16xf32>
    %956 = arith.addf %954, %955 : vector<2x16xf32>
    %957 = arith.negf %956 : vector<2x16xf32>
    %958 = math.exp %957 : vector<2x16xf32>
    %cst_570 = arith.constant 1.000000e+00 : f32
    %959 = vector.broadcast %cst_570 : f32 to vector<2x16xf32>
    %960 = arith.addf %959, %958 : vector<2x16xf32>
    %961 = arith.divf %959, %960 : vector<2x16xf32>
    %962 = arith.mulf %947, %927 : vector<2x16xf32>
    %963 = arith.mulf %938, %952 : vector<2x16xf32>
    %964 = arith.addf %962, %963 : vector<2x16xf32>
    %965 = math.tanh %964 : vector<2x16xf32>
    %966 = arith.mulf %961, %965 : vector<2x16xf32>
    %c0_571 = arith.constant 0 : index
    %c12_572 = arith.constant 12 : index
    %c0_573 = arith.constant 0 : index
    %967 = vector.load %arg17[%c0_571, %c12_572, %c0_573] : memref<4x16x16xf32, #tpu.memory_space<vmem>>, vector<1x2x16xf32>
    %968 = vector.shape_cast %967 : vector<1x2x16xf32> to vector<2x16xf32>
    %cst_574 = arith.constant dense<0.000000e+00> : vector<2x16xf32>
    %969 = tpu.matmul %966, %736, %cst_574 {dimension_numbers = #tpu.dot_dimension_numbers<[1], [0], [0], [1], [0, 0, 1, 1], [], []>} : vector<2x16xf32>, vector<16x16xf32>, vector<2x16xf32> -> vector<2x16xf32>
    %970 = arith.addf %968, %969 : vector<2x16xf32>
    %971 = arith.negf %970 : vector<2x16xf32>
    %972 = math.exp %971 : vector<2x16xf32>
    %cst_575 = arith.constant 1.000000e+00 : f32
    %973 = vector.broadcast %cst_575 : f32 to vector<2x16xf32>
    %974 = arith.addf %973, %972 : vector<2x16xf32>
    %975 = arith.divf %973, %974 : vector<2x16xf32>
    %c1_576 = arith.constant 1 : index
    %c12_577 = arith.constant 12 : index
    %c0_578 = arith.constant 0 : index
    %976 = vector.load %arg17[%c1_576, %c12_577, %c0_578] : memref<4x16x16xf32, #tpu.memory_space<vmem>>, vector<1x2x16xf32>
    %977 = vector.shape_cast %976 : vector<1x2x16xf32> to vector<2x16xf32>
    %cst_579 = arith.constant dense<0.000000e+00> : vector<2x16xf32>
    %978 = tpu.matmul %966, %738, %cst_579 {dimension_numbers = #tpu.dot_dimension_numbers<[1], [0], [0], [1], [0, 0, 1, 1], [], []>} : vector<2x16xf32>, vector<16x16xf32>, vector<2x16xf32> -> vector<2x16xf32>
    %979 = arith.addf %977, %978 : vector<2x16xf32>
    %980 = arith.negf %979 : vector<2x16xf32>
    %981 = math.exp %980 : vector<2x16xf32>
    %cst_580 = arith.constant 1.000000e+00 : f32
    %982 = vector.broadcast %cst_580 : f32 to vector<2x16xf32>
    %983 = arith.addf %982, %981 : vector<2x16xf32>
    %984 = arith.divf %982, %983 : vector<2x16xf32>
    %c2_581 = arith.constant 2 : index
    %c12_582 = arith.constant 12 : index
    %c0_583 = arith.constant 0 : index
    %985 = vector.load %arg17[%c2_581, %c12_582, %c0_583] : memref<4x16x16xf32, #tpu.memory_space<vmem>>, vector<1x2x16xf32>
    %986 = vector.shape_cast %985 : vector<1x2x16xf32> to vector<2x16xf32>
    %cst_584 = arith.constant dense<0.000000e+00> : vector<2x16xf32>
    %987 = tpu.matmul %966, %740, %cst_584 {dimension_numbers = #tpu.dot_dimension_numbers<[1], [0], [0], [1], [0, 0, 1, 1], [], []>} : vector<2x16xf32>, vector<16x16xf32>, vector<2x16xf32> -> vector<2x16xf32>
    %988 = arith.addf %986, %987 : vector<2x16xf32>
    %989 = math.tanh %988 : vector<2x16xf32>
    %c3_585 = arith.constant 3 : index
    %c12_586 = arith.constant 12 : index
    %c0_587 = arith.constant 0 : index
    %990 = vector.load %arg17[%c3_585, %c12_586, %c0_587] : memref<4x16x16xf32, #tpu.memory_space<vmem>>, vector<1x2x16xf32>
    %991 = vector.shape_cast %990 : vector<1x2x16xf32> to vector<2x16xf32>
    %cst_588 = arith.constant dense<0.000000e+00> : vector<2x16xf32>
    %992 = tpu.matmul %966, %742, %cst_588 {dimension_numbers = #tpu.dot_dimension_numbers<[1], [0], [0], [1], [0, 0, 1, 1], [], []>} : vector<2x16xf32>, vector<16x16xf32>, vector<2x16xf32> -> vector<2x16xf32>
    %993 = arith.addf %991, %992 : vector<2x16xf32>
    %994 = arith.negf %993 : vector<2x16xf32>
    %995 = math.exp %994 : vector<2x16xf32>
    %cst_589 = arith.constant 1.000000e+00 : f32
    %996 = vector.broadcast %cst_589 : f32 to vector<2x16xf32>
    %997 = arith.addf %996, %995 : vector<2x16xf32>
    %998 = arith.divf %996, %997 : vector<2x16xf32>
    %999 = arith.mulf %984, %964 : vector<2x16xf32>
    %1000 = arith.mulf %975, %989 : vector<2x16xf32>
    %1001 = arith.addf %999, %1000 : vector<2x16xf32>
    %1002 = math.tanh %1001 : vector<2x16xf32>
    %1003 = arith.mulf %998, %1002 : vector<2x16xf32>
    %c0_590 = arith.constant 0 : index
    %c14_591 = arith.constant 14 : index
    %c0_592 = arith.constant 0 : index
    %1004 = vector.load %arg17[%c0_590, %c14_591, %c0_592] : memref<4x16x16xf32, #tpu.memory_space<vmem>>, vector<1x2x16xf32>
    %1005 = vector.shape_cast %1004 : vector<1x2x16xf32> to vector<2x16xf32>
    %cst_593 = arith.constant dense<0.000000e+00> : vector<2x16xf32>
    %1006 = tpu.matmul %1003, %736, %cst_593 {dimension_numbers = #tpu.dot_dimension_numbers<[1], [0], [0], [1], [0, 0, 1, 1], [], []>} : vector<2x16xf32>, vector<16x16xf32>, vector<2x16xf32> -> vector<2x16xf32>
    %1007 = arith.addf %1005, %1006 : vector<2x16xf32>
    %1008 = arith.negf %1007 : vector<2x16xf32>
    %1009 = math.exp %1008 : vector<2x16xf32>
    %cst_594 = arith.constant 1.000000e+00 : f32
    %1010 = vector.broadcast %cst_594 : f32 to vector<2x16xf32>
    %1011 = arith.addf %1010, %1009 : vector<2x16xf32>
    %1012 = arith.divf %1010, %1011 : vector<2x16xf32>
    %c1_595 = arith.constant 1 : index
    %c14_596 = arith.constant 14 : index
    %c0_597 = arith.constant 0 : index
    %1013 = vector.load %arg17[%c1_595, %c14_596, %c0_597] : memref<4x16x16xf32, #tpu.memory_space<vmem>>, vector<1x2x16xf32>
    %1014 = vector.shape_cast %1013 : vector<1x2x16xf32> to vector<2x16xf32>
    %cst_598 = arith.constant dense<0.000000e+00> : vector<2x16xf32>
    %1015 = tpu.matmul %1003, %738, %cst_598 {dimension_numbers = #tpu.dot_dimension_numbers<[1], [0], [0], [1], [0, 0, 1, 1], [], []>} : vector<2x16xf32>, vector<16x16xf32>, vector<2x16xf32> -> vector<2x16xf32>
    %1016 = arith.addf %1014, %1015 : vector<2x16xf32>
    %1017 = arith.negf %1016 : vector<2x16xf32>
    %1018 = math.exp %1017 : vector<2x16xf32>
    %cst_599 = arith.constant 1.000000e+00 : f32
    %1019 = vector.broadcast %cst_599 : f32 to vector<2x16xf32>
    %1020 = arith.addf %1019, %1018 : vector<2x16xf32>
    %1021 = arith.divf %1019, %1020 : vector<2x16xf32>
    %c2_600 = arith.constant 2 : index
    %c14_601 = arith.constant 14 : index
    %c0_602 = arith.constant 0 : index
    %1022 = vector.load %arg17[%c2_600, %c14_601, %c0_602] : memref<4x16x16xf32, #tpu.memory_space<vmem>>, vector<1x2x16xf32>
    %1023 = vector.shape_cast %1022 : vector<1x2x16xf32> to vector<2x16xf32>
    %cst_603 = arith.constant dense<0.000000e+00> : vector<2x16xf32>
    %1024 = tpu.matmul %1003, %740, %cst_603 {dimension_numbers = #tpu.dot_dimension_numbers<[1], [0], [0], [1], [0, 0, 1, 1], [], []>} : vector<2x16xf32>, vector<16x16xf32>, vector<2x16xf32> -> vector<2x16xf32>
    %1025 = arith.addf %1023, %1024 : vector<2x16xf32>
    %1026 = math.tanh %1025 : vector<2x16xf32>
    %c3_604 = arith.constant 3 : index
    %c14_605 = arith.constant 14 : index
    %c0_606 = arith.constant 0 : index
    %1027 = vector.load %arg17[%c3_604, %c14_605, %c0_606] : memref<4x16x16xf32, #tpu.memory_space<vmem>>, vector<1x2x16xf32>
    %1028 = vector.shape_cast %1027 : vector<1x2x16xf32> to vector<2x16xf32>
    %cst_607 = arith.constant dense<0.000000e+00> : vector<2x16xf32>
    %1029 = tpu.matmul %1003, %742, %cst_607 {dimension_numbers = #tpu.dot_dimension_numbers<[1], [0], [0], [1], [0, 0, 1, 1], [], []>} : vector<2x16xf32>, vector<16x16xf32>, vector<2x16xf32> -> vector<2x16xf32>
    %1030 = arith.addf %1028, %1029 : vector<2x16xf32>
    %1031 = arith.negf %1030 : vector<2x16xf32>
    %1032 = math.exp %1031 : vector<2x16xf32>
    %cst_608 = arith.constant 1.000000e+00 : f32
    %1033 = vector.broadcast %cst_608 : f32 to vector<2x16xf32>
    %1034 = arith.addf %1033, %1032 : vector<2x16xf32>
    %1035 = arith.divf %1033, %1034 : vector<2x16xf32>
    %1036 = arith.mulf %1021, %1001 : vector<2x16xf32>
    %1037 = arith.mulf %1012, %1026 : vector<2x16xf32>
    %1038 = arith.addf %1036, %1037 : vector<2x16xf32>
    %1039 = math.tanh %1038 : vector<2x16xf32>
    %1040 = arith.mulf %1035, %1039 : vector<2x16xf32>
    %1041 = tpu.concatenate %1003, %1040 in 0 : vector<2x16xf32>, vector<2x16xf32> -> vector<4x16xf32>
    %c0_609 = arith.constant 0 : index
    %c0_610 = arith.constant 0 : index
    %1042 = vector.load %arg10[%c0_609, %c0_610] : memref<16x8xf32, #tpu.memory_space<vmem>>, vector<16x8xf32>
    %cst_611 = arith.constant dense<0.000000e+00> : vector<4x8xf32>
    %1043 = tpu.matmul %1041, %1042, %cst_611 {dimension_numbers = #tpu.dot_dimension_numbers<[1], [0], [0], [1], [0, 0, 1, 1], [], []>} : vector<4x16xf32>, vector<16x8xf32>, vector<4x8xf32> -> vector<4x8xf32>
    %c0_612 = arith.constant 0 : index
    %c0_613 = arith.constant 0 : index
    %1044 = vector.load %arg11[%c0_612, %c0_613] : memref<1x8xf32, #tpu.memory_space<vmem>>, vector<1x8xf32>
    %1045 = vector.broadcast %1044 : vector<1x8xf32> to vector<4x8xf32>
    %1046 = arith.addf %1043, %1045 : vector<4x8xf32>
    %cst_614 = arith.constant 0.000000e+00 : f32
    %1047 = vector.broadcast %cst_614 : f32 to vector<4x8xf32>
    %1048 = arith.maximumf %1046, %1047 : vector<4x8xf32>
    %c0_615 = arith.constant 0 : index
    %c0_616 = arith.constant 0 : index
    %1049 = vector.load %arg12[%c0_615, %c0_616] : memref<8x1xf32, #tpu.memory_space<vmem>>, vector<8x1xf32>
    %cst_617 = arith.constant dense<0.000000e+00> : vector<4x1xf32>
    %1050 = tpu.matmul %1048, %1049, %cst_617 {dimension_numbers = #tpu.dot_dimension_numbers<[1], [0], [0], [1], [0, 0, 1, 1], [], []>} : vector<4x8xf32>, vector<8x1xf32>, vector<4x1xf32> -> vector<4x1xf32>
    %c0_618 = arith.constant 0 : index
    %c0_619 = arith.constant 0 : index
    %1051 = vector.load %arg13[%c0_618, %c0_619] : memref<1x1xf32, #tpu.memory_space<vmem>>, vector<1x1xf32>
    %1052 = vector.broadcast %1051 : vector<1x1xf32> to vector<4x1xf32>
    %1053 = arith.addf %1050, %1052 : vector<4x1xf32>
    %c0_620 = arith.constant 0 : index
    %c0_621 = arith.constant 0 : index
    %1054 = vector.load %arg14[%c0_620, %c0_621] : memref<4x1xf32, #tpu.memory_space<vmem>>, vector<4x1xf32>
    tpu.vector_store %arg14[%c0_620, %c0_621], %1053 {strides = array<i32>} : memref<4x1xf32, #tpu.memory_space<vmem>>, vector<4x1xf32>,
    return
  }
}

</mosaic_0001>

<llo_original>
// kernel: lstm_model_forward.1
$region0: #{lstm_model_forward.1}
  #allocation0 [shape = 'u32[]', space=smem, size = 0x4, offset = 0x4, fixed_abs, tag = 'smem constant byte address 0x4 - core index']
  #allocation1 [shape = 'u32[144,128]{1,0:T(1,128)}', space=vmem, size = 0x12000, scoped, tag = 'internal scratch']
  #allocation2 [shape = 'f32[4,16,64]{2,1,0:T(8,128)}', space=vmem, size = 0x8000, scoped, tag = 'scratch operand']
  #allocation3 [shape = 'f32[4,16,32]{2,1,0:T(8,128)}', space=vmem, size = 0x8000, scoped, tag = 'scratch operand']
  #allocation4 [shape = 'f32[4,16,16]{2,1,0:T(8,128)}', space=vmem, size = 0x8000, scoped, tag = 'scratch operand']
  #allocation5 [shape = 'f32[1,1]{1,0:T(1,128)S(1)}', space=vmem, size = 0x200, scoped, tag = 'scoped memory for lstm_model_forward.1']
  %s0 = inlined_call_operand.vmem [shape: f32[16,7], index: 0, kind: input, shape index: {}]
  %s1 = inlined_call_operand.vmem [shape: f32[4,7,64], index: 1, kind: input, shape index: {}]
  %s2 = inlined_call_operand.vmem [shape: f32[4,64,64], index: 2, kind: input, shape index: {}]
  %s3 = inlined_call_operand.vmem [shape: f32[4,1,64], index: 3, kind: input, shape index: {}]
  %s4 = inlined_call_operand.vmem [shape: f32[4,64,32], index: 4, kind: input, shape index: {}]
  %s5 = inlined_call_operand.vmem [shape: f32[4,32,32], index: 5, kind: input, shape index: {}]
  %s6 = inlined_call_operand.vmem [shape: f32[4,1,32], index: 6, kind: input, shape index: {}]
  %s7 = inlined_call_operand.vmem [shape: f32[4,32,16], index: 7, kind: input, shape index: {}]
  %s8 = inlined_call_operand.vmem [shape: f32[4,16,16], index: 8, kind: input, shape index: {}]
  %s9 = inlined_call_operand.vmem [shape: f32[4,1,16], index: 9, kind: input, shape index: {}]
  %s10 = inlined_call_operand.vmem [shape: f32[16,8], index: 10, kind: input, shape index: {}]
  %s11 = inlined_call_operand.vmem [shape: f32[1,8], index: 11, kind: input, shape index: {}]
  %s12 = inlined_call_operand.vmem [shape: f32[8,1], index: 12, kind: input, shape index: {}]
  %s13 = inlined_call_operand.<no memory space> [shape: f32[1,1], index: 13, kind: input, shape index: {}]
  %s14 = inlined_call_operand.vmem [shape: f32[4,1], index: 14, kind: output, shape index: {}]
  %s15 = sld [smem:[#allocation0]]
  $region66: #{lstm_model_forward.1} parent=0
    _
  %s17 = ssub.s32 1, %s15
  %s18 = scalar_select 0, %s17, %s15
  %v19 = vstv %s13
  %20 = vst [vmem:[#allocation5] sm:$0x1] %v19
  // Predicated region
  $region2: #{lstm_model_forward.1} parent=0 // pred_check
    _
  $region3: #{lstm_model_forward.1} parent=0 // pred_check_branch
    %22 = sbr.rel (0) target = $region5
  $region4: #{lstm_model_forward.1} parent=0 // pred_region
    _
  $region5: #{lstm_model_forward.1} parent=0 // pred_fallthru
    _
  // Predicated region
  $region6: #{lstm_model_forward.1} parent=0 // pred_check
    _
  $region7: #{lstm_model_forward.1} parent=0 // pred_check_branch
    %24 = sbr.rel (0) target = $region9
  $region8: #{lstm_model_forward.1} parent=0 // pred_region
    _
  $region9: #{lstm_model_forward.1} parent=0 // pred_fallthru
    _
  // Predicated region
  $region10: #{lstm_model_forward.1} parent=0 // pred_check
    _
  $region11: #{lstm_model_forward.1} parent=0 // pred_check_branch
    %26 = sbr.rel (0) target = $region13
  $region12: #{lstm_model_forward.1} parent=0 // pred_region
    _
  $region13: #{lstm_model_forward.1} parent=0 // pred_fallthru
    _
  // Predicated region
  $region14: #{lstm_model_forward.1} parent=0 // pred_check
    _
  $region15: #{lstm_model_forward.1} parent=0 // pred_check_branch
    %28 = sbr.rel (0) target = $region17
  $region16: #{lstm_model_forward.1} parent=0 // pred_region
    _
  $region17: #{lstm_model_forward.1} parent=0 // pred_fallthru
    _
  // Predicated region
  $region18: #{lstm_model_forward.1} parent=0 // pred_check
    _
  $region19: #{lstm_model_forward.1} parent=0 // pred_check_branch
    %30 = sbr.rel (0) target = $region21
  $region20: #{lstm_model_forward.1} parent=0 // pred_region
    _
  $region21: #{lstm_model_forward.1} parent=0 // pred_fallthru
    _
  // Predicated region
  $region22: #{lstm_model_forward.1} parent=0 // pred_check
    _
  $region23: #{lstm_model_forward.1} parent=0 // pred_check_branch
    %32 = sbr.rel (0) target = $region25
  $region24: #{lstm_model_forward.1} parent=0 // pred_region
    _
  $region25: #{lstm_model_forward.1} parent=0 // pred_fallthru
    _
  // Predicated region
  $region26: #{lstm_model_forward.1} parent=0 // pred_check
    _
  $region27: #{lstm_model_forward.1} parent=0 // pred_check_branch
    %34 = sbr.rel (0) target = $region29
  $region28: #{lstm_model_forward.1} parent=0 // pred_region
    _
  $region29: #{lstm_model_forward.1} parent=0 // pred_fallthru
    _
  // Predicated region
  $region30: #{lstm_model_forward.1} parent=0 // pred_check
    _
  $region31: #{lstm_model_forward.1} parent=0 // pred_check_branch
    %36 = sbr.rel (0) target = $region33
  $region32: #{lstm_model_forward.1} parent=0 // pred_region
    _
  $region33: #{lstm_model_forward.1} parent=0 // pred_fallthru
    _
  // Predicated region
  $region34: #{lstm_model_forward.1} parent=0 // pred_check
    _
  $region35: #{lstm_model_forward.1} parent=0 // pred_check_branch
    %38 = sbr.rel (0) target = $region37
  $region36: #{lstm_model_forward.1} parent=0 // pred_region
    _
  $region37: #{lstm_model_forward.1} parent=0 // pred_fallthru
    _
  // Predicated region
  $region38: #{lstm_model_forward.1} parent=0 // pred_check
    _
  $region39: #{lstm_model_forward.1} parent=0 // pred_check_branch
    %40 = sbr.rel (0) target = $region41
  $region40: #{lstm_model_forward.1} parent=0 // pred_region
    _
  $region41: #{lstm_model_forward.1} parent=0 // pred_fallthru
    _
  // Predicated region
  $region42: #{lstm_model_forward.1} parent=0 // pred_check
    _
  $region43: #{lstm_model_forward.1} parent=0 // pred_check_branch
    %42 = sbr.rel (0) target = $region45
  $region44: #{lstm_model_forward.1} parent=0 // pred_region
    _
  $region45: #{lstm_model_forward.1} parent=0 // pred_fallthru
    _
  // Predicated region
  $region46: #{lstm_model_forward.1} parent=0 // pred_check
    _
  $region47: #{lstm_model_forward.1} parent=0 // pred_check_branch
    %44 = sbr.rel (0) target = $region49
  $region48: #{lstm_model_forward.1} parent=0 // pred_region
    _
  $region49: #{lstm_model_forward.1} parent=0 // pred_fallthru
    _
  // Predicated region
  $region50: #{lstm_model_forward.1} parent=0 // pred_check
    _
  $region51: #{lstm_model_forward.1} parent=0 // pred_check_branch
    %46 = sbr.rel (0) target = $region53
  $region52: #{lstm_model_forward.1} parent=0 // pred_region
    _
  $region53: #{lstm_model_forward.1} parent=0 // pred_fallthru
    _
  // Predicated region
  $region54: #{lstm_model_forward.1} parent=0 // pred_check
    _
  $region55: #{lstm_model_forward.1} parent=0 // pred_check_branch
    %48 = sbr.rel (0) target = $region57
  $region56: #{lstm_model_forward.1} parent=0 // pred_region
    _
  $region57: #{lstm_model_forward.1} parent=0 // pred_fallthru
    _
  %v49 = vld [vmem:[%s0] sm:$0xff]
  %v50 = vld [vmem:[%s0 + $0x8] sm:$0xff]
  %v51 = vld [vmem:[%s1] sm:$0x7f]
  %v52 = vld [vmem:[%s3] sm:$0x1]
  %v54 = vlaneseq
  %v55 = vshrl.u32 %v54, 7
  %v56 = vsub.s32 0, %v55
  %v57 = vrot.slane %v52, %v56
  %vm59 = vcmask 56320
  %v61 = vsel %vm59, %v49, 0
  %v64 = vsel %vm59, %v50, 0
  %vm66 = vcmask 1046528
  %v68 = vsel %vm66, %v51, 0
  %70 = vmatprep.subr.mxu0 0.0
  %71 = vmatpush1.msra.mxu0 0.0
  %72 = vmatprep.subr.mxu0 0.0
  %73 = vmatpush1.msra.mxu0 0.0
  %74 = vmatprep.subr.mxu0 0.0
  %75 = vmatpush1.msra.mxu0 0.0
  %76 = vmatprep.subr.mxu0 0.0
  %77 = vmatpush1.msra.mxu0 0.0
  %78 = vmatprep.subr.mxu0 0.0
  %79 = vmatpush1.msra.mxu0 0.0
  %80 = vmatprep.subr.mxu0 0.0
  %81 = vmatpush1.msra.mxu0 0.0
  %82 = vmatprep.subr.mxu0 0.0
  %83 = vmatpush1.msra.mxu0 0.0
  %84 = vmatprep.subr.mxu0 0.0
  %85 = vmatpush1.msra.mxu0 0.0
  %86 = vmatprep.subr.mxu0 0.0
  %87 = vmatpush1.msra.mxu0 0.0
  %88 = vmatprep.subr.mxu0 0.0
  %89 = vmatpush1.msra.mxu0 0.0
  %90 = vmatprep.subr.mxu0 0.0
  %91 = vmatpush1.msra.mxu0 0.0
  %92 = vmatprep.subr.mxu0 0.0
  %93 = vmatpush1.msra.mxu0 0.0
  %94 = vmatprep.subr.mxu0 0.0
  %95 = vmatpush1.msra.mxu0 0.0
  %96 = vmatprep.subr.mxu0 0.0
  %97 = vmatpush1.msra.mxu0 0.0
  %98 = vmatprep.subr.mxu0 0.0
  %99 = vmatpush1.msra.mxu0 0.0
  %100 = vmatprep.subr.mxu0 0.0
  %101 = vmatpush1.msra.mxu0 %v68
  %102 = vmatprep.subr.mxu0 0.0
  %103 = vmatpush2.msra.mxu0 0.0
  %104 = vmatprep.subr.mxu0 0.0
  %105 = vmatpush2.msra.mxu0 0.0
  %106 = vmatprep.subr.mxu0 0.0
  %107 = vmatpush2.msra.mxu0 0.0
  %108 = vmatprep.subr.mxu0 0.0
  %109 = vmatpush2.msra.mxu0 0.0
  %110 = vmatprep.subr.mxu0 0.0
  %111 = vmatpush2.msra.mxu0 0.0
  %112 = vmatprep.subr.mxu0 0.0
  %113 = vmatpush2.msra.mxu0 0.0
  %114 = vmatprep.subr.mxu0 0.0
  %115 = vmatpush2.msra.mxu0 0.0
  %116 = vmatprep.subr.mxu0 0.0
  %117 = vmatpush2.msra.mxu0 0.0
  %118 = vmatprep.subr.mxu0 0.0
  %119 = vmatpush2.msra.mxu0 0.0
  %120 = vmatprep.subr.mxu0 0.0
  %121 = vmatpush2.msra.mxu0 0.0
  %122 = vmatprep.subr.mxu0 0.0
  %123 = vmatpush2.msra.mxu0 0.0
  %124 = vmatprep.subr.mxu0 0.0
  %125 = vmatpush2.msra.mxu0 0.0
  %126 = vmatprep.subr.mxu0 0.0
  %127 = vmatpush2.msra.mxu0 0.0
  %128 = vmatprep.subr.mxu0 0.0
  %129 = vmatpush2.msra.mxu0 0.0
  %130 = vmatprep.subr.mxu0 0.0
  %131 = vmatpush2.msra.mxu0 0.0
  %132 = vmatprep.subr.mxu0 0.0
  %133 = vmatpush2.msra.mxu0 0.0
  %134 = vmatprep.mubr.f32.mxu0 0.0
  %135 = vmatmul.mubr.f32.gmra.mxu0 %v61
  %v136 = vpop.f32.mrf.mxu0
  %v137 = vadd.f32 %v57, %v136
  %v138 = vpop.f32.mrf.mxu0
  %139 = vmatprep.mubr.f32.mxu0 0.0
  %140 = vmatmul.mubr.f32.gmra.mxu0 %v64
  %v141 = vpop.f32.mrf.mxu0
  %v142 = vadd.f32 %v57, %v141
  %v143 = vpop.f32.mrf.mxu0
  %144 = vdwg.mxu0
  %vm145 = vcmask 523264
  %146 = vst.msk [vmem:[#allocation2] sm:$0xff] %vm145, %v137
  %147 = vst.msk [vmem:[#allocation2 + $0x8] sm:$0xff] %vm145, %v142
  %s148 = scalar_lea.vmem %s1, 8
  %v149 = vld [vmem:[%s148] sm:$0x7f]
  %s150 = scalar_lea.vmem %s3, 1
  %v151 = vld [vmem:[%s150] sm:$0x1]
  %v153 = vlaneseq
  %v154 = vshrl.u32 %v153, 7
  %v155 = vsub.s32 0, %v154
  %v156 = vrot.slane %v151, %v155
  %v159 = vsel %vm66, %v149, 0
  %161 = vmatprep.subr.mxu0 0.0
  %162 = vmatpush1.msra.mxu0 0.0
  %163 = vmatprep.subr.mxu0 0.0
  %164 = vmatpush1.msra.mxu0 0.0
  %165 = vmatprep.subr.mxu0 0.0
  %166 = vmatpush1.msra.mxu0 0.0
  %167 = vmatprep.subr.mxu0 0.0
  %168 = vmatpush1.msra.mxu0 0.0
  %169 = vmatprep.subr.mxu0 0.0
  %170 = vmatpush1.msra.mxu0 0.0
  %171 = vmatprep.subr.mxu0 0.0
  %172 = vmatpush1.msra.mxu0 0.0
  %173 = vmatprep.subr.mxu0 0.0
  %174 = vmatpush1.msra.mxu0 0.0
  %175 = vmatprep.subr.mxu0 0.0
  %176 = vmatpush1.msra.mxu0 0.0
  %177 = vmatprep.subr.mxu0 0.0
  %178 = vmatpush1.msra.mxu0 0.0
  %179 = vmatprep.subr.mxu0 0.0
  %180 = vmatpush1.msra.mxu0 0.0
  %181 = vmatprep.subr.mxu0 0.0
  %182 = vmatpush1.msra.mxu0 0.0
  %183 = vmatprep.subr.mxu0 0.0
  %184 = vmatpush1.msra.mxu0 0.0
  %185 = vmatprep.subr.mxu0 0.0
  %186 = vmatpush1.msra.mxu0 0.0
  %187 = vmatprep.subr.mxu0 0.0
  %188 = vmatpush1.msra.mxu0 0.0
  %189 = vmatprep.subr.mxu0 0.0
  %190 = vmatpush1.msra.mxu0 0.0
  %191 = vmatprep.subr.mxu0 0.0
  %192 = vmatpush1.msra.mxu0 %v159
  %193 = vmatprep.subr.mxu0 0.0
  %194 = vmatpush2.msra.mxu0 0.0
  %195 = vmatprep.subr.mxu0 0.0
  %196 = vmatpush2.msra.mxu0 0.0
  %197 = vmatprep.subr.mxu0 0.0
  %198 = vmatpush2.msra.mxu0 0.0
  %199 = vmatprep.subr.mxu0 0.0
  %200 = vmatpush2.msra.mxu0 0.0
  %201 = vmatprep.subr.mxu0 0.0
  %202 = vmatpush2.msra.mxu0 0.0
  %203 = vmatprep.subr.mxu0 0.0
  %204 = vmatpush2.msra.mxu0 0.0
  %205 = vmatprep.subr.mxu0 0.0
  %206 = vmatpush2.msra.mxu0 0.0
  %207 = vmatprep.subr.mxu0 0.0
  %208 = vmatpush2.msra.mxu0 0.0
  %209 = vmatprep.subr.mxu0 0.0
  %210 = vmatpush2.msra.mxu0 0.0
  %211 = vmatprep.subr.mxu0 0.0
  %212 = vmatpush2.msra.mxu0 0.0
  %213 = vmatprep.subr.mxu0 0.0
  %214 = vmatpush2.msra.mxu0 0.0
  %215 = vmatprep.subr.mxu0 0.0
  %216 = vmatpush2.msra.mxu0 0.0
  %217 = vmatprep.subr.mxu0 0.0
  %218 = vmatpush2.msra.mxu0 0.0
  %219 = vmatprep.subr.mxu0 0.0
  %220 = vmatpush2.msra.mxu0 0.0
  %221 = vmatprep.subr.mxu0 0.0
  %222 = vmatpush2.msra.mxu0 0.0
  %223 = vmatprep.subr.mxu0 0.0
  %224 = vmatpush2.msra.mxu0 0.0
  %225 = vmatprep.mubr.f32.mxu0 0.0
  %226 = vmatmul.mubr.f32.gmra.mxu0 %v61
  %v227 = vpop.f32.mrf.mxu0
  %v228 = vadd.f32 %v156, %v227
  %v229 = vpop.f32.mrf.mxu0
  %230 = vmatprep.mubr.f32.mxu0 0.0
  %231 = vmatmul.mubr.f32.gmra.mxu0 %v64
  %v232 = vpop.f32.mrf.mxu0
  %v233 = vadd.f32 %v156, %v232
  %v234 = vpop.f32.mrf.mxu0
  %235 = vdwg.mxu0
  %s236 = scalar_lea.vmem [#allocation2], 16
  %237 = vst.msk [vmem:[%s236] sm:$0xff] %vm145, %v228
  %238 = vst.msk [vmem:[%s236 + $0x8] sm:$0xff] %vm145, %v233
  %s239 = scalar_lea.vmem %s1, 16
  %v240 = vld [vmem:[%s239] sm:$0x7f]
  %s241 = scalar_lea.vmem %s3, 2
  %v242 = vld [vmem:[%s241] sm:$0x1]
  %v244 = vlaneseq
  %v245 = vshrl.u32 %v244, 7
  %v246 = vsub.s32 0, %v245
  %v247 = vrot.slane %v242, %v246
  %v250 = vsel %vm66, %v240, 0
  %252 = vmatprep.subr.mxu0 0.0
  %253 = vmatpush1.msra.mxu0 0.0
  %254 = vmatprep.subr.mxu0 0.0
  %255 = vmatpush1.msra.mxu0 0.0
  %256 = vmatprep.subr.mxu0 0.0
  %257 = vmatpush1.msra.mxu0 0.0
  %258 = vmatprep.subr.mxu0 0.0
  %259 = vmatpush1.msra.mxu0 0.0
  %260 = vmatprep.subr.mxu0 0.0
  %261 = vmatpush1.msra.mxu0 0.0
  %262 = vmatprep.subr.mxu0 0.0
  %263 = vmatpush1.msra.mxu0 0.0
  %264 = vmatprep.subr.mxu0 0.0
  %265 = vmatpush1.msra.mxu0 0.0
  %266 = vmatprep.subr.mxu0 0.0
  %267 = vmatpush1.msra.mxu0 0.0
  %268 = vmatprep.subr.mxu0 0.0
  %269 = vmatpush1.msra.mxu0 0.0
  %270 = vmatprep.subr.mxu0 0.0
  %271 = vmatpush1.msra.mxu0 0.0
  %272 = vmatprep.subr.mxu0 0.0
  %273 = vmatpush1.msra.mxu0 0.0
  %274 = vmatprep.subr.mxu0 0.0
  %275 = vmatpush1.msra.mxu0 0.0
  %276 = vmatprep.subr.mxu0 0.0
  %277 = vmatpush1.msra.mxu0 0.0
  %278 = vmatprep.subr.mxu0 0.0
  %279 = vmatpush1.msra.mxu0 0.0
  %280 = vmatprep.subr.mxu0 0.0
  %281 = vmatpush1.msra.mxu0 0.0
  %282 = vmatprep.subr.mxu0 0.0
  %283 = vmatpush1.msra.mxu0 %v250
  %284 = vmatprep.subr.mxu0 0.0
  %285 = vmatpush2.msra.mxu0 0.0
  %286 = vmatprep.subr.mxu0 0.0
  %287 = vmatpush2.msra.mxu0 0.0
  %288 = vmatprep.subr.mxu0 0.0
  %289 = vmatpush2.msra.mxu0 0.0
  %290 = vmatprep.subr.mxu0 0.0
  %291 = vmatpush2.msra.mxu0 0.0
  %292 = vmatprep.subr.mxu0 0.0
  %293 = vmatpush2.msra.mxu0 0.0
  %294 = vmatprep.subr.mxu0 0.0
  %295 = vmatpush2.msra.mxu0 0.0
  %296 = vmatprep.subr.mxu0 0.0
  %297 = vmatpush2.msra.mxu0 0.0
  %298 = vmatprep.subr.mxu0 0.0
  %299 = vmatpush2.msra.mxu0 0.0
  %300 = vmatprep.subr.mxu0 0.0
  %301 = vmatpush2.msra.mxu0 0.0
  %302 = vmatprep.subr.mxu0 0.0
  %303 = vmatpush2.msra.mxu0 0.0
  %304 = vmatprep.subr.mxu0 0.0
  %305 = vmatpush2.msra.mxu0 0.0
  %306 = vmatprep.subr.mxu0 0.0
  %307 = vmatpush2.msra.mxu0 0.0
  %308 = vmatprep.subr.mxu0 0.0
  %309 = vmatpush2.msra.mxu0 0.0
  %310 = vmatprep.subr.mxu0 0.0
  %311 = vmatpush2.msra.mxu0 0.0
  %312 = vmatprep.subr.mxu0 0.0
  %313 = vmatpush2.msra.mxu0 0.0
  %314 = vmatprep.subr.mxu0 0.0
  %315 = vmatpush2.msra.mxu0 0.0
  %316 = vmatprep.mubr.f32.mxu0 0.0
  %317 = vmatmul.mubr.f32.gmra.mxu0 %v61
  %v318 = vpop.f32.mrf.mxu0
  %v319 = vadd.f32 %v247, %v318
  %v320 = vpop.f32.mrf.mxu0
  %321 = vmatprep.mubr.f32.mxu0 0.0
  %322 = vmatmul.mubr.f32.gmra.mxu0 %v64
  %v323 = vpop.f32.mrf.mxu0
  %v324 = vadd.f32 %v247, %v323
  %v325 = vpop.f32.mrf.mxu0
  %326 = vdwg.mxu0
  %s327 = scalar_lea.vmem [#allocation2], 32
  %328 = vst.msk [vmem:[%s327] sm:$0xff] %vm145, %v319
  %329 = vst.msk [vmem:[%s327 + $0x8] sm:$0xff] %vm145, %v324
  %s330 = scalar_lea.vmem %s1, 24
  %v331 = vld [vmem:[%s330] sm:$0x7f]
  %s332 = scalar_lea.vmem %s3, 3
  %v333 = vld [vmem:[%s332] sm:$0x1]
  %v335 = vlaneseq
  %v336 = vshrl.u32 %v335, 7
  %v337 = vsub.s32 0, %v336
  %v338 = vrot.slane %v333, %v337
  %v341 = vsel %vm66, %v331, 0
  %343 = vmatprep.subr.mxu0 0.0
  %344 = vmatpush1.msra.mxu0 0.0
  %345 = vmatprep.subr.mxu0 0.0
  %346 = vmatpush1.msra.mxu0 0.0
  %347 = vmatprep.subr.mxu0 0.0
  %348 = vmatpush1.msra.mxu0 0.0
  %349 = vmatprep.subr.mxu0 0.0
  %350 = vmatpush1.msra.mxu0 0.0
  %351 = vmatprep.subr.mxu0 0.0
  %352 = vmatpush1.msra.mxu0 0.0
  %353 = vmatprep.subr.mxu0 0.0
  %354 = vmatpush1.msra.mxu0 0.0
  %355 = vmatprep.subr.mxu0 0.0
  %356 = vmatpush1.msra.mxu0 0.0
  %357 = vmatprep.subr.mxu0 0.0
  %358 = vmatpush1.msra.mxu0 0.0
  %359 = vmatprep.subr.mxu0 0.0
  %360 = vmatpush1.msra.mxu0 0.0
  %361 = vmatprep.subr.mxu0 0.0
  %362 = vmatpush1.msra.mxu0 0.0
  %363 = vmatprep.subr.mxu0 0.0
  %364 = vmatpush1.msra.mxu0 0.0
  %365 = vmatprep.subr.mxu0 0.0
  %366 = vmatpush1.msra.mxu0 0.0
  %367 = vmatprep.subr.mxu0 0.0
  %368 = vmatpush1.msra.mxu0 0.0
  %369 = vmatprep.subr.mxu0 0.0
  %370 = vmatpush1.msra.mxu0 0.0
  %371 = vmatprep.subr.mxu0 0.0
  %372 = vmatpush1.msra.mxu0 0.0
  %373 = vmatprep.subr.mxu0 0.0
  %374 = vmatpush1.msra.mxu0 %v341
  %375 = vmatprep.subr.mxu0 0.0
  %376 = vmatpush2.msra.mxu0 0.0
  %377 = vmatprep.subr.mxu0 0.0
  %378 = vmatpush2.msra.mxu0 0.0
  %379 = vmatprep.subr.mxu0 0.0
  %380 = vmatpush2.msra.mxu0 0.0
  %381 = vmatprep.subr.mxu0 0.0
  %382 = vmatpush2.msra.mxu0 0.0
  %383 = vmatprep.subr.mxu0 0.0
  %384 = vmatpush2.msra.mxu0 0.0
  %385 = vmatprep.subr.mxu0 0.0
  %386 = vmatpush2.msra.mxu0 0.0
  %387 = vmatprep.subr.mxu0 0.0
  %388 = vmatpush2.msra.mxu0 0.0
  %389 = vmatprep.subr.mxu0 0.0
  %390 = vmatpush2.msra.mxu0 0.0
  %391 = vmatprep.subr.mxu0 0.0
  %392 = vmatpush2.msra.mxu0 0.0
  %393 = vmatprep.subr.mxu0 0.0
  %394 = vmatpush2.msra.mxu0 0.0
  %395 = vmatprep.subr.mxu0 0.0
  %396 = vmatpush2.msra.mxu0 0.0
  %397 = vmatprep.subr.mxu0 0.0
  %398 = vmatpush2.msra.mxu0 0.0
  %399 = vmatprep.subr.mxu0 0.0
  %400 = vmatpush2.msra.mxu0 0.0
  %401 = vmatprep.subr.mxu0 0.0
  %402 = vmatpush2.msra.mxu0 0.0
  %403 = vmatprep.subr.mxu0 0.0
  %404 = vmatpush2.msra.mxu0 0.0
  %405 = vmatprep.subr.mxu0 0.0
  %406 = vmatpush2.msra.mxu0 0.0
  %407 = vmatprep.mubr.f32.mxu0 0.0
  %408 = vmatmul.mubr.f32.gmra.mxu0 %v61
  %v409 = vpop.f32.mrf.mxu0
  %v410 = vadd.f32 %v338, %v409
  %v411 = vpop.f32.mrf.mxu0
  %412 = vmatprep.mubr.f32.mxu0 0.0
  %413 = vmatmul.mubr.f32.gmra.mxu0 %v64
  %v414 = vpop.f32.mrf.mxu0
  %v415 = vadd.f32 %v338, %v414
  %v416 = vpop.f32.mrf.mxu0
  %417 = vdwg.mxu0
  %s418 = scalar_lea.vmem [#allocation2], 48
  %419 = vst.msk [vmem:[%s418] sm:$0xff] %vm145, %v410
  %420 = vst.msk [vmem:[%s418 + $0x8] sm:$0xff] %vm145, %v415
  %v421 = vld [vmem:[%s2] sm:$0xff]
  %v422 = vld [vmem:[%s2 + $0x8] sm:$0xff]
  %v423 = vld [vmem:[%s2 + $0x10] sm:$0xff]
  %v424 = vld [vmem:[%s2 + $0x18] sm:$0xff]
  %v425 = vld [vmem:[%s2 + $0x20] sm:$0xff]
  %v426 = vld [vmem:[%s2 + $0x28] sm:$0xff]
  %v427 = vld [vmem:[%s2 + $0x30] sm:$0xff]
  %v428 = vld [vmem:[%s2 + $0x38] sm:$0xff]
  %s429 = scalar_lea.vmem %s2, 64
  %v430 = vld [vmem:[%s429] sm:$0xff]
  %v431 = vld [vmem:[%s429 + $0x8] sm:$0xff]
  %v432 = vld [vmem:[%s429 + $0x10] sm:$0xff]
  %v433 = vld [vmem:[%s429 + $0x18] sm:$0xff]
  %v434 = vld [vmem:[%s429 + $0x20] sm:$0xff]
  %v435 = vld [vmem:[%s429 + $0x28] sm:$0xff]
  %v436 = vld [vmem:[%s429 + $0x30] sm:$0xff]
  %v437 = vld [vmem:[%s429 + $0x38] sm:$0xff]
  %s438 = scalar_lea.vmem %s2, 128
  %v439 = vld [vmem:[%s438] sm:$0xff]
  %v440 = vld [vmem:[%s438 + $0x8] sm:$0xff]
  %v441 = vld [vmem:[%s438 + $0x10] sm:$0xff]
  %v442 = vld [vmem:[%s438 + $0x18] sm:$0xff]
  %v443 = vld [vmem:[%s438 + $0x20] sm:$0xff]
  %v444 = vld [vmem:[%s438 + $0x28] sm:$0xff]
  %v445 = vld [vmem:[%s438 + $0x30] sm:$0xff]
  %v446 = vld [vmem:[%s438 + $0x38] sm:$0xff]
  %s447 = scalar_lea.vmem %s2, 192
  %v448 = vld [vmem:[%s447] sm:$0xff]
  %v449 = vld [vmem:[%s447 + $0x8] sm:$0xff]
  %v450 = vld [vmem:[%s447 + $0x10] sm:$0xff]
  %v451 = vld [vmem:[%s447 + $0x18] sm:$0xff]
  %v452 = vld [vmem:[%s447 + $0x20] sm:$0xff]
  %v453 = vld [vmem:[%s447 + $0x28] sm:$0xff]
  %v454 = vld [vmem:[%s447 + $0x30] sm:$0xff]
  %v455 = vld [vmem:[%s447 + $0x38] sm:$0xff]
  %v456 = vld [vmem:[#allocation2] sm:$0x3]
  %v458 = vsel %vm145, 0.0, 0
  %460 = vmatprep.subr.mxu0 0.0
  %461 = vmatpush1.msra.mxu0 0.0
  %462 = vmatprep.subr.mxu0 0.0
  %463 = vmatpush1.msra.mxu0 0.0
  %464 = vmatprep.subr.mxu0 0.0
  %465 = vmatpush1.msra.mxu0 0.0
  %466 = vmatprep.subr.mxu0 0.0
  %467 = vmatpush1.msra.mxu0 0.0
  %468 = vmatprep.subr.mxu0 0.0
  %469 = vmatpush1.msra.mxu0 0.0
  %470 = vmatprep.subr.mxu0 0.0
  %471 = vmatpush1.msra.mxu0 0.0
  %472 = vmatprep.subr.mxu0 0.0
  %473 = vmatpush1.msra.mxu0 0.0
  %474 = vmatprep.subr.mxu0 0.0
  %475 = vmatpush1.msra.mxu0 0.0
  %476 = vmatprep.subr.mxu0 0.0
  %477 = vmatpush1.msra.mxu0 %v428
  %478 = vmatprep.subr.mxu0 0.0
  %479 = vmatpush1.msra.mxu0 %v427
  %480 = vmatprep.subr.mxu0 0.0
  %481 = vmatpush1.msra.mxu0 %v426
  %482 = vmatprep.subr.mxu0 0.0
  %483 = vmatpush1.msra.mxu0 %v425
  %484 = vmatprep.subr.mxu0 0.0
  %485 = vmatpush1.msra.mxu0 %v424
  %486 = vmatprep.subr.mxu0 0.0
  %487 = vmatpush1.msra.mxu0 %v423
  %488 = vmatprep.subr.mxu0 0.0
  %489 = vmatpush1.msra.mxu0 %v422
  %490 = vmatprep.subr.mxu0 0.0
  %491 = vmatpush1.msra.mxu0 %v421
  %492 = vmatprep.subr.mxu0 0.0
  %493 = vmatpush2.msra.mxu0 0.0
  %494 = vmatprep.subr.mxu0 0.0
  %495 = vmatpush2.msra.mxu0 0.0
  %496 = vmatprep.subr.mxu0 0.0
  %497 = vmatpush2.msra.mxu0 0.0
  %498 = vmatprep.subr.mxu0 0.0
  %499 = vmatpush2.msra.mxu0 0.0
  %500 = vmatprep.subr.mxu0 0.0
  %501 = vmatpush2.msra.mxu0 0.0
  %502 = vmatprep.subr.mxu0 0.0
  %503 = vmatpush2.msra.mxu0 0.0
  %504 = vmatprep.subr.mxu0 0.0
  %505 = vmatpush2.msra.mxu0 0.0
  %506 = vmatprep.subr.mxu0 0.0
  %507 = vmatpush2.msra.mxu0 0.0
  %508 = vmatprep.subr.mxu0 0.0
  %509 = vmatpush2.msra.mxu0 0.0
  %510 = vmatprep.subr.mxu0 0.0
  %511 = vmatpush2.msra.mxu0 0.0
  %512 = vmatprep.subr.mxu0 0.0
  %513 = vmatpush2.msra.mxu0 0.0
  %514 = vmatprep.subr.mxu0 0.0
  %515 = vmatpush2.msra.mxu0 0.0
  %516 = vmatprep.subr.mxu0 0.0
  %517 = vmatpush2.msra.mxu0 0.0
  %518 = vmatprep.subr.mxu0 0.0
  %519 = vmatpush2.msra.mxu0 0.0
  %520 = vmatprep.subr.mxu0 0.0
  %521 = vmatpush2.msra.mxu0 0.0
  %522 = vmatprep.subr.mxu0 0.0
  %523 = vmatpush2.msra.mxu0 0.0
  %524 = vmatprep.mubr.f32.mxu0 0.0
  %525 = vmatmul.mubr.f32.gmra.mxu0 %v458
  %v526 = vpop.f32.mrf.mxu0
  %v527 = vadd.f32 0.0, %v526
  %v528 = vpop.f32.mrf.mxu0
  %529 = vdwg.mxu0
  %v530 = vadd.f32 %v456, %v527
  %v531 = vxor.u32 %v530, 2147483648
  %v532 = vmul.f32 %v531, 1.442695
  %v533 = vpow.pop %v532
  %v534 = vadd.f32 %v533, 1.0
  %v535 = vrcp.pop %v534
  %v536 = vmul.f32 1.0, %v535
  %v537 = vld [vmem:[%s236] sm:$0x3]
  %538 = vmatprep.subr.mxu0 0.0
  %539 = vmatpush1.msra.mxu0 0.0
  %540 = vmatprep.subr.mxu0 0.0
  %541 = vmatpush1.msra.mxu0 0.0
  %542 = vmatprep.subr.mxu0 0.0
  %543 = vmatpush1.msra.mxu0 0.0
  %544 = vmatprep.subr.mxu0 0.0
  %545 = vmatpush1.msra.mxu0 0.0
  %546 = vmatprep.subr.mxu0 0.0
  %547 = vmatpush1.msra.mxu0 0.0
  %548 = vmatprep.subr.mxu0 0.0
  %549 = vmatpush1.msra.mxu0 0.0
  %550 = vmatprep.subr.mxu0 0.0
  %551 = vmatpush1.msra.mxu0 0.0
  %552 = vmatprep.subr.mxu0 0.0
  %553 = vmatpush1.msra.mxu0 0.0
  %554 = vmatprep.subr.mxu0 0.0
  %555 = vmatpush1.msra.mxu0 %v437
  %556 = vmatprep.subr.mxu0 0.0
  %557 = vmatpush1.msra.mxu0 %v436
  %558 = vmatprep.subr.mxu0 0.0
  %559 = vmatpush1.msra.mxu0 %v435
  %560 = vmatprep.subr.mxu0 0.0
  %561 = vmatpush1.msra.mxu0 %v434
  %562 = vmatprep.subr.mxu0 0.0
  %563 = vmatpush1.msra.mxu0 %v433
  %564 = vmatprep.subr.mxu0 0.0
  %565 = vmatpush1.msra.mxu0 %v432
  %566 = vmatprep.subr.mxu0 0.0
  %567 = vmatpush1.msra.mxu0 %v431
  %568 = vmatprep.subr.mxu0 0.0
  %569 = vmatpush1.msra.mxu0 %v430
  %570 = vmatprep.subr.mxu0 0.0
  %571 = vmatpush2.msra.mxu0 0.0
  %572 = vmatprep.subr.mxu0 0.0
  %573 = vmatpush2.msra.mxu0 0.0
  %574 = vmatprep.subr.mxu0 0.0
  %575 = vmatpush2.msra.mxu0 0.0
  %576 = vmatprep.subr.mxu0 0.0
  %577 = vmatpush2.msra.mxu0 0.0
  %578 = vmatprep.subr.mxu0 0.0
  %579 = vmatpush2.msra.mxu0 0.0
  %580 = vmatprep.subr.mxu0 0.0
  %581 = vmatpush2.msra.mxu0 0.0
  %582 = vmatprep.subr.mxu0 0.0
  %583 = vmatpush2.msra.mxu0 0.0
  %584 = vmatprep.subr.mxu0 0.0
  %585 = vmatpush2.msra.mxu0 0.0
  %586 = vmatprep.subr.mxu0 0.0
  %587 = vmatpush2.msra.mxu0 0.0
  %588 = vmatprep.subr.mxu0 0.0
  %589 = vmatpush2.msra.mxu0 0.0
  %590 = vmatprep.subr.mxu0 0.0
  %591 = vmatpush2.msra.mxu0 0.0
  %592 = vmatprep.subr.mxu0 0.0
  %593 = vmatpush2.msra.mxu0 0.0
  %594 = vmatprep.subr.mxu0 0.0
  %595 = vmatpush2.msra.mxu0 0.0
  %596 = vmatprep.subr.mxu0 0.0
  %597 = vmatpush2.msra.mxu0 0.0
  %598 = vmatprep.subr.mxu0 0.0
  %599 = vmatpush2.msra.mxu0 0.0
  %600 = vmatprep.subr.mxu0 0.0
  %601 = vmatpush2.msra.mxu0 0.0
  %602 = vmatprep.mubr.f32.mxu0 0.0
  %603 = vmatmul.mubr.f32.gmra.mxu0 %v458
  %v604 = vpop.f32.mrf.mxu0
  %v605 = vadd.f32 0.0, %v604
  %v606 = vpop.f32.mrf.mxu0
  %607 = vdwg.mxu0
  %v608 = vadd.f32 %v537, %v605
  %v609 = vxor.u32 %v608, 2147483648
  %v610 = vmul.f32 %v609, 1.442695
  %v611 = vpow.pop %v610
  %v612 = vadd.f32 %v611, 1.0
  %v613 = vrcp.pop %v612
  %v614 = vmul.f32 1.0, %v613
  %v615 = vld [vmem:[%s327] sm:$0x3]
  %616 = vmatprep.subr.mxu0 0.0
  %617 = vmatpush1.msra.mxu0 0.0
  %618 = vmatprep.subr.mxu0 0.0
  %619 = vmatpush1.msra.mxu0 0.0
  %620 = vmatprep.subr.mxu0 0.0
  %621 = vmatpush1.msra.mxu0 0.0
  %622 = vmatprep.subr.mxu0 0.0
  %623 = vmatpush1.msra.mxu0 0.0
  %624 = vmatprep.subr.mxu0 0.0
  %625 = vmatpush1.msra.mxu0 0.0
  %626 = vmatprep.subr.mxu0 0.0
  %627 = vmatpush1.msra.mxu0 0.0
  %628 = vmatprep.subr.mxu0 0.0
  %629 = vmatpush1.msra.mxu0 0.0
  %630 = vmatprep.subr.mxu0 0.0
  %631 = vmatpush1.msra.mxu0 0.0
  %632 = vmatprep.subr.mxu0 0.0
  %633 = vmatpush1.msra.mxu0 %v446
  %634 = vmatprep.subr.mxu0 0.0
  %635 = vmatpush1.msra.mxu0 %v445
  %636 = vmatprep.subr.mxu0 0.0
  %637 = vmatpush1.msra.mxu0 %v444
  %638 = vmatprep.subr.mxu0 0.0
  %639 = vmatpush1.msra.mxu0 %v443
  %640 = vmatprep.subr.mxu0 0.0
  %641 = vmatpush1.msra.mxu0 %v442
  %642 = vmatprep.subr.mxu0 0.0
  %643 = vmatpush1.msra.mxu0 %v441
  %644 = vmatprep.subr.mxu0 0.0
  %645 = vmatpush1.msra.mxu0 %v440
  %646 = vmatprep.subr.mxu0 0.0
  %647 = vmatpush1.msra.mxu0 %v439
  %648 = vmatprep.subr.mxu0 0.0
  %649 = vmatpush2.msra.mxu0 0.0
  %650 = vmatprep.subr.mxu0 0.0
  %651 = vmatpush2.msra.mxu0 0.0
  %652 = vmatprep.subr.mxu0 0.0
  %653 = vmatpush2.msra.mxu0 0.0
  %654 = vmatprep.subr.mxu0 0.0
  %655 = vmatpush2.msra.mxu0 0.0
  %656 = vmatprep.subr.mxu0 0.0
  %657 = vmatpush2.msra.mxu0 0.0
  %658 = vmatprep.subr.mxu0 0.0
  %659 = vmatpush2.msra.mxu0 0.0
  %660 = vmatprep.subr.mxu0 0.0
  %661 = vmatpush2.msra.mxu0 0.0
  %662 = vmatprep.subr.mxu0 0.0
  %663 = vmatpush2.msra.mxu0 0.0
  %664 = vmatprep.subr.mxu0 0.0
  %665 = vmatpush2.msra.mxu0 0.0
  %666 = vmatprep.subr.mxu0 0.0
  %667 = vmatpush2.msra.mxu0 0.0
  %668 = vmatprep.subr.mxu0 0.0
  %669 = vmatpush2.msra.mxu0 0.0
  %670 = vmatprep.subr.mxu0 0.0
  %671 = vmatpush2.msra.mxu0 0.0
  %672 = vmatprep.subr.mxu0 0.0
  %673 = vmatpush2.msra.mxu0 0.0
  %674 = vmatprep.subr.mxu0 0.0
  %675 = vmatpush2.msra.mxu0 0.0
  %676 = vmatprep.subr.mxu0 0.0
  %677 = vmatpush2.msra.mxu0 0.0
  %678 = vmatprep.subr.mxu0 0.0
  %679 = vmatpush2.msra.mxu0 0.0
  %680 = vmatprep.mubr.f32.mxu0 0.0
  %681 = vmatmul.mubr.f32.gmra.mxu0 %v458
  %v682 = vpop.f32.mrf.mxu0
  %v683 = vadd.f32 0.0, %v682
  %v684 = vpop.f32.mrf.mxu0
  %685 = vdwg.mxu0
  %v686 = vadd.f32 %v615, %v683
  %v687 = vtanh.pop %v686
  %v688 = vld [vmem:[%s418] sm:$0x3]
  %689 = vmatprep.subr.mxu0 0.0
  %690 = vmatpush1.msra.mxu0 0.0
  %691 = vmatprep.subr.mxu0 0.0
  %692 = vmatpush1.msra.mxu0 0.0
  %693 = vmatprep.subr.mxu0 0.0
  %694 = vmatpush1.msra.mxu0 0.0
  %695 = vmatprep.subr.mxu0 0.0
  %696 = vmatpush1.msra.mxu0 0.0
  %697 = vmatprep.subr.mxu0 0.0
  %698 = vmatpush1.msra.mxu0 0.0
  %699 = vmatprep.subr.mxu0 0.0
  %700 = vmatpush1.msra.mxu0 0.0
  %701 = vmatprep.subr.mxu0 0.0
  %702 = vmatpush1.msra.mxu0 0.0
  %703 = vmatprep.subr.mxu0 0.0
  %704 = vmatpush1.msra.mxu0 0.0
  %705 = vmatprep.subr.mxu0 0.0
  %706 = vmatpush1.msra.mxu0 %v455
  %707 = vmatprep.subr.mxu0 0.0
  %708 = vmatpush1.msra.mxu0 %v454
  %709 = vmatprep.subr.mxu0 0.0
  %710 = vmatpush1.msra.mxu0 %v453
  %711 = vmatprep.subr.mxu0 0.0
  %712 = vmatpush1.msra.mxu0 %v452
  %713 = vmatprep.subr.mxu0 0.0
  %714 = vmatpush1.msra.mxu0 %v451
  %715 = vmatprep.subr.mxu0 0.0
  %716 = vmatpush1.msra.mxu0 %v450
  %717 = vmatprep.subr.mxu0 0.0
  %718 = vmatpush1.msra.mxu0 %v449
  %719 = vmatprep.subr.mxu0 0.0
  %720 = vmatpush1.msra.mxu0 %v448
  %721 = vmatprep.subr.mxu0 0.0
  %722 = vmatpush2.msra.mxu0 0.0
  %723 = vmatprep.subr.mxu0 0.0
  %724 = vmatpush2.msra.mxu0 0.0
  %725 = vmatprep.subr.mxu0 0.0
  %726 = vmatpush2.msra.mxu0 0.0
  %727 = vmatprep.subr.mxu0 0.0
  %728 = vmatpush2.msra.mxu0 0.0
  %729 = vmatprep.subr.mxu0 0.0
  %730 = vmatpush2.msra.mxu0 0.0
  %731 = vmatprep.subr.mxu0 0.0
  %732 = vmatpush2.msra.mxu0 0.0
  %733 = vmatprep.subr.mxu0 0.0
  %734 = vmatpush2.msra.mxu0 0.0
  %735 = vmatprep.subr.mxu0 0.0
  %736 = vmatpush2.msra.mxu0 0.0
  %737 = vmatprep.subr.mxu0 0.0
  %738 = vmatpush2.msra.mxu0 0.0
  %739 = vmatprep.subr.mxu0 0.0
  %740 = vmatpush2.msra.mxu0 0.0
  %741 = vmatprep.subr.mxu0 0.0
  %742 = vmatpush2.msra.mxu0 0.0
  %743 = vmatprep.subr.mxu0 0.0
  %744 = vmatpush2.msra.mxu0 0.0
  %745 = vmatprep.subr.mxu0 0.0
  %746 = vmatpush2.msra.mxu0 0.0
  %747 = vmatprep.subr.mxu0 0.0
  %748 = vmatpush2.msra.mxu0 0.0
  %749 = vmatprep.subr.mxu0 0.0
  %750 = vmatpush2.msra.mxu0 0.0
  %751 = vmatprep.subr.mxu0 0.0
  %752 = vmatpush2.msra.mxu0 0.0
  %753 = vmatprep.mubr.f32.mxu0 0.0
  %754 = vmatmul.mubr.f32.gmra.mxu0 %v458
  %v755 = vpop.f32.mrf.mxu0
  %v756 = vadd.f32 0.0, %v755
  %v757 = vpop.f32.mrf.mxu0
  %758 = vdwg.mxu0
  %v759 = vadd.f32 %v688, %v756
  %v760 = vxor.u32 %v759, 2147483648
  %v761 = vmul.f32 %v760, 1.442695
  %v762 = vpow.pop %v761
  %v763 = vadd.f32 %v762, 1.0
  %v764 = vrcp.pop %v763
  %v765 = vmul.f32 1.0, %v764
  %v766 = vmul.f32 %v614, 0.0
  %v767 = vmul.f32 %v536, %v687
  %v768 = vadd.f32 %v766, %v767
  %v769 = vtanh.pop %v768
  %v770 = vmul.f32 %v765, %v769
  %v771 = vld [vmem:[#allocation2 + $0x2] sm:$0x3]
  %v773 = vsel %vm145, %v770, 0
  %775 = vmatprep.subr.mxu0 0.0
  %776 = vmatpush1.msra.mxu0 0.0
  %777 = vmatprep.subr.mxu0 0.0
  %778 = vmatpush1.msra.mxu0 0.0
  %779 = vmatprep.subr.mxu0 0.0
  %780 = vmatpush1.msra.mxu0 0.0
  %781 = vmatprep.subr.mxu0 0.0
  %782 = vmatpush1.msra.mxu0 0.0
  %783 = vmatprep.subr.mxu0 0.0
  %784 = vmatpush1.msra.mxu0 0.0
  %785 = vmatprep.subr.mxu0 0.0
  %786 = vmatpush1.msra.mxu0 0.0
  %787 = vmatprep.subr.mxu0 0.0
  %788 = vmatpush1.msra.mxu0 0.0
  %789 = vmatprep.subr.mxu0 0.0
  %790 = vmatpush1.msra.mxu0 0.0
  %791 = vmatprep.subr.mxu0 0.0
  %792 = vmatpush1.msra.mxu0 %v428
  %793 = vmatprep.subr.mxu0 0.0
  %794 = vmatpush1.msra.mxu0 %v427
  %795 = vmatprep.subr.mxu0 0.0
  %796 = vmatpush1.msra.mxu0 %v426
  %797 = vmatprep.subr.mxu0 0.0
  %798 = vmatpush1.msra.mxu0 %v425
  %799 = vmatprep.subr.mxu0 0.0
  %800 = vmatpush1.msra.mxu0 %v424
  %801 = vmatprep.subr.mxu0 0.0
  %802 = vmatpush1.msra.mxu0 %v423
  %803 = vmatprep.subr.mxu0 0.0
  %804 = vmatpush1.msra.mxu0 %v422
  %805 = vmatprep.subr.mxu0 0.0
  %806 = vmatpush1.msra.mxu0 %v421
  %807 = vmatprep.subr.mxu0 0.0
  %808 = vmatpush2.msra.mxu0 0.0
  %809 = vmatprep.subr.mxu0 0.0
  %810 = vmatpush2.msra.mxu0 0.0
  %811 = vmatprep.subr.mxu0 0.0
  %812 = vmatpush2.msra.mxu0 0.0
  %813 = vmatprep.subr.mxu0 0.0
  %814 = vmatpush2.msra.mxu0 0.0
  %815 = vmatprep.subr.mxu0 0.0
  %816 = vmatpush2.msra.mxu0 0.0
  %817 = vmatprep.subr.mxu0 0.0
  %818 = vmatpush2.msra.mxu0 0.0
  %819 = vmatprep.subr.mxu0 0.0
  %820 = vmatpush2.msra.mxu0 0.0
  %821 = vmatprep.subr.mxu0 0.0
  %822 = vmatpush2.msra.mxu0 0.0
  %823 = vmatprep.subr.mxu0 0.0
  %824 = vmatpush2.msra.mxu0 0.0
  %825 = vmatprep.subr.mxu0 0.0
  %826 = vmatpush2.msra.mxu0 0.0
  %827 = vmatprep.subr.mxu0 0.0
  %828 = vmatpush2.msra.mxu0 0.0
  %829 = vmatprep.subr.mxu0 0.0
  %830 = vmatpush2.msra.mxu0 0.0
  %831 = vmatprep.subr.mxu0 0.0
  %832 = vmatpush2.msra.mxu0 0.0
  %833 = vmatprep.subr.mxu0 0.0
  %834 = vmatpush2.msra.mxu0 0.0
  %835 = vmatprep.subr.mxu0 0.0
  %836 = vmatpush2.msra.mxu0 0.0
  %837 = vmatprep.subr.mxu0 0.0
  %838 = vmatpush2.msra.mxu0 0.0
  %839 = vmatprep.mubr.f32.mxu0 0.0
  %840 = vmatmul.mubr.f32.gmra.mxu0 %v773
  %v841 = vpop.f32.mrf.mxu0
  %v842 = vadd.f32 0.0, %v841
  %v843 = vpop.f32.mrf.mxu0
  %844 = vdwg.mxu0
  %v845 = vadd.f32 %v771, %v842
  %v846 = vxor.u32 %v845, 2147483648
  %v847 = vmul.f32 %v846, 1.442695
  %v848 = vpow.pop %v847
  %v849 = vadd.f32 %v848, 1.0
  %v850 = vrcp.pop %v849
  %v851 = vmul.f32 1.0, %v850
  %v852 = vld [vmem:[%s236 + $0x2] sm:$0x3]
  %853 = vmatprep.subr.mxu0 0.0
  %854 = vmatpush1.msra.mxu0 0.0
  %855 = vmatprep.subr.mxu0 0.0
  %856 = vmatpush1.msra.mxu0 0.0
  %857 = vmatprep.subr.mxu0 0.0
  %858 = vmatpush1.msra.mxu0 0.0
  %859 = vmatprep.subr.mxu0 0.0
  %860 = vmatpush1.msra.mxu0 0.0
  %861 = vmatprep.subr.mxu0 0.0
  %862 = vmatpush1.msra.mxu0 0.0
  %863 = vmatprep.subr.mxu0 0.0
  %864 = vmatpush1.msra.mxu0 0.0
  %865 = vmatprep.subr.mxu0 0.0
  %866 = vmatpush1.msra.mxu0 0.0
  %867 = vmatprep.subr.mxu0 0.0
  %868 = vmatpush1.msra.mxu0 0.0
  %869 = vmatprep.subr.mxu0 0.0
  %870 = vmatpush1.msra.mxu0 %v437
  %871 = vmatprep.subr.mxu0 0.0
  %872 = vmatpush1.msra.mxu0 %v436
  %873 = vmatprep.subr.mxu0 0.0
  %874 = vmatpush1.msra.mxu0 %v435
  %875 = vmatprep.subr.mxu0 0.0
  %876 = vmatpush1.msra.mxu0 %v434
  %877 = vmatprep.subr.mxu0 0.0
  %878 = vmatpush1.msra.mxu0 %v433
  %879 = vmatprep.subr.mxu0 0.0
  %880 = vmatpush1.msra.mxu0 %v432
  %881 = vmatprep.subr.mxu0 0.0
  %882 = vmatpush1.msra.mxu0 %v431
  %883 = vmatprep.subr.mxu0 0.0
  %884 = vmatpush1.msra.mxu0 %v430
  %885 = vmatprep.subr.mxu0 0.0
  %886 = vmatpush2.msra.mxu0 0.0
  %887 = vmatprep.subr.mxu0 0.0
  %888 = vmatpush2.msra.mxu0 0.0
  %889 = vmatprep.subr.mxu0 0.0
  %890 = vmatpush2.msra.mxu0 0.0
  %891 = vmatprep.subr.mxu0 0.0
  %892 = vmatpush2.msra.mxu0 0.0
  %893 = vmatprep.subr.mxu0 0.0
  %894 = vmatpush2.msra.mxu0 0.0
  %895 = vmatprep.subr.mxu0 0.0
  %896 = vmatpush2.msra.mxu0 0.0
  %897 = vmatprep.subr.mxu0 0.0
  %898 = vmatpush2.msra.mxu0 0.0
  %899 = vmatprep.subr.mxu0 0.0
  %900 = vmatpush2.msra.mxu0 0.0
  %901 = vmatprep.subr.mxu0 0.0
  %902 = vmatpush2.msra.mxu0 0.0
  %903 = vmatprep.subr.mxu0 0.0
  %904 = vmatpush2.msra.mxu0 0.0
  %905 = vmatprep.subr.mxu0 0.0
  %906 = vmatpush2.msra.mxu0 0.0
  %907 = vmatprep.subr.mxu0 0.0
  %908 = vmatpush2.msra.mxu0 0.0
  %909 = vmatprep.subr.mxu0 0.0
  %910 = vmatpush2.msra.mxu0 0.0
  %911 = vmatprep.subr.mxu0 0.0
  %912 = vmatpush2.msra.mxu0 0.0
  %913 = vmatprep.subr.mxu0 0.0
  %914 = vmatpush2.msra.mxu0 0.0
  %915 = vmatprep.subr.mxu0 0.0
  %916 = vmatpush2.msra.mxu0 0.0
  %917 = vmatprep.mubr.f32.mxu0 0.0
  %918 = vmatmul.mubr.f32.gmra.mxu0 %v773
  %v919 = vpop.f32.mrf.mxu0
  %v920 = vadd.f32 0.0, %v919
  %v921 = vpop.f32.mrf.mxu0
  %922 = vdwg.mxu0
  %v923 = vadd.f32 %v852, %v920
  %v924 = vxor.u32 %v923, 2147483648
  %v925 = vmul.f32 %v924, 1.442695
  %v926 = vpow.pop %v925
  %v927 = vadd.f32 %v926, 1.0
  %v928 = vrcp.pop %v927
  %v929 = vmul.f32 1.0, %v928
  %v930 = vld [vmem:[%s327 + $0x2] sm:$0x3]
  %931 = vmatprep.subr.mxu0 0.0
  %932 = vmatpush1.msra.mxu0 0.0
  %933 = vmatprep.subr.mxu0 0.0
  %934 = vmatpush1.msra.mxu0 0.0
  %935 = vmatprep.subr.mxu0 0.0
  %936 = vmatpush1.msra.mxu0 0.0
  %937 = vmatprep.subr.mxu0 0.0
  %938 = vmatpush1.msra.mxu0 0.0
  %939 = vmatprep.subr.mxu0 0.0
  %940 = vmatpush1.msra.mxu0 0.0
  %941 = vmatprep.subr.mxu0 0.0
  %942 = vmatpush1.msra.mxu0 0.0
  %943 = vmatprep.subr.mxu0 0.0
  %944 = vmatpush1.msra.mxu0 0.0
  %945 = vmatprep.subr.mxu0 0.0
  %946 = vmatpush1.msra.mxu0 0.0
  %947 = vmatprep.subr.mxu0 0.0
  %948 = vmatpush1.msra.mxu0 %v446
  %949 = vmatprep.subr.mxu0 0.0
  %950 = vmatpush1.msra.mxu0 %v445
  %951 = vmatprep.subr.mxu0 0.0
  %952 = vmatpush1.msra.mxu0 %v444
  %953 = vmatprep.subr.mxu0 0.0
  %954 = vmatpush1.msra.mxu0 %v443
  %955 = vmatprep.subr.mxu0 0.0
  %956 = vmatpush1.msra.mxu0 %v442
  %957 = vmatprep.subr.mxu0 0.0
  %958 = vmatpush1.msra.mxu0 %v441
  %959 = vmatprep.subr.mxu0 0.0
  %960 = vmatpush1.msra.mxu0 %v440
  %961 = vmatprep.subr.mxu0 0.0
  %962 = vmatpush1.msra.mxu0 %v439
  %963 = vmatprep.subr.mxu0 0.0
  %964 = vmatpush2.msra.mxu0 0.0
  %965 = vmatprep.subr.mxu0 0.0
  %966 = vmatpush2.msra.mxu0 0.0
  %967 = vmatprep.subr.mxu0 0.0
  %968 = vmatpush2.msra.mxu0 0.0
  %969 = vmatprep.subr.mxu0 0.0
  %970 = vmatpush2.msra.mxu0 0.0
  %971 = vmatprep.subr.mxu0 0.0
  %972 = vmatpush2.msra.mxu0 0.0
  %973 = vmatprep.subr.mxu0 0.0
  %974 = vmatpush2.msra.mxu0 0.0
  %975 = vmatprep.subr.mxu0 0.0
  %976 = vmatpush2.msra.mxu0 0.0
  %977 = vmatprep.subr.mxu0 0.0
  %978 = vmatpush2.msra.mxu0 0.0
  %979 = vmatprep.subr.mxu0 0.0
  %980 = vmatpush2.msra.mxu0 0.0
  %981 = vmatprep.subr.mxu0 0.0
  %982 = vmatpush2.msra.mxu0 0.0
  %983 = vmatprep.subr.mxu0 0.0
  %984 = vmatpush2.msra.mxu0 0.0
  %985 = vmatprep.subr.mxu0 0.0
  %986 = vmatpush2.msra.mxu0 0.0
  %987 = vmatprep.subr.mxu0 0.0
  %988 = vmatpush2.msra.mxu0 0.0
  %989 = vmatprep.subr.mxu0 0.0
  %990 = vmatpush2.msra.mxu0 0.0
  %991 = vmatprep.subr.mxu0 0.0
  %992 = vmatpush2.msra.mxu0 0.0
  %993 = vmatprep.subr.mxu0 0.0
  %994 = vmatpush2.msra.mxu0 0.0
  %995 = vmatprep.mubr.f32.mxu0 0.0
  %996 = vmatmul.mubr.f32.gmra.mxu0 %v773
  %v997 = vpop.f32.mrf.mxu0
  %v998 = vadd.f32 0.0, %v997
  %v999 = vpop.f32.mrf.mxu0
  %1000 = vdwg.mxu0
  %v1001 = vadd.f32 %v930, %v998
  %v1002 = vtanh.pop %v1001
  %v1003 = vld [vmem:[%s418 + $0x2] sm:$0x3]
  %1004 = vmatprep.subr.mxu0 0.0
  %1005 = vmatpush1.msra.mxu0 0.0
  %1006 = vmatprep.subr.mxu0 0.0
  %1007 = vmatpush1.msra.mxu0 0.0
  %1008 = vmatprep.subr.mxu0 0.0
  %1009 = vmatpush1.msra.mxu0 0.0
  %1010 = vmatprep.subr.mxu0 0.0
  %1011 = vmatpush1.msra.mxu0 0.0
  %1012 = vmatprep.subr.mxu0 0.0
  %1013 = vmatpush1.msra.mxu0 0.0
  %1014 = vmatprep.subr.mxu0 0.0
  %1015 = vmatpush1.msra.mxu0 0.0
  %1016 = vmatprep.subr.mxu0 0.0
  %1017 = vmatpush1.msra.mxu0 0.0
  %1018 = vmatprep.subr.mxu0 0.0
  %1019 = vmatpush1.msra.mxu0 0.0
  %1020 = vmatprep.subr.mxu0 0.0
  %1021 = vmatpush1.msra.mxu0 %v455
  %1022 = vmatprep.subr.mxu0 0.0
  %1023 = vmatpush1.msra.mxu0 %v454
  %1024 = vmatprep.subr.mxu0 0.0
  %1025 = vmatpush1.msra.mxu0 %v453
  %1026 = vmatprep.subr.mxu0 0.0
  %1027 = vmatpush1.msra.mxu0 %v452
  %1028 = vmatprep.subr.mxu0 0.0
  %1029 = vmatpush1.msra.mxu0 %v451
  %1030 = vmatprep.subr.mxu0 0.0
  %1031 = vmatpush1.msra.mxu0 %v450
  %1032 = vmatprep.subr.mxu0 0.0
  %1033 = vmatpush1.msra.mxu0 %v449
  %1034 = vmatprep.subr.mxu0 0.0
  %1035 = vmatpush1.msra.mxu0 %v448
  %1036 = vmatprep.subr.mxu0 0.0
  %1037 = vmatpush2.msra.mxu0 0.0
  %1038 = vmatprep.subr.mxu0 0.0
  %1039 = vmatpush2.msra.mxu0 0.0
  %1040 = vmatprep.subr.mxu0 0.0
  %1041 = vmatpush2.msra.mxu0 0.0
  %1042 = vmatprep.subr.mxu0 0.0
  %1043 = vmatpush2.msra.mxu0 0.0
  %1044 = vmatprep.subr.mxu0 0.0
  %1045 = vmatpush2.msra.mxu0 0.0
  %1046 = vmatprep.subr.mxu0 0.0
  %1047 = vmatpush2.msra.mxu0 0.0
  %1048 = vmatprep.subr.mxu0 0.0
  %1049 = vmatpush2.msra.mxu0 0.0
  %1050 = vmatprep.subr.mxu0 0.0
  %1051 = vmatpush2.msra.mxu0 0.0
  %1052 = vmatprep.subr.mxu0 0.0
  %1053 = vmatpush2.msra.mxu0 0.0
  %1054 = vmatprep.subr.mxu0 0.0
  %1055 = vmatpush2.msra.mxu0 0.0
  %1056 = vmatprep.subr.mxu0 0.0
  %1057 = vmatpush2.msra.mxu0 0.0
  %1058 = vmatprep.subr.mxu0 0.0
  %1059 = vmatpush2.msra.mxu0 0.0
  %1060 = vmatprep.subr.mxu0 0.0
  %1061 = vmatpush2.msra.mxu0 0.0
  %1062 = vmatprep.subr.mxu0 0.0
  %1063 = vmatpush2.msra.mxu0 0.0
  %1064 = vmatprep.subr.mxu0 0.0
  %1065 = vmatpush2.msra.mxu0 0.0
  %1066 = vmatprep.subr.mxu0 0.0
  %1067 = vmatpush2.msra.mxu0 0.0
  %1068 = vmatprep.mubr.f32.mxu0 0.0
  %1069 = vmatmul.mubr.f32.gmra.mxu0 %v773
  %v1070 = vpop.f32.mrf.mxu0
  %v1071 = vadd.f32 0.0, %v1070
  %v1072 = vpop.f32.mrf.mxu0
  %1073 = vdwg.mxu0
  %v1074 = vadd.f32 %v1003, %v1071
  %v1075 = vxor.u32 %v1074, 2147483648
  %v1076 = vmul.f32 %v1075, 1.442695
  %v1077 = vpow.pop %v1076
  %v1078 = vadd.f32 %v1077, 1.0
  %v1079 = vrcp.pop %v1078
  %v1080 = vmul.f32 1.0, %v1079
  %v1081 = vmul.f32 %v929, %v768
  %v1082 = vmul.f32 %v851, %v1002
  %v1083 = vadd.f32 %v1081, %v1082
  %v1084 = vtanh.pop %v1083
  %v1085 = vmul.f32 %v1080, %v1084
  %v1086 = vld [vmem:[#allocation2 + $0x4] sm:$0x3]
  %v1088 = vsel %vm145, %v1085, 0
  %1090 = vmatprep.subr.mxu0 0.0
  %1091 = vmatpush1.msra.mxu0 0.0
  %1092 = vmatprep.subr.mxu0 0.0
  %1093 = vmatpush1.msra.mxu0 0.0
  %1094 = vmatprep.subr.mxu0 0.0
  %1095 = vmatpush1.msra.mxu0 0.0
  %1096 = vmatprep.subr.mxu0 0.0
  %1097 = vmatpush1.msra.mxu0 0.0
  %1098 = vmatprep.subr.mxu0 0.0
  %1099 = vmatpush1.msra.mxu0 0.0
  %1100 = vmatprep.subr.mxu0 0.0
  %1101 = vmatpush1.msra.mxu0 0.0
  %1102 = vmatprep.subr.mxu0 0.0
  %1103 = vmatpush1.msra.mxu0 0.0
  %1104 = vmatprep.subr.mxu0 0.0
  %1105 = vmatpush1.msra.mxu0 0.0
  %1106 = vmatprep.subr.mxu0 0.0
  %1107 = vmatpush1.msra.mxu0 %v428
  %1108 = vmatprep.subr.mxu0 0.0
  %1109 = vmatpush1.msra.mxu0 %v427
  %1110 = vmatprep.subr.mxu0 0.0
  %1111 = vmatpush1.msra.mxu0 %v426
  %1112 = vmatprep.subr.mxu0 0.0
  %1113 = vmatpush1.msra.mxu0 %v425
  %1114 = vmatprep.subr.mxu0 0.0
  %1115 = vmatpush1.msra.mxu0 %v424
  %1116 = vmatprep.subr.mxu0 0.0
  %1117 = vmatpush1.msra.mxu0 %v423
  %1118 = vmatprep.subr.mxu0 0.0
  %1119 = vmatpush1.msra.mxu0 %v422
  %1120 = vmatprep.subr.mxu0 0.0
  %1121 = vmatpush1.msra.mxu0 %v421
  %1122 = vmatprep.subr.mxu0 0.0
  %1123 = vmatpush2.msra.mxu0 0.0
  %1124 = vmatprep.subr.mxu0 0.0
  %1125 = vmatpush2.msra.mxu0 0.0
  %1126 = vmatprep.subr.mxu0 0.0
  %1127 = vmatpush2.msra.mxu0 0.0
  %1128 = vmatprep.subr.mxu0 0.0
  %1129 = vmatpush2.msra.mxu0 0.0
  %1130 = vmatprep.subr.mxu0 0.0
  %1131 = vmatpush2.msra.mxu0 0.0
  %1132 = vmatprep.subr.mxu0 0.0
  %1133 = vmatpush2.msra.mxu0 0.0
  %1134 = vmatprep.subr.mxu0 0.0
  %1135 = vmatpush2.msra.mxu0 0.0
  %1136 = vmatprep.subr.mxu0 0.0
  %1137 = vmatpush2.msra.mxu0 0.0
  %1138 = vmatprep.subr.mxu0 0.0
  %1139 = vmatpush2.msra.mxu0 0.0
  %1140 = vmatprep.subr.mxu0 0.0
  %1141 = vmatpush2.msra.mxu0 0.0
  %1142 = vmatprep.subr.mxu0 0.0
  %1143 = vmatpush2.msra.mxu0 0.0
  %1144 = vmatprep.subr.mxu0 0.0
  %1145 = vmatpush2.msra.mxu0 0.0
  %1146 = vmatprep.subr.mxu0 0.0
  %1147 = vmatpush2.msra.mxu0 0.0
  %1148 = vmatprep.subr.mxu0 0.0
  %1149 = vmatpush2.msra.mxu0 0.0
  %1150 = vmatprep.subr.mxu0 0.0
  %1151 = vmatpush2.msra.mxu0 0.0
  %1152 = vmatprep.subr.mxu0 0.0
  %1153 = vmatpush2.msra.mxu0 0.0
  %1154 = vmatprep.mubr.f32.mxu0 0.0
  %1155 = vmatmul.mubr.f32.gmra.mxu0 %v1088
  %v1156 = vpop.f32.mrf.mxu0
  %v1157 = vadd.f32 0.0, %v1156
  %v1158 = vpop.f32.mrf.mxu0
  %1159 = vdwg.mxu0
  %v1160 = vadd.f32 %v1086, %v1157
  %v1161 = vxor.u32 %v1160, 2147483648
  %v1162 = vmul.f32 %v1161, 1.442695
  %v1163 = vpow.pop %v1162
  %v1164 = vadd.f32 %v1163, 1.0
  %v1165 = vrcp.pop %v1164
  %v1166 = vmul.f32 1.0, %v1165
  %v1167 = vld [vmem:[%s236 + $0x4] sm:$0x3]
  %1168 = vmatprep.subr.mxu0 0.0
  %1169 = vmatpush1.msra.mxu0 0.0
  %1170 = vmatprep.subr.mxu0 0.0
  %1171 = vmatpush1.msra.mxu0 0.0
  %1172 = vmatprep.subr.mxu0 0.0
  %1173 = vmatpush1.msra.mxu0 0.0
  %1174 = vmatprep.subr.mxu0 0.0
  %1175 = vmatpush1.msra.mxu0 0.0
  %1176 = vmatprep.subr.mxu0 0.0
  %1177 = vmatpush1.msra.mxu0 0.0
  %1178 = vmatprep.subr.mxu0 0.0
  %1179 = vmatpush1.msra.mxu0 0.0
  %1180 = vmatprep.subr.mxu0 0.0
  %1181 = vmatpush1.msra.mxu0 0.0
  %1182 = vmatprep.subr.mxu0 0.0
  %1183 = vmatpush1.msra.mxu0 0.0
  %1184 = vmatprep.subr.mxu0 0.0
  %1185 = vmatpush1.msra.mxu0 %v437
  %1186 = vmatprep.subr.mxu0 0.0
  %1187 = vmatpush1.msra.mxu0 %v436
  %1188 = vmatprep.subr.mxu0 0.0
  %1189 = vmatpush1.msra.mxu0 %v435
  %1190 = vmatprep.subr.mxu0 0.0
  %1191 = vmatpush1.msra.mxu0 %v434
  %1192 = vmatprep.subr.mxu0 0.0
  %1193 = vmatpush1.msra.mxu0 %v433
  %1194 = vmatprep.subr.mxu0 0.0
  %1195 = vmatpush1.msra.mxu0 %v432
  %1196 = vmatprep.subr.mxu0 0.0
  %1197 = vmatpush1.msra.mxu0 %v431
  %1198 = vmatprep.subr.mxu0 0.0
  %1199 = vmatpush1.msra.mxu0 %v430
  %1200 = vmatprep.subr.mxu0 0.0
  %1201 = vmatpush2.msra.mxu0 0.0
  %1202 = vmatprep.subr.mxu0 0.0
  %1203 = vmatpush2.msra.mxu0 0.0
  %1204 = vmatprep.subr.mxu0 0.0
  %1205 = vmatpush2.msra.mxu0 0.0
  %1206 = vmatprep.subr.mxu0 0.0
  %1207 = vmatpush2.msra.mxu0 0.0
  %1208 = vmatprep.subr.mxu0 0.0
  %1209 = vmatpush2.msra.mxu0 0.0
  %1210 = vmatprep.subr.mxu0 0.0
  %1211 = vmatpush2.msra.mxu0 0.0
  %1212 = vmatprep.subr.mxu0 0.0
  %1213 = vmatpush2.msra.mxu0 0.0
  %1214 = vmatprep.subr.mxu0 0.0
  %1215 = vmatpush2.msra.mxu0 0.0
  %1216 = vmatprep.subr.mxu0 0.0
  %1217 = vmatpush2.msra.mxu0 0.0
  %1218 = vmatprep.subr.mxu0 0.0
  %1219 = vmatpush2.msra.mxu0 0.0
  %1220 = vmatprep.subr.mxu0 0.0
  %1221 = vmatpush2.msra.mxu0 0.0
  %1222 = vmatprep.subr.mxu0 0.0
  %1223 = vmatpush2.msra.mxu0 0.0
  %1224 = vmatprep.subr.mxu0 0.0
  %1225 = vmatpush2.msra.mxu0 0.0
  %1226 = vmatprep.subr.mxu0 0.0
  %1227 = vmatpush2.msra.mxu0 0.0
  %1228 = vmatprep.subr.mxu0 0.0
  %1229 = vmatpush2.msra.mxu0 0.0
  %1230 = vmatprep.subr.mxu0 0.0
  %1231 = vmatpush2.msra.mxu0 0.0
  %1232 = vmatprep.mubr.f32.mxu0 0.0
  %1233 = vmatmul.mubr.f32.gmra.mxu0 %v1088
  %v1234 = vpop.f32.mrf.mxu0
  %v1235 = vadd.f32 0.0, %v1234
  %v1236 = vpop.f32.mrf.mxu0
  %1237 = vdwg.mxu0
  %v1238 = vadd.f32 %v1167, %v1235
  %v1239 = vxor.u32 %v1238, 2147483648
  %v1240 = vmul.f32 %v1239, 1.442695
  %v1241 = vpow.pop %v1240
  %v1242 = vadd.f32 %v1241, 1.0
  %v1243 = vrcp.pop %v1242
  %v1244 = vmul.f32 1.0, %v1243
  %v1245 = vld [vmem:[%s327 + $0x4] sm:$0x3]
  %1246 = vmatprep.subr.mxu0 0.0
  %1247 = vmatpush1.msra.mxu0 0.0
  %1248 = vmatprep.subr.mxu0 0.0
  %1249 = vmatpush1.msra.mxu0 0.0
  %1250 = vmatprep.subr.mxu0 0.0
  %1251 = vmatpush1.msra.mxu0 0.0
  %1252 = vmatprep.subr.mxu0 0.0
  %1253 = vmatpush1.msra.mxu0 0.0
  %1254 = vmatprep.subr.mxu0 0.0
  %1255 = vmatpush1.msra.mxu0 0.0
  %1256 = vmatprep.subr.mxu0 0.0
  %1257 = vmatpush1.msra.mxu0 0.0
  %1258 = vmatprep.subr.mxu0 0.0
  %1259 = vmatpush1.msra.mxu0 0.0
  %1260 = vmatprep.subr.mxu0 0.0
  %1261 = vmatpush1.msra.mxu0 0.0
  %1262 = vmatprep.subr.mxu0 0.0
  %1263 = vmatpush1.msra.mxu0 %v446
  %1264 = vmatprep.subr.mxu0 0.0
  %1265 = vmatpush1.msra.mxu0 %v445
  %1266 = vmatprep.subr.mxu0 0.0
  %1267 = vmatpush1.msra.mxu0 %v444
  %1268 = vmatprep.subr.mxu0 0.0
  %1269 = vmatpush1.msra.mxu0 %v443
  %1270 = vmatprep.subr.mxu0 0.0
  %1271 = vmatpush1.msra.mxu0 %v442
  %1272 = vmatprep.subr.mxu0 0.0
  %1273 = vmatpush1.msra.mxu0 %v441
  %1274 = vmatprep.subr.mxu0 0.0
  %1275 = vmatpush1.msra.mxu0 %v440
  %1276 = vmatprep.subr.mxu0 0.0
  %1277 = vmatpush1.msra.mxu0 %v439
  %1278 = vmatprep.subr.mxu0 0.0
  %1279 = vmatpush2.msra.mxu0 0.0
  %1280 = vmatprep.subr.mxu0 0.0
  %1281 = vmatpush2.msra.mxu0 0.0
  %1282 = vmatprep.subr.mxu0 0.0
  %1283 = vmatpush2.msra.mxu0 0.0
  %1284 = vmatprep.subr.mxu0 0.0
  %1285 = vmatpush2.msra.mxu0 0.0
  %1286 = vmatprep.subr.mxu0 0.0
  %1287 = vmatpush2.msra.mxu0 0.0
  %1288 = vmatprep.subr.mxu0 0.0
  %1289 = vmatpush2.msra.mxu0 0.0
  %1290 = vmatprep.subr.mxu0 0.0
  %1291 = vmatpush2.msra.mxu0 0.0
  %1292 = vmatprep.subr.mxu0 0.0
  %1293 = vmatpush2.msra.mxu0 0.0
  %1294 = vmatprep.subr.mxu0 0.0
  %1295 = vmatpush2.msra.mxu0 0.0
  %1296 = vmatprep.subr.mxu0 0.0
  %1297 = vmatpush2.msra.mxu0 0.0
  %1298 = vmatprep.subr.mxu0 0.0
  %1299 = vmatpush2.msra.mxu0 0.0
  %1300 = vmatprep.subr.mxu0 0.0
  %1301 = vmatpush2.msra.mxu0 0.0
  %1302 = vmatprep.subr.mxu0 0.0
  %1303 = vmatpush2.msra.mxu0 0.0
  %1304 = vmatprep.subr.mxu0 0.0
  %1305 = vmatpush2.msra.mxu0 0.0
  %1306 = vmatprep.subr.mxu0 0.0
  %1307 = vmatpush2.msra.mxu0 0.0
  %1308 = vmatprep.subr.mxu0 0.0
  %1309 = vmatpush2.msra.mxu0 0.0
  %1310 = vmatprep.mubr.f32.mxu0 0.0
  %1311 = vmatmul.mubr.f32.gmra.mxu0 %v1088
  %v1312 = vpop.f32.mrf.mxu0
  %v1313 = vadd.f32 0.0, %v1312
  %v1314 = vpop.f32.mrf.mxu0
  %1315 = vdwg.mxu0
  %v1316 = vadd.f32 %v1245, %v1313
  %v1317 = vtanh.pop %v1316
  %v1318 = vld [vmem:[%s418 + $0x4] sm:$0x3]
  %1319 = vmatprep.subr.mxu0 0.0
  %1320 = vmatpush1.msra.mxu0 0.0
  %1321 = vmatprep.subr.mxu0 0.0
  %1322 = vmatpush1.msra.mxu0 0.0
  %1323 = vmatprep.subr.mxu0 0.0
  %1324 = vmatpush1.msra.mxu0 0.0
  %1325 = vmatprep.subr.mxu0 0.0
  %1326 = vmatpush1.msra.mxu0 0.0
  %1327 = vmatprep.subr.mxu0 0.0
  %1328 = vmatpush1.msra.mxu0 0.0
  %1329 = vmatprep.subr.mxu0 0.0
  %1330 = vmatpush1.msra.mxu0 0.0
  %1331 = vmatprep.subr.mxu0 0.0
  %1332 = vmatpush1.msra.mxu0 0.0
  %1333 = vmatprep.subr.mxu0 0.0
  %1334 = vmatpush1.msra.mxu0 0.0
  %1335 = vmatprep.subr.mxu0 0.0
  %1336 = vmatpush1.msra.mxu0 %v455
  %1337 = vmatprep.subr.mxu0 0.0
  %1338 = vmatpush1.msra.mxu0 %v454
  %1339 = vmatprep.subr.mxu0 0.0
  %1340 = vmatpush1.msra.mxu0 %v453
  %1341 = vmatprep.subr.mxu0 0.0
  %1342 = vmatpush1.msra.mxu0 %v452
  %1343 = vmatprep.subr.mxu0 0.0
  %1344 = vmatpush1.msra.mxu0 %v451
  %1345 = vmatprep.subr.mxu0 0.0
  %1346 = vmatpush1.msra.mxu0 %v450
  %1347 = vmatprep.subr.mxu0 0.0
  %1348 = vmatpush1.msra.mxu0 %v449
  %1349 = vmatprep.subr.mxu0 0.0
  %1350 = vmatpush1.msra.mxu0 %v448
  %1351 = vmatprep.subr.mxu0 0.0
  %1352 = vmatpush2.msra.mxu0 0.0
  %1353 = vmatprep.subr.mxu0 0.0
  %1354 = vmatpush2.msra.mxu0 0.0
  %1355 = vmatprep.subr.mxu0 0.0
  %1356 = vmatpush2.msra.mxu0 0.0
  %1357 = vmatprep.subr.mxu0 0.0
  %1358 = vmatpush2.msra.mxu0 0.0
  %1359 = vmatprep.subr.mxu0 0.0
  %1360 = vmatpush2.msra.mxu0 0.0
  %1361 = vmatprep.subr.mxu0 0.0
  %1362 = vmatpush2.msra.mxu0 0.0
  %1363 = vmatprep.subr.mxu0 0.0
  %1364 = vmatpush2.msra.mxu0 0.0
  %1365 = vmatprep.subr.mxu0 0.0
  %1366 = vmatpush2.msra.mxu0 0.0
  %1367 = vmatprep.subr.mxu0 0.0
  %1368 = vmatpush2.msra.mxu0 0.0
  %1369 = vmatprep.subr.mxu0 0.0
  %1370 = vmatpush2.msra.mxu0 0.0
  %1371 = vmatprep.subr.mxu0 0.0
  %1372 = vmatpush2.msra.mxu0 0.0
  %1373 = vmatprep.subr.mxu0 0.0
  %1374 = vmatpush2.msra.mxu0 0.0
  %1375 = vmatprep.subr.mxu0 0.0
  %1376 = vmatpush2.msra.mxu0 0.0
  %1377 = vmatprep.subr.mxu0 0.0
  %1378 = vmatpush2.msra.mxu0 0.0
  %1379 = vmatprep.subr.mxu0 0.0
  %1380 = vmatpush2.msra.mxu0 0.0
  %1381 = vmatprep.subr.mxu0 0.0
  %1382 = vmatpush2.msra.mxu0 0.0
  %1383 = vmatprep.mubr.f32.mxu0 0.0
  %1384 = vmatmul.mubr.f32.gmra.mxu0 %v1088
  %v1385 = vpop.f32.mrf.mxu0
  %v1386 = vadd.f32 0.0, %v1385
  %v1387 = vpop.f32.mrf.mxu0
  %1388 = vdwg.mxu0
  %v1389 = vadd.f32 %v1318, %v1386
  %v1390 = vxor.u32 %v1389, 2147483648
  %v1391 = vmul.f32 %v1390, 1.442695
  %v1392 = vpow.pop %v1391
  %v1393 = vadd.f32 %v1392, 1.0
  %v1394 = vrcp.pop %v1393
  %v1395 = vmul.f32 1.0, %v1394
  %v1396 = vmul.f32 %v1244, %v1083
  %v1397 = vmul.f32 %v1166, %v1317
  %v1398 = vadd.f32 %v1396, %v1397
  %v1399 = vtanh.pop %v1398
  %v1400 = vmul.f32 %v1395, %v1399
  %v1401 = vld [vmem:[#allocation2 + $0x6] sm:$0x3]
  %v1403 = vsel %vm145, %v1400, 0
  %1405 = vmatprep.subr.mxu0 0.0
  %1406 = vmatpush1.msra.mxu0 0.0
  %1407 = vmatprep.subr.mxu0 0.0
  %1408 = vmatpush1.msra.mxu0 0.0
  %1409 = vmatprep.subr.mxu0 0.0
  %1410 = vmatpush1.msra.mxu0 0.0
  %1411 = vmatprep.subr.mxu0 0.0
  %1412 = vmatpush1.msra.mxu0 0.0
  %1413 = vmatprep.subr.mxu0 0.0
  %1414 = vmatpush1.msra.mxu0 0.0
  %1415 = vmatprep.subr.mxu0 0.0
  %1416 = vmatpush1.msra.mxu0 0.0
  %1417 = vmatprep.subr.mxu0 0.0
  %1418 = vmatpush1.msra.mxu0 0.0
  %1419 = vmatprep.subr.mxu0 0.0
  %1420 = vmatpush1.msra.mxu0 0.0
  %1421 = vmatprep.subr.mxu0 0.0
  %1422 = vmatpush1.msra.mxu0 %v428
  %1423 = vmatprep.subr.mxu0 0.0
  %1424 = vmatpush1.msra.mxu0 %v427
  %1425 = vmatprep.subr.mxu0 0.0
  %1426 = vmatpush1.msra.mxu0 %v426
  %1427 = vmatprep.subr.mxu0 0.0
  %1428 = vmatpush1.msra.mxu0 %v425
  %1429 = vmatprep.subr.mxu0 0.0
  %1430 = vmatpush1.msra.mxu0 %v424
  %1431 = vmatprep.subr.mxu0 0.0
  %1432 = vmatpush1.msra.mxu0 %v423
  %1433 = vmatprep.subr.mxu0 0.0
  %1434 = vmatpush1.msra.mxu0 %v422
  %1435 = vmatprep.subr.mxu0 0.0
  %1436 = vmatpush1.msra.mxu0 %v421
  %1437 = vmatprep.subr.mxu0 0.0
  %1438 = vmatpush2.msra.mxu0 0.0
  %1439 = vmatprep.subr.mxu0 0.0
  %1440 = vmatpush2.msra.mxu0 0.0
  %1441 = vmatprep.subr.mxu0 0.0
  %1442 = vmatpush2.msra.mxu0 0.0
  %1443 = vmatprep.subr.mxu0 0.0
  %1444 = vmatpush2.msra.mxu0 0.0
  %1445 = vmatprep.subr.mxu0 0.0
  %1446 = vmatpush2.msra.mxu0 0.0
  %1447 = vmatprep.subr.mxu0 0.0
  %1448 = vmatpush2.msra.mxu0 0.0
  %1449 = vmatprep.subr.mxu0 0.0
  %1450 = vmatpush2.msra.mxu0 0.0
  %1451 = vmatprep.subr.mxu0 0.0
  %1452 = vmatpush2.msra.mxu0 0.0
  %1453 = vmatprep.subr.mxu0 0.0
  %1454 = vmatpush2.msra.mxu0 0.0
  %1455 = vmatprep.subr.mxu0 0.0
  %1456 = vmatpush2.msra.mxu0 0.0
  %1457 = vmatprep.subr.mxu0 0.0
  %1458 = vmatpush2.msra.mxu0 0.0
  %1459 = vmatprep.subr.mxu0 0.0
  %1460 = vmatpush2.msra.mxu0 0.0
  %1461 = vmatprep.subr.mxu0 0.0
  %1462 = vmatpush2.msra.mxu0 0.0
  %1463 = vmatprep.subr.mxu0 0.0
  %1464 = vmatpush2.msra.mxu0 0.0
  %1465 = vmatprep.subr.mxu0 0.0
  %1466 = vmatpush2.msra.mxu0 0.0
  %1467 = vmatprep.subr.mxu0 0.0
  %1468 = vmatpush2.msra.mxu0 0.0
  %1469 = vmatprep.mubr.f32.mxu0 0.0
  %1470 = vmatmul.mubr.f32.gmra.mxu0 %v1403
  %v1471 = vpop.f32.mrf.mxu0
  %v1472 = vadd.f32 0.0, %v1471
  %v1473 = vpop.f32.mrf.mxu0
  %1474 = vdwg.mxu0
  %v1475 = vadd.f32 %v1401, %v1472
  %v1476 = vxor.u32 %v1475, 2147483648
  %v1477 = vmul.f32 %v1476, 1.442695
  %v1478 = vpow.pop %v1477
  %v1479 = vadd.f32 %v1478, 1.0
  %v1480 = vrcp.pop %v1479
  %v1481 = vmul.f32 1.0, %v1480
  %v1482 = vld [vmem:[%s236 + $0x6] sm:$0x3]
  %1483 = vmatprep.subr.mxu0 0.0
  %1484 = vmatpush1.msra.mxu0 0.0
  %1485 = vmatprep.subr.mxu0 0.0
  %1486 = vmatpush1.msra.mxu0 0.0
  %1487 = vmatprep.subr.mxu0 0.0
  %1488 = vmatpush1.msra.mxu0 0.0
  %1489 = vmatprep.subr.mxu0 0.0
  %1490 = vmatpush1.msra.mxu0 0.0
  %1491 = vmatprep.subr.mxu0 0.0
  %1492 = vmatpush1.msra.mxu0 0.0
  %1493 = vmatprep.subr.mxu0 0.0
  %1494 = vmatpush1.msra.mxu0 0.0
  %1495 = vmatprep.subr.mxu0 0.0
  %1496 = vmatpush1.msra.mxu0 0.0
  %1497 = vmatprep.subr.mxu0 0.0
  %1498 = vmatpush1.msra.mxu0 0.0
  %1499 = vmatprep.subr.mxu0 0.0
  %1500 = vmatpush1.msra.mxu0 %v437
  %1501 = vmatprep.subr.mxu0 0.0
  %1502 = vmatpush1.msra.mxu0 %v436
  %1503 = vmatprep.subr.mxu0 0.0
  %1504 = vmatpush1.msra.mxu0 %v435
  %1505 = vmatprep.subr.mxu0 0.0
  %1506 = vmatpush1.msra.mxu0 %v434
  %1507 = vmatprep.subr.mxu0 0.0
  %1508 = vmatpush1.msra.mxu0 %v433
  %1509 = vmatprep.subr.mxu0 0.0
  %1510 = vmatpush1.msra.mxu0 %v432
  %1511 = vmatprep.subr.mxu0 0.0
  %1512 = vmatpush1.msra.mxu0 %v431
  %1513 = vmatprep.subr.mxu0 0.0
  %1514 = vmatpush1.msra.mxu0 %v430
  %1515 = vmatprep.subr.mxu0 0.0
  %1516 = vmatpush2.msra.mxu0 0.0
  %1517 = vmatprep.subr.mxu0 0.0
  %1518 = vmatpush2.msra.mxu0 0.0
  %1519 = vmatprep.subr.mxu0 0.0
  %1520 = vmatpush2.msra.mxu0 0.0
  %1521 = vmatprep.subr.mxu0 0.0
  %1522 = vmatpush2.msra.mxu0 0.0
  %1523 = vmatprep.subr.mxu0 0.0
  %1524 = vmatpush2.msra.mxu0 0.0
  %1525 = vmatprep.subr.mxu0 0.0
  %1526 = vmatpush2.msra.mxu0 0.0
  %1527 = vmatprep.subr.mxu0 0.0
  %1528 = vmatpush2.msra.mxu0 0.0
  %1529 = vmatprep.subr.mxu0 0.0
  %1530 = vmatpush2.msra.mxu0 0.0
  %1531 = vmatprep.subr.mxu0 0.0
  %1532 = vmatpush2.msra.mxu0 0.0
  %1533 = vmatprep.subr.mxu0 0.0
  %1534 = vmatpush2.msra.mxu0 0.0
  %1535 = vmatprep.subr.mxu0 0.0
  %1536 = vmatpush2.msra.mxu0 0.0
  %1537 = vmatprep.subr.mxu0 0.0
  %1538 = vmatpush2.msra.mxu0 0.0
  %1539 = vmatprep.subr.mxu0 0.0
  %1540 = vmatpush2.msra.mxu0 0.0
  %1541 = vmatprep.subr.mxu0 0.0
  %1542 = vmatpush2.msra.mxu0 0.0
  %1543 = vmatprep.subr.mxu0 0.0
  %1544 = vmatpush2.msra.mxu0 0.0
  %1545 = vmatprep.subr.mxu0 0.0
  %1546 = vmatpush2.msra.mxu0 0.0
  %1547 = vmatprep.mubr.f32.mxu0 0.0
  %1548 = vmatmul.mubr.f32.gmra.mxu0 %v1403
  %v1549 = vpop.f32.mrf.mxu0
  %v1550 = vadd.f32 0.0, %v1549
  %v1551 = vpop.f32.mrf.mxu0
  %1552 = vdwg.mxu0
  %v1553 = vadd.f32 %v1482, %v1550
  %v1554 = vxor.u32 %v1553, 2147483648
  %v1555 = vmul.f32 %v1554, 1.442695
  %v1556 = vpow.pop %v1555
  %v1557 = vadd.f32 %v1556, 1.0
  %v1558 = vrcp.pop %v1557
  %v1559 = vmul.f32 1.0, %v1558
  %v1560 = vld [vmem:[%s327 + $0x6] sm:$0x3]
  %1561 = vmatprep.subr.mxu0 0.0
  %1562 = vmatpush1.msra.mxu0 0.0
  %1563 = vmatprep.subr.mxu0 0.0
  %1564 = vmatpush1.msra.mxu0 0.0
  %1565 = vmatprep.subr.mxu0 0.0
  %1566 = vmatpush1.msra.mxu0 0.0
  %1567 = vmatprep.subr.mxu0 0.0
  %1568 = vmatpush1.msra.mxu0 0.0
  %1569 = vmatprep.subr.mxu0 0.0
  %1570 = vmatpush1.msra.mxu0 0.0
  %1571 = vmatprep.subr.mxu0 0.0
  %1572 = vmatpush1.msra.mxu0 0.0
  %1573 = vmatprep.subr.mxu0 0.0
  %1574 = vmatpush1.msra.mxu0 0.0
  %1575 = vmatprep.subr.mxu0 0.0
  %1576 = vmatpush1.msra.mxu0 0.0
  %1577 = vmatprep.subr.mxu0 0.0
  %1578 = vmatpush1.msra.mxu0 %v446
  %1579 = vmatprep.subr.mxu0 0.0
  %1580 = vmatpush1.msra.mxu0 %v445
  %1581 = vmatprep.subr.mxu0 0.0
  %1582 = vmatpush1.msra.mxu0 %v444
  %1583 = vmatprep.subr.mxu0 0.0
  %1584 = vmatpush1.msra.mxu0 %v443
  %1585 = vmatprep.subr.mxu0 0.0
  %1586 = vmatpush1.msra.mxu0 %v442
  %1587 = vmatprep.subr.mxu0 0.0
  %1588 = vmatpush1.msra.mxu0 %v441
  %1589 = vmatprep.subr.mxu0 0.0
  %1590 = vmatpush1.msra.mxu0 %v440
  %1591 = vmatprep.subr.mxu0 0.0
  %1592 = vmatpush1.msra.mxu0 %v439
  %1593 = vmatprep.subr.mxu0 0.0
  %1594 = vmatpush2.msra.mxu0 0.0
  %1595 = vmatprep.subr.mxu0 0.0
  %1596 = vmatpush2.msra.mxu0 0.0
  %1597 = vmatprep.subr.mxu0 0.0
  %1598 = vmatpush2.msra.mxu0 0.0
  %1599 = vmatprep.subr.mxu0 0.0
  %1600 = vmatpush2.msra.mxu0 0.0
  %1601 = vmatprep.subr.mxu0 0.0
  %1602 = vmatpush2.msra.mxu0 0.0
  %1603 = vmatprep.subr.mxu0 0.0
  %1604 = vmatpush2.msra.mxu0 0.0
  %1605 = vmatprep.subr.mxu0 0.0
  %1606 = vmatpush2.msra.mxu0 0.0
  %1607 = vmatprep.subr.mxu0 0.0
  %1608 = vmatpush2.msra.mxu0 0.0
  %1609 = vmatprep.subr.mxu0 0.0
  %1610 = vmatpush2.msra.mxu0 0.0
  %1611 = vmatprep.subr.mxu0 0.0
  %1612 = vmatpush2.msra.mxu0 0.0
  %1613 = vmatprep.subr.mxu0 0.0
  %1614 = vmatpush2.msra.mxu0 0.0
  %1615 = vmatprep.subr.mxu0 0.0
  %1616 = vmatpush2.msra.mxu0 0.0
  %1617 = vmatprep.subr.mxu0 0.0
  %1618 = vmatpush2.msra.mxu0 0.0
  %1619 = vmatprep.subr.mxu0 0.0
  %1620 = vmatpush2.msra.mxu0 0.0
  %1621 = vmatprep.subr.mxu0 0.0
  %1622 = vmatpush2.msra.mxu0 0.0
  %1623 = vmatprep.subr.mxu0 0.0
  %1624 = vmatpush2.msra.mxu0 0.0
  %1625 = vmatprep.mubr.f32.mxu0 0.0
  %1626 = vmatmul.mubr.f32.gmra.mxu0 %v1403
  %v1627 = vpop.f32.mrf.mxu0
  %v1628 = vadd.f32 0.0, %v1627
  %v1629 = vpop.f32.mrf.mxu0
  %1630 = vdwg.mxu0
  %v1631 = vadd.f32 %v1560, %v1628
  %v1632 = vtanh.pop %v1631
  %v1633 = vld [vmem:[%s418 + $0x6] sm:$0x3]
  %1634 = vmatprep.subr.mxu0 0.0
  %1635 = vmatpush1.msra.mxu0 0.0
  %1636 = vmatprep.subr.mxu0 0.0
  %1637 = vmatpush1.msra.mxu0 0.0
  %1638 = vmatprep.subr.mxu0 0.0
  %1639 = vmatpush1.msra.mxu0 0.0
  %1640 = vmatprep.subr.mxu0 0.0
  %1641 = vmatpush1.msra.mxu0 0.0
  %1642 = vmatprep.subr.mxu0 0.0
  %1643 = vmatpush1.msra.mxu0 0.0
  %1644 = vmatprep.subr.mxu0 0.0
  %1645 = vmatpush1.msra.mxu0 0.0
  %1646 = vmatprep.subr.mxu0 0.0
  %1647 = vmatpush1.msra.mxu0 0.0
  %1648 = vmatprep.subr.mxu0 0.0
  %1649 = vmatpush1.msra.mxu0 0.0
  %1650 = vmatprep.subr.mxu0 0.0
  %1651 = vmatpush1.msra.mxu0 %v455
  %1652 = vmatprep.subr.mxu0 0.0
  %1653 = vmatpush1.msra.mxu0 %v454
  %1654 = vmatprep.subr.mxu0 0.0
  %1655 = vmatpush1.msra.mxu0 %v453
  %1656 = vmatprep.subr.mxu0 0.0
  %1657 = vmatpush1.msra.mxu0 %v452
  %1658 = vmatprep.subr.mxu0 0.0
  %1659 = vmatpush1.msra.mxu0 %v451
  %1660 = vmatprep.subr.mxu0 0.0
  %1661 = vmatpush1.msra.mxu0 %v450
  %1662 = vmatprep.subr.mxu0 0.0
  %1663 = vmatpush1.msra.mxu0 %v449
  %1664 = vmatprep.subr.mxu0 0.0
  %1665 = vmatpush1.msra.mxu0 %v448
  %1666 = vmatprep.subr.mxu0 0.0
  %1667 = vmatpush2.msra.mxu0 0.0
  %1668 = vmatprep.subr.mxu0 0.0
  %1669 = vmatpush2.msra.mxu0 0.0
  %1670 = vmatprep.subr.mxu0 0.0
  %1671 = vmatpush2.msra.mxu0 0.0
  %1672 = vmatprep.subr.mxu0 0.0
  %1673 = vmatpush2.msra.mxu0 0.0
  %1674 = vmatprep.subr.mxu0 0.0
  %1675 = vmatpush2.msra.mxu0 0.0
  %1676 = vmatprep.subr.mxu0 0.0
  %1677 = vmatpush2.msra.mxu0 0.0
  %1678 = vmatprep.subr.mxu0 0.0
  %1679 = vmatpush2.msra.mxu0 0.0
  %1680 = vmatprep.subr.mxu0 0.0
  %1681 = vmatpush2.msra.mxu0 0.0
  %1682 = vmatprep.subr.mxu0 0.0
  %1683 = vmatpush2.msra.mxu0 0.0
  %1684 = vmatprep.subr.mxu0 0.0
  %1685 = vmatpush2.msra.mxu0 0.0
  %1686 = vmatprep.subr.mxu0 0.0
  %1687 = vmatpush2.msra.mxu0 0.0
  %1688 = vmatprep.subr.mxu0 0.0
  %1689 = vmatpush2.msra.mxu0 0.0
  %1690 = vmatprep.subr.mxu0 0.0
  %1691 = vmatpush2.msra.mxu0 0.0
  %1692 = vmatprep.subr.mxu0 0.0
  %1693 = vmatpush2.msra.mxu0 0.0
  %1694 = vmatprep.subr.mxu0 0.0
  %1695 = vmatpush2.msra.mxu0 0.0
  %1696 = vmatprep.subr.mxu0 0.0
  %1697 = vmatpush2.msra.mxu0 0.0
  %1698 = vmatprep.mubr.f32.mxu0 0.0
  %1699 = vmatmul.mubr.f32.gmra.mxu0 %v1403
  %v1700 = vpop.f32.mrf.mxu0
  %v1701 = vadd.f32 0.0, %v1700
  %v1702 = vpop.f32.mrf.mxu0
  %1703 = vdwg.mxu0
  %v1704 = vadd.f32 %v1633, %v1701
  %v1705 = vxor.u32 %v1704, 2147483648
  %v1706 = vmul.f32 %v1705, 1.442695
  %v1707 = vpow.pop %v1706
  %v1708 = vadd.f32 %v1707, 1.0
  %v1709 = vrcp.pop %v1708
  %v1710 = vmul.f32 1.0, %v1709
  %v1711 = vmul.f32 %v1559, %v1398
  %v1712 = vmul.f32 %v1481, %v1632
  %v1713 = vadd.f32 %v1711, %v1712
  %v1714 = vtanh.pop %v1713
  %v1715 = vmul.f32 %v1710, %v1714
  %v1716 = vld [vmem:[#allocation2 + $0x8] sm:$0x3]
  %v1718 = vsel %vm145, %v1715, 0
  %1720 = vmatprep.subr.mxu0 0.0
  %1721 = vmatpush1.msra.mxu0 0.0
  %1722 = vmatprep.subr.mxu0 0.0
  %1723 = vmatpush1.msra.mxu0 0.0
  %1724 = vmatprep.subr.mxu0 0.0
  %1725 = vmatpush1.msra.mxu0 0.0
  %1726 = vmatprep.subr.mxu0 0.0
  %1727 = vmatpush1.msra.mxu0 0.0
  %1728 = vmatprep.subr.mxu0 0.0
  %1729 = vmatpush1.msra.mxu0 0.0
  %1730 = vmatprep.subr.mxu0 0.0
  %1731 = vmatpush1.msra.mxu0 0.0
  %1732 = vmatprep.subr.mxu0 0.0
  %1733 = vmatpush1.msra.mxu0 0.0
  %1734 = vmatprep.subr.mxu0 0.0
  %1735 = vmatpush1.msra.mxu0 0.0
  %1736 = vmatprep.subr.mxu0 0.0
  %1737 = vmatpush1.msra.mxu0 %v428
  %1738 = vmatprep.subr.mxu0 0.0
  %1739 = vmatpush1.msra.mxu0 %v427
  %1740 = vmatprep.subr.mxu0 0.0
  %1741 = vmatpush1.msra.mxu0 %v426
  %1742 = vmatprep.subr.mxu0 0.0
  %1743 = vmatpush1.msra.mxu0 %v425
  %1744 = vmatprep.subr.mxu0 0.0
  %1745 = vmatpush1.msra.mxu0 %v424
  %1746 = vmatprep.subr.mxu0 0.0
  %1747 = vmatpush1.msra.mxu0 %v423
  %1748 = vmatprep.subr.mxu0 0.0
  %1749 = vmatpush1.msra.mxu0 %v422
  %1750 = vmatprep.subr.mxu0 0.0
  %1751 = vmatpush1.msra.mxu0 %v421
  %1752 = vmatprep.subr.mxu0 0.0
  %1753 = vmatpush2.msra.mxu0 0.0
  %1754 = vmatprep.subr.mxu0 0.0
  %1755 = vmatpush2.msra.mxu0 0.0
  %1756 = vmatprep.subr.mxu0 0.0
  %1757 = vmatpush2.msra.mxu0 0.0
  %1758 = vmatprep.subr.mxu0 0.0
  %1759 = vmatpush2.msra.mxu0 0.0
  %1760 = vmatprep.subr.mxu0 0.0
  %1761 = vmatpush2.msra.mxu0 0.0
  %1762 = vmatprep.subr.mxu0 0.0
  %1763 = vmatpush2.msra.mxu0 0.0
  %1764 = vmatprep.subr.mxu0 0.0
  %1765 = vmatpush2.msra.mxu0 0.0
  %1766 = vmatprep.subr.mxu0 0.0
  %1767 = vmatpush2.msra.mxu0 0.0
  %1768 = vmatprep.subr.mxu0 0.0
  %1769 = vmatpush2.msra.mxu0 0.0
  %1770 = vmatprep.subr.mxu0 0.0
  %1771 = vmatpush2.msra.mxu0 0.0
  %1772 = vmatprep.subr.mxu0 0.0
  %1773 = vmatpush2.msra.mxu0 0.0
  %1774 = vmatprep.subr.mxu0 0.0
  %1775 = vmatpush2.msra.mxu0 0.0
  %1776 = vmatprep.subr.mxu0 0.0
  %1777 = vmatpush2.msra.mxu0 0.0
  %1778 = vmatprep.subr.mxu0 0.0
  %1779 = vmatpush2.msra.mxu0 0.0
  %1780 = vmatprep.subr.mxu0 0.0
  %1781 = vmatpush2.msra.mxu0 0.0
  %1782 = vmatprep.subr.mxu0 0.0
  %1783 = vmatpush2.msra.mxu0 0.0
  %1784 = vmatprep.mubr.f32.mxu0 0.0
  %1785 = vmatmul.mubr.f32.gmra.mxu0 %v1718
  %v1786 = vpop.f32.mrf.mxu0
  %v1787 = vadd.f32 0.0, %v1786
  %v1788 = vpop.f32.mrf.mxu0
  %1789 = vdwg.mxu0
  %v1790 = vadd.f32 %v1716, %v1787
  %v1791 = vxor.u32 %v1790, 2147483648
  %v1792 = vmul.f32 %v1791, 1.442695
  %v1793 = vpow.pop %v1792
  %v1794 = vadd.f32 %v1793, 1.0
  %v1795 = vrcp.pop %v1794
  %v1796 = vmul.f32 1.0, %v1795
  %v1797 = vld [vmem:[%s236 + $0x8] sm:$0x3]
  %1798 = vmatprep.subr.mxu0 0.0
  %1799 = vmatpush1.msra.mxu0 0.0
  %1800 = vmatprep.subr.mxu0 0.0
  %1801 = vmatpush1.msra.mxu0 0.0
  %1802 = vmatprep.subr.mxu0 0.0
  %1803 = vmatpush1.msra.mxu0 0.0
  %1804 = vmatprep.subr.mxu0 0.0
  %1805 = vmatpush1.msra.mxu0 0.0
  %1806 = vmatprep.subr.mxu0 0.0
  %1807 = vmatpush1.msra.mxu0 0.0
  %1808 = vmatprep.subr.mxu0 0.0
  %1809 = vmatpush1.msra.mxu0 0.0
  %1810 = vmatprep.subr.mxu0 0.0
  %1811 = vmatpush1.msra.mxu0 0.0
  %1812 = vmatprep.subr.mxu0 0.0
  %1813 = vmatpush1.msra.mxu0 0.0
  %1814 = vmatprep.subr.mxu0 0.0
  %1815 = vmatpush1.msra.mxu0 %v437
  %1816 = vmatprep.subr.mxu0 0.0
  %1817 = vmatpush1.msra.mxu0 %v436
  %1818 = vmatprep.subr.mxu0 0.0
  %1819 = vmatpush1.msra.mxu0 %v435
  %1820 = vmatprep.subr.mxu0 0.0
  %1821 = vmatpush1.msra.mxu0 %v434
  %1822 = vmatprep.subr.mxu0 0.0
  %1823 = vmatpush1.msra.mxu0 %v433
  %1824 = vmatprep.subr.mxu0 0.0
  %1825 = vmatpush1.msra.mxu0 %v432
  %1826 = vmatprep.subr.mxu0 0.0
  %1827 = vmatpush1.msra.mxu0 %v431
  %1828 = vmatprep.subr.mxu0 0.0
  %1829 = vmatpush1.msra.mxu0 %v430
  %1830 = vmatprep.subr.mxu0 0.0
  %1831 = vmatpush2.msra.mxu0 0.0
  %1832 = vmatprep.subr.mxu0 0.0
  %1833 = vmatpush2.msra.mxu0 0.0
  %1834 = vmatprep.subr.mxu0 0.0
  %1835 = vmatpush2.msra.mxu0 0.0
  %1836 = vmatprep.subr.mxu0 0.0
  %1837 = vmatpush2.msra.mxu0 0.0
  %1838 = vmatprep.subr.mxu0 0.0
  %1839 = vmatpush2.msra.mxu0 0.0
  %1840 = vmatprep.subr.mxu0 0.0
  %1841 = vmatpush2.msra.mxu0 0.0
  %1842 = vmatprep.subr.mxu0 0.0
  %1843 = vmatpush2.msra.mxu0 0.0
  %1844 = vmatprep.subr.mxu0 0.0
  %1845 = vmatpush2.msra.mxu0 0.0
  %1846 = vmatprep.subr.mxu0 0.0
  %1847 = vmatpush2.msra.mxu0 0.0
  %1848 = vmatprep.subr.mxu0 0.0
  %1849 = vmatpush2.msra.mxu0 0.0
  %1850 = vmatprep.subr.mxu0 0.0
  %1851 = vmatpush2.msra.mxu0 0.0
  %1852 = vmatprep.subr.mxu0 0.0
  %1853 = vmatpush2.msra.mxu0 0.0
  %1854 = vmatprep.subr.mxu0 0.0
  %1855 = vmatpush2.msra.mxu0 0.0
  %1856 = vmatprep.subr.mxu0 0.0
  %1857 = vmatpush2.msra.mxu0 0.0
  %1858 = vmatprep.subr.mxu0 0.0
  %1859 = vmatpush2.msra.mxu0 0.0
  %1860 = vmatprep.subr.mxu0 0.0
  %1861 = vmatpush2.msra.mxu0 0.0
  %1862 = vmatprep.mubr.f32.mxu0 0.0
  %1863 = vmatmul.mubr.f32.gmra.mxu0 %v1718
  %v1864 = vpop.f32.mrf.mxu0
  %v1865 = vadd.f32 0.0, %v1864
  %v1866 = vpop.f32.mrf.mxu0
  %1867 = vdwg.mxu0
  %v1868 = vadd.f32 %v1797, %v1865
  %v1869 = vxor.u32 %v1868, 2147483648
  %v1870 = vmul.f32 %v1869, 1.442695
  %v1871 = vpow.pop %v1870
  %v1872 = vadd.f32 %v1871, 1.0
  %v1873 = vrcp.pop %v1872
  %v1874 = vmul.f32 1.0, %v1873
  %v1875 = vld [vmem:[%s327 + $0x8] sm:$0x3]
  %1876 = vmatprep.subr.mxu0 0.0
  %1877 = vmatpush1.msra.mxu0 0.0
  %1878 = vmatprep.subr.mxu0 0.0
  %1879 = vmatpush1.msra.mxu0 0.0
  %1880 = vmatprep.subr.mxu0 0.0
  %1881 = vmatpush1.msra.mxu0 0.0
  %1882 = vmatprep.subr.mxu0 0.0
  %1883 = vmatpush1.msra.mxu0 0.0
  %1884 = vmatprep.subr.mxu0 0.0
  %1885 = vmatpush1.msra.mxu0 0.0
  %1886 = vmatprep.subr.mxu0 0.0
  %1887 = vmatpush1.msra.mxu0 0.0
  %1888 = vmatprep.subr.mxu0 0.0
  %1889 = vmatpush1.msra.mxu0 0.0
  %1890 = vmatprep.subr.mxu0 0.0
  %1891 = vmatpush1.msra.mxu0 0.0
  %1892 = vmatprep.subr.mxu0 0.0
  %1893 = vmatpush1.msra.mxu0 %v446
  %1894 = vmatprep.subr.mxu0 0.0
  %1895 = vmatpush1.msra.mxu0 %v445
  %1896 = vmatprep.subr.mxu0 0.0
  %1897 = vmatpush1.msra.mxu0 %v444
  %1898 = vmatprep.subr.mxu0 0.0
  %1899 = vmatpush1.msra.mxu0 %v443
  %1900 = vmatprep.subr.mxu0 0.0
  %1901 = vmatpush1.msra.mxu0 %v442
  %1902 = vmatprep.subr.mxu0 0.0
  %1903 = vmatpush1.msra.mxu0 %v441
  %1904 = vmatprep.subr.mxu0 0.0
  %1905 = vmatpush1.msra.mxu0 %v440
  %1906 = vmatprep.subr.mxu0 0.0
  %1907 = vmatpush1.msra.mxu0 %v439
  %1908 = vmatprep.subr.mxu0 0.0
  %1909 = vmatpush2.msra.mxu0 0.0
  %1910 = vmatprep.subr.mxu0 0.0
  %1911 = vmatpush2.msra.mxu0 0.0
  %1912 = vmatprep.subr.mxu0 0.0
  %1913 = vmatpush2.msra.mxu0 0.0
  %1914 = vmatprep.subr.mxu0 0.0
  %1915 = vmatpush2.msra.mxu0 0.0
  %1916 = vmatprep.subr.mxu0 0.0
  %1917 = vmatpush2.msra.mxu0 0.0
  %1918 = vmatprep.subr.mxu0 0.0
  %1919 = vmatpush2.msra.mxu0 0.0
  %1920 = vmatprep.subr.mxu0 0.0
  %1921 = vmatpush2.msra.mxu0 0.0
  %1922 = vmatprep.subr.mxu0 0.0
  %1923 = vmatpush2.msra.mxu0 0.0
  %1924 = vmatprep.subr.mxu0 0.0
  %1925 = vmatpush2.msra.mxu0 0.0
  %1926 = vmatprep.subr.mxu0 0.0
  %1927 = vmatpush2.msra.mxu0 0.0
  %1928 = vmatprep.subr.mxu0 0.0
  %1929 = vmatpush2.msra.mxu0 0.0
  %1930 = vmatprep.subr.mxu0 0.0
  %1931 = vmatpush2.msra.mxu0 0.0
  %1932 = vmatprep.subr.mxu0 0.0
  %1933 = vmatpush2.msra.mxu0 0.0
  %1934 = vmatprep.subr.mxu0 0.0
  %1935 = vmatpush2.msra.mxu0 0.0
  %1936 = vmatprep.subr.mxu0 0.0
  %1937 = vmatpush2.msra.mxu0 0.0
  %1938 = vmatprep.subr.mxu0 0.0
  %1939 = vmatpush2.msra.mxu0 0.0
  %1940 = vmatprep.mubr.f32.mxu0 0.0
  %1941 = vmatmul.mubr.f32.gmra.mxu0 %v1718
  %v1942 = vpop.f32.mrf.mxu0
  %v1943 = vadd.f32 0.0, %v1942
  %v1944 = vpop.f32.mrf.mxu0
  %1945 = vdwg.mxu0
  %v1946 = vadd.f32 %v1875, %v1943
  %v1947 = vtanh.pop %v1946
  %v1948 = vld [vmem:[%s418 + $0x8] sm:$0x3]
  %1949 = vmatprep.subr.mxu0 0.0
  %1950 = vmatpush1.msra.mxu0 0.0
  %1951 = vmatprep.subr.mxu0 0.0
  %1952 = vmatpush1.msra.mxu0 0.0
  %1953 = vmatprep.subr.mxu0 0.0
  %1954 = vmatpush1.msra.mxu0 0.0
  %1955 = vmatprep.subr.mxu0 0.0
  %1956 = vmatpush1.msra.mxu0 0.0
  %1957 = vmatprep.subr.mxu0 0.0
  %1958 = vmatpush1.msra.mxu0 0.0
  %1959 = vmatprep.subr.mxu0 0.0
  %1960 = vmatpush1.msra.mxu0 0.0
  %1961 = vmatprep.subr.mxu0 0.0
  %1962 = vmatpush1.msra.mxu0 0.0
  %1963 = vmatprep.subr.mxu0 0.0
  %1964 = vmatpush1.msra.mxu0 0.0
  %1965 = vmatprep.subr.mxu0 0.0
  %1966 = vmatpush1.msra.mxu0 %v455
  %1967 = vmatprep.subr.mxu0 0.0
  %1968 = vmatpush1.msra.mxu0 %v454
  %1969 = vmatprep.subr.mxu0 0.0
  %1970 = vmatpush1.msra.mxu0 %v453
  %1971 = vmatprep.subr.mxu0 0.0
  %1972 = vmatpush1.msra.mxu0 %v452
  %1973 = vmatprep.subr.mxu0 0.0
  %1974 = vmatpush1.msra.mxu0 %v451
  %1975 = vmatprep.subr.mxu0 0.0
  %1976 = vmatpush1.msra.mxu0 %v450
  %1977 = vmatprep.subr.mxu0 0.0
  %1978 = vmatpush1.msra.mxu0 %v449
  %1979 = vmatprep.subr.mxu0 0.0
  %1980 = vmatpush1.msra.mxu0 %v448
  %1981 = vmatprep.subr.mxu0 0.0
  %1982 = vmatpush2.msra.mxu0 0.0
  %1983 = vmatprep.subr.mxu0 0.0
  %1984 = vmatpush2.msra.mxu0 0.0
  %1985 = vmatprep.subr.mxu0 0.0
  %1986 = vmatpush2.msra.mxu0 0.0
  %1987 = vmatprep.subr.mxu0 0.0
  %1988 = vmatpush2.msra.mxu0 0.0
  %1989 = vmatprep.subr.mxu0 0.0
  %1990 = vmatpush2.msra.mxu0 0.0
  %1991 = vmatprep.subr.mxu0 0.0
  %1992 = vmatpush2.msra.mxu0 0.0
  %1993 = vmatprep.subr.mxu0 0.0
  %1994 = vmatpush2.msra.mxu0 0.0
  %1995 = vmatprep.subr.mxu0 0.0
  %1996 = vmatpush2.msra.mxu0 0.0
  %1997 = vmatprep.subr.mxu0 0.0
  %1998 = vmatpush2.msra.mxu0 0.0
  %1999 = vmatprep.subr.mxu0 0.0
  %2000 = vmatpush2.msra.mxu0 0.0
  %2001 = vmatprep.subr.mxu0 0.0
  %2002 = vmatpush2.msra.mxu0 0.0
  %2003 = vmatprep.subr.mxu0 0.0
  %2004 = vmatpush2.msra.mxu0 0.0
  %2005 = vmatprep.subr.mxu0 0.0
  %2006 = vmatpush2.msra.mxu0 0.0
  %2007 = vmatprep.subr.mxu0 0.0
  %2008 = vmatpush2.msra.mxu0 0.0
  %2009 = vmatprep.subr.mxu0 0.0
  %2010 = vmatpush2.msra.mxu0 0.0
  %2011 = vmatprep.subr.mxu0 0.0
  %2012 = vmatpush2.msra.mxu0 0.0
  %2013 = vmatprep.mubr.f32.mxu0 0.0
  %2014 = vmatmul.mubr.f32.gmra.mxu0 %v1718
  %v2015 = vpop.f32.mrf.mxu0
  %v2016 = vadd.f32 0.0, %v2015
  %v2017 = vpop.f32.mrf.mxu0
  %2018 = vdwg.mxu0
  %v2019 = vadd.f32 %v1948, %v2016
  %v2020 = vxor.u32 %v2019, 2147483648
  %v2021 = vmul.f32 %v2020, 1.442695
  %v2022 = vpow.pop %v2021
  %v2023 = vadd.f32 %v2022, 1.0
  %v2024 = vrcp.pop %v2023
  %v2025 = vmul.f32 1.0, %v2024
  %v2026 = vmul.f32 %v1874, %v1713
  %v2027 = vmul.f32 %v1796, %v1947
  %v2028 = vadd.f32 %v2026, %v2027
  %v2029 = vtanh.pop %v2028
  %v2030 = vmul.f32 %v2025, %v2029
  %v2031 = vld [vmem:[#allocation2 + $0xa] sm:$0x3]
  %v2033 = vsel %vm145, %v2030, 0
  %2035 = vmatprep.subr.mxu0 0.0
  %2036 = vmatpush1.msra.mxu0 0.0
  %2037 = vmatprep.subr.mxu0 0.0
  %2038 = vmatpush1.msra.mxu0 0.0
  %2039 = vmatprep.subr.mxu0 0.0
  %2040 = vmatpush1.msra.mxu0 0.0
  %2041 = vmatprep.subr.mxu0 0.0
  %2042 = vmatpush1.msra.mxu0 0.0
  %2043 = vmatprep.subr.mxu0 0.0
  %2044 = vmatpush1.msra.mxu0 0.0
  %2045 = vmatprep.subr.mxu0 0.0
  %2046 = vmatpush1.msra.mxu0 0.0
  %2047 = vmatprep.subr.mxu0 0.0
  %2048 = vmatpush1.msra.mxu0 0.0
  %2049 = vmatprep.subr.mxu0 0.0
  %2050 = vmatpush1.msra.mxu0 0.0
  %2051 = vmatprep.subr.mxu0 0.0
  %2052 = vmatpush1.msra.mxu0 %v428
  %2053 = vmatprep.subr.mxu0 0.0
  %2054 = vmatpush1.msra.mxu0 %v427
  %2055 = vmatprep.subr.mxu0 0.0
  %2056 = vmatpush1.msra.mxu0 %v426
  %2057 = vmatprep.subr.mxu0 0.0
  %2058 = vmatpush1.msra.mxu0 %v425
  %2059 = vmatprep.subr.mxu0 0.0
  %2060 = vmatpush1.msra.mxu0 %v424
  %2061 = vmatprep.subr.mxu0 0.0
  %2062 = vmatpush1.msra.mxu0 %v423
  %2063 = vmatprep.subr.mxu0 0.0
  %2064 = vmatpush1.msra.mxu0 %v422
  %2065 = vmatprep.subr.mxu0 0.0
  %2066 = vmatpush1.msra.mxu0 %v421
  %2067 = vmatprep.subr.mxu0 0.0
  %2068 = vmatpush2.msra.mxu0 0.0
  %2069 = vmatprep.subr.mxu0 0.0
  %2070 = vmatpush2.msra.mxu0 0.0
  %2071 = vmatprep.subr.mxu0 0.0
  %2072 = vmatpush2.msra.mxu0 0.0
  %2073 = vmatprep.subr.mxu0 0.0
  %2074 = vmatpush2.msra.mxu0 0.0
  %2075 = vmatprep.subr.mxu0 0.0
  %2076 = vmatpush2.msra.mxu0 0.0
  %2077 = vmatprep.subr.mxu0 0.0
  %2078 = vmatpush2.msra.mxu0 0.0
  %2079 = vmatprep.subr.mxu0 0.0
  %2080 = vmatpush2.msra.mxu0 0.0
  %2081 = vmatprep.subr.mxu0 0.0
  %2082 = vmatpush2.msra.mxu0 0.0
  %2083 = vmatprep.subr.mxu0 0.0
  %2084 = vmatpush2.msra.mxu0 0.0
  %2085 = vmatprep.subr.mxu0 0.0
  %2086 = vmatpush2.msra.mxu0 0.0
  %2087 = vmatprep.subr.mxu0 0.0
  %2088 = vmatpush2.msra.mxu0 0.0
  %2089 = vmatprep.subr.mxu0 0.0
  %2090 = vmatpush2.msra.mxu0 0.0
  %2091 = vmatprep.subr.mxu0 0.0
  %2092 = vmatpush2.msra.mxu0 0.0
  %2093 = vmatprep.subr.mxu0 0.0
  %2094 = vmatpush2.msra.mxu0 0.0
  %2095 = vmatprep.subr.mxu0 0.0
  %2096 = vmatpush2.msra.mxu0 0.0
  %2097 = vmatprep.subr.mxu0 0.0
  %2098 = vmatpush2.msra.mxu0 0.0
  %2099 = vmatprep.mubr.f32.mxu0 0.0
  %2100 = vmatmul.mubr.f32.gmra.mxu0 %v2033
  %v2101 = vpop.f32.mrf.mxu0
  %v2102 = vadd.f32 0.0, %v2101
  %v2103 = vpop.f32.mrf.mxu0
  %2104 = vdwg.mxu0
  %v2105 = vadd.f32 %v2031, %v2102
  %v2106 = vxor.u32 %v2105, 2147483648
  %v2107 = vmul.f32 %v2106, 1.442695
  %v2108 = vpow.pop %v2107
  %v2109 = vadd.f32 %v2108, 1.0
  %v2110 = vrcp.pop %v2109
  %v2111 = vmul.f32 1.0, %v2110
  %v2112 = vld [vmem:[%s236 + $0xa] sm:$0x3]
  %2113 = vmatprep.subr.mxu0 0.0
  %2114 = vmatpush1.msra.mxu0 0.0
  %2115 = vmatprep.subr.mxu0 0.0
  %2116 = vmatpush1.msra.mxu0 0.0
  %2117 = vmatprep.subr.mxu0 0.0
  %2118 = vmatpush1.msra.mxu0 0.0
  %2119 = vmatprep.subr.mxu0 0.0
  %2120 = vmatpush1.msra.mxu0 0.0
  %2121 = vmatprep.subr.mxu0 0.0
  %2122 = vmatpush1.msra.mxu0 0.0
  %2123 = vmatprep.subr.mxu0 0.0
  %2124 = vmatpush1.msra.mxu0 0.0
  %2125 = vmatprep.subr.mxu0 0.0
  %2126 = vmatpush1.msra.mxu0 0.0
  %2127 = vmatprep.subr.mxu0 0.0
  %2128 = vmatpush1.msra.mxu0 0.0
  %2129 = vmatprep.subr.mxu0 0.0
  %2130 = vmatpush1.msra.mxu0 %v437
  %2131 = vmatprep.subr.mxu0 0.0
  %2132 = vmatpush1.msra.mxu0 %v436
  %2133 = vmatprep.subr.mxu0 0.0
  %2134 = vmatpush1.msra.mxu0 %v435
  %2135 = vmatprep.subr.mxu0 0.0
  %2136 = vmatpush1.msra.mxu0 %v434
  %2137 = vmatprep.subr.mxu0 0.0
  %2138 = vmatpush1.msra.mxu0 %v433
  %2139 = vmatprep.subr.mxu0 0.0
  %2140 = vmatpush1.msra.mxu0 %v432
  %2141 = vmatprep.subr.mxu0 0.0
  %2142 = vmatpush1.msra.mxu0 %v431
  %2143 = vmatprep.subr.mxu0 0.0
  %2144 = vmatpush1.msra.mxu0 %v430
  %2145 = vmatprep.subr.mxu0 0.0
  %2146 = vmatpush2.msra.mxu0 0.0
  %2147 = vmatprep.subr.mxu0 0.0
  %2148 = vmatpush2.msra.mxu0 0.0
  %2149 = vmatprep.subr.mxu0 0.0
  %2150 = vmatpush2.msra.mxu0 0.0
  %2151 = vmatprep.subr.mxu0 0.0
  %2152 = vmatpush2.msra.mxu0 0.0
  %2153 = vmatprep.subr.mxu0 0.0
  %2154 = vmatpush2.msra.mxu0 0.0
  %2155 = vmatprep.subr.mxu0 0.0
  %2156 = vmatpush2.msra.mxu0 0.0
  %2157 = vmatprep.subr.mxu0 0.0
  %2158 = vmatpush2.msra.mxu0 0.0
  %2159 = vmatprep.subr.mxu0 0.0
  %2160 = vmatpush2.msra.mxu0 0.0
  %2161 = vmatprep.subr.mxu0 0.0
  %2162 = vmatpush2.msra.mxu0 0.0
  %2163 = vmatprep.subr.mxu0 0.0
  %2164 = vmatpush2.msra.mxu0 0.0
  %2165 = vmatprep.subr.mxu0 0.0
  %2166 = vmatpush2.msra.mxu0 0.0
  %2167 = vmatprep.subr.mxu0 0.0
  %2168 = vmatpush2.msra.mxu0 0.0
  %2169 = vmatprep.subr.mxu0 0.0
  %2170 = vmatpush2.msra.mxu0 0.0
  %2171 = vmatprep.subr.mxu0 0.0
  %2172 = vmatpush2.msra.mxu0 0.0
  %2173 = vmatprep.subr.mxu0 0.0
  %2174 = vmatpush2.msra.mxu0 0.0
  %2175 = vmatprep.subr.mxu0 0.0
  %2176 = vmatpush2.msra.mxu0 0.0
  %2177 = vmatprep.mubr.f32.mxu0 0.0
  %2178 = vmatmul.mubr.f32.gmra.mxu0 %v2033
  %v2179 = vpop.f32.mrf.mxu0
  %v2180 = vadd.f32 0.0, %v2179
  %v2181 = vpop.f32.mrf.mxu0
  %2182 = vdwg.mxu0
  %v2183 = vadd.f32 %v2112, %v2180
  %v2184 = vxor.u32 %v2183, 2147483648
  %v2185 = vmul.f32 %v2184, 1.442695
  %v2186 = vpow.pop %v2185
  %v2187 = vadd.f32 %v2186, 1.0
  %v2188 = vrcp.pop %v2187
  %v2189 = vmul.f32 1.0, %v2188
  %v2190 = vld [vmem:[%s327 + $0xa] sm:$0x3]
  %2191 = vmatprep.subr.mxu0 0.0
  %2192 = vmatpush1.msra.mxu0 0.0
  %2193 = vmatprep.subr.mxu0 0.0
  %2194 = vmatpush1.msra.mxu0 0.0
  %2195 = vmatprep.subr.mxu0 0.0
  %2196 = vmatpush1.msra.mxu0 0.0
  %2197 = vmatprep.subr.mxu0 0.0
  %2198 = vmatpush1.msra.mxu0 0.0
  %2199 = vmatprep.subr.mxu0 0.0
  %2200 = vmatpush1.msra.mxu0 0.0
  %2201 = vmatprep.subr.mxu0 0.0
  %2202 = vmatpush1.msra.mxu0 0.0
  %2203 = vmatprep.subr.mxu0 0.0
  %2204 = vmatpush1.msra.mxu0 0.0
  %2205 = vmatprep.subr.mxu0 0.0
  %2206 = vmatpush1.msra.mxu0 0.0
  %2207 = vmatprep.subr.mxu0 0.0
  %2208 = vmatpush1.msra.mxu0 %v446
  %2209 = vmatprep.subr.mxu0 0.0
  %2210 = vmatpush1.msra.mxu0 %v445
  %2211 = vmatprep.subr.mxu0 0.0
  %2212 = vmatpush1.msra.mxu0 %v444
  %2213 = vmatprep.subr.mxu0 0.0
  %2214 = vmatpush1.msra.mxu0 %v443
  %2215 = vmatprep.subr.mxu0 0.0
  %2216 = vmatpush1.msra.mxu0 %v442
  %2217 = vmatprep.subr.mxu0 0.0
  %2218 = vmatpush1.msra.mxu0 %v441
  %2219 = vmatprep.subr.mxu0 0.0
  %2220 = vmatpush1.msra.mxu0 %v440
  %2221 = vmatprep.subr.mxu0 0.0
  %2222 = vmatpush1.msra.mxu0 %v439
  %2223 = vmatprep.subr.mxu0 0.0
  %2224 = vmatpush2.msra.mxu0 0.0
  %2225 = vmatprep.subr.mxu0 0.0
  %2226 = vmatpush2.msra.mxu0 0.0
  %2227 = vmatprep.subr.mxu0 0.0
  %2228 = vmatpush2.msra.mxu0 0.0
  %2229 = vmatprep.subr.mxu0 0.0
  %2230 = vmatpush2.msra.mxu0 0.0
  %2231 = vmatprep.subr.mxu0 0.0
  %2232 = vmatpush2.msra.mxu0 0.0
  %2233 = vmatprep.subr.mxu0 0.0
  %2234 = vmatpush2.msra.mxu0 0.0
  %2235 = vmatprep.subr.mxu0 0.0
  %2236 = vmatpush2.msra.mxu0 0.0
  %2237 = vmatprep.subr.mxu0 0.0
  %2238 = vmatpush2.msra.mxu0 0.0
  %2239 = vmatprep.subr.mxu0 0.0
  %2240 = vmatpush2.msra.mxu0 0.0
  %2241 = vmatprep.subr.mxu0 0.0
  %2242 = vmatpush2.msra.mxu0 0.0
  %2243 = vmatprep.subr.mxu0 0.0
  %2244 = vmatpush2.msra.mxu0 0.0
  %2245 = vmatprep.subr.mxu0 0.0
  %2246 = vmatpush2.msra.mxu0 0.0
  %2247 = vmatprep.subr.mxu0 0.0
  %2248 = vmatpush2.msra.mxu0 0.0
  %2249 = vmatprep.subr.mxu0 0.0
  %2250 = vmatpush2.msra.mxu0 0.0
  %2251 = vmatprep.subr.mxu0 0.0
  %2252 = vmatpush2.msra.mxu0 0.0
  %2253 = vmatprep.subr.mxu0 0.0
  %2254 = vmatpush2.msra.mxu0 0.0
  %2255 = vmatprep.mubr.f32.mxu0 0.0
  %2256 = vmatmul.mubr.f32.gmra.mxu0 %v2033
  %v2257 = vpop.f32.mrf.mxu0
  %v2258 = vadd.f32 0.0, %v2257
  %v2259 = vpop.f32.mrf.mxu0
  %2260 = vdwg.mxu0
  %v2261 = vadd.f32 %v2190, %v2258
  %v2262 = vtanh.pop %v2261
  %v2263 = vld [vmem:[%s418 + $0xa] sm:$0x3]
  %2264 = vmatprep.subr.mxu0 0.0
  %2265 = vmatpush1.msra.mxu0 0.0
  %2266 = vmatprep.subr.mxu0 0.0
  %2267 = vmatpush1.msra.mxu0 0.0
  %2268 = vmatprep.subr.mxu0 0.0
  %2269 = vmatpush1.msra.mxu0 0.0
  %2270 = vmatprep.subr.mxu0 0.0
  %2271 = vmatpush1.msra.mxu0 0.0
  %2272 = vmatprep.subr.mxu0 0.0
  %2273 = vmatpush1.msra.mxu0 0.0
  %2274 = vmatprep.subr.mxu0 0.0
  %2275 = vmatpush1.msra.mxu0 0.0
  %2276 = vmatprep.subr.mxu0 0.0
  %2277 = vmatpush1.msra.mxu0 0.0
  %2278 = vmatprep.subr.mxu0 0.0
  %2279 = vmatpush1.msra.mxu0 0.0
  %2280 = vmatprep.subr.mxu0 0.0
  %2281 = vmatpush1.msra.mxu0 %v455
  %2282 = vmatprep.subr.mxu0 0.0
  %2283 = vmatpush1.msra.mxu0 %v454
  %2284 = vmatprep.subr.mxu0 0.0
  %2285 = vmatpush1.msra.mxu0 %v453
  %2286 = vmatprep.subr.mxu0 0.0
  %2287 = vmatpush1.msra.mxu0 %v452
  %2288 = vmatprep.subr.mxu0 0.0
  %2289 = vmatpush1.msra.mxu0 %v451
  %2290 = vmatprep.subr.mxu0 0.0
  %2291 = vmatpush1.msra.mxu0 %v450
  %2292 = vmatprep.subr.mxu0 0.0
  %2293 = vmatpush1.msra.mxu0 %v449
  %2294 = vmatprep.subr.mxu0 0.0
  %2295 = vmatpush1.msra.mxu0 %v448
  %2296 = vmatprep.subr.mxu0 0.0
  %2297 = vmatpush2.msra.mxu0 0.0
  %2298 = vmatprep.subr.mxu0 0.0
  %2299 = vmatpush2.msra.mxu0 0.0
  %2300 = vmatprep.subr.mxu0 0.0
  %2301 = vmatpush2.msra.mxu0 0.0
  %2302 = vmatprep.subr.mxu0 0.0
  %2303 = vmatpush2.msra.mxu0 0.0
  %2304 = vmatprep.subr.mxu0 0.0
  %2305 = vmatpush2.msra.mxu0 0.0
  %2306 = vmatprep.subr.mxu0 0.0
  %2307 = vmatpush2.msra.mxu0 0.0
  %2308 = vmatprep.subr.mxu0 0.0
  %2309 = vmatpush2.msra.mxu0 0.0
  %2310 = vmatprep.subr.mxu0 0.0
  %2311 = vmatpush2.msra.mxu0 0.0
  %2312 = vmatprep.subr.mxu0 0.0
  %2313 = vmatpush2.msra.mxu0 0.0
  %2314 = vmatprep.subr.mxu0 0.0
  %2315 = vmatpush2.msra.mxu0 0.0
  %2316 = vmatprep.subr.mxu0 0.0
  %2317 = vmatpush2.msra.mxu0 0.0
  %2318 = vmatprep.subr.mxu0 0.0
  %2319 = vmatpush2.msra.mxu0 0.0
  %2320 = vmatprep.subr.mxu0 0.0
  %2321 = vmatpush2.msra.mxu0 0.0
  %2322 = vmatprep.subr.mxu0 0.0
  %2323 = vmatpush2.msra.mxu0 0.0
  %2324 = vmatprep.subr.mxu0 0.0
  %2325 = vmatpush2.msra.mxu0 0.0
  %2326 = vmatprep.subr.mxu0 0.0
  %2327 = vmatpush2.msra.mxu0 0.0
  %2328 = vmatprep.mubr.f32.mxu0 0.0
  %2329 = vmatmul.mubr.f32.gmra.mxu0 %v2033
  %v2330 = vpop.f32.mrf.mxu0
  %v2331 = vadd.f32 0.0, %v2330
  %v2332 = vpop.f32.mrf.mxu0
  %2333 = vdwg.mxu0
  %v2334 = vadd.f32 %v2263, %v2331
  %v2335 = vxor.u32 %v2334, 2147483648
  %v2336 = vmul.f32 %v2335, 1.442695
  %v2337 = vpow.pop %v2336
  %v2338 = vadd.f32 %v2337, 1.0
  %v2339 = vrcp.pop %v2338
  %v2340 = vmul.f32 1.0, %v2339
  %v2341 = vmul.f32 %v2189, %v2028
  %v2342 = vmul.f32 %v2111, %v2262
  %v2343 = vadd.f32 %v2341, %v2342
  %v2344 = vtanh.pop %v2343
  %v2345 = vmul.f32 %v2340, %v2344
  %v2346 = vld [vmem:[#allocation2 + $0xc] sm:$0x3]
  %v2348 = vsel %vm145, %v2345, 0
  %2350 = vmatprep.subr.mxu0 0.0
  %2351 = vmatpush1.msra.mxu0 0.0
  %2352 = vmatprep.subr.mxu0 0.0
  %2353 = vmatpush1.msra.mxu0 0.0
  %2354 = vmatprep.subr.mxu0 0.0
  %2355 = vmatpush1.msra.mxu0 0.0
  %2356 = vmatprep.subr.mxu0 0.0
  %2357 = vmatpush1.msra.mxu0 0.0
  %2358 = vmatprep.subr.mxu0 0.0
  %2359 = vmatpush1.msra.mxu0 0.0
  %2360 = vmatprep.subr.mxu0 0.0
  %2361 = vmatpush1.msra.mxu0 0.0
  %2362 = vmatprep.subr.mxu0 0.0
  %2363 = vmatpush1.msra.mxu0 0.0
  %2364 = vmatprep.subr.mxu0 0.0
  %2365 = vmatpush1.msra.mxu0 0.0
  %2366 = vmatprep.subr.mxu0 0.0
  %2367 = vmatpush1.msra.mxu0 %v428
  %2368 = vmatprep.subr.mxu0 0.0
  %2369 = vmatpush1.msra.mxu0 %v427
  %2370 = vmatprep.subr.mxu0 0.0
  %2371 = vmatpush1.msra.mxu0 %v426
  %2372 = vmatprep.subr.mxu0 0.0
  %2373 = vmatpush1.msra.mxu0 %v425
  %2374 = vmatprep.subr.mxu0 0.0
  %2375 = vmatpush1.msra.mxu0 %v424
  %2376 = vmatprep.subr.mxu0 0.0
  %2377 = vmatpush1.msra.mxu0 %v423
  %2378 = vmatprep.subr.mxu0 0.0
  %2379 = vmatpush1.msra.mxu0 %v422
  %2380 = vmatprep.subr.mxu0 0.0
  %2381 = vmatpush1.msra.mxu0 %v421
  %2382 = vmatprep.subr.mxu0 0.0
  %2383 = vmatpush2.msra.mxu0 0.0
  %2384 = vmatprep.subr.mxu0 0.0
  %2385 = vmatpush2.msra.mxu0 0.0
  %2386 = vmatprep.subr.mxu0 0.0
  %2387 = vmatpush2.msra.mxu0 0.0
  %2388 = vmatprep.subr.mxu0 0.0
  %2389 = vmatpush2.msra.mxu0 0.0
  %2390 = vmatprep.subr.mxu0 0.0
  %2391 = vmatpush2.msra.mxu0 0.0
  %2392 = vmatprep.subr.mxu0 0.0
  %2393 = vmatpush2.msra.mxu0 0.0
  %2394 = vmatprep.subr.mxu0 0.0
  %2395 = vmatpush2.msra.mxu0 0.0
  %2396 = vmatprep.subr.mxu0 0.0
  %2397 = vmatpush2.msra.mxu0 0.0
  %2398 = vmatprep.subr.mxu0 0.0
  %2399 = vmatpush2.msra.mxu0 0.0
  %2400 = vmatprep.subr.mxu0 0.0
  %2401 = vmatpush2.msra.mxu0 0.0
  %2402 = vmatprep.subr.mxu0 0.0
  %2403 = vmatpush2.msra.mxu0 0.0
  %2404 = vmatprep.subr.mxu0 0.0
  %2405 = vmatpush2.msra.mxu0 0.0
  %2406 = vmatprep.subr.mxu0 0.0
  %2407 = vmatpush2.msra.mxu0 0.0
  %2408 = vmatprep.subr.mxu0 0.0
  %2409 = vmatpush2.msra.mxu0 0.0
  %2410 = vmatprep.subr.mxu0 0.0
  %2411 = vmatpush2.msra.mxu0 0.0
  %2412 = vmatprep.subr.mxu0 0.0
  %2413 = vmatpush2.msra.mxu0 0.0
  %2414 = vmatprep.mubr.f32.mxu0 0.0
  %2415 = vmatmul.mubr.f32.gmra.mxu0 %v2348
  %v2416 = vpop.f32.mrf.mxu0
  %v2417 = vadd.f32 0.0, %v2416
  %v2418 = vpop.f32.mrf.mxu0
  %2419 = vdwg.mxu0
  %v2420 = vadd.f32 %v2346, %v2417
  %v2421 = vxor.u32 %v2420, 2147483648
  %v2422 = vmul.f32 %v2421, 1.442695
  %v2423 = vpow.pop %v2422
  %v2424 = vadd.f32 %v2423, 1.0
  %v2425 = vrcp.pop %v2424
  %v2426 = vmul.f32 1.0, %v2425
  %v2427 = vld [vmem:[%s236 + $0xc] sm:$0x3]
  %2428 = vmatprep.subr.mxu0 0.0
  %2429 = vmatpush1.msra.mxu0 0.0
  %2430 = vmatprep.subr.mxu0 0.0
  %2431 = vmatpush1.msra.mxu0 0.0
  %2432 = vmatprep.subr.mxu0 0.0
  %2433 = vmatpush1.msra.mxu0 0.0
  %2434 = vmatprep.subr.mxu0 0.0
  %2435 = vmatpush1.msra.mxu0 0.0
  %2436 = vmatprep.subr.mxu0 0.0
  %2437 = vmatpush1.msra.mxu0 0.0
  %2438 = vmatprep.subr.mxu0 0.0
  %2439 = vmatpush1.msra.mxu0 0.0
  %2440 = vmatprep.subr.mxu0 0.0
  %2441 = vmatpush1.msra.mxu0 0.0
  %2442 = vmatprep.subr.mxu0 0.0
  %2443 = vmatpush1.msra.mxu0 0.0
  %2444 = vmatprep.subr.mxu0 0.0
  %2445 = vmatpush1.msra.mxu0 %v437
  %2446 = vmatprep.subr.mxu0 0.0
  %2447 = vmatpush1.msra.mxu0 %v436
  %2448 = vmatprep.subr.mxu0 0.0
  %2449 = vmatpush1.msra.mxu0 %v435
  %2450 = vmatprep.subr.mxu0 0.0
  %2451 = vmatpush1.msra.mxu0 %v434
  %2452 = vmatprep.subr.mxu0 0.0
  %2453 = vmatpush1.msra.mxu0 %v433
  %2454 = vmatprep.subr.mxu0 0.0
  %2455 = vmatpush1.msra.mxu0 %v432
  %2456 = vmatprep.subr.mxu0 0.0
  %2457 = vmatpush1.msra.mxu0 %v431
  %2458 = vmatprep.subr.mxu0 0.0
  %2459 = vmatpush1.msra.mxu0 %v430
  %2460 = vmatprep.subr.mxu0 0.0
  %2461 = vmatpush2.msra.mxu0 0.0
  %2462 = vmatprep.subr.mxu0 0.0
  %2463 = vmatpush2.msra.mxu0 0.0
  %2464 = vmatprep.subr.mxu0 0.0
  %2465 = vmatpush2.msra.mxu0 0.0
  %2466 = vmatprep.subr.mxu0 0.0
  %2467 = vmatpush2.msra.mxu0 0.0
  %2468 = vmatprep.subr.mxu0 0.0
  %2469 = vmatpush2.msra.mxu0 0.0
  %2470 = vmatprep.subr.mxu0 0.0
  %2471 = vmatpush2.msra.mxu0 0.0
  %2472 = vmatprep.subr.mxu0 0.0
  %2473 = vmatpush2.msra.mxu0 0.0
  %2474 = vmatprep.subr.mxu0 0.0
  %2475 = vmatpush2.msra.mxu0 0.0
  %2476 = vmatprep.subr.mxu0 0.0
  %2477 = vmatpush2.msra.mxu0 0.0
  %2478 = vmatprep.subr.mxu0 0.0
  %2479 = vmatpush2.msra.mxu0 0.0
  %2480 = vmatprep.subr.mxu0 0.0
  %2481 = vmatpush2.msra.mxu0 0.0
  %2482 = vmatprep.subr.mxu0 0.0
  %2483 = vmatpush2.msra.mxu0 0.0
  %2484 = vmatprep.subr.mxu0 0.0
  %2485 = vmatpush2.msra.mxu0 0.0
  %2486 = vmatprep.subr.mxu0 0.0
  %2487 = vmatpush2.msra.mxu0 0.0
  %2488 = vmatprep.subr.mxu0 0.0
  %2489 = vmatpush2.msra.mxu0 0.0
  %2490 = vmatprep.subr.mxu0 0.0
  %2491 = vmatpush2.msra.mxu0 0.0
  %2492 = vmatprep.mubr.f32.mxu0 0.0
  %2493 = vmatmul.mubr.f32.gmra.mxu0 %v2348
  %v2494 = vpop.f32.mrf.mxu0
  %v2495 = vadd.f32 0.0, %v2494
  %v2496 = vpop.f32.mrf.mxu0
  %2497 = vdwg.mxu0
  %v2498 = vadd.f32 %v2427, %v2495
  %v2499 = vxor.u32 %v2498, 2147483648
  %v2500 = vmul.f32 %v2499, 1.442695
  %v2501 = vpow.pop %v2500
  %v2502 = vadd.f32 %v2501, 1.0
  %v2503 = vrcp.pop %v2502
  %v2504 = vmul.f32 1.0, %v2503
  %v2505 = vld [vmem:[%s327 + $0xc] sm:$0x3]
  %2506 = vmatprep.subr.mxu0 0.0
  %2507 = vmatpush1.msra.mxu0 0.0
  %2508 = vmatprep.subr.mxu0 0.0
  %2509 = vmatpush1.msra.mxu0 0.0
  %2510 = vmatprep.subr.mxu0 0.0
  %2511 = vmatpush1.msra.mxu0 0.0
  %2512 = vmatprep.subr.mxu0 0.0
  %2513 = vmatpush1.msra.mxu0 0.0
  %2514 = vmatprep.subr.mxu0 0.0
  %2515 = vmatpush1.msra.mxu0 0.0
  %2516 = vmatprep.subr.mxu0 0.0
  %2517 = vmatpush1.msra.mxu0 0.0
  %2518 = vmatprep.subr.mxu0 0.0
  %2519 = vmatpush1.msra.mxu0 0.0
  %2520 = vmatprep.subr.mxu0 0.0
  %2521 = vmatpush1.msra.mxu0 0.0
  %2522 = vmatprep.subr.mxu0 0.0
  %2523 = vmatpush1.msra.mxu0 %v446
  %2524 = vmatprep.subr.mxu0 0.0
  %2525 = vmatpush1.msra.mxu0 %v445
  %2526 = vmatprep.subr.mxu0 0.0
  %2527 = vmatpush1.msra.mxu0 %v444
  %2528 = vmatprep.subr.mxu0 0.0
  %2529 = vmatpush1.msra.mxu0 %v443
  %2530 = vmatprep.subr.mxu0 0.0
  %2531 = vmatpush1.msra.mxu0 %v442
  %2532 = vmatprep.subr.mxu0 0.0
  %2533 = vmatpush1.msra.mxu0 %v441
  %2534 = vmatprep.subr.mxu0 0.0
  %2535 = vmatpush1.msra.mxu0 %v440
  %2536 = vmatprep.subr.mxu0 0.0
  %2537 = vmatpush1.msra.mxu0 %v439
  %2538 = vmatprep.subr.mxu0 0.0
  %2539 = vmatpush2.msra.mxu0 0.0
  %2540 = vmatprep.subr.mxu0 0.0
  %2541 = vmatpush2.msra.mxu0 0.0
  %2542 = vmatprep.subr.mxu0 0.0
  %2543 = vmatpush2.msra.mxu0 0.0
  %2544 = vmatprep.subr.mxu0 0.0
  %2545 = vmatpush2.msra.mxu0 0.0
  %2546 = vmatprep.subr.mxu0 0.0
  %2547 = vmatpush2.msra.mxu0 0.0
  %2548 = vmatprep.subr.mxu0 0.0
  %2549 = vmatpush2.msra.mxu0 0.0
  %2550 = vmatprep.subr.mxu0 0.0
  %2551 = vmatpush2.msra.mxu0 0.0
  %2552 = vmatprep.subr.mxu0 0.0
  %2553 = vmatpush2.msra.mxu0 0.0
  %2554 = vmatprep.subr.mxu0 0.0
  %2555 = vmatpush2.msra.mxu0 0.0
  %2556 = vmatprep.subr.mxu0 0.0
  %2557 = vmatpush2.msra.mxu0 0.0
  %2558 = vmatprep.subr.mxu0 0.0
  %2559 = vmatpush2.msra.mxu0 0.0
  %2560 = vmatprep.subr.mxu0 0.0
  %2561 = vmatpush2.msra.mxu0 0.0
  %2562 = vmatprep.subr.mxu0 0.0
  %2563 = vmatpush2.msra.mxu0 0.0
  %2564 = vmatprep.subr.mxu0 0.0
  %2565 = vmatpush2.msra.mxu0 0.0
  %2566 = vmatprep.subr.mxu0 0.0
  %2567 = vmatpush2.msra.mxu0 0.0
  %2568 = vmatprep.subr.mxu0 0.0
  %2569 = vmatpush2.msra.mxu0 0.0
  %2570 = vmatprep.mubr.f32.mxu0 0.0
  %2571 = vmatmul.mubr.f32.gmra.mxu0 %v2348
  %v2572 = vpop.f32.mrf.mxu0
  %v2573 = vadd.f32 0.0, %v2572
  %v2574 = vpop.f32.mrf.mxu0
  %2575 = vdwg.mxu0
  %v2576 = vadd.f32 %v2505, %v2573
  %v2577 = vtanh.pop %v2576
  %v2578 = vld [vmem:[%s418 + $0xc] sm:$0x3]
  %2579 = vmatprep.subr.mxu0 0.0
  %2580 = vmatpush1.msra.mxu0 0.0
  %2581 = vmatprep.subr.mxu0 0.0
  %2582 = vmatpush1.msra.mxu0 0.0
  %2583 = vmatprep.subr.mxu0 0.0
  %2584 = vmatpush1.msra.mxu0 0.0
  %2585 = vmatprep.subr.mxu0 0.0
  %2586 = vmatpush1.msra.mxu0 0.0
  %2587 = vmatprep.subr.mxu0 0.0
  %2588 = vmatpush1.msra.mxu0 0.0
  %2589 = vmatprep.subr.mxu0 0.0
  %2590 = vmatpush1.msra.mxu0 0.0
  %2591 = vmatprep.subr.mxu0 0.0
  %2592 = vmatpush1.msra.mxu0 0.0
  %2593 = vmatprep.subr.mxu0 0.0
  %2594 = vmatpush1.msra.mxu0 0.0
  %2595 = vmatprep.subr.mxu0 0.0
  %2596 = vmatpush1.msra.mxu0 %v455
  %2597 = vmatprep.subr.mxu0 0.0
  %2598 = vmatpush1.msra.mxu0 %v454
  %2599 = vmatprep.subr.mxu0 0.0
  %2600 = vmatpush1.msra.mxu0 %v453
  %2601 = vmatprep.subr.mxu0 0.0
  %2602 = vmatpush1.msra.mxu0 %v452
  %2603 = vmatprep.subr.mxu0 0.0
  %2604 = vmatpush1.msra.mxu0 %v451
  %2605 = vmatprep.subr.mxu0 0.0
  %2606 = vmatpush1.msra.mxu0 %v450
  %2607 = vmatprep.subr.mxu0 0.0
  %2608 = vmatpush1.msra.mxu0 %v449
  %2609 = vmatprep.subr.mxu0 0.0
  %2610 = vmatpush1.msra.mxu0 %v448
  %2611 = vmatprep.subr.mxu0 0.0
  %2612 = vmatpush2.msra.mxu0 0.0
  %2613 = vmatprep.subr.mxu0 0.0
  %2614 = vmatpush2.msra.mxu0 0.0
  %2615 = vmatprep.subr.mxu0 0.0
  %2616 = vmatpush2.msra.mxu0 0.0
  %2617 = vmatprep.subr.mxu0 0.0
  %2618 = vmatpush2.msra.mxu0 0.0
  %2619 = vmatprep.subr.mxu0 0.0
  %2620 = vmatpush2.msra.mxu0 0.0
  %2621 = vmatprep.subr.mxu0 0.0
  %2622 = vmatpush2.msra.mxu0 0.0
  %2623 = vmatprep.subr.mxu0 0.0
  %2624 = vmatpush2.msra.mxu0 0.0
  %2625 = vmatprep.subr.mxu0 0.0
  %2626 = vmatpush2.msra.mxu0 0.0
  %2627 = vmatprep.subr.mxu0 0.0
  %2628 = vmatpush2.msra.mxu0 0.0
  %2629 = vmatprep.subr.mxu0 0.0
  %2630 = vmatpush2.msra.mxu0 0.0
  %2631 = vmatprep.subr.mxu0 0.0
  %2632 = vmatpush2.msra.mxu0 0.0
  %2633 = vmatprep.subr.mxu0 0.0
  %2634 = vmatpush2.msra.mxu0 0.0
  %2635 = vmatprep.subr.mxu0 0.0
  %2636 = vmatpush2.msra.mxu0 0.0
  %2637 = vmatprep.subr.mxu0 0.0
  %2638 = vmatpush2.msra.mxu0 0.0
  %2639 = vmatprep.subr.mxu0 0.0
  %2640 = vmatpush2.msra.mxu0 0.0
  %2641 = vmatprep.subr.mxu0 0.0
  %2642 = vmatpush2.msra.mxu0 0.0
  %2643 = vmatprep.mubr.f32.mxu0 0.0
  %2644 = vmatmul.mubr.f32.gmra.mxu0 %v2348
  %v2645 = vpop.f32.mrf.mxu0
  %v2646 = vadd.f32 0.0, %v2645
  %v2647 = vpop.f32.mrf.mxu0
  %2648 = vdwg.mxu0
  %v2649 = vadd.f32 %v2578, %v2646
  %v2650 = vxor.u32 %v2649, 2147483648
  %v2651 = vmul.f32 %v2650, 1.442695
  %v2652 = vpow.pop %v2651
  %v2653 = vadd.f32 %v2652, 1.0
  %v2654 = vrcp.pop %v2653
  %v2655 = vmul.f32 1.0, %v2654
  %v2656 = vmul.f32 %v2504, %v2343
  %v2657 = vmul.f32 %v2426, %v2577
  %v2658 = vadd.f32 %v2656, %v2657
  %v2659 = vtanh.pop %v2658
  %v2660 = vmul.f32 %v2655, %v2659
  %v2661 = vld [vmem:[#allocation2 + $0xe] sm:$0x3]
  %v2663 = vsel %vm145, %v2660, 0
  %2665 = vmatprep.subr.mxu0 0.0
  %2666 = vmatpush1.msra.mxu0 0.0
  %2667 = vmatprep.subr.mxu0 0.0
  %2668 = vmatpush1.msra.mxu0 0.0
  %2669 = vmatprep.subr.mxu0 0.0
  %2670 = vmatpush1.msra.mxu0 0.0
  %2671 = vmatprep.subr.mxu0 0.0
  %2672 = vmatpush1.msra.mxu0 0.0
  %2673 = vmatprep.subr.mxu0 0.0
  %2674 = vmatpush1.msra.mxu0 0.0
  %2675 = vmatprep.subr.mxu0 0.0
  %2676 = vmatpush1.msra.mxu0 0.0
  %2677 = vmatprep.subr.mxu0 0.0
  %2678 = vmatpush1.msra.mxu0 0.0
  %2679 = vmatprep.subr.mxu0 0.0
  %2680 = vmatpush1.msra.mxu0 0.0
  %2681 = vmatprep.subr.mxu0 0.0
  %2682 = vmatpush1.msra.mxu0 %v428
  %2683 = vmatprep.subr.mxu0 0.0
  %2684 = vmatpush1.msra.mxu0 %v427
  %2685 = vmatprep.subr.mxu0 0.0
  %2686 = vmatpush1.msra.mxu0 %v426
  %2687 = vmatprep.subr.mxu0 0.0
  %2688 = vmatpush1.msra.mxu0 %v425
  %2689 = vmatprep.subr.mxu0 0.0
  %2690 = vmatpush1.msra.mxu0 %v424
  %2691 = vmatprep.subr.mxu0 0.0
  %2692 = vmatpush1.msra.mxu0 %v423
  %2693 = vmatprep.subr.mxu0 0.0
  %2694 = vmatpush1.msra.mxu0 %v422
  %2695 = vmatprep.subr.mxu0 0.0
  %2696 = vmatpush1.msra.mxu0 %v421
  %2697 = vmatprep.subr.mxu0 0.0
  %2698 = vmatpush2.msra.mxu0 0.0
  %2699 = vmatprep.subr.mxu0 0.0
  %2700 = vmatpush2.msra.mxu0 0.0
  %2701 = vmatprep.subr.mxu0 0.0
  %2702 = vmatpush2.msra.mxu0 0.0
  %2703 = vmatprep.subr.mxu0 0.0
  %2704 = vmatpush2.msra.mxu0 0.0
  %2705 = vmatprep.subr.mxu0 0.0
  %2706 = vmatpush2.msra.mxu0 0.0
  %2707 = vmatprep.subr.mxu0 0.0
  %2708 = vmatpush2.msra.mxu0 0.0
  %2709 = vmatprep.subr.mxu0 0.0
  %2710 = vmatpush2.msra.mxu0 0.0
  %2711 = vmatprep.subr.mxu0 0.0
  %2712 = vmatpush2.msra.mxu0 0.0
  %2713 = vmatprep.subr.mxu0 0.0
  %2714 = vmatpush2.msra.mxu0 0.0
  %2715 = vmatprep.subr.mxu0 0.0
  %2716 = vmatpush2.msra.mxu0 0.0
  %2717 = vmatprep.subr.mxu0 0.0
  %2718 = vmatpush2.msra.mxu0 0.0
  %2719 = vmatprep.subr.mxu0 0.0
  %2720 = vmatpush2.msra.mxu0 0.0
  %2721 = vmatprep.subr.mxu0 0.0
  %2722 = vmatpush2.msra.mxu0 0.0
  %2723 = vmatprep.subr.mxu0 0.0
  %2724 = vmatpush2.msra.mxu0 0.0
  %2725 = vmatprep.subr.mxu0 0.0
  %2726 = vmatpush2.msra.mxu0 0.0
  %2727 = vmatprep.subr.mxu0 0.0
  %2728 = vmatpush2.msra.mxu0 0.0
  %2729 = vmatprep.mubr.f32.mxu0 0.0
  %2730 = vmatmul.mubr.f32.gmra.mxu0 %v2663
  %v2731 = vpop.f32.mrf.mxu0
  %v2732 = vadd.f32 0.0, %v2731
  %v2733 = vpop.f32.mrf.mxu0
  %2734 = vdwg.mxu0
  %v2735 = vadd.f32 %v2661, %v2732
  %v2736 = vxor.u32 %v2735, 2147483648
  %v2737 = vmul.f32 %v2736, 1.442695
  %v2738 = vpow.pop %v2737
  %v2739 = vadd.f32 %v2738, 1.0
  %v2740 = vrcp.pop %v2739
  %v2741 = vmul.f32 1.0, %v2740
  %v2742 = vld [vmem:[%s236 + $0xe] sm:$0x3]
  %2743 = vmatprep.subr.mxu0 0.0
  %2744 = vmatpush1.msra.mxu0 0.0
  %2745 = vmatprep.subr.mxu0 0.0
  %2746 = vmatpush1.msra.mxu0 0.0
  %2747 = vmatprep.subr.mxu0 0.0
  %2748 = vmatpush1.msra.mxu0 0.0
  %2749 = vmatprep.subr.mxu0 0.0
  %2750 = vmatpush1.msra.mxu0 0.0
  %2751 = vmatprep.subr.mxu0 0.0
  %2752 = vmatpush1.msra.mxu0 0.0
  %2753 = vmatprep.subr.mxu0 0.0
  %2754 = vmatpush1.msra.mxu0 0.0
  %2755 = vmatprep.subr.mxu0 0.0
  %2756 = vmatpush1.msra.mxu0 0.0
  %2757 = vmatprep.subr.mxu0 0.0
  %2758 = vmatpush1.msra.mxu0 0.0
  %2759 = vmatprep.subr.mxu0 0.0
  %2760 = vmatpush1.msra.mxu0 %v437
  %2761 = vmatprep.subr.mxu0 0.0
  %2762 = vmatpush1.msra.mxu0 %v436
  %2763 = vmatprep.subr.mxu0 0.0
  %2764 = vmatpush1.msra.mxu0 %v435
  %2765 = vmatprep.subr.mxu0 0.0
  %2766 = vmatpush1.msra.mxu0 %v434
  %2767 = vmatprep.subr.mxu0 0.0
  %2768 = vmatpush1.msra.mxu0 %v433
  %2769 = vmatprep.subr.mxu0 0.0
  %2770 = vmatpush1.msra.mxu0 %v432
  %2771 = vmatprep.subr.mxu0 0.0
  %2772 = vmatpush1.msra.mxu0 %v431
  %2773 = vmatprep.subr.mxu0 0.0
  %2774 = vmatpush1.msra.mxu0 %v430
  %2775 = vmatprep.subr.mxu0 0.0
  %2776 = vmatpush2.msra.mxu0 0.0
  %2777 = vmatprep.subr.mxu0 0.0
  %2778 = vmatpush2.msra.mxu0 0.0
  %2779 = vmatprep.subr.mxu0 0.0
  %2780 = vmatpush2.msra.mxu0 0.0
  %2781 = vmatprep.subr.mxu0 0.0
  %2782 = vmatpush2.msra.mxu0 0.0
  %2783 = vmatprep.subr.mxu0 0.0
  %2784 = vmatpush2.msra.mxu0 0.0
  %2785 = vmatprep.subr.mxu0 0.0
  %2786 = vmatpush2.msra.mxu0 0.0
  %2787 = vmatprep.subr.mxu0 0.0
  %2788 = vmatpush2.msra.mxu0 0.0
  %2789 = vmatprep.subr.mxu0 0.0
  %2790 = vmatpush2.msra.mxu0 0.0
  %2791 = vmatprep.subr.mxu0 0.0
  %2792 = vmatpush2.msra.mxu0 0.0
  %2793 = vmatprep.subr.mxu0 0.0
  %2794 = vmatpush2.msra.mxu0 0.0
  %2795 = vmatprep.subr.mxu0 0.0
  %2796 = vmatpush2.msra.mxu0 0.0
  %2797 = vmatprep.subr.mxu0 0.0
  %2798 = vmatpush2.msra.mxu0 0.0
  %2799 = vmatprep.subr.mxu0 0.0
  %2800 = vmatpush2.msra.mxu0 0.0
  %2801 = vmatprep.subr.mxu0 0.0
  %2802 = vmatpush2.msra.mxu0 0.0
  %2803 = vmatprep.subr.mxu0 0.0
  %2804 = vmatpush2.msra.mxu0 0.0
  %2805 = vmatprep.subr.mxu0 0.0
  %2806 = vmatpush2.msra.mxu0 0.0
  %2807 = vmatprep.mubr.f32.mxu0 0.0
  %2808 = vmatmul.mubr.f32.gmra.mxu0 %v2663
  %v2809 = vpop.f32.mrf.mxu0
  %v2810 = vadd.f32 0.0, %v2809
  %v2811 = vpop.f32.mrf.mxu0
  %2812 = vdwg.mxu0
  %v2813 = vadd.f32 %v2742, %v2810
  %v2814 = vxor.u32 %v2813, 2147483648
  %v2815 = vmul.f32 %v2814, 1.442695
  %v2816 = vpow.pop %v2815
  %v2817 = vadd.f32 %v2816, 1.0
  %v2818 = vrcp.pop %v2817
  %v2819 = vmul.f32 1.0, %v2818
  %v2820 = vld [vmem:[%s327 + $0xe] sm:$0x3]
  %2821 = vmatprep.subr.mxu0 0.0
  %2822 = vmatpush1.msra.mxu0 0.0
  %2823 = vmatprep.subr.mxu0 0.0
  %2824 = vmatpush1.msra.mxu0 0.0
  %2825 = vmatprep.subr.mxu0 0.0
  %2826 = vmatpush1.msra.mxu0 0.0
  %2827 = vmatprep.subr.mxu0 0.0
  %2828 = vmatpush1.msra.mxu0 0.0
  %2829 = vmatprep.subr.mxu0 0.0
  %2830 = vmatpush1.msra.mxu0 0.0
  %2831 = vmatprep.subr.mxu0 0.0
  %2832 = vmatpush1.msra.mxu0 0.0
  %2833 = vmatprep.subr.mxu0 0.0
  %2834 = vmatpush1.msra.mxu0 0.0
  %2835 = vmatprep.subr.mxu0 0.0
  %2836 = vmatpush1.msra.mxu0 0.0
  %2837 = vmatprep.subr.mxu0 0.0
  %2838 = vmatpush1.msra.mxu0 %v446
  %2839 = vmatprep.subr.mxu0 0.0
  %2840 = vmatpush1.msra.mxu0 %v445
  %2841 = vmatprep.subr.mxu0 0.0
  %2842 = vmatpush1.msra.mxu0 %v444
  %2843 = vmatprep.subr.mxu0 0.0
  %2844 = vmatpush1.msra.mxu0 %v443
  %2845 = vmatprep.subr.mxu0 0.0
  %2846 = vmatpush1.msra.mxu0 %v442
  %2847 = vmatprep.subr.mxu0 0.0
  %2848 = vmatpush1.msra.mxu0 %v441
  %2849 = vmatprep.subr.mxu0 0.0
  %2850 = vmatpush1.msra.mxu0 %v440
  %2851 = vmatprep.subr.mxu0 0.0
  %2852 = vmatpush1.msra.mxu0 %v439
  %2853 = vmatprep.subr.mxu0 0.0
  %2854 = vmatpush2.msra.mxu0 0.0
  %2855 = vmatprep.subr.mxu0 0.0
  %2856 = vmatpush2.msra.mxu0 0.0
  %2857 = vmatprep.subr.mxu0 0.0
  %2858 = vmatpush2.msra.mxu0 0.0
  %2859 = vmatprep.subr.mxu0 0.0
  %2860 = vmatpush2.msra.mxu0 0.0
  %2861 = vmatprep.subr.mxu0 0.0
  %2862 = vmatpush2.msra.mxu0 0.0
  %2863 = vmatprep.subr.mxu0 0.0
  %2864 = vmatpush2.msra.mxu0 0.0
  %2865 = vmatprep.subr.mxu0 0.0
  %2866 = vmatpush2.msra.mxu0 0.0
  %2867 = vmatprep.subr.mxu0 0.0
  %2868 = vmatpush2.msra.mxu0 0.0
  %2869 = vmatprep.subr.mxu0 0.0
  %2870 = vmatpush2.msra.mxu0 0.0
  %2871 = vmatprep.subr.mxu0 0.0
  %2872 = vmatpush2.msra.mxu0 0.0
  %2873 = vmatprep.subr.mxu0 0.0
  %2874 = vmatpush2.msra.mxu0 0.0
  %2875 = vmatprep.subr.mxu0 0.0
  %2876 = vmatpush2.msra.mxu0 0.0
  %2877 = vmatprep.subr.mxu0 0.0
  %2878 = vmatpush2.msra.mxu0 0.0
  %2879 = vmatprep.subr.mxu0 0.0
  %2880 = vmatpush2.msra.mxu0 0.0
  %2881 = vmatprep.subr.mxu0 0.0
  %2882 = vmatpush2.msra.mxu0 0.0
  %2883 = vmatprep.subr.mxu0 0.0
  %2884 = vmatpush2.msra.mxu0 0.0
  %2885 = vmatprep.mubr.f32.mxu0 0.0
  %2886 = vmatmul.mubr.f32.gmra.mxu0 %v2663
  %v2887 = vpop.f32.mrf.mxu0
  %v2888 = vadd.f32 0.0, %v2887
  %v2889 = vpop.f32.mrf.mxu0
  %2890 = vdwg.mxu0
  %v2891 = vadd.f32 %v2820, %v2888
  %v2892 = vtanh.pop %v2891
  %v2893 = vld [vmem:[%s418 + $0xe] sm:$0x3]
  %2894 = vmatprep.subr.mxu0 0.0
  %2895 = vmatpush1.msra.mxu0 0.0
  %2896 = vmatprep.subr.mxu0 0.0
  %2897 = vmatpush1.msra.mxu0 0.0
  %2898 = vmatprep.subr.mxu0 0.0
  %2899 = vmatpush1.msra.mxu0 0.0
  %2900 = vmatprep.subr.mxu0 0.0
  %2901 = vmatpush1.msra.mxu0 0.0
  %2902 = vmatprep.subr.mxu0 0.0
  %2903 = vmatpush1.msra.mxu0 0.0
  %2904 = vmatprep.subr.mxu0 0.0
  %2905 = vmatpush1.msra.mxu0 0.0
  %2906 = vmatprep.subr.mxu0 0.0
  %2907 = vmatpush1.msra.mxu0 0.0
  %2908 = vmatprep.subr.mxu0 0.0
  %2909 = vmatpush1.msra.mxu0 0.0
  %2910 = vmatprep.subr.mxu0 0.0
  %2911 = vmatpush1.msra.mxu0 %v455
  %2912 = vmatprep.subr.mxu0 0.0
  %2913 = vmatpush1.msra.mxu0 %v454
  %2914 = vmatprep.subr.mxu0 0.0
  %2915 = vmatpush1.msra.mxu0 %v453
  %2916 = vmatprep.subr.mxu0 0.0
  %2917 = vmatpush1.msra.mxu0 %v452
  %2918 = vmatprep.subr.mxu0 0.0
  %2919 = vmatpush1.msra.mxu0 %v451
  %2920 = vmatprep.subr.mxu0 0.0
  %2921 = vmatpush1.msra.mxu0 %v450
  %2922 = vmatprep.subr.mxu0 0.0
  %2923 = vmatpush1.msra.mxu0 %v449
  %2924 = vmatprep.subr.mxu0 0.0
  %2925 = vmatpush1.msra.mxu0 %v448
  %2926 = vmatprep.subr.mxu0 0.0
  %2927 = vmatpush2.msra.mxu0 0.0
  %2928 = vmatprep.subr.mxu0 0.0
  %2929 = vmatpush2.msra.mxu0 0.0
  %2930 = vmatprep.subr.mxu0 0.0
  %2931 = vmatpush2.msra.mxu0 0.0
  %2932 = vmatprep.subr.mxu0 0.0
  %2933 = vmatpush2.msra.mxu0 0.0
  %2934 = vmatprep.subr.mxu0 0.0
  %2935 = vmatpush2.msra.mxu0 0.0
  %2936 = vmatprep.subr.mxu0 0.0
  %2937 = vmatpush2.msra.mxu0 0.0
  %2938 = vmatprep.subr.mxu0 0.0
  %2939 = vmatpush2.msra.mxu0 0.0
  %2940 = vmatprep.subr.mxu0 0.0
  %2941 = vmatpush2.msra.mxu0 0.0
  %2942 = vmatprep.subr.mxu0 0.0
  %2943 = vmatpush2.msra.mxu0 0.0
  %2944 = vmatprep.subr.mxu0 0.0
  %2945 = vmatpush2.msra.mxu0 0.0
  %2946 = vmatprep.subr.mxu0 0.0
  %2947 = vmatpush2.msra.mxu0 0.0
  %2948 = vmatprep.subr.mxu0 0.0
  %2949 = vmatpush2.msra.mxu0 0.0
  %2950 = vmatprep.subr.mxu0 0.0
  %2951 = vmatpush2.msra.mxu0 0.0
  %2952 = vmatprep.subr.mxu0 0.0
  %2953 = vmatpush2.msra.mxu0 0.0
  %2954 = vmatprep.subr.mxu0 0.0
  %2955 = vmatpush2.msra.mxu0 0.0
  %2956 = vmatprep.subr.mxu0 0.0
  %2957 = vmatpush2.msra.mxu0 0.0
  %2958 = vmatprep.mubr.f32.mxu0 0.0
  %2959 = vmatmul.mubr.f32.gmra.mxu0 %v2663
  %v2960 = vpop.f32.mrf.mxu0
  %v2961 = vadd.f32 0.0, %v2960
  %v2962 = vpop.f32.mrf.mxu0
  %2963 = vdwg.mxu0
  %v2964 = vadd.f32 %v2893, %v2961
  %v2965 = vxor.u32 %v2964, 2147483648
  %v2966 = vmul.f32 %v2965, 1.442695
  %v2967 = vpow.pop %v2966
  %v2968 = vadd.f32 %v2967, 1.0
  %v2969 = vrcp.pop %v2968
  %v2970 = vmul.f32 1.0, %v2969
  %v2971 = vmul.f32 %v2819, %v2658
  %v2972 = vmul.f32 %v2741, %v2892
  %v2973 = vadd.f32 %v2971, %v2972
  %v2974 = vtanh.pop %v2973
  %v2975 = vmul.f32 %v2970, %v2974
  %v2976 = vrot.slane %v1085, 6
  %v2978 = vrot.slane %v1400, 4
  %v2980 = vrot.slane %v1715, 2
  %v2982 = vrot.slane %v2345, 6
  %v2984 = vrot.slane %v2660, 4
  %v2987 = vrot.slane %v2975, 2
  %vm2989 = vcmask 1041408
  %v2990 = vsel %vm2989, %v770, %v2976
  %vm2991 = vcmask 1043456
  %v2992 = vsel %vm2991, %v2990, %v2978
  %vm2993 = vcmask 1045504
  %v2994 = vsel %vm2993, %v2992, %v2980
  %v2995 = vsel %vm2989, %v2030, %v2982
  %v2996 = vsel %vm2991, %v2995, %v2984
  %v2997 = vsel %vm2993, %v2996, %v2987
  %v2998 = vld [vmem:[%s4] sm:$0xff]
  %v2999 = vld [vmem:[%s4 + $0x8] sm:$0xff]
  %v3000 = vld [vmem:[%s4 + $0x10] sm:$0xff]
  %v3001 = vld [vmem:[%s4 + $0x18] sm:$0xff]
  %v3002 = vld [vmem:[%s4 + $0x20] sm:$0xff]
  %v3003 = vld [vmem:[%s4 + $0x28] sm:$0xff]
  %v3004 = vld [vmem:[%s4 + $0x30] sm:$0xff]
  %v3005 = vld [vmem:[%s4 + $0x38] sm:$0xff]
  %v3006 = vld [vmem:[%s6] sm:$0x1]
  %v3008 = vlaneseq
  %v3009 = vshrl.u32 %v3008, 7
  %v3010 = vsub.s32 0, %v3009
  %v3011 = vrot.slane %v3006, %v3010
  %v3014 = vsel %vm145, %v2994, 0
  %v3017 = vsel %vm145, %v2997, 0
  %3019 = vmatprep.subr.mxu0 0.0
  %3020 = vmatpush1.msra.mxu0 0.0
  %3021 = vmatprep.subr.mxu0 0.0
  %3022 = vmatpush1.msra.mxu0 0.0
  %3023 = vmatprep.subr.mxu0 0.0
  %3024 = vmatpush1.msra.mxu0 0.0
  %3025 = vmatprep.subr.mxu0 0.0
  %3026 = vmatpush1.msra.mxu0 0.0
  %3027 = vmatprep.subr.mxu0 0.0
  %3028 = vmatpush1.msra.mxu0 0.0
  %3029 = vmatprep.subr.mxu0 0.0
  %3030 = vmatpush1.msra.mxu0 0.0
  %3031 = vmatprep.subr.mxu0 0.0
  %3032 = vmatpush1.msra.mxu0 0.0
  %3033 = vmatprep.subr.mxu0 0.0
  %3034 = vmatpush1.msra.mxu0 0.0
  %3035 = vmatprep.subr.mxu0 0.0
  %3036 = vmatpush1.msra.mxu0 %v3005
  %3037 = vmatprep.subr.mxu0 0.0
  %3038 = vmatpush1.msra.mxu0 %v3004
  %3039 = vmatprep.subr.mxu0 0.0
  %3040 = vmatpush1.msra.mxu0 %v3003
  %3041 = vmatprep.subr.mxu0 0.0
  %3042 = vmatpush1.msra.mxu0 %v3002
  %3043 = vmatprep.subr.mxu0 0.0
  %3044 = vmatpush1.msra.mxu0 %v3001
  %3045 = vmatprep.subr.mxu0 0.0
  %3046 = vmatpush1.msra.mxu0 %v3000
  %3047 = vmatprep.subr.mxu0 0.0
  %3048 = vmatpush1.msra.mxu0 %v2999
  %3049 = vmatprep.subr.mxu0 0.0
  %3050 = vmatpush1.msra.mxu0 %v2998
  %3051 = vmatprep.subr.mxu0 0.0
  %3052 = vmatpush2.msra.mxu0 0.0
  %3053 = vmatprep.subr.mxu0 0.0
  %3054 = vmatpush2.msra.mxu0 0.0
  %3055 = vmatprep.subr.mxu0 0.0
  %3056 = vmatpush2.msra.mxu0 0.0
  %3057 = vmatprep.subr.mxu0 0.0
  %3058 = vmatpush2.msra.mxu0 0.0
  %3059 = vmatprep.subr.mxu0 0.0
  %3060 = vmatpush2.msra.mxu0 0.0
  %3061 = vmatprep.subr.mxu0 0.0
  %3062 = vmatpush2.msra.mxu0 0.0
  %3063 = vmatprep.subr.mxu0 0.0
  %3064 = vmatpush2.msra.mxu0 0.0
  %3065 = vmatprep.subr.mxu0 0.0
  %3066 = vmatpush2.msra.mxu0 0.0
  %3067 = vmatprep.subr.mxu0 0.0
  %3068 = vmatpush2.msra.mxu0 0.0
  %3069 = vmatprep.subr.mxu0 0.0
  %3070 = vmatpush2.msra.mxu0 0.0
  %3071 = vmatprep.subr.mxu0 0.0
  %3072 = vmatpush2.msra.mxu0 0.0
  %3073 = vmatprep.subr.mxu0 0.0
  %3074 = vmatpush2.msra.mxu0 0.0
  %3075 = vmatprep.subr.mxu0 0.0
  %3076 = vmatpush2.msra.mxu0 0.0
  %3077 = vmatprep.subr.mxu0 0.0
  %3078 = vmatpush2.msra.mxu0 0.0
  %3079 = vmatprep.subr.mxu0 0.0
  %3080 = vmatpush2.msra.mxu0 0.0
  %3081 = vmatprep.subr.mxu0 0.0
  %3082 = vmatpush2.msra.mxu0 0.0
  %3083 = vmatprep.mubr.f32.mxu0 0.0
  %3084 = vmatmul.mubr.f32.gmra.mxu0 %v3014
  %v3085 = vpop.f32.mrf.mxu0
  %v3086 = vadd.f32 %v3011, %v3085
  %v3087 = vpop.f32.mrf.mxu0
  %3088 = vmatprep.mubr.f32.mxu0 0.0
  %3089 = vmatmul.mubr.f32.gmra.mxu0 %v3017
  %v3090 = vpop.f32.mrf.mxu0
  %v3091 = vadd.f32 %v3011, %v3090
  %v3092 = vpop.f32.mrf.mxu0
  %3093 = vdwg.mxu0
  %vm3094 = vcmask 261120
  %3095 = vst.msk [vmem:[#allocation3] sm:$0xff] %vm3094, %v3086
  %3096 = vst.msk [vmem:[#allocation3 + $0x8] sm:$0xff] %vm3094, %v3091
  %s3097 = scalar_lea.vmem %s4, 64
  %v3098 = vld [vmem:[%s3097] sm:$0xff]
  %v3099 = vld [vmem:[%s3097 + $0x8] sm:$0xff]
  %v3100 = vld [vmem:[%s3097 + $0x10] sm:$0xff]
  %v3101 = vld [vmem:[%s3097 + $0x18] sm:$0xff]
  %v3102 = vld [vmem:[%s3097 + $0x20] sm:$0xff]
  %v3103 = vld [vmem:[%s3097 + $0x28] sm:$0xff]
  %v3104 = vld [vmem:[%s3097 + $0x30] sm:$0xff]
  %v3105 = vld [vmem:[%s3097 + $0x38] sm:$0xff]
  %s3106 = scalar_lea.vmem %s6, 1
  %v3107 = vld [vmem:[%s3106] sm:$0x1]
  %v3109 = vlaneseq
  %v3110 = vshrl.u32 %v3109, 7
  %v3111 = vsub.s32 0, %v3110
  %v3112 = vrot.slane %v3107, %v3111
  %3114 = vmatprep.subr.mxu0 0.0
  %3115 = vmatpush1.msra.mxu0 0.0
  %3116 = vmatprep.subr.mxu0 0.0
  %3117 = vmatpush1.msra.mxu0 0.0
  %3118 = vmatprep.subr.mxu0 0.0
  %3119 = vmatpush1.msra.mxu0 0.0
  %3120 = vmatprep.subr.mxu0 0.0
  %3121 = vmatpush1.msra.mxu0 0.0
  %3122 = vmatprep.subr.mxu0 0.0
  %3123 = vmatpush1.msra.mxu0 0.0
  %3124 = vmatprep.subr.mxu0 0.0
  %3125 = vmatpush1.msra.mxu0 0.0
  %3126 = vmatprep.subr.mxu0 0.0
  %3127 = vmatpush1.msra.mxu0 0.0
  %3128 = vmatprep.subr.mxu0 0.0
  %3129 = vmatpush1.msra.mxu0 0.0
  %3130 = vmatprep.subr.mxu0 0.0
  %3131 = vmatpush1.msra.mxu0 %v3105
  %3132 = vmatprep.subr.mxu0 0.0
  %3133 = vmatpush1.msra.mxu0 %v3104
  %3134 = vmatprep.subr.mxu0 0.0
  %3135 = vmatpush1.msra.mxu0 %v3103
  %3136 = vmatprep.subr.mxu0 0.0
  %3137 = vmatpush1.msra.mxu0 %v3102
  %3138 = vmatprep.subr.mxu0 0.0
  %3139 = vmatpush1.msra.mxu0 %v3101
  %3140 = vmatprep.subr.mxu0 0.0
  %3141 = vmatpush1.msra.mxu0 %v3100
  %3142 = vmatprep.subr.mxu0 0.0
  %3143 = vmatpush1.msra.mxu0 %v3099
  %3144 = vmatprep.subr.mxu0 0.0
  %3145 = vmatpush1.msra.mxu0 %v3098
  %3146 = vmatprep.subr.mxu0 0.0
  %3147 = vmatpush2.msra.mxu0 0.0
  %3148 = vmatprep.subr.mxu0 0.0
  %3149 = vmatpush2.msra.mxu0 0.0
  %3150 = vmatprep.subr.mxu0 0.0
  %3151 = vmatpush2.msra.mxu0 0.0
  %3152 = vmatprep.subr.mxu0 0.0
  %3153 = vmatpush2.msra.mxu0 0.0
  %3154 = vmatprep.subr.mxu0 0.0
  %3155 = vmatpush2.msra.mxu0 0.0
  %3156 = vmatprep.subr.mxu0 0.0
  %3157 = vmatpush2.msra.mxu0 0.0
  %3158 = vmatprep.subr.mxu0 0.0
  %3159 = vmatpush2.msra.mxu0 0.0
  %3160 = vmatprep.subr.mxu0 0.0
  %3161 = vmatpush2.msra.mxu0 0.0
  %3162 = vmatprep.subr.mxu0 0.0
  %3163 = vmatpush2.msra.mxu0 0.0
  %3164 = vmatprep.subr.mxu0 0.0
  %3165 = vmatpush2.msra.mxu0 0.0
  %3166 = vmatprep.subr.mxu0 0.0
  %3167 = vmatpush2.msra.mxu0 0.0
  %3168 = vmatprep.subr.mxu0 0.0
  %3169 = vmatpush2.msra.mxu0 0.0
  %3170 = vmatprep.subr.mxu0 0.0
  %3171 = vmatpush2.msra.mxu0 0.0
  %3172 = vmatprep.subr.mxu0 0.0
  %3173 = vmatpush2.msra.mxu0 0.0
  %3174 = vmatprep.subr.mxu0 0.0
  %3175 = vmatpush2.msra.mxu0 0.0
  %3176 = vmatprep.subr.mxu0 0.0
  %3177 = vmatpush2.msra.mxu0 0.0
  %3178 = vmatprep.mubr.f32.mxu0 0.0
  %3179 = vmatmul.mubr.f32.gmra.mxu0 %v3014
  %v3180 = vpop.f32.mrf.mxu0
  %v3181 = vadd.f32 %v3112, %v3180
  %v3182 = vpop.f32.mrf.mxu0
  %3183 = vmatprep.mubr.f32.mxu0 0.0
  %3184 = vmatmul.mubr.f32.gmra.mxu0 %v3017
  %v3185 = vpop.f32.mrf.mxu0
  %v3186 = vadd.f32 %v3112, %v3185
  %v3187 = vpop.f32.mrf.mxu0
  %3188 = vdwg.mxu0
  %s3189 = scalar_lea.vmem [#allocation3], 16
  %3190 = vst.msk [vmem:[%s3189] sm:$0xff] %vm3094, %v3181
  %3191 = vst.msk [vmem:[%s3189 + $0x8] sm:$0xff] %vm3094, %v3186
  %s3192 = scalar_lea.vmem %s4, 128
  %v3193 = vld [vmem:[%s3192] sm:$0xff]
  %v3194 = vld [vmem:[%s3192 + $0x8] sm:$0xff]
  %v3195 = vld [vmem:[%s3192 + $0x10] sm:$0xff]
  %v3196 = vld [vmem:[%s3192 + $0x18] sm:$0xff]
  %v3197 = vld [vmem:[%s3192 + $0x20] sm:$0xff]
  %v3198 = vld [vmem:[%s3192 + $0x28] sm:$0xff]
  %v3199 = vld [vmem:[%s3192 + $0x30] sm:$0xff]
  %v3200 = vld [vmem:[%s3192 + $0x38] sm:$0xff]
  %s3201 = scalar_lea.vmem %s6, 2
  %v3202 = vld [vmem:[%s3201] sm:$0x1]
  %v3204 = vlaneseq
  %v3205 = vshrl.u32 %v3204, 7
  %v3206 = vsub.s32 0, %v3205
  %v3207 = vrot.slane %v3202, %v3206
  %3209 = vmatprep.subr.mxu0 0.0
  %3210 = vmatpush1.msra.mxu0 0.0
  %3211 = vmatprep.subr.mxu0 0.0
  %3212 = vmatpush1.msra.mxu0 0.0
  %3213 = vmatprep.subr.mxu0 0.0
  %3214 = vmatpush1.msra.mxu0 0.0
  %3215 = vmatprep.subr.mxu0 0.0
  %3216 = vmatpush1.msra.mxu0 0.0
  %3217 = vmatprep.subr.mxu0 0.0
  %3218 = vmatpush1.msra.mxu0 0.0
  %3219 = vmatprep.subr.mxu0 0.0
  %3220 = vmatpush1.msra.mxu0 0.0
  %3221 = vmatprep.subr.mxu0 0.0
  %3222 = vmatpush1.msra.mxu0 0.0
  %3223 = vmatprep.subr.mxu0 0.0
  %3224 = vmatpush1.msra.mxu0 0.0
  %3225 = vmatprep.subr.mxu0 0.0
  %3226 = vmatpush1.msra.mxu0 %v3200
  %3227 = vmatprep.subr.mxu0 0.0
  %3228 = vmatpush1.msra.mxu0 %v3199
  %3229 = vmatprep.subr.mxu0 0.0
  %3230 = vmatpush1.msra.mxu0 %v3198
  %3231 = vmatprep.subr.mxu0 0.0
  %3232 = vmatpush1.msra.mxu0 %v3197
  %3233 = vmatprep.subr.mxu0 0.0
  %3234 = vmatpush1.msra.mxu0 %v3196
  %3235 = vmatprep.subr.mxu0 0.0
  %3236 = vmatpush1.msra.mxu0 %v3195
  %3237 = vmatprep.subr.mxu0 0.0
  %3238 = vmatpush1.msra.mxu0 %v3194
  %3239 = vmatprep.subr.mxu0 0.0
  %3240 = vmatpush1.msra.mxu0 %v3193
  %3241 = vmatprep.subr.mxu0 0.0
  %3242 = vmatpush2.msra.mxu0 0.0
  %3243 = vmatprep.subr.mxu0 0.0
  %3244 = vmatpush2.msra.mxu0 0.0
  %3245 = vmatprep.subr.mxu0 0.0
  %3246 = vmatpush2.msra.mxu0 0.0
  %3247 = vmatprep.subr.mxu0 0.0
  %3248 = vmatpush2.msra.mxu0 0.0
  %3249 = vmatprep.subr.mxu0 0.0
  %3250 = vmatpush2.msra.mxu0 0.0
  %3251 = vmatprep.subr.mxu0 0.0
  %3252 = vmatpush2.msra.mxu0 0.0
  %3253 = vmatprep.subr.mxu0 0.0
  %3254 = vmatpush2.msra.mxu0 0.0
  %3255 = vmatprep.subr.mxu0 0.0
  %3256 = vmatpush2.msra.mxu0 0.0
  %3257 = vmatprep.subr.mxu0 0.0
  %3258 = vmatpush2.msra.mxu0 0.0
  %3259 = vmatprep.subr.mxu0 0.0
  %3260 = vmatpush2.msra.mxu0 0.0
  %3261 = vmatprep.subr.mxu0 0.0
  %3262 = vmatpush2.msra.mxu0 0.0
  %3263 = vmatprep.subr.mxu0 0.0
  %3264 = vmatpush2.msra.mxu0 0.0
  %3265 = vmatprep.subr.mxu0 0.0
  %3266 = vmatpush2.msra.mxu0 0.0
  %3267 = vmatprep.subr.mxu0 0.0
  %3268 = vmatpush2.msra.mxu0 0.0
  %3269 = vmatprep.subr.mxu0 0.0
  %3270 = vmatpush2.msra.mxu0 0.0
  %3271 = vmatprep.subr.mxu0 0.0
  %3272 = vmatpush2.msra.mxu0 0.0
  %3273 = vmatprep.mubr.f32.mxu0 0.0
  %3274 = vmatmul.mubr.f32.gmra.mxu0 %v3014
  %v3275 = vpop.f32.mrf.mxu0
  %v3276 = vadd.f32 %v3207, %v3275
  %v3277 = vpop.f32.mrf.mxu0
  %3278 = vmatprep.mubr.f32.mxu0 0.0
  %3279 = vmatmul.mubr.f32.gmra.mxu0 %v3017
  %v3280 = vpop.f32.mrf.mxu0
  %v3281 = vadd.f32 %v3207, %v3280
  %v3282 = vpop.f32.mrf.mxu0
  %3283 = vdwg.mxu0
  %s3284 = scalar_lea.vmem [#allocation3], 32
  %3285 = vst.msk [vmem:[%s3284] sm:$0xff] %vm3094, %v3276
  %3286 = vst.msk [vmem:[%s3284 + $0x8] sm:$0xff] %vm3094, %v3281
  %s3287 = scalar_lea.vmem %s4, 192
  %v3288 = vld [vmem:[%s3287] sm:$0xff]
  %v3289 = vld [vmem:[%s3287 + $0x8] sm:$0xff]
  %v3290 = vld [vmem:[%s3287 + $0x10] sm:$0xff]
  %v3291 = vld [vmem:[%s3287 + $0x18] sm:$0xff]
  %v3292 = vld [vmem:[%s3287 + $0x20] sm:$0xff]
  %v3293 = vld [vmem:[%s3287 + $0x28] sm:$0xff]
  %v3294 = vld [vmem:[%s3287 + $0x30] sm:$0xff]
  %v3295 = vld [vmem:[%s3287 + $0x38] sm:$0xff]
  %s3296 = scalar_lea.vmem %s6, 3
  %v3297 = vld [vmem:[%s3296] sm:$0x1]
  %v3299 = vlaneseq
  %v3300 = vshrl.u32 %v3299, 7
  %v3301 = vsub.s32 0, %v3300
  %v3302 = vrot.slane %v3297, %v3301
  %3304 = vmatprep.subr.mxu0 0.0
  %3305 = vmatpush1.msra.mxu0 0.0
  %3306 = vmatprep.subr.mxu0 0.0
  %3307 = vmatpush1.msra.mxu0 0.0
  %3308 = vmatprep.subr.mxu0 0.0
  %3309 = vmatpush1.msra.mxu0 0.0
  %3310 = vmatprep.subr.mxu0 0.0
  %3311 = vmatpush1.msra.mxu0 0.0
  %3312 = vmatprep.subr.mxu0 0.0
  %3313 = vmatpush1.msra.mxu0 0.0
  %3314 = vmatprep.subr.mxu0 0.0
  %3315 = vmatpush1.msra.mxu0 0.0
  %3316 = vmatprep.subr.mxu0 0.0
  %3317 = vmatpush1.msra.mxu0 0.0
  %3318 = vmatprep.subr.mxu0 0.0
  %3319 = vmatpush1.msra.mxu0 0.0
  %3320 = vmatprep.subr.mxu0 0.0
  %3321 = vmatpush1.msra.mxu0 %v3295
  %3322 = vmatprep.subr.mxu0 0.0
  %3323 = vmatpush1.msra.mxu0 %v3294
  %3324 = vmatprep.subr.mxu0 0.0
  %3325 = vmatpush1.msra.mxu0 %v3293
  %3326 = vmatprep.subr.mxu0 0.0
  %3327 = vmatpush1.msra.mxu0 %v3292
  %3328 = vmatprep.subr.mxu0 0.0
  %3329 = vmatpush1.msra.mxu0 %v3291
  %3330 = vmatprep.subr.mxu0 0.0
  %3331 = vmatpush1.msra.mxu0 %v3290
  %3332 = vmatprep.subr.mxu0 0.0
  %3333 = vmatpush1.msra.mxu0 %v3289
  %3334 = vmatprep.subr.mxu0 0.0
  %3335 = vmatpush1.msra.mxu0 %v3288
  %3336 = vmatprep.subr.mxu0 0.0
  %3337 = vmatpush2.msra.mxu0 0.0
  %3338 = vmatprep.subr.mxu0 0.0
  %3339 = vmatpush2.msra.mxu0 0.0
  %3340 = vmatprep.subr.mxu0 0.0
  %3341 = vmatpush2.msra.mxu0 0.0
  %3342 = vmatprep.subr.mxu0 0.0
  %3343 = vmatpush2.msra.mxu0 0.0
  %3344 = vmatprep.subr.mxu0 0.0
  %3345 = vmatpush2.msra.mxu0 0.0
  %3346 = vmatprep.subr.mxu0 0.0
  %3347 = vmatpush2.msra.mxu0 0.0
  %3348 = vmatprep.subr.mxu0 0.0
  %3349 = vmatpush2.msra.mxu0 0.0
  %3350 = vmatprep.subr.mxu0 0.0
  %3351 = vmatpush2.msra.mxu0 0.0
  %3352 = vmatprep.subr.mxu0 0.0
  %3353 = vmatpush2.msra.mxu0 0.0
  %3354 = vmatprep.subr.mxu0 0.0
  %3355 = vmatpush2.msra.mxu0 0.0
  %3356 = vmatprep.subr.mxu0 0.0
  %3357 = vmatpush2.msra.mxu0 0.0
  %3358 = vmatprep.subr.mxu0 0.0
  %3359 = vmatpush2.msra.mxu0 0.0
  %3360 = vmatprep.subr.mxu0 0.0
  %3361 = vmatpush2.msra.mxu0 0.0
  %3362 = vmatprep.subr.mxu0 0.0
  %3363 = vmatpush2.msra.mxu0 0.0
  %3364 = vmatprep.subr.mxu0 0.0
  %3365 = vmatpush2.msra.mxu0 0.0
  %3366 = vmatprep.subr.mxu0 0.0
  %3367 = vmatpush2.msra.mxu0 0.0
  %3368 = vmatprep.mubr.f32.mxu0 0.0
  %3369 = vmatmul.mubr.f32.gmra.mxu0 %v3014
  %v3370 = vpop.f32.mrf.mxu0
  %v3371 = vadd.f32 %v3302, %v3370
  %v3372 = vpop.f32.mrf.mxu0
  %3373 = vmatprep.mubr.f32.mxu0 0.0
  %3374 = vmatmul.mubr.f32.gmra.mxu0 %v3017
  %v3375 = vpop.f32.mrf.mxu0
  %v3376 = vadd.f32 %v3302, %v3375
  %v3377 = vpop.f32.mrf.mxu0
  %3378 = vdwg.mxu0
  %s3379 = scalar_lea.vmem [#allocation3], 48
  %3380 = vst.msk [vmem:[%s3379] sm:$0xff] %vm3094, %v3371
  %3381 = vst.msk [vmem:[%s3379 + $0x8] sm:$0xff] %vm3094, %v3376
  %v3382 = vld [vmem:[%s5] sm:$0xff]
  %v3383 = vld [vmem:[%s5 + $0x8] sm:$0xff]
  %v3384 = vld [vmem:[%s5 + $0x10] sm:$0xff]
  %v3385 = vld [vmem:[%s5 + $0x18] sm:$0xff]
  %s3386 = scalar_lea.vmem %s5, 32
  %v3387 = vld [vmem:[%s3386] sm:$0xff]
  %v3388 = vld [vmem:[%s3386 + $0x8] sm:$0xff]
  %v3389 = vld [vmem:[%s3386 + $0x10] sm:$0xff]
  %v3390 = vld [vmem:[%s3386 + $0x18] sm:$0xff]
  %s3391 = scalar_lea.vmem %s5, 64
  %v3392 = vld [vmem:[%s3391] sm:$0xff]
  %v3393 = vld [vmem:[%s3391 + $0x8] sm:$0xff]
  %v3394 = vld [vmem:[%s3391 + $0x10] sm:$0xff]
  %v3395 = vld [vmem:[%s3391 + $0x18] sm:$0xff]
  %s3396 = scalar_lea.vmem %s5, 96
  %v3397 = vld [vmem:[%s3396] sm:$0xff]
  %v3398 = vld [vmem:[%s3396 + $0x8] sm:$0xff]
  %v3399 = vld [vmem:[%s3396 + $0x10] sm:$0xff]
  %v3400 = vld [vmem:[%s3396 + $0x18] sm:$0xff]
  %v3401 = vld [vmem:[#allocation3] sm:$0x3]
  %v3402 = vsel %vm3094, 0.0, 0
  %3404 = vmatprep.subr.mxu0 0.0
  %3405 = vmatpush1.msra.mxu0 0.0
  %3406 = vmatprep.subr.mxu0 0.0
  %3407 = vmatpush1.msra.mxu0 0.0
  %3408 = vmatprep.subr.mxu0 0.0
  %3409 = vmatpush1.msra.mxu0 0.0
  %3410 = vmatprep.subr.mxu0 0.0
  %3411 = vmatpush1.msra.mxu0 0.0
  %3412 = vmatprep.subr.mxu0 0.0
  %3413 = vmatpush1.msra.mxu0 0.0
  %3414 = vmatprep.subr.mxu0 0.0
  %3415 = vmatpush1.msra.mxu0 0.0
  %3416 = vmatprep.subr.mxu0 0.0
  %3417 = vmatpush1.msra.mxu0 0.0
  %3418 = vmatprep.subr.mxu0 0.0
  %3419 = vmatpush1.msra.mxu0 0.0
  %3420 = vmatprep.subr.mxu0 0.0
  %3421 = vmatpush1.msra.mxu0 0.0
  %3422 = vmatprep.subr.mxu0 0.0
  %3423 = vmatpush1.msra.mxu0 0.0
  %3424 = vmatprep.subr.mxu0 0.0
  %3425 = vmatpush1.msra.mxu0 0.0
  %3426 = vmatprep.subr.mxu0 0.0
  %3427 = vmatpush1.msra.mxu0 0.0
  %3428 = vmatprep.subr.mxu0 0.0
  %3429 = vmatpush1.msra.mxu0 %v3385
  %3430 = vmatprep.subr.mxu0 0.0
  %3431 = vmatpush1.msra.mxu0 %v3384
  %3432 = vmatprep.subr.mxu0 0.0
  %3433 = vmatpush1.msra.mxu0 %v3383
  %3434 = vmatprep.subr.mxu0 0.0
  %3435 = vmatpush1.msra.mxu0 %v3382
  %3436 = vmatprep.subr.mxu0 0.0
  %3437 = vmatpush2.msra.mxu0 0.0
  %3438 = vmatprep.subr.mxu0 0.0
  %3439 = vmatpush2.msra.mxu0 0.0
  %3440 = vmatprep.subr.mxu0 0.0
  %3441 = vmatpush2.msra.mxu0 0.0
  %3442 = vmatprep.subr.mxu0 0.0
  %3443 = vmatpush2.msra.mxu0 0.0
  %3444 = vmatprep.subr.mxu0 0.0
  %3445 = vmatpush2.msra.mxu0 0.0
  %3446 = vmatprep.subr.mxu0 0.0
  %3447 = vmatpush2.msra.mxu0 0.0
  %3448 = vmatprep.subr.mxu0 0.0
  %3449 = vmatpush2.msra.mxu0 0.0
  %3450 = vmatprep.subr.mxu0 0.0
  %3451 = vmatpush2.msra.mxu0 0.0
  %3452 = vmatprep.subr.mxu0 0.0
  %3453 = vmatpush2.msra.mxu0 0.0
  %3454 = vmatprep.subr.mxu0 0.0
  %3455 = vmatpush2.msra.mxu0 0.0
  %3456 = vmatprep.subr.mxu0 0.0
  %3457 = vmatpush2.msra.mxu0 0.0
  %3458 = vmatprep.subr.mxu0 0.0
  %3459 = vmatpush2.msra.mxu0 0.0
  %3460 = vmatprep.subr.mxu0 0.0
  %3461 = vmatpush2.msra.mxu0 0.0
  %3462 = vmatprep.subr.mxu0 0.0
  %3463 = vmatpush2.msra.mxu0 0.0
  %3464 = vmatprep.subr.mxu0 0.0
  %3465 = vmatpush2.msra.mxu0 0.0
  %3466 = vmatprep.subr.mxu0 0.0
  %3467 = vmatpush2.msra.mxu0 0.0
  %3468 = vmatprep.mubr.f32.mxu0 0.0
  %3469 = vmatmul.mubr.f32.gmra.mxu0 %v3402
  %v3470 = vpop.f32.mrf.mxu0
  %v3471 = vadd.f32 0.0, %v3470
  %v3472 = vpop.f32.mrf.mxu0
  %3473 = vdwg.mxu0
  %v3474 = vadd.f32 %v3401, %v3471
  %v3475 = vxor.u32 %v3474, 2147483648
  %v3476 = vmul.f32 %v3475, 1.442695
  %v3477 = vpow.pop %v3476
  %v3478 = vadd.f32 %v3477, 1.0
  %v3479 = vrcp.pop %v3478
  %v3480 = vmul.f32 1.0, %v3479
  %v3481 = vld [vmem:[%s3189] sm:$0x3]
  %3482 = vmatprep.subr.mxu0 0.0
  %3483 = vmatpush1.msra.mxu0 0.0
  %3484 = vmatprep.subr.mxu0 0.0
  %3485 = vmatpush1.msra.mxu0 0.0
  %3486 = vmatprep.subr.mxu0 0.0
  %3487 = vmatpush1.msra.mxu0 0.0
  %3488 = vmatprep.subr.mxu0 0.0
  %3489 = vmatpush1.msra.mxu0 0.0
  %3490 = vmatprep.subr.mxu0 0.0
  %3491 = vmatpush1.msra.mxu0 0.0
  %3492 = vmatprep.subr.mxu0 0.0
  %3493 = vmatpush1.msra.mxu0 0.0
  %3494 = vmatprep.subr.mxu0 0.0
  %3495 = vmatpush1.msra.mxu0 0.0
  %3496 = vmatprep.subr.mxu0 0.0
  %3497 = vmatpush1.msra.mxu0 0.0
  %3498 = vmatprep.subr.mxu0 0.0
  %3499 = vmatpush1.msra.mxu0 0.0
  %3500 = vmatprep.subr.mxu0 0.0
  %3501 = vmatpush1.msra.mxu0 0.0
  %3502 = vmatprep.subr.mxu0 0.0
  %3503 = vmatpush1.msra.mxu0 0.0
  %3504 = vmatprep.subr.mxu0 0.0
  %3505 = vmatpush1.msra.mxu0 0.0
  %3506 = vmatprep.subr.mxu0 0.0
  %3507 = vmatpush1.msra.mxu0 %v3390
  %3508 = vmatprep.subr.mxu0 0.0
  %3509 = vmatpush1.msra.mxu0 %v3389
  %3510 = vmatprep.subr.mxu0 0.0
  %3511 = vmatpush1.msra.mxu0 %v3388
  %3512 = vmatprep.subr.mxu0 0.0
  %3513 = vmatpush1.msra.mxu0 %v3387
  %3514 = vmatprep.subr.mxu0 0.0
  %3515 = vmatpush2.msra.mxu0 0.0
  %3516 = vmatprep.subr.mxu0 0.0
  %3517 = vmatpush2.msra.mxu0 0.0
  %3518 = vmatprep.subr.mxu0 0.0
  %3519 = vmatpush2.msra.mxu0 0.0
  %3520 = vmatprep.subr.mxu0 0.0
  %3521 = vmatpush2.msra.mxu0 0.0
  %3522 = vmatprep.subr.mxu0 0.0
  %3523 = vmatpush2.msra.mxu0 0.0
  %3524 = vmatprep.subr.mxu0 0.0
  %3525 = vmatpush2.msra.mxu0 0.0
  %3526 = vmatprep.subr.mxu0 0.0
  %3527 = vmatpush2.msra.mxu0 0.0
  %3528 = vmatprep.subr.mxu0 0.0
  %3529 = vmatpush2.msra.mxu0 0.0
  %3530 = vmatprep.subr.mxu0 0.0
  %3531 = vmatpush2.msra.mxu0 0.0
  %3532 = vmatprep.subr.mxu0 0.0
  %3533 = vmatpush2.msra.mxu0 0.0
  %3534 = vmatprep.subr.mxu0 0.0
  %3535 = vmatpush2.msra.mxu0 0.0
  %3536 = vmatprep.subr.mxu0 0.0
  %3537 = vmatpush2.msra.mxu0 0.0
  %3538 = vmatprep.subr.mxu0 0.0
  %3539 = vmatpush2.msra.mxu0 0.0
  %3540 = vmatprep.subr.mxu0 0.0
  %3541 = vmatpush2.msra.mxu0 0.0
  %3542 = vmatprep.subr.mxu0 0.0
  %3543 = vmatpush2.msra.mxu0 0.0
  %3544 = vmatprep.subr.mxu0 0.0
  %3545 = vmatpush2.msra.mxu0 0.0
  %3546 = vmatprep.mubr.f32.mxu0 0.0
  %3547 = vmatmul.mubr.f32.gmra.mxu0 %v3402
  %v3548 = vpop.f32.mrf.mxu0
  %v3549 = vadd.f32 0.0, %v3548
  %v3550 = vpop.f32.mrf.mxu0
  %3551 = vdwg.mxu0
  %v3552 = vadd.f32 %v3481, %v3549
  %v3553 = vxor.u32 %v3552, 2147483648
  %v3554 = vmul.f32 %v3553, 1.442695
  %v3555 = vpow.pop %v3554
  %v3556 = vadd.f32 %v3555, 1.0
  %v3557 = vrcp.pop %v3556
  %v3558 = vmul.f32 1.0, %v3557
  %v3559 = vld [vmem:[%s3284] sm:$0x3]
  %3560 = vmatprep.subr.mxu0 0.0
  %3561 = vmatpush1.msra.mxu0 0.0
  %3562 = vmatprep.subr.mxu0 0.0
  %3563 = vmatpush1.msra.mxu0 0.0
  %3564 = vmatprep.subr.mxu0 0.0
  %3565 = vmatpush1.msra.mxu0 0.0
  %3566 = vmatprep.subr.mxu0 0.0
  %3567 = vmatpush1.msra.mxu0 0.0
  %3568 = vmatprep.subr.mxu0 0.0
  %3569 = vmatpush1.msra.mxu0 0.0
  %3570 = vmatprep.subr.mxu0 0.0
  %3571 = vmatpush1.msra.mxu0 0.0
  %3572 = vmatprep.subr.mxu0 0.0
  %3573 = vmatpush1.msra.mxu0 0.0
  %3574 = vmatprep.subr.mxu0 0.0
  %3575 = vmatpush1.msra.mxu0 0.0
  %3576 = vmatprep.subr.mxu0 0.0
  %3577 = vmatpush1.msra.mxu0 0.0
  %3578 = vmatprep.subr.mxu0 0.0
  %3579 = vmatpush1.msra.mxu0 0.0
  %3580 = vmatprep.subr.mxu0 0.0
  %3581 = vmatpush1.msra.mxu0 0.0
  %3582 = vmatprep.subr.mxu0 0.0
  %3583 = vmatpush1.msra.mxu0 0.0
  %3584 = vmatprep.subr.mxu0 0.0
  %3585 = vmatpush1.msra.mxu0 %v3395
  %3586 = vmatprep.subr.mxu0 0.0
  %3587 = vmatpush1.msra.mxu0 %v3394
  %3588 = vmatprep.subr.mxu0 0.0
  %3589 = vmatpush1.msra.mxu0 %v3393
  %3590 = vmatprep.subr.mxu0 0.0
  %3591 = vmatpush1.msra.mxu0 %v3392
  %3592 = vmatprep.subr.mxu0 0.0
  %3593 = vmatpush2.msra.mxu0 0.0
  %3594 = vmatprep.subr.mxu0 0.0
  %3595 = vmatpush2.msra.mxu0 0.0
  %3596 = vmatprep.subr.mxu0 0.0
  %3597 = vmatpush2.msra.mxu0 0.0
  %3598 = vmatprep.subr.mxu0 0.0
  %3599 = vmatpush2.msra.mxu0 0.0
  %3600 = vmatprep.subr.mxu0 0.0
  %3601 = vmatpush2.msra.mxu0 0.0
  %3602 = vmatprep.subr.mxu0 0.0
  %3603 = vmatpush2.msra.mxu0 0.0
  %3604 = vmatprep.subr.mxu0 0.0
  %3605 = vmatpush2.msra.mxu0 0.0
  %3606 = vmatprep.subr.mxu0 0.0
  %3607 = vmatpush2.msra.mxu0 0.0
  %3608 = vmatprep.subr.mxu0 0.0
  %3609 = vmatpush2.msra.mxu0 0.0
  %3610 = vmatprep.subr.mxu0 0.0
  %3611 = vmatpush2.msra.mxu0 0.0
  %3612 = vmatprep.subr.mxu0 0.0
  %3613 = vmatpush2.msra.mxu0 0.0
  %3614 = vmatprep.subr.mxu0 0.0
  %3615 = vmatpush2.msra.mxu0 0.0
  %3616 = vmatprep.subr.mxu0 0.0
  %3617 = vmatpush2.msra.mxu0 0.0
  %3618 = vmatprep.subr.mxu0 0.0
  %3619 = vmatpush2.msra.mxu0 0.0
  %3620 = vmatprep.subr.mxu0 0.0
  %3621 = vmatpush2.msra.mxu0 0.0
  %3622 = vmatprep.subr.mxu0 0.0
  %3623 = vmatpush2.msra.mxu0 0.0
  %3624 = vmatprep.mubr.f32.mxu0 0.0
  %3625 = vmatmul.mubr.f32.gmra.mxu0 %v3402
  %v3626 = vpop.f32.mrf.mxu0
  %v3627 = vadd.f32 0.0, %v3626
  %v3628 = vpop.f32.mrf.mxu0
  %3629 = vdwg.mxu0
  %v3630 = vadd.f32 %v3559, %v3627
  %v3631 = vtanh.pop %v3630
  %v3632 = vld [vmem:[%s3379] sm:$0x3]
  %3633 = vmatprep.subr.mxu0 0.0
  %3634 = vmatpush1.msra.mxu0 0.0
  %3635 = vmatprep.subr.mxu0 0.0
  %3636 = vmatpush1.msra.mxu0 0.0
  %3637 = vmatprep.subr.mxu0 0.0
  %3638 = vmatpush1.msra.mxu0 0.0
  %3639 = vmatprep.subr.mxu0 0.0
  %3640 = vmatpush1.msra.mxu0 0.0
  %3641 = vmatprep.subr.mxu0 0.0
  %3642 = vmatpush1.msra.mxu0 0.0
  %3643 = vmatprep.subr.mxu0 0.0
  %3644 = vmatpush1.msra.mxu0 0.0
  %3645 = vmatprep.subr.mxu0 0.0
  %3646 = vmatpush1.msra.mxu0 0.0
  %3647 = vmatprep.subr.mxu0 0.0
  %3648 = vmatpush1.msra.mxu0 0.0
  %3649 = vmatprep.subr.mxu0 0.0
  %3650 = vmatpush1.msra.mxu0 0.0
  %3651 = vmatprep.subr.mxu0 0.0
  %3652 = vmatpush1.msra.mxu0 0.0
  %3653 = vmatprep.subr.mxu0 0.0
  %3654 = vmatpush1.msra.mxu0 0.0
  %3655 = vmatprep.subr.mxu0 0.0
  %3656 = vmatpush1.msra.mxu0 0.0
  %3657 = vmatprep.subr.mxu0 0.0
  %3658 = vmatpush1.msra.mxu0 %v3400
  %3659 = vmatprep.subr.mxu0 0.0
  %3660 = vmatpush1.msra.mxu0 %v3399
  %3661 = vmatprep.subr.mxu0 0.0
  %3662 = vmatpush1.msra.mxu0 %v3398
  %3663 = vmatprep.subr.mxu0 0.0
  %3664 = vmatpush1.msra.mxu0 %v3397
  %3665 = vmatprep.subr.mxu0 0.0
  %3666 = vmatpush2.msra.mxu0 0.0
  %3667 = vmatprep.subr.mxu0 0.0
  %3668 = vmatpush2.msra.mxu0 0.0
  %3669 = vmatprep.subr.mxu0 0.0
  %3670 = vmatpush2.msra.mxu0 0.0
  %3671 = vmatprep.subr.mxu0 0.0
  %3672 = vmatpush2.msra.mxu0 0.0
  %3673 = vmatprep.subr.mxu0 0.0
  %3674 = vmatpush2.msra.mxu0 0.0
  %3675 = vmatprep.subr.mxu0 0.0
  %3676 = vmatpush2.msra.mxu0 0.0
  %3677 = vmatprep.subr.mxu0 0.0
  %3678 = vmatpush2.msra.mxu0 0.0
  %3679 = vmatprep.subr.mxu0 0.0
  %3680 = vmatpush2.msra.mxu0 0.0
  %3681 = vmatprep.subr.mxu0 0.0
  %3682 = vmatpush2.msra.mxu0 0.0
  %3683 = vmatprep.subr.mxu0 0.0
  %3684 = vmatpush2.msra.mxu0 0.0
  %3685 = vmatprep.subr.mxu0 0.0
  %3686 = vmatpush2.msra.mxu0 0.0
  %3687 = vmatprep.subr.mxu0 0.0
  %3688 = vmatpush2.msra.mxu0 0.0
  %3689 = vmatprep.subr.mxu0 0.0
  %3690 = vmatpush2.msra.mxu0 0.0
  %3691 = vmatprep.subr.mxu0 0.0
  %3692 = vmatpush2.msra.mxu0 0.0
  %3693 = vmatprep.subr.mxu0 0.0
  %3694 = vmatpush2.msra.mxu0 0.0
  %3695 = vmatprep.subr.mxu0 0.0
  %3696 = vmatpush2.msra.mxu0 0.0
  %3697 = vmatprep.mubr.f32.mxu0 0.0
  %3698 = vmatmul.mubr.f32.gmra.mxu0 %v3402
  %v3699 = vpop.f32.mrf.mxu0
  %v3700 = vadd.f32 0.0, %v3699
  %v3701 = vpop.f32.mrf.mxu0
  %3702 = vdwg.mxu0
  %v3703 = vadd.f32 %v3632, %v3700
  %v3704 = vxor.u32 %v3703, 2147483648
  %v3705 = vmul.f32 %v3704, 1.442695
  %v3706 = vpow.pop %v3705
  %v3707 = vadd.f32 %v3706, 1.0
  %v3708 = vrcp.pop %v3707
  %v3709 = vmul.f32 1.0, %v3708
  %v3710 = vmul.f32 %v3558, 0.0
  %v3711 = vmul.f32 %v3480, %v3631
  %v3712 = vadd.f32 %v3710, %v3711
  %v3713 = vtanh.pop %v3712
  %v3714 = vmul.f32 %v3709, %v3713
  %v3715 = vld [vmem:[#allocation3 + $0x2] sm:$0x3]
  %v3717 = vsel %vm3094, %v3714, 0
  %3719 = vmatprep.subr.mxu0 0.0
  %3720 = vmatpush1.msra.mxu0 0.0
  %3721 = vmatprep.subr.mxu0 0.0
  %3722 = vmatpush1.msra.mxu0 0.0
  %3723 = vmatprep.subr.mxu0 0.0
  %3724 = vmatpush1.msra.mxu0 0.0
  %3725 = vmatprep.subr.mxu0 0.0
  %3726 = vmatpush1.msra.mxu0 0.0
  %3727 = vmatprep.subr.mxu0 0.0
  %3728 = vmatpush1.msra.mxu0 0.0
  %3729 = vmatprep.subr.mxu0 0.0
  %3730 = vmatpush1.msra.mxu0 0.0
  %3731 = vmatprep.subr.mxu0 0.0
  %3732 = vmatpush1.msra.mxu0 0.0
  %3733 = vmatprep.subr.mxu0 0.0
  %3734 = vmatpush1.msra.mxu0 0.0
  %3735 = vmatprep.subr.mxu0 0.0
  %3736 = vmatpush1.msra.mxu0 0.0
  %3737 = vmatprep.subr.mxu0 0.0
  %3738 = vmatpush1.msra.mxu0 0.0
  %3739 = vmatprep.subr.mxu0 0.0
  %3740 = vmatpush1.msra.mxu0 0.0
  %3741 = vmatprep.subr.mxu0 0.0
  %3742 = vmatpush1.msra.mxu0 0.0
  %3743 = vmatprep.subr.mxu0 0.0
  %3744 = vmatpush1.msra.mxu0 %v3385
  %3745 = vmatprep.subr.mxu0 0.0
  %3746 = vmatpush1.msra.mxu0 %v3384
  %3747 = vmatprep.subr.mxu0 0.0
  %3748 = vmatpush1.msra.mxu0 %v3383
  %3749 = vmatprep.subr.mxu0 0.0
  %3750 = vmatpush1.msra.mxu0 %v3382
  %3751 = vmatprep.subr.mxu0 0.0
  %3752 = vmatpush2.msra.mxu0 0.0
  %3753 = vmatprep.subr.mxu0 0.0
  %3754 = vmatpush2.msra.mxu0 0.0
  %3755 = vmatprep.subr.mxu0 0.0
  %3756 = vmatpush2.msra.mxu0 0.0
  %3757 = vmatprep.subr.mxu0 0.0
  %3758 = vmatpush2.msra.mxu0 0.0
  %3759 = vmatprep.subr.mxu0 0.0
  %3760 = vmatpush2.msra.mxu0 0.0
  %3761 = vmatprep.subr.mxu0 0.0
  %3762 = vmatpush2.msra.mxu0 0.0
  %3763 = vmatprep.subr.mxu0 0.0
  %3764 = vmatpush2.msra.mxu0 0.0
  %3765 = vmatprep.subr.mxu0 0.0
  %3766 = vmatpush2.msra.mxu0 0.0
  %3767 = vmatprep.subr.mxu0 0.0
  %3768 = vmatpush2.msra.mxu0 0.0
  %3769 = vmatprep.subr.mxu0 0.0
  %3770 = vmatpush2.msra.mxu0 0.0
  %3771 = vmatprep.subr.mxu0 0.0
  %3772 = vmatpush2.msra.mxu0 0.0
  %3773 = vmatprep.subr.mxu0 0.0
  %3774 = vmatpush2.msra.mxu0 0.0
  %3775 = vmatprep.subr.mxu0 0.0
  %3776 = vmatpush2.msra.mxu0 0.0
  %3777 = vmatprep.subr.mxu0 0.0
  %3778 = vmatpush2.msra.mxu0 0.0
  %3779 = vmatprep.subr.mxu0 0.0
  %3780 = vmatpush2.msra.mxu0 0.0
  %3781 = vmatprep.subr.mxu0 0.0
  %3782 = vmatpush2.msra.mxu0 0.0
  %3783 = vmatprep.mubr.f32.mxu0 0.0
  %3784 = vmatmul.mubr.f32.gmra.mxu0 %v3717
  %v3785 = vpop.f32.mrf.mxu0
  %v3786 = vadd.f32 0.0, %v3785
  %v3787 = vpop.f32.mrf.mxu0
  %3788 = vdwg.mxu0
  %v3789 = vadd.f32 %v3715, %v3786
  %v3790 = vxor.u32 %v3789, 2147483648
  %v3791 = vmul.f32 %v3790, 1.442695
  %v3792 = vpow.pop %v3791
  %v3793 = vadd.f32 %v3792, 1.0
  %v3794 = vrcp.pop %v3793
  %v3795 = vmul.f32 1.0, %v3794
  %v3796 = vld [vmem:[%s3189 + $0x2] sm:$0x3]
  %3797 = vmatprep.subr.mxu0 0.0
  %3798 = vmatpush1.msra.mxu0 0.0
  %3799 = vmatprep.subr.mxu0 0.0
  %3800 = vmatpush1.msra.mxu0 0.0
  %3801 = vmatprep.subr.mxu0 0.0
  %3802 = vmatpush1.msra.mxu0 0.0
  %3803 = vmatprep.subr.mxu0 0.0
  %3804 = vmatpush1.msra.mxu0 0.0
  %3805 = vmatprep.subr.mxu0 0.0
  %3806 = vmatpush1.msra.mxu0 0.0
  %3807 = vmatprep.subr.mxu0 0.0
  %3808 = vmatpush1.msra.mxu0 0.0
  %3809 = vmatprep.subr.mxu0 0.0
  %3810 = vmatpush1.msra.mxu0 0.0
  %3811 = vmatprep.subr.mxu0 0.0
  %3812 = vmatpush1.msra.mxu0 0.0
  %3813 = vmatprep.subr.mxu0 0.0
  %3814 = vmatpush1.msra.mxu0 0.0
  %3815 = vmatprep.subr.mxu0 0.0
  %3816 = vmatpush1.msra.mxu0 0.0
  %3817 = vmatprep.subr.mxu0 0.0
  %3818 = vmatpush1.msra.mxu0 0.0
  %3819 = vmatprep.subr.mxu0 0.0
  %3820 = vmatpush1.msra.mxu0 0.0
  %3821 = vmatprep.subr.mxu0 0.0
  %3822 = vmatpush1.msra.mxu0 %v3390
  %3823 = vmatprep.subr.mxu0 0.0
  %3824 = vmatpush1.msra.mxu0 %v3389
  %3825 = vmatprep.subr.mxu0 0.0
  %3826 = vmatpush1.msra.mxu0 %v3388
  %3827 = vmatprep.subr.mxu0 0.0
  %3828 = vmatpush1.msra.mxu0 %v3387
  %3829 = vmatprep.subr.mxu0 0.0
  %3830 = vmatpush2.msra.mxu0 0.0
  %3831 = vmatprep.subr.mxu0 0.0
  %3832 = vmatpush2.msra.mxu0 0.0
  %3833 = vmatprep.subr.mxu0 0.0
  %3834 = vmatpush2.msra.mxu0 0.0
  %3835 = vmatprep.subr.mxu0 0.0
  %3836 = vmatpush2.msra.mxu0 0.0
  %3837 = vmatprep.subr.mxu0 0.0
  %3838 = vmatpush2.msra.mxu0 0.0
  %3839 = vmatprep.subr.mxu0 0.0
  %3840 = vmatpush2.msra.mxu0 0.0
  %3841 = vmatprep.subr.mxu0 0.0
  %3842 = vmatpush2.msra.mxu0 0.0
  %3843 = vmatprep.subr.mxu0 0.0
  %3844 = vmatpush2.msra.mxu0 0.0
  %3845 = vmatprep.subr.mxu0 0.0
  %3846 = vmatpush2.msra.mxu0 0.0
  %3847 = vmatprep.subr.mxu0 0.0
  %3848 = vmatpush2.msra.mxu0 0.0
  %3849 = vmatprep.subr.mxu0 0.0
  %3850 = vmatpush2.msra.mxu0 0.0
  %3851 = vmatprep.subr.mxu0 0.0
  %3852 = vmatpush2.msra.mxu0 0.0
  %3853 = vmatprep.subr.mxu0 0.0
  %3854 = vmatpush2.msra.mxu0 0.0
  %3855 = vmatprep.subr.mxu0 0.0
  %3856 = vmatpush2.msra.mxu0 0.0
  %3857 = vmatprep.subr.mxu0 0.0
  %3858 = vmatpush2.msra.mxu0 0.0
  %3859 = vmatprep.subr.mxu0 0.0
  %3860 = vmatpush2.msra.mxu0 0.0
  %3861 = vmatprep.mubr.f32.mxu0 0.0
  %3862 = vmatmul.mubr.f32.gmra.mxu0 %v3717
  %v3863 = vpop.f32.mrf.mxu0
  %v3864 = vadd.f32 0.0, %v3863
  %v3865 = vpop.f32.mrf.mxu0
  %3866 = vdwg.mxu0
  %v3867 = vadd.f32 %v3796, %v3864
  %v3868 = vxor.u32 %v3867, 2147483648
  %v3869 = vmul.f32 %v3868, 1.442695
  %v3870 = vpow.pop %v3869
  %v3871 = vadd.f32 %v3870, 1.0
  %v3872 = vrcp.pop %v3871
  %v3873 = vmul.f32 1.0, %v3872
  %v3874 = vld [vmem:[%s3284 + $0x2] sm:$0x3]
  %3875 = vmatprep.subr.mxu0 0.0
  %3876 = vmatpush1.msra.mxu0 0.0
  %3877 = vmatprep.subr.mxu0 0.0
  %3878 = vmatpush1.msra.mxu0 0.0
  %3879 = vmatprep.subr.mxu0 0.0
  %3880 = vmatpush1.msra.mxu0 0.0
  %3881 = vmatprep.subr.mxu0 0.0
  %3882 = vmatpush1.msra.mxu0 0.0
  %3883 = vmatprep.subr.mxu0 0.0
  %3884 = vmatpush1.msra.mxu0 0.0
  %3885 = vmatprep.subr.mxu0 0.0
  %3886 = vmatpush1.msra.mxu0 0.0
  %3887 = vmatprep.subr.mxu0 0.0
  %3888 = vmatpush1.msra.mxu0 0.0
  %3889 = vmatprep.subr.mxu0 0.0
  %3890 = vmatpush1.msra.mxu0 0.0
  %3891 = vmatprep.subr.mxu0 0.0
  %3892 = vmatpush1.msra.mxu0 0.0
  %3893 = vmatprep.subr.mxu0 0.0
  %3894 = vmatpush1.msra.mxu0 0.0
  %3895 = vmatprep.subr.mxu0 0.0
  %3896 = vmatpush1.msra.mxu0 0.0
  %3897 = vmatprep.subr.mxu0 0.0
  %3898 = vmatpush1.msra.mxu0 0.0
  %3899 = vmatprep.subr.mxu0 0.0
  %3900 = vmatpush1.msra.mxu0 %v3395
  %3901 = vmatprep.subr.mxu0 0.0
  %3902 = vmatpush1.msra.mxu0 %v3394
  %3903 = vmatprep.subr.mxu0 0.0
  %3904 = vmatpush1.msra.mxu0 %v3393
  %3905 = vmatprep.subr.mxu0 0.0
  %3906 = vmatpush1.msra.mxu0 %v3392
  %3907 = vmatprep.subr.mxu0 0.0
  %3908 = vmatpush2.msra.mxu0 0.0
  %3909 = vmatprep.subr.mxu0 0.0
  %3910 = vmatpush2.msra.mxu0 0.0
  %3911 = vmatprep.subr.mxu0 0.0
  %3912 = vmatpush2.msra.mxu0 0.0
  %3913 = vmatprep.subr.mxu0 0.0
  %3914 = vmatpush2.msra.mxu0 0.0
  %3915 = vmatprep.subr.mxu0 0.0
  %3916 = vmatpush2.msra.mxu0 0.0
  %3917 = vmatprep.subr.mxu0 0.0
  %3918 = vmatpush2.msra.mxu0 0.0
  %3919 = vmatprep.subr.mxu0 0.0
  %3920 = vmatpush2.msra.mxu0 0.0
  %3921 = vmatprep.subr.mxu0 0.0
  %3922 = vmatpush2.msra.mxu0 0.0
  %3923 = vmatprep.subr.mxu0 0.0
  %3924 = vmatpush2.msra.mxu0 0.0
  %3925 = vmatprep.subr.mxu0 0.0
  %3926 = vmatpush2.msra.mxu0 0.0
  %3927 = vmatprep.subr.mxu0 0.0
  %3928 = vmatpush2.msra.mxu0 0.0
  %3929 = vmatprep.subr.mxu0 0.0
  %3930 = vmatpush2.msra.mxu0 0.0
  %3931 = vmatprep.subr.mxu0 0.0
  %3932 = vmatpush2.msra.mxu0 0.0
  %3933 = vmatprep.subr.mxu0 0.0
  %3934 = vmatpush2.msra.mxu0 0.0
  %3935 = vmatprep.subr.mxu0 0.0
  %3936 = vmatpush2.msra.mxu0 0.0
  %3937 = vmatprep.subr.mxu0 0.0
  %3938 = vmatpush2.msra.mxu0 0.0
  %3939 = vmatprep.mubr.f32.mxu0 0.0
  %3940 = vmatmul.mubr.f32.gmra.mxu0 %v3717
  %v3941 = vpop.f32.mrf.mxu0
  %v3942 = vadd.f32 0.0, %v3941
  %v3943 = vpop.f32.mrf.mxu0
  %3944 = vdwg.mxu0
  %v3945 = vadd.f32 %v3874, %v3942
  %v3946 = vtanh.pop %v3945
  %v3947 = vld [vmem:[%s3379 + $0x2] sm:$0x3]
  %3948 = vmatprep.subr.mxu0 0.0
  %3949 = vmatpush1.msra.mxu0 0.0
  %3950 = vmatprep.subr.mxu0 0.0
  %3951 = vmatpush1.msra.mxu0 0.0
  %3952 = vmatprep.subr.mxu0 0.0
  %3953 = vmatpush1.msra.mxu0 0.0
  %3954 = vmatprep.subr.mxu0 0.0
  %3955 = vmatpush1.msra.mxu0 0.0
  %3956 = vmatprep.subr.mxu0 0.0
  %3957 = vmatpush1.msra.mxu0 0.0
  %3958 = vmatprep.subr.mxu0 0.0
  %3959 = vmatpush1.msra.mxu0 0.0
  %3960 = vmatprep.subr.mxu0 0.0
  %3961 = vmatpush1.msra.mxu0 0.0
  %3962 = vmatprep.subr.mxu0 0.0
  %3963 = vmatpush1.msra.mxu0 0.0
  %3964 = vmatprep.subr.mxu0 0.0
  %3965 = vmatpush1.msra.mxu0 0.0
  %3966 = vmatprep.subr.mxu0 0.0
  %3967 = vmatpush1.msra.mxu0 0.0
  %3968 = vmatprep.subr.mxu0 0.0
  %3969 = vmatpush1.msra.mxu0 0.0
  %3970 = vmatprep.subr.mxu0 0.0
  %3971 = vmatpush1.msra.mxu0 0.0
  %3972 = vmatprep.subr.mxu0 0.0
  %3973 = vmatpush1.msra.mxu0 %v3400
  %3974 = vmatprep.subr.mxu0 0.0
  %3975 = vmatpush1.msra.mxu0 %v3399
  %3976 = vmatprep.subr.mxu0 0.0
  %3977 = vmatpush1.msra.mxu0 %v3398
  %3978 = vmatprep.subr.mxu0 0.0
  %3979 = vmatpush1.msra.mxu0 %v3397
  %3980 = vmatprep.subr.mxu0 0.0
  %3981 = vmatpush2.msra.mxu0 0.0
  %3982 = vmatprep.subr.mxu0 0.0
  %3983 = vmatpush2.msra.mxu0 0.0
  %3984 = vmatprep.subr.mxu0 0.0
  %3985 = vmatpush2.msra.mxu0 0.0
  %3986 = vmatprep.subr.mxu0 0.0
  %3987 = vmatpush2.msra.mxu0 0.0
  %3988 = vmatprep.subr.mxu0 0.0
  %3989 = vmatpush2.msra.mxu0 0.0
  %3990 = vmatprep.subr.mxu0 0.0
  %3991 = vmatpush2.msra.mxu0 0.0
  %3992 = vmatprep.subr.mxu0 0.0
  %3993 = vmatpush2.msra.mxu0 0.0
  %3994 = vmatprep.subr.mxu0 0.0
  %3995 = vmatpush2.msra.mxu0 0.0
  %3996 = vmatprep.subr.mxu0 0.0
  %3997 = vmatpush2.msra.mxu0 0.0
  %3998 = vmatprep.subr.mxu0 0.0
  %3999 = vmatpush2.msra.mxu0 0.0
  %4000 = vmatprep.subr.mxu0 0.0
  %4001 = vmatpush2.msra.mxu0 0.0
  %4002 = vmatprep.subr.mxu0 0.0
  %4003 = vmatpush2.msra.mxu0 0.0
  %4004 = vmatprep.subr.mxu0 0.0
  %4005 = vmatpush2.msra.mxu0 0.0
  %4006 = vmatprep.subr.mxu0 0.0
  %4007 = vmatpush2.msra.mxu0 0.0
  %4008 = vmatprep.subr.mxu0 0.0
  %4009 = vmatpush2.msra.mxu0 0.0
  %4010 = vmatprep.subr.mxu0 0.0
  %4011 = vmatpush2.msra.mxu0 0.0
  %4012 = vmatprep.mubr.f32.mxu0 0.0
  %4013 = vmatmul.mubr.f32.gmra.mxu0 %v3717
  %v4014 = vpop.f32.mrf.mxu0
  %v4015 = vadd.f32 0.0, %v4014
  %v4016 = vpop.f32.mrf.mxu0
  %4017 = vdwg.mxu0
  %v4018 = vadd.f32 %v3947, %v4015
  %v4019 = vxor.u32 %v4018, 2147483648
  %v4020 = vmul.f32 %v4019, 1.442695
  %v4021 = vpow.pop %v4020
  %v4022 = vadd.f32 %v4021, 1.0
  %v4023 = vrcp.pop %v4022
  %v4024 = vmul.f32 1.0, %v4023
  %v4025 = vmul.f32 %v3873, %v3712
  %v4026 = vmul.f32 %v3795, %v3946
  %v4027 = vadd.f32 %v4025, %v4026
  %v4028 = vtanh.pop %v4027
  %v4029 = vmul.f32 %v4024, %v4028
  %v4030 = vld [vmem:[#allocation3 + $0x4] sm:$0x3]
  %v4032 = vsel %vm3094, %v4029, 0
  %4034 = vmatprep.subr.mxu0 0.0
  %4035 = vmatpush1.msra.mxu0 0.0
  %4036 = vmatprep.subr.mxu0 0.0
  %4037 = vmatpush1.msra.mxu0 0.0
  %4038 = vmatprep.subr.mxu0 0.0
  %4039 = vmatpush1.msra.mxu0 0.0
  %4040 = vmatprep.subr.mxu0 0.0
  %4041 = vmatpush1.msra.mxu0 0.0
  %4042 = vmatprep.subr.mxu0 0.0
  %4043 = vmatpush1.msra.mxu0 0.0
  %4044 = vmatprep.subr.mxu0 0.0
  %4045 = vmatpush1.msra.mxu0 0.0
  %4046 = vmatprep.subr.mxu0 0.0
  %4047 = vmatpush1.msra.mxu0 0.0
  %4048 = vmatprep.subr.mxu0 0.0
  %4049 = vmatpush1.msra.mxu0 0.0
  %4050 = vmatprep.subr.mxu0 0.0
  %4051 = vmatpush1.msra.mxu0 0.0
  %4052 = vmatprep.subr.mxu0 0.0
  %4053 = vmatpush1.msra.mxu0 0.0
  %4054 = vmatprep.subr.mxu0 0.0
  %4055 = vmatpush1.msra.mxu0 0.0
  %4056 = vmatprep.subr.mxu0 0.0
  %4057 = vmatpush1.msra.mxu0 0.0
  %4058 = vmatprep.subr.mxu0 0.0
  %4059 = vmatpush1.msra.mxu0 %v3385
  %4060 = vmatprep.subr.mxu0 0.0
  %4061 = vmatpush1.msra.mxu0 %v3384
  %4062 = vmatprep.subr.mxu0 0.0
  %4063 = vmatpush1.msra.mxu0 %v3383
  %4064 = vmatprep.subr.mxu0 0.0
  %4065 = vmatpush1.msra.mxu0 %v3382
  %4066 = vmatprep.subr.mxu0 0.0
  %4067 = vmatpush2.msra.mxu0 0.0
  %4068 = vmatprep.subr.mxu0 0.0
  %4069 = vmatpush2.msra.mxu0 0.0
  %4070 = vmatprep.subr.mxu0 0.0
  %4071 = vmatpush2.msra.mxu0 0.0
  %4072 = vmatprep.subr.mxu0 0.0
  %4073 = vmatpush2.msra.mxu0 0.0
  %4074 = vmatprep.subr.mxu0 0.0
  %4075 = vmatpush2.msra.mxu0 0.0
  %4076 = vmatprep.subr.mxu0 0.0
  %4077 = vmatpush2.msra.mxu0 0.0
  %4078 = vmatprep.subr.mxu0 0.0
  %4079 = vmatpush2.msra.mxu0 0.0
  %4080 = vmatprep.subr.mxu0 0.0
  %4081 = vmatpush2.msra.mxu0 0.0
  %4082 = vmatprep.subr.mxu0 0.0
  %4083 = vmatpush2.msra.mxu0 0.0
  %4084 = vmatprep.subr.mxu0 0.0
  %4085 = vmatpush2.msra.mxu0 0.0
  %4086 = vmatprep.subr.mxu0 0.0
  %4087 = vmatpush2.msra.mxu0 0.0
  %4088 = vmatprep.subr.mxu0 0.0
  %4089 = vmatpush2.msra.mxu0 0.0
  %4090 = vmatprep.subr.mxu0 0.0
  %4091 = vmatpush2.msra.mxu0 0.0
  %4092 = vmatprep.subr.mxu0 0.0
  %4093 = vmatpush2.msra.mxu0 0.0
  %4094 = vmatprep.subr.mxu0 0.0
  %4095 = vmatpush2.msra.mxu0 0.0
  %4096 = vmatprep.subr.mxu0 0.0
  %4097 = vmatpush2.msra.mxu0 0.0
  %4098 = vmatprep.mubr.f32.mxu0 0.0
  %4099 = vmatmul.mubr.f32.gmra.mxu0 %v4032
  %v4100 = vpop.f32.mrf.mxu0
  %v4101 = vadd.f32 0.0, %v4100
  %v4102 = vpop.f32.mrf.mxu0
  %4103 = vdwg.mxu0
  %v4104 = vadd.f32 %v4030, %v4101
  %v4105 = vxor.u32 %v4104, 2147483648
  %v4106 = vmul.f32 %v4105, 1.442695
  %v4107 = vpow.pop %v4106
  %v4108 = vadd.f32 %v4107, 1.0
  %v4109 = vrcp.pop %v4108
  %v4110 = vmul.f32 1.0, %v4109
  %v4111 = vld [vmem:[%s3189 + $0x4] sm:$0x3]
  %4112 = vmatprep.subr.mxu0 0.0
  %4113 = vmatpush1.msra.mxu0 0.0
  %4114 = vmatprep.subr.mxu0 0.0
  %4115 = vmatpush1.msra.mxu0 0.0
  %4116 = vmatprep.subr.mxu0 0.0
  %4117 = vmatpush1.msra.mxu0 0.0
  %4118 = vmatprep.subr.mxu0 0.0
  %4119 = vmatpush1.msra.mxu0 0.0
  %4120 = vmatprep.subr.mxu0 0.0
  %4121 = vmatpush1.msra.mxu0 0.0
  %4122 = vmatprep.subr.mxu0 0.0
  %4123 = vmatpush1.msra.mxu0 0.0
  %4124 = vmatprep.subr.mxu0 0.0
  %4125 = vmatpush1.msra.mxu0 0.0
  %4126 = vmatprep.subr.mxu0 0.0
  %4127 = vmatpush1.msra.mxu0 0.0
  %4128 = vmatprep.subr.mxu0 0.0
  %4129 = vmatpush1.msra.mxu0 0.0
  %4130 = vmatprep.subr.mxu0 0.0
  %4131 = vmatpush1.msra.mxu0 0.0
  %4132 = vmatprep.subr.mxu0 0.0
  %4133 = vmatpush1.msra.mxu0 0.0
  %4134 = vmatprep.subr.mxu0 0.0
  %4135 = vmatpush1.msra.mxu0 0.0
  %4136 = vmatprep.subr.mxu0 0.0
  %4137 = vmatpush1.msra.mxu0 %v3390
  %4138 = vmatprep.subr.mxu0 0.0
  %4139 = vmatpush1.msra.mxu0 %v3389
  %4140 = vmatprep.subr.mxu0 0.0
  %4141 = vmatpush1.msra.mxu0 %v3388
  %4142 = vmatprep.subr.mxu0 0.0
  %4143 = vmatpush1.msra.mxu0 %v3387
  %4144 = vmatprep.subr.mxu0 0.0
  %4145 = vmatpush2.msra.mxu0 0.0
  %4146 = vmatprep.subr.mxu0 0.0
  %4147 = vmatpush2.msra.mxu0 0.0
  %4148 = vmatprep.subr.mxu0 0.0
  %4149 = vmatpush2.msra.mxu0 0.0
  %4150 = vmatprep.subr.mxu0 0.0
  %4151 = vmatpush2.msra.mxu0 0.0
  %4152 = vmatprep.subr.mxu0 0.0
  %4153 = vmatpush2.msra.mxu0 0.0
  %4154 = vmatprep.subr.mxu0 0.0
  %4155 = vmatpush2.msra.mxu0 0.0
  %4156 = vmatprep.subr.mxu0 0.0
  %4157 = vmatpush2.msra.mxu0 0.0
  %4158 = vmatprep.subr.mxu0 0.0
  %4159 = vmatpush2.msra.mxu0 0.0
  %4160 = vmatprep.subr.mxu0 0.0
  %4161 = vmatpush2.msra.mxu0 0.0
  %4162 = vmatprep.subr.mxu0 0.0
  %4163 = vmatpush2.msra.mxu0 0.0
  %4164 = vmatprep.subr.mxu0 0.0
  %4165 = vmatpush2.msra.mxu0 0.0
  %4166 = vmatprep.subr.mxu0 0.0
  %4167 = vmatpush2.msra.mxu0 0.0
  %4168 = vmatprep.subr.mxu0 0.0
  %4169 = vmatpush2.msra.mxu0 0.0
  %4170 = vmatprep.subr.mxu0 0.0
  %4171 = vmatpush2.msra.mxu0 0.0
  %4172 = vmatprep.subr.mxu0 0.0
  %4173 = vmatpush2.msra.mxu0 0.0
  %4174 = vmatprep.subr.mxu0 0.0
  %4175 = vmatpush2.msra.mxu0 0.0
  %4176 = vmatprep.mubr.f32.mxu0 0.0
  %4177 = vmatmul.mubr.f32.gmra.mxu0 %v4032
  %v4178 = vpop.f32.mrf.mxu0
  %v4179 = vadd.f32 0.0, %v4178
  %v4180 = vpop.f32.mrf.mxu0
  %4181 = vdwg.mxu0
  %v4182 = vadd.f32 %v4111, %v4179
  %v4183 = vxor.u32 %v4182, 2147483648
  %v4184 = vmul.f32 %v4183, 1.442695
  %v4185 = vpow.pop %v4184
  %v4186 = vadd.f32 %v4185, 1.0
  %v4187 = vrcp.pop %v4186
  %v4188 = vmul.f32 1.0, %v4187
  %v4189 = vld [vmem:[%s3284 + $0x4] sm:$0x3]
  %4190 = vmatprep.subr.mxu0 0.0
  %4191 = vmatpush1.msra.mxu0 0.0
  %4192 = vmatprep.subr.mxu0 0.0
  %4193 = vmatpush1.msra.mxu0 0.0
  %4194 = vmatprep.subr.mxu0 0.0
  %4195 = vmatpush1.msra.mxu0 0.0
  %4196 = vmatprep.subr.mxu0 0.0
  %4197 = vmatpush1.msra.mxu0 0.0
  %4198 = vmatprep.subr.mxu0 0.0
  %4199 = vmatpush1.msra.mxu0 0.0
  %4200 = vmatprep.subr.mxu0 0.0
  %4201 = vmatpush1.msra.mxu0 0.0
  %4202 = vmatprep.subr.mxu0 0.0
  %4203 = vmatpush1.msra.mxu0 0.0
  %4204 = vmatprep.subr.mxu0 0.0
  %4205 = vmatpush1.msra.mxu0 0.0
  %4206 = vmatprep.subr.mxu0 0.0
  %4207 = vmatpush1.msra.mxu0 0.0
  %4208 = vmatprep.subr.mxu0 0.0
  %4209 = vmatpush1.msra.mxu0 0.0
  %4210 = vmatprep.subr.mxu0 0.0
  %4211 = vmatpush1.msra.mxu0 0.0
  %4212 = vmatprep.subr.mxu0 0.0
  %4213 = vmatpush1.msra.mxu0 0.0
  %4214 = vmatprep.subr.mxu0 0.0
  %4215 = vmatpush1.msra.mxu0 %v3395
  %4216 = vmatprep.subr.mxu0 0.0
  %4217 = vmatpush1.msra.mxu0 %v3394
  %4218 = vmatprep.subr.mxu0 0.0
  %4219 = vmatpush1.msra.mxu0 %v3393
  %4220 = vmatprep.subr.mxu0 0.0
  %4221 = vmatpush1.msra.mxu0 %v3392
  %4222 = vmatprep.subr.mxu0 0.0
  %4223 = vmatpush2.msra.mxu0 0.0
  %4224 = vmatprep.subr.mxu0 0.0
  %4225 = vmatpush2.msra.mxu0 0.0
  %4226 = vmatprep.subr.mxu0 0.0
  %4227 = vmatpush2.msra.mxu0 0.0
  %4228 = vmatprep.subr.mxu0 0.0
  %4229 = vmatpush2.msra.mxu0 0.0
  %4230 = vmatprep.subr.mxu0 0.0
  %4231 = vmatpush2.msra.mxu0 0.0
  %4232 = vmatprep.subr.mxu0 0.0
  %4233 = vmatpush2.msra.mxu0 0.0
  %4234 = vmatprep.subr.mxu0 0.0
  %4235 = vmatpush2.msra.mxu0 0.0
  %4236 = vmatprep.subr.mxu0 0.0
  %4237 = vmatpush2.msra.mxu0 0.0
  %4238 = vmatprep.subr.mxu0 0.0
  %4239 = vmatpush2.msra.mxu0 0.0
  %4240 = vmatprep.subr.mxu0 0.0
  %4241 = vmatpush2.msra.mxu0 0.0
  %4242 = vmatprep.subr.mxu0 0.0
  %4243 = vmatpush2.msra.mxu0 0.0
  %4244 = vmatprep.subr.mxu0 0.0
  %4245 = vmatpush2.msra.mxu0 0.0
  %4246 = vmatprep.subr.mxu0 0.0
  %4247 = vmatpush2.msra.mxu0 0.0
  %4248 = vmatprep.subr.mxu0 0.0
  %4249 = vmatpush2.msra.mxu0 0.0
  %4250 = vmatprep.subr.mxu0 0.0
  %4251 = vmatpush2.msra.mxu0 0.0
  %4252 = vmatprep.subr.mxu0 0.0
  %4253 = vmatpush2.msra.mxu0 0.0
  %4254 = vmatprep.mubr.f32.mxu0 0.0
  %4255 = vmatmul.mubr.f32.gmra.mxu0 %v4032
  %v4256 = vpop.f32.mrf.mxu0
  %v4257 = vadd.f32 0.0, %v4256
  %v4258 = vpop.f32.mrf.mxu0
  %4259 = vdwg.mxu0
  %v4260 = vadd.f32 %v4189, %v4257
  %v4261 = vtanh.pop %v4260
  %v4262 = vld [vmem:[%s3379 + $0x4] sm:$0x3]
  %4263 = vmatprep.subr.mxu0 0.0
  %4264 = vmatpush1.msra.mxu0 0.0
  %4265 = vmatprep.subr.mxu0 0.0
  %4266 = vmatpush1.msra.mxu0 0.0
  %4267 = vmatprep.subr.mxu0 0.0
  %4268 = vmatpush1.msra.mxu0 0.0
  %4269 = vmatprep.subr.mxu0 0.0
  %4270 = vmatpush1.msra.mxu0 0.0
  %4271 = vmatprep.subr.mxu0 0.0
  %4272 = vmatpush1.msra.mxu0 0.0
  %4273 = vmatprep.subr.mxu0 0.0
  %4274 = vmatpush1.msra.mxu0 0.0
  %4275 = vmatprep.subr.mxu0 0.0
  %4276 = vmatpush1.msra.mxu0 0.0
  %4277 = vmatprep.subr.mxu0 0.0
  %4278 = vmatpush1.msra.mxu0 0.0
  %4279 = vmatprep.subr.mxu0 0.0
  %4280 = vmatpush1.msra.mxu0 0.0
  %4281 = vmatprep.subr.mxu0 0.0
  %4282 = vmatpush1.msra.mxu0 0.0
  %4283 = vmatprep.subr.mxu0 0.0
  %4284 = vmatpush1.msra.mxu0 0.0
  %4285 = vmatprep.subr.mxu0 0.0
  %4286 = vmatpush1.msra.mxu0 0.0
  %4287 = vmatprep.subr.mxu0 0.0
  %4288 = vmatpush1.msra.mxu0 %v3400
  %4289 = vmatprep.subr.mxu0 0.0
  %4290 = vmatpush1.msra.mxu0 %v3399
  %4291 = vmatprep.subr.mxu0 0.0
  %4292 = vmatpush1.msra.mxu0 %v3398
  %4293 = vmatprep.subr.mxu0 0.0
  %4294 = vmatpush1.msra.mxu0 %v3397
  %4295 = vmatprep.subr.mxu0 0.0
  %4296 = vmatpush2.msra.mxu0 0.0
  %4297 = vmatprep.subr.mxu0 0.0
  %4298 = vmatpush2.msra.mxu0 0.0
  %4299 = vmatprep.subr.mxu0 0.0
  %4300 = vmatpush2.msra.mxu0 0.0
  %4301 = vmatprep.subr.mxu0 0.0
  %4302 = vmatpush2.msra.mxu0 0.0
  %4303 = vmatprep.subr.mxu0 0.0
  %4304 = vmatpush2.msra.mxu0 0.0
  %4305 = vmatprep.subr.mxu0 0.0
  %4306 = vmatpush2.msra.mxu0 0.0
  %4307 = vmatprep.subr.mxu0 0.0
  %4308 = vmatpush2.msra.mxu0 0.0
  %4309 = vmatprep.subr.mxu0 0.0
  %4310 = vmatpush2.msra.mxu0 0.0
  %4311 = vmatprep.subr.mxu0 0.0
  %4312 = vmatpush2.msra.mxu0 0.0
  %4313 = vmatprep.subr.mxu0 0.0
  %4314 = vmatpush2.msra.mxu0 0.0
  %4315 = vmatprep.subr.mxu0 0.0
  %4316 = vmatpush2.msra.mxu0 0.0
  %4317 = vmatprep.subr.mxu0 0.0
  %4318 = vmatpush2.msra.mxu0 0.0
  %4319 = vmatprep.subr.mxu0 0.0
  %4320 = vmatpush2.msra.mxu0 0.0
  %4321 = vmatprep.subr.mxu0 0.0
  %4322 = vmatpush2.msra.mxu0 0.0
  %4323 = vmatprep.subr.mxu0 0.0
  %4324 = vmatpush2.msra.mxu0 0.0
  %4325 = vmatprep.subr.mxu0 0.0
  %4326 = vmatpush2.msra.mxu0 0.0
  %4327 = vmatprep.mubr.f32.mxu0 0.0
  %4328 = vmatmul.mubr.f32.gmra.mxu0 %v4032
  %v4329 = vpop.f32.mrf.mxu0
  %v4330 = vadd.f32 0.0, %v4329
  %v4331 = vpop.f32.mrf.mxu0
  %4332 = vdwg.mxu0
  %v4333 = vadd.f32 %v4262, %v4330
  %v4334 = vxor.u32 %v4333, 2147483648
  %v4335 = vmul.f32 %v4334, 1.442695
  %v4336 = vpow.pop %v4335
  %v4337 = vadd.f32 %v4336, 1.0
  %v4338 = vrcp.pop %v4337
  %v4339 = vmul.f32 1.0, %v4338
  %v4340 = vmul.f32 %v4188, %v4027
  %v4341 = vmul.f32 %v4110, %v4261
  %v4342 = vadd.f32 %v4340, %v4341
  %v4343 = vtanh.pop %v4342
  %v4344 = vmul.f32 %v4339, %v4343
  %v4345 = vld [vmem:[#allocation3 + $0x6] sm:$0x3]
  %v4347 = vsel %vm3094, %v4344, 0
  %4349 = vmatprep.subr.mxu0 0.0
  %4350 = vmatpush1.msra.mxu0 0.0
  %4351 = vmatprep.subr.mxu0 0.0
  %4352 = vmatpush1.msra.mxu0 0.0
  %4353 = vmatprep.subr.mxu0 0.0
  %4354 = vmatpush1.msra.mxu0 0.0
  %4355 = vmatprep.subr.mxu0 0.0
  %4356 = vmatpush1.msra.mxu0 0.0
  %4357 = vmatprep.subr.mxu0 0.0
  %4358 = vmatpush1.msra.mxu0 0.0
  %4359 = vmatprep.subr.mxu0 0.0
  %4360 = vmatpush1.msra.mxu0 0.0
  %4361 = vmatprep.subr.mxu0 0.0
  %4362 = vmatpush1.msra.mxu0 0.0
  %4363 = vmatprep.subr.mxu0 0.0
  %4364 = vmatpush1.msra.mxu0 0.0
  %4365 = vmatprep.subr.mxu0 0.0
  %4366 = vmatpush1.msra.mxu0 0.0
  %4367 = vmatprep.subr.mxu0 0.0
  %4368 = vmatpush1.msra.mxu0 0.0
  %4369 = vmatprep.subr.mxu0 0.0
  %4370 = vmatpush1.msra.mxu0 0.0
  %4371 = vmatprep.subr.mxu0 0.0
  %4372 = vmatpush1.msra.mxu0 0.0
  %4373 = vmatprep.subr.mxu0 0.0
  %4374 = vmatpush1.msra.mxu0 %v3385
  %4375 = vmatprep.subr.mxu0 0.0
  %4376 = vmatpush1.msra.mxu0 %v3384
  %4377 = vmatprep.subr.mxu0 0.0
  %4378 = vmatpush1.msra.mxu0 %v3383
  %4379 = vmatprep.subr.mxu0 0.0
  %4380 = vmatpush1.msra.mxu0 %v3382
  %4381 = vmatprep.subr.mxu0 0.0
  %4382 = vmatpush2.msra.mxu0 0.0
  %4383 = vmatprep.subr.mxu0 0.0
  %4384 = vmatpush2.msra.mxu0 0.0
  %4385 = vmatprep.subr.mxu0 0.0
  %4386 = vmatpush2.msra.mxu0 0.0
  %4387 = vmatprep.subr.mxu0 0.0
  %4388 = vmatpush2.msra.mxu0 0.0
  %4389 = vmatprep.subr.mxu0 0.0
  %4390 = vmatpush2.msra.mxu0 0.0
  %4391 = vmatprep.subr.mxu0 0.0
  %4392 = vmatpush2.msra.mxu0 0.0
  %4393 = vmatprep.subr.mxu0 0.0
  %4394 = vmatpush2.msra.mxu0 0.0
  %4395 = vmatprep.subr.mxu0 0.0
  %4396 = vmatpush2.msra.mxu0 0.0
  %4397 = vmatprep.subr.mxu0 0.0
  %4398 = vmatpush2.msra.mxu0 0.0
  %4399 = vmatprep.subr.mxu0 0.0
  %4400 = vmatpush2.msra.mxu0 0.0
  %4401 = vmatprep.subr.mxu0 0.0
  %4402 = vmatpush2.msra.mxu0 0.0
  %4403 = vmatprep.subr.mxu0 0.0
  %4404 = vmatpush2.msra.mxu0 0.0
  %4405 = vmatprep.subr.mxu0 0.0
  %4406 = vmatpush2.msra.mxu0 0.0
  %4407 = vmatprep.subr.mxu0 0.0
  %4408 = vmatpush2.msra.mxu0 0.0
  %4409 = vmatprep.subr.mxu0 0.0
  %4410 = vmatpush2.msra.mxu0 0.0
  %4411 = vmatprep.subr.mxu0 0.0
  %4412 = vmatpush2.msra.mxu0 0.0
  %4413 = vmatprep.mubr.f32.mxu0 0.0
  %4414 = vmatmul.mubr.f32.gmra.mxu0 %v4347
  %v4415 = vpop.f32.mrf.mxu0
  %v4416 = vadd.f32 0.0, %v4415
  %v4417 = vpop.f32.mrf.mxu0
  %4418 = vdwg.mxu0
  %v4419 = vadd.f32 %v4345, %v4416
  %v4420 = vxor.u32 %v4419, 2147483648
  %v4421 = vmul.f32 %v4420, 1.442695
  %v4422 = vpow.pop %v4421
  %v4423 = vadd.f32 %v4422, 1.0
  %v4424 = vrcp.pop %v4423
  %v4425 = vmul.f32 1.0, %v4424
  %v4426 = vld [vmem:[%s3189 + $0x6] sm:$0x3]
  %4427 = vmatprep.subr.mxu0 0.0
  %4428 = vmatpush1.msra.mxu0 0.0
  %4429 = vmatprep.subr.mxu0 0.0
  %4430 = vmatpush1.msra.mxu0 0.0
  %4431 = vmatprep.subr.mxu0 0.0
  %4432 = vmatpush1.msra.mxu0 0.0
  %4433 = vmatprep.subr.mxu0 0.0
  %4434 = vmatpush1.msra.mxu0 0.0
  %4435 = vmatprep.subr.mxu0 0.0
  %4436 = vmatpush1.msra.mxu0 0.0
  %4437 = vmatprep.subr.mxu0 0.0
  %4438 = vmatpush1.msra.mxu0 0.0
  %4439 = vmatprep.subr.mxu0 0.0
  %4440 = vmatpush1.msra.mxu0 0.0
  %4441 = vmatprep.subr.mxu0 0.0
  %4442 = vmatpush1.msra.mxu0 0.0
  %4443 = vmatprep.subr.mxu0 0.0
  %4444 = vmatpush1.msra.mxu0 0.0
  %4445 = vmatprep.subr.mxu0 0.0
  %4446 = vmatpush1.msra.mxu0 0.0
  %4447 = vmatprep.subr.mxu0 0.0
  %4448 = vmatpush1.msra.mxu0 0.0
  %4449 = vmatprep.subr.mxu0 0.0
  %4450 = vmatpush1.msra.mxu0 0.0
  %4451 = vmatprep.subr.mxu0 0.0
  %4452 = vmatpush1.msra.mxu0 %v3390
  %4453 = vmatprep.subr.mxu0 0.0
  %4454 = vmatpush1.msra.mxu0 %v3389
  %4455 = vmatprep.subr.mxu0 0.0
  %4456 = vmatpush1.msra.mxu0 %v3388
  %4457 = vmatprep.subr.mxu0 0.0
  %4458 = vmatpush1.msra.mxu0 %v3387
  %4459 = vmatprep.subr.mxu0 0.0
  %4460 = vmatpush2.msra.mxu0 0.0
  %4461 = vmatprep.subr.mxu0 0.0
  %4462 = vmatpush2.msra.mxu0 0.0
  %4463 = vmatprep.subr.mxu0 0.0
  %4464 = vmatpush2.msra.mxu0 0.0
  %4465 = vmatprep.subr.mxu0 0.0
  %4466 = vmatpush2.msra.mxu0 0.0
  %4467 = vmatprep.subr.mxu0 0.0
  %4468 = vmatpush2.msra.mxu0 0.0
  %4469 = vmatprep.subr.mxu0 0.0
  %4470 = vmatpush2.msra.mxu0 0.0
  %4471 = vmatprep.subr.mxu0 0.0
  %4472 = vmatpush2.msra.mxu0 0.0
  %4473 = vmatprep.subr.mxu0 0.0
  %4474 = vmatpush2.msra.mxu0 0.0
  %4475 = vmatprep.subr.mxu0 0.0
  %4476 = vmatpush2.msra.mxu0 0.0
  %4477 = vmatprep.subr.mxu0 0.0
  %4478 = vmatpush2.msra.mxu0 0.0
  %4479 = vmatprep.subr.mxu0 0.0
  %4480 = vmatpush2.msra.mxu0 0.0
  %4481 = vmatprep.subr.mxu0 0.0
  %4482 = vmatpush2.msra.mxu0 0.0
  %4483 = vmatprep.subr.mxu0 0.0
  %4484 = vmatpush2.msra.mxu0 0.0
  %4485 = vmatprep.subr.mxu0 0.0
  %4486 = vmatpush2.msra.mxu0 0.0
  %4487 = vmatprep.subr.mxu0 0.0
  %4488 = vmatpush2.msra.mxu0 0.0
  %4489 = vmatprep.subr.mxu0 0.0
  %4490 = vmatpush2.msra.mxu0 0.0
  %4491 = vmatprep.mubr.f32.mxu0 0.0
  %4492 = vmatmul.mubr.f32.gmra.mxu0 %v4347
  %v4493 = vpop.f32.mrf.mxu0
  %v4494 = vadd.f32 0.0, %v4493
  %v4495 = vpop.f32.mrf.mxu0
  %4496 = vdwg.mxu0
  %v4497 = vadd.f32 %v4426, %v4494
  %v4498 = vxor.u32 %v4497, 2147483648
  %v4499 = vmul.f32 %v4498, 1.442695
  %v4500 = vpow.pop %v4499
  %v4501 = vadd.f32 %v4500, 1.0
  %v4502 = vrcp.pop %v4501
  %v4503 = vmul.f32 1.0, %v4502
  %v4504 = vld [vmem:[%s3284 + $0x6] sm:$0x3]
  %4505 = vmatprep.subr.mxu0 0.0
  %4506 = vmatpush1.msra.mxu0 0.0
  %4507 = vmatprep.subr.mxu0 0.0
  %4508 = vmatpush1.msra.mxu0 0.0
  %4509 = vmatprep.subr.mxu0 0.0
  %4510 = vmatpush1.msra.mxu0 0.0
  %4511 = vmatprep.subr.mxu0 0.0
  %4512 = vmatpush1.msra.mxu0 0.0
  %4513 = vmatprep.subr.mxu0 0.0
  %4514 = vmatpush1.msra.mxu0 0.0
  %4515 = vmatprep.subr.mxu0 0.0
  %4516 = vmatpush1.msra.mxu0 0.0
  %4517 = vmatprep.subr.mxu0 0.0
  %4518 = vmatpush1.msra.mxu0 0.0
  %4519 = vmatprep.subr.mxu0 0.0
  %4520 = vmatpush1.msra.mxu0 0.0
  %4521 = vmatprep.subr.mxu0 0.0
  %4522 = vmatpush1.msra.mxu0 0.0
  %4523 = vmatprep.subr.mxu0 0.0
  %4524 = vmatpush1.msra.mxu0 0.0
  %4525 = vmatprep.subr.mxu0 0.0
  %4526 = vmatpush1.msra.mxu0 0.0
  %4527 = vmatprep.subr.mxu0 0.0
  %4528 = vmatpush1.msra.mxu0 0.0
  %4529 = vmatprep.subr.mxu0 0.0
  %4530 = vmatpush1.msra.mxu0 %v3395
  %4531 = vmatprep.subr.mxu0 0.0
  %4532 = vmatpush1.msra.mxu0 %v3394
  %4533 = vmatprep.subr.mxu0 0.0
  %4534 = vmatpush1.msra.mxu0 %v3393
  %4535 = vmatprep.subr.mxu0 0.0
  %4536 = vmatpush1.msra.mxu0 %v3392
  %4537 = vmatprep.subr.mxu0 0.0
  %4538 = vmatpush2.msra.mxu0 0.0
  %4539 = vmatprep.subr.mxu0 0.0
  %4540 = vmatpush2.msra.mxu0 0.0
  %4541 = vmatprep.subr.mxu0 0.0
  %4542 = vmatpush2.msra.mxu0 0.0
  %4543 = vmatprep.subr.mxu0 0.0
  %4544 = vmatpush2.msra.mxu0 0.0
  %4545 = vmatprep.subr.mxu0 0.0
  %4546 = vmatpush2.msra.mxu0 0.0
  %4547 = vmatprep.subr.mxu0 0.0
  %4548 = vmatpush2.msra.mxu0 0.0
  %4549 = vmatprep.subr.mxu0 0.0
  %4550 = vmatpush2.msra.mxu0 0.0
  %4551 = vmatprep.subr.mxu0 0.0
  %4552 = vmatpush2.msra.mxu0 0.0
  %4553 = vmatprep.subr.mxu0 0.0
  %4554 = vmatpush2.msra.mxu0 0.0
  %4555 = vmatprep.subr.mxu0 0.0
  %4556 = vmatpush2.msra.mxu0 0.0
  %4557 = vmatprep.subr.mxu0 0.0
  %4558 = vmatpush2.msra.mxu0 0.0
  %4559 = vmatprep.subr.mxu0 0.0
  %4560 = vmatpush2.msra.mxu0 0.0
  %4561 = vmatprep.subr.mxu0 0.0
  %4562 = vmatpush2.msra.mxu0 0.0
  %4563 = vmatprep.subr.mxu0 0.0
  %4564 = vmatpush2.msra.mxu0 0.0
  %4565 = vmatprep.subr.mxu0 0.0
  %4566 = vmatpush2.msra.mxu0 0.0
  %4567 = vmatprep.subr.mxu0 0.0
  %4568 = vmatpush2.msra.mxu0 0.0
  %4569 = vmatprep.mubr.f32.mxu0 0.0
  %4570 = vmatmul.mubr.f32.gmra.mxu0 %v4347
  %v4571 = vpop.f32.mrf.mxu0
  %v4572 = vadd.f32 0.0, %v4571
  %v4573 = vpop.f32.mrf.mxu0
  %4574 = vdwg.mxu0
  %v4575 = vadd.f32 %v4504, %v4572
  %v4576 = vtanh.pop %v4575
  %v4577 = vld [vmem:[%s3379 + $0x6] sm:$0x3]
  %4578 = vmatprep.subr.mxu0 0.0
  %4579 = vmatpush1.msra.mxu0 0.0
  %4580 = vmatprep.subr.mxu0 0.0
  %4581 = vmatpush1.msra.mxu0 0.0
  %4582 = vmatprep.subr.mxu0 0.0
  %4583 = vmatpush1.msra.mxu0 0.0
  %4584 = vmatprep.subr.mxu0 0.0
  %4585 = vmatpush1.msra.mxu0 0.0
  %4586 = vmatprep.subr.mxu0 0.0
  %4587 = vmatpush1.msra.mxu0 0.0
  %4588 = vmatprep.subr.mxu0 0.0
  %4589 = vmatpush1.msra.mxu0 0.0
  %4590 = vmatprep.subr.mxu0 0.0
  %4591 = vmatpush1.msra.mxu0 0.0
  %4592 = vmatprep.subr.mxu0 0.0
  %4593 = vmatpush1.msra.mxu0 0.0
  %4594 = vmatprep.subr.mxu0 0.0
  %4595 = vmatpush1.msra.mxu0 0.0
  %4596 = vmatprep.subr.mxu0 0.0
  %4597 = vmatpush1.msra.mxu0 0.0
  %4598 = vmatprep.subr.mxu0 0.0
  %4599 = vmatpush1.msra.mxu0 0.0
  %4600 = vmatprep.subr.mxu0 0.0
  %4601 = vmatpush1.msra.mxu0 0.0
  %4602 = vmatprep.subr.mxu0 0.0
  %4603 = vmatpush1.msra.mxu0 %v3400
  %4604 = vmatprep.subr.mxu0 0.0
  %4605 = vmatpush1.msra.mxu0 %v3399
  %4606 = vmatprep.subr.mxu0 0.0
  %4607 = vmatpush1.msra.mxu0 %v3398
  %4608 = vmatprep.subr.mxu0 0.0
  %4609 = vmatpush1.msra.mxu0 %v3397
  %4610 = vmatprep.subr.mxu0 0.0
  %4611 = vmatpush2.msra.mxu0 0.0
  %4612 = vmatprep.subr.mxu0 0.0
  %4613 = vmatpush2.msra.mxu0 0.0
  %4614 = vmatprep.subr.mxu0 0.0
  %4615 = vmatpush2.msra.mxu0 0.0
  %4616 = vmatprep.subr.mxu0 0.0
  %4617 = vmatpush2.msra.mxu0 0.0
  %4618 = vmatprep.subr.mxu0 0.0
  %4619 = vmatpush2.msra.mxu0 0.0
  %4620 = vmatprep.subr.mxu0 0.0
  %4621 = vmatpush2.msra.mxu0 0.0
  %4622 = vmatprep.subr.mxu0 0.0
  %4623 = vmatpush2.msra.mxu0 0.0
  %4624 = vmatprep.subr.mxu0 0.0
  %4625 = vmatpush2.msra.mxu0 0.0
  %4626 = vmatprep.subr.mxu0 0.0
  %4627 = vmatpush2.msra.mxu0 0.0
  %4628 = vmatprep.subr.mxu0 0.0
  %4629 = vmatpush2.msra.mxu0 0.0
  %4630 = vmatprep.subr.mxu0 0.0
  %4631 = vmatpush2.msra.mxu0 0.0
  %4632 = vmatprep.subr.mxu0 0.0
  %4633 = vmatpush2.msra.mxu0 0.0
  %4634 = vmatprep.subr.mxu0 0.0
  %4635 = vmatpush2.msra.mxu0 0.0
  %4636 = vmatprep.subr.mxu0 0.0
  %4637 = vmatpush2.msra.mxu0 0.0
  %4638 = vmatprep.subr.mxu0 0.0
  %4639 = vmatpush2.msra.mxu0 0.0
  %4640 = vmatprep.subr.mxu0 0.0
  %4641 = vmatpush2.msra.mxu0 0.0
  %4642 = vmatprep.mubr.f32.mxu0 0.0
  %4643 = vmatmul.mubr.f32.gmra.mxu0 %v4347
  %v4644 = vpop.f32.mrf.mxu0
  %v4645 = vadd.f32 0.0, %v4644
  %v4646 = vpop.f32.mrf.mxu0
  %4647 = vdwg.mxu0
  %v4648 = vadd.f32 %v4577, %v4645
  %v4649 = vxor.u32 %v4648, 2147483648
  %v4650 = vmul.f32 %v4649, 1.442695
  %v4651 = vpow.pop %v4650
  %v4652 = vadd.f32 %v4651, 1.0
  %v4653 = vrcp.pop %v4652
  %v4654 = vmul.f32 1.0, %v4653
  %v4655 = vmul.f32 %v4503, %v4342
  %v4656 = vmul.f32 %v4425, %v4576
  %v4657 = vadd.f32 %v4655, %v4656
  %v4658 = vtanh.pop %v4657
  %v4659 = vmul.f32 %v4654, %v4658
  %v4660 = vld [vmem:[#allocation3 + $0x8] sm:$0x3]
  %v4662 = vsel %vm3094, %v4659, 0
  %4664 = vmatprep.subr.mxu0 0.0
  %4665 = vmatpush1.msra.mxu0 0.0
  %4666 = vmatprep.subr.mxu0 0.0
  %4667 = vmatpush1.msra.mxu0 0.0
  %4668 = vmatprep.subr.mxu0 0.0
  %4669 = vmatpush1.msra.mxu0 0.0
  %4670 = vmatprep.subr.mxu0 0.0
  %4671 = vmatpush1.msra.mxu0 0.0
  %4672 = vmatprep.subr.mxu0 0.0
  %4673 = vmatpush1.msra.mxu0 0.0
  %4674 = vmatprep.subr.mxu0 0.0
  %4675 = vmatpush1.msra.mxu0 0.0
  %4676 = vmatprep.subr.mxu0 0.0
  %4677 = vmatpush1.msra.mxu0 0.0
  %4678 = vmatprep.subr.mxu0 0.0
  %4679 = vmatpush1.msra.mxu0 0.0
  %4680 = vmatprep.subr.mxu0 0.0
  %4681 = vmatpush1.msra.mxu0 0.0
  %4682 = vmatprep.subr.mxu0 0.0
  %4683 = vmatpush1.msra.mxu0 0.0
  %4684 = vmatprep.subr.mxu0 0.0
  %4685 = vmatpush1.msra.mxu0 0.0
  %4686 = vmatprep.subr.mxu0 0.0
  %4687 = vmatpush1.msra.mxu0 0.0
  %4688 = vmatprep.subr.mxu0 0.0
  %4689 = vmatpush1.msra.mxu0 %v3385
  %4690 = vmatprep.subr.mxu0 0.0
  %4691 = vmatpush1.msra.mxu0 %v3384
  %4692 = vmatprep.subr.mxu0 0.0
  %4693 = vmatpush1.msra.mxu0 %v3383
  %4694 = vmatprep.subr.mxu0 0.0
  %4695 = vmatpush1.msra.mxu0 %v3382
  %4696 = vmatprep.subr.mxu0 0.0
  %4697 = vmatpush2.msra.mxu0 0.0
  %4698 = vmatprep.subr.mxu0 0.0
  %4699 = vmatpush2.msra.mxu0 0.0
  %4700 = vmatprep.subr.mxu0 0.0
  %4701 = vmatpush2.msra.mxu0 0.0
  %4702 = vmatprep.subr.mxu0 0.0
  %4703 = vmatpush2.msra.mxu0 0.0
  %4704 = vmatprep.subr.mxu0 0.0
  %4705 = vmatpush2.msra.mxu0 0.0
  %4706 = vmatprep.subr.mxu0 0.0
  %4707 = vmatpush2.msra.mxu0 0.0
  %4708 = vmatprep.subr.mxu0 0.0
  %4709 = vmatpush2.msra.mxu0 0.0
  %4710 = vmatprep.subr.mxu0 0.0
  %4711 = vmatpush2.msra.mxu0 0.0
  %4712 = vmatprep.subr.mxu0 0.0
  %4713 = vmatpush2.msra.mxu0 0.0
  %4714 = vmatprep.subr.mxu0 0.0
  %4715 = vmatpush2.msra.mxu0 0.0
  %4716 = vmatprep.subr.mxu0 0.0
  %4717 = vmatpush2.msra.mxu0 0.0
  %4718 = vmatprep.subr.mxu0 0.0
  %4719 = vmatpush2.msra.mxu0 0.0
  %4720 = vmatprep.subr.mxu0 0.0
  %4721 = vmatpush2.msra.mxu0 0.0
  %4722 = vmatprep.subr.mxu0 0.0
  %4723 = vmatpush2.msra.mxu0 0.0
  %4724 = vmatprep.subr.mxu0 0.0
  %4725 = vmatpush2.msra.mxu0 0.0
  %4726 = vmatprep.subr.mxu0 0.0
  %4727 = vmatpush2.msra.mxu0 0.0
  %4728 = vmatprep.mubr.f32.mxu0 0.0
  %4729 = vmatmul.mubr.f32.gmra.mxu0 %v4662
  %v4730 = vpop.f32.mrf.mxu0
  %v4731 = vadd.f32 0.0, %v4730
  %v4732 = vpop.f32.mrf.mxu0
  %4733 = vdwg.mxu0
  %v4734 = vadd.f32 %v4660, %v4731
  %v4735 = vxor.u32 %v4734, 2147483648
  %v4736 = vmul.f32 %v4735, 1.442695
  %v4737 = vpow.pop %v4736
  %v4738 = vadd.f32 %v4737, 1.0
  %v4739 = vrcp.pop %v4738
  %v4740 = vmul.f32 1.0, %v4739
  %v4741 = vld [vmem:[%s3189 + $0x8] sm:$0x3]
  %4742 = vmatprep.subr.mxu0 0.0
  %4743 = vmatpush1.msra.mxu0 0.0
  %4744 = vmatprep.subr.mxu0 0.0
  %4745 = vmatpush1.msra.mxu0 0.0
  %4746 = vmatprep.subr.mxu0 0.0
  %4747 = vmatpush1.msra.mxu0 0.0
  %4748 = vmatprep.subr.mxu0 0.0
  %4749 = vmatpush1.msra.mxu0 0.0
  %4750 = vmatprep.subr.mxu0 0.0
  %4751 = vmatpush1.msra.mxu0 0.0
  %4752 = vmatprep.subr.mxu0 0.0
  %4753 = vmatpush1.msra.mxu0 0.0
  %4754 = vmatprep.subr.mxu0 0.0
  %4755 = vmatpush1.msra.mxu0 0.0
  %4756 = vmatprep.subr.mxu0 0.0
  %4757 = vmatpush1.msra.mxu0 0.0
  %4758 = vmatprep.subr.mxu0 0.0
  %4759 = vmatpush1.msra.mxu0 0.0
  %4760 = vmatprep.subr.mxu0 0.0
  %4761 = vmatpush1.msra.mxu0 0.0
  %4762 = vmatprep.subr.mxu0 0.0
  %4763 = vmatpush1.msra.mxu0 0.0
  %4764 = vmatprep.subr.mxu0 0.0
  %4765 = vmatpush1.msra.mxu0 0.0
  %4766 = vmatprep.subr.mxu0 0.0
  %4767 = vmatpush1.msra.mxu0 %v3390
  %4768 = vmatprep.subr.mxu0 0.0
  %4769 = vmatpush1.msra.mxu0 %v3389
  %4770 = vmatprep.subr.mxu0 0.0
  %4771 = vmatpush1.msra.mxu0 %v3388
  %4772 = vmatprep.subr.mxu0 0.0
  %4773 = vmatpush1.msra.mxu0 %v3387
  %4774 = vmatprep.subr.mxu0 0.0
  %4775 = vmatpush2.msra.mxu0 0.0
  %4776 = vmatprep.subr.mxu0 0.0
  %4777 = vmatpush2.msra.mxu0 0.0
  %4778 = vmatprep.subr.mxu0 0.0
  %4779 = vmatpush2.msra.mxu0 0.0
  %4780 = vmatprep.subr.mxu0 0.0
  %4781 = vmatpush2.msra.mxu0 0.0
  %4782 = vmatprep.subr.mxu0 0.0
  %4783 = vmatpush2.msra.mxu0 0.0
  %4784 = vmatprep.subr.mxu0 0.0
  %4785 = vmatpush2.msra.mxu0 0.0
  %4786 = vmatprep.subr.mxu0 0.0
  %4787 = vmatpush2.msra.mxu0 0.0
  %4788 = vmatprep.subr.mxu0 0.0
  %4789 = vmatpush2.msra.mxu0 0.0
  %4790 = vmatprep.subr.mxu0 0.0
  %4791 = vmatpush2.msra.mxu0 0.0
  %4792 = vmatprep.subr.mxu0 0.0
  %4793 = vmatpush2.msra.mxu0 0.0
  %4794 = vmatprep.subr.mxu0 0.0
  %4795 = vmatpush2.msra.mxu0 0.0
  %4796 = vmatprep.subr.mxu0 0.0
  %4797 = vmatpush2.msra.mxu0 0.0
  %4798 = vmatprep.subr.mxu0 0.0
  %4799 = vmatpush2.msra.mxu0 0.0
  %4800 = vmatprep.subr.mxu0 0.0
  %4801 = vmatpush2.msra.mxu0 0.0
  %4802 = vmatprep.subr.mxu0 0.0
  %4803 = vmatpush2.msra.mxu0 0.0
  %4804 = vmatprep.subr.mxu0 0.0
  %4805 = vmatpush2.msra.mxu0 0.0
  %4806 = vmatprep.mubr.f32.mxu0 0.0
  %4807 = vmatmul.mubr.f32.gmra.mxu0 %v4662
  %v4808 = vpop.f32.mrf.mxu0
  %v4809 = vadd.f32 0.0, %v4808
  %v4810 = vpop.f32.mrf.mxu0
  %4811 = vdwg.mxu0
  %v4812 = vadd.f32 %v4741, %v4809
  %v4813 = vxor.u32 %v4812, 2147483648
  %v4814 = vmul.f32 %v4813, 1.442695
  %v4815 = vpow.pop %v4814
  %v4816 = vadd.f32 %v4815, 1.0
  %v4817 = vrcp.pop %v4816
  %v4818 = vmul.f32 1.0, %v4817
  %v4819 = vld [vmem:[%s3284 + $0x8] sm:$0x3]
  %4820 = vmatprep.subr.mxu0 0.0
  %4821 = vmatpush1.msra.mxu0 0.0
  %4822 = vmatprep.subr.mxu0 0.0
  %4823 = vmatpush1.msra.mxu0 0.0
  %4824 = vmatprep.subr.mxu0 0.0
  %4825 = vmatpush1.msra.mxu0 0.0
  %4826 = vmatprep.subr.mxu0 0.0
  %4827 = vmatpush1.msra.mxu0 0.0
  %4828 = vmatprep.subr.mxu0 0.0
  %4829 = vmatpush1.msra.mxu0 0.0
  %4830 = vmatprep.subr.mxu0 0.0
  %4831 = vmatpush1.msra.mxu0 0.0
  %4832 = vmatprep.subr.mxu0 0.0
  %4833 = vmatpush1.msra.mxu0 0.0
  %4834 = vmatprep.subr.mxu0 0.0
  %4835 = vmatpush1.msra.mxu0 0.0
  %4836 = vmatprep.subr.mxu0 0.0
  %4837 = vmatpush1.msra.mxu0 0.0
  %4838 = vmatprep.subr.mxu0 0.0
  %4839 = vmatpush1.msra.mxu0 0.0
  %4840 = vmatprep.subr.mxu0 0.0
  %4841 = vmatpush1.msra.mxu0 0.0
  %4842 = vmatprep.subr.mxu0 0.0
  %4843 = vmatpush1.msra.mxu0 0.0
  %4844 = vmatprep.subr.mxu0 0.0
  %4845 = vmatpush1.msra.mxu0 %v3395
  %4846 = vmatprep.subr.mxu0 0.0
  %4847 = vmatpush1.msra.mxu0 %v3394
  %4848 = vmatprep.subr.mxu0 0.0
  %4849 = vmatpush1.msra.mxu0 %v3393
  %4850 = vmatprep.subr.mxu0 0.0
  %4851 = vmatpush1.msra.mxu0 %v3392
  %4852 = vmatprep.subr.mxu0 0.0
  %4853 = vmatpush2.msra.mxu0 0.0
  %4854 = vmatprep.subr.mxu0 0.0
  %4855 = vmatpush2.msra.mxu0 0.0
  %4856 = vmatprep.subr.mxu0 0.0
  %4857 = vmatpush2.msra.mxu0 0.0
  %4858 = vmatprep.subr.mxu0 0.0
  %4859 = vmatpush2.msra.mxu0 0.0
  %4860 = vmatprep.subr.mxu0 0.0
  %4861 = vmatpush2.msra.mxu0 0.0
  %4862 = vmatprep.subr.mxu0 0.0
  %4863 = vmatpush2.msra.mxu0 0.0
  %4864 = vmatprep.subr.mxu0 0.0
  %4865 = vmatpush2.msra.mxu0 0.0
  %4866 = vmatprep.subr.mxu0 0.0
  %4867 = vmatpush2.msra.mxu0 0.0
  %4868 = vmatprep.subr.mxu0 0.0
  %4869 = vmatpush2.msra.mxu0 0.0
  %4870 = vmatprep.subr.mxu0 0.0
  %4871 = vmatpush2.msra.mxu0 0.0
  %4872 = vmatprep.subr.mxu0 0.0
  %4873 = vmatpush2.msra.mxu0 0.0
  %4874 = vmatprep.subr.mxu0 0.0
  %4875 = vmatpush2.msra.mxu0 0.0
  %4876 = vmatprep.subr.mxu0 0.0
  %4877 = vmatpush2.msra.mxu0 0.0
  %4878 = vmatprep.subr.mxu0 0.0
  %4879 = vmatpush2.msra.mxu0 0.0
  %4880 = vmatprep.subr.mxu0 0.0
  %4881 = vmatpush2.msra.mxu0 0.0
  %4882 = vmatprep.subr.mxu0 0.0
  %4883 = vmatpush2.msra.mxu0 0.0
  %4884 = vmatprep.mubr.f32.mxu0 0.0
  %4885 = vmatmul.mubr.f32.gmra.mxu0 %v4662
  %v4886 = vpop.f32.mrf.mxu0
  %v4887 = vadd.f32 0.0, %v4886
  %v4888 = vpop.f32.mrf.mxu0
  %4889 = vdwg.mxu0
  %v4890 = vadd.f32 %v4819, %v4887
  %v4891 = vtanh.pop %v4890
  %v4892 = vld [vmem:[%s3379 + $0x8] sm:$0x3]
  %4893 = vmatprep.subr.mxu0 0.0
  %4894 = vmatpush1.msra.mxu0 0.0
  %4895 = vmatprep.subr.mxu0 0.0
  %4896 = vmatpush1.msra.mxu0 0.0
  %4897 = vmatprep.subr.mxu0 0.0
  %4898 = vmatpush1.msra.mxu0 0.0
  %4899 = vmatprep.subr.mxu0 0.0
  %4900 = vmatpush1.msra.mxu0 0.0
  %4901 = vmatprep.subr.mxu0 0.0
  %4902 = vmatpush1.msra.mxu0 0.0
  %4903 = vmatprep.subr.mxu0 0.0
  %4904 = vmatpush1.msra.mxu0 0.0
  %4905 = vmatprep.subr.mxu0 0.0
  %4906 = vmatpush1.msra.mxu0 0.0
  %4907 = vmatprep.subr.mxu0 0.0
  %4908 = vmatpush1.msra.mxu0 0.0
  %4909 = vmatprep.subr.mxu0 0.0
  %4910 = vmatpush1.msra.mxu0 0.0
  %4911 = vmatprep.subr.mxu0 0.0
  %4912 = vmatpush1.msra.mxu0 0.0
  %4913 = vmatprep.subr.mxu0 0.0
  %4914 = vmatpush1.msra.mxu0 0.0
  %4915 = vmatprep.subr.mxu0 0.0
  %4916 = vmatpush1.msra.mxu0 0.0
  %4917 = vmatprep.subr.mxu0 0.0
  %4918 = vmatpush1.msra.mxu0 %v3400
  %4919 = vmatprep.subr.mxu0 0.0
  %4920 = vmatpush1.msra.mxu0 %v3399
  %4921 = vmatprep.subr.mxu0 0.0
  %4922 = vmatpush1.msra.mxu0 %v3398
  %4923 = vmatprep.subr.mxu0 0.0
  %4924 = vmatpush1.msra.mxu0 %v3397
  %4925 = vmatprep.subr.mxu0 0.0
  %4926 = vmatpush2.msra.mxu0 0.0
  %4927 = vmatprep.subr.mxu0 0.0
  %4928 = vmatpush2.msra.mxu0 0.0
  %4929 = vmatprep.subr.mxu0 0.0
  %4930 = vmatpush2.msra.mxu0 0.0
  %4931 = vmatprep.subr.mxu0 0.0
  %4932 = vmatpush2.msra.mxu0 0.0
  %4933 = vmatprep.subr.mxu0 0.0
  %4934 = vmatpush2.msra.mxu0 0.0
  %4935 = vmatprep.subr.mxu0 0.0
  %4936 = vmatpush2.msra.mxu0 0.0
  %4937 = vmatprep.subr.mxu0 0.0
  %4938 = vmatpush2.msra.mxu0 0.0
  %4939 = vmatprep.subr.mxu0 0.0
  %4940 = vmatpush2.msra.mxu0 0.0
  %4941 = vmatprep.subr.mxu0 0.0
  %4942 = vmatpush2.msra.mxu0 0.0
  %4943 = vmatprep.subr.mxu0 0.0
  %4944 = vmatpush2.msra.mxu0 0.0
  %4945 = vmatprep.subr.mxu0 0.0
  %4946 = vmatpush2.msra.mxu0 0.0
  %4947 = vmatprep.subr.mxu0 0.0
  %4948 = vmatpush2.msra.mxu0 0.0
  %4949 = vmatprep.subr.mxu0 0.0
  %4950 = vmatpush2.msra.mxu0 0.0
  %4951 = vmatprep.subr.mxu0 0.0
  %4952 = vmatpush2.msra.mxu0 0.0
  %4953 = vmatprep.subr.mxu0 0.0
  %4954 = vmatpush2.msra.mxu0 0.0
  %4955 = vmatprep.subr.mxu0 0.0
  %4956 = vmatpush2.msra.mxu0 0.0
  %4957 = vmatprep.mubr.f32.mxu0 0.0
  %4958 = vmatmul.mubr.f32.gmra.mxu0 %v4662
  %v4959 = vpop.f32.mrf.mxu0
  %v4960 = vadd.f32 0.0, %v4959
  %v4961 = vpop.f32.mrf.mxu0
  %4962 = vdwg.mxu0
  %v4963 = vadd.f32 %v4892, %v4960
  %v4964 = vxor.u32 %v4963, 2147483648
  %v4965 = vmul.f32 %v4964, 1.442695
  %v4966 = vpow.pop %v4965
  %v4967 = vadd.f32 %v4966, 1.0
  %v4968 = vrcp.pop %v4967
  %v4969 = vmul.f32 1.0, %v4968
  %v4970 = vmul.f32 %v4818, %v4657
  %v4971 = vmul.f32 %v4740, %v4891
  %v4972 = vadd.f32 %v4970, %v4971
  %v4973 = vtanh.pop %v4972
  %v4974 = vmul.f32 %v4969, %v4973
  %v4975 = vld [vmem:[#allocation3 + $0xa] sm:$0x3]
  %v4977 = vsel %vm3094, %v4974, 0
  %4979 = vmatprep.subr.mxu0 0.0
  %4980 = vmatpush1.msra.mxu0 0.0
  %4981 = vmatprep.subr.mxu0 0.0
  %4982 = vmatpush1.msra.mxu0 0.0
  %4983 = vmatprep.subr.mxu0 0.0
  %4984 = vmatpush1.msra.mxu0 0.0
  %4985 = vmatprep.subr.mxu0 0.0
  %4986 = vmatpush1.msra.mxu0 0.0
  %4987 = vmatprep.subr.mxu0 0.0
  %4988 = vmatpush1.msra.mxu0 0.0
  %4989 = vmatprep.subr.mxu0 0.0
  %4990 = vmatpush1.msra.mxu0 0.0
  %4991 = vmatprep.subr.mxu0 0.0
  %4992 = vmatpush1.msra.mxu0 0.0
  %4993 = vmatprep.subr.mxu0 0.0
  %4994 = vmatpush1.msra.mxu0 0.0
  %4995 = vmatprep.subr.mxu0 0.0
  %4996 = vmatpush1.msra.mxu0 0.0
  %4997 = vmatprep.subr.mxu0 0.0
  %4998 = vmatpush1.msra.mxu0 0.0
  %4999 = vmatprep.subr.mxu0 0.0
  %5000 = vmatpush1.msra.mxu0 0.0
  %5001 = vmatprep.subr.mxu0 0.0
  %5002 = vmatpush1.msra.mxu0 0.0
  %5003 = vmatprep.subr.mxu0 0.0
  %5004 = vmatpush1.msra.mxu0 %v3385
  %5005 = vmatprep.subr.mxu0 0.0
  %5006 = vmatpush1.msra.mxu0 %v3384
  %5007 = vmatprep.subr.mxu0 0.0
  %5008 = vmatpush1.msra.mxu0 %v3383
  %5009 = vmatprep.subr.mxu0 0.0
  %5010 = vmatpush1.msra.mxu0 %v3382
  %5011 = vmatprep.subr.mxu0 0.0
  %5012 = vmatpush2.msra.mxu0 0.0
  %5013 = vmatprep.subr.mxu0 0.0
  %5014 = vmatpush2.msra.mxu0 0.0
  %5015 = vmatprep.subr.mxu0 0.0
  %5016 = vmatpush2.msra.mxu0 0.0
  %5017 = vmatprep.subr.mxu0 0.0
  %5018 = vmatpush2.msra.mxu0 0.0
  %5019 = vmatprep.subr.mxu0 0.0
  %5020 = vmatpush2.msra.mxu0 0.0
  %5021 = vmatprep.subr.mxu0 0.0
  %5022 = vmatpush2.msra.mxu0 0.0
  %5023 = vmatprep.subr.mxu0 0.0
  %5024 = vmatpush2.msra.mxu0 0.0
  %5025 = vmatprep.subr.mxu0 0.0
  %5026 = vmatpush2.msra.mxu0 0.0
  %5027 = vmatprep.subr.mxu0 0.0
  %5028 = vmatpush2.msra.mxu0 0.0
  %5029 = vmatprep.subr.mxu0 0.0
  %5030 = vmatpush2.msra.mxu0 0.0
  %5031 = vmatprep.subr.mxu0 0.0
  %5032 = vmatpush2.msra.mxu0 0.0
  %5033 = vmatprep.subr.mxu0 0.0
  %5034 = vmatpush2.msra.mxu0 0.0
  %5035 = vmatprep.subr.mxu0 0.0
  %5036 = vmatpush2.msra.mxu0 0.0
  %5037 = vmatprep.subr.mxu0 0.0
  %5038 = vmatpush2.msra.mxu0 0.0
  %5039 = vmatprep.subr.mxu0 0.0
  %5040 = vmatpush2.msra.mxu0 0.0
  %5041 = vmatprep.subr.mxu0 0.0
  %5042 = vmatpush2.msra.mxu0 0.0
  %5043 = vmatprep.mubr.f32.mxu0 0.0
  %5044 = vmatmul.mubr.f32.gmra.mxu0 %v4977
  %v5045 = vpop.f32.mrf.mxu0
  %v5046 = vadd.f32 0.0, %v5045
  %v5047 = vpop.f32.mrf.mxu0
  %5048 = vdwg.mxu0
  %v5049 = vadd.f32 %v4975, %v5046
  %v5050 = vxor.u32 %v5049, 2147483648
  %v5051 = vmul.f32 %v5050, 1.442695
  %v5052 = vpow.pop %v5051
  %v5053 = vadd.f32 %v5052, 1.0
  %v5054 = vrcp.pop %v5053
  %v5055 = vmul.f32 1.0, %v5054
  %v5056 = vld [vmem:[%s3189 + $0xa] sm:$0x3]
  %5057 = vmatprep.subr.mxu0 0.0
  %5058 = vmatpush1.msra.mxu0 0.0
  %5059 = vmatprep.subr.mxu0 0.0
  %5060 = vmatpush1.msra.mxu0 0.0
  %5061 = vmatprep.subr.mxu0 0.0
  %5062 = vmatpush1.msra.mxu0 0.0
  %5063 = vmatprep.subr.mxu0 0.0
  %5064 = vmatpush1.msra.mxu0 0.0
  %5065 = vmatprep.subr.mxu0 0.0
  %5066 = vmatpush1.msra.mxu0 0.0
  %5067 = vmatprep.subr.mxu0 0.0
  %5068 = vmatpush1.msra.mxu0 0.0
  %5069 = vmatprep.subr.mxu0 0.0
  %5070 = vmatpush1.msra.mxu0 0.0
  %5071 = vmatprep.subr.mxu0 0.0
  %5072 = vmatpush1.msra.mxu0 0.0
  %5073 = vmatprep.subr.mxu0 0.0
  %5074 = vmatpush1.msra.mxu0 0.0
  %5075 = vmatprep.subr.mxu0 0.0
  %5076 = vmatpush1.msra.mxu0 0.0
  %5077 = vmatprep.subr.mxu0 0.0
  %5078 = vmatpush1.msra.mxu0 0.0
  %5079 = vmatprep.subr.mxu0 0.0
  %5080 = vmatpush1.msra.mxu0 0.0
  %5081 = vmatprep.subr.mxu0 0.0
  %5082 = vmatpush1.msra.mxu0 %v3390
  %5083 = vmatprep.subr.mxu0 0.0
  %5084 = vmatpush1.msra.mxu0 %v3389
  %5085 = vmatprep.subr.mxu0 0.0
  %5086 = vmatpush1.msra.mxu0 %v3388
  %5087 = vmatprep.subr.mxu0 0.0
  %5088 = vmatpush1.msra.mxu0 %v3387
  %5089 = vmatprep.subr.mxu0 0.0
  %5090 = vmatpush2.msra.mxu0 0.0
  %5091 = vmatprep.subr.mxu0 0.0
  %5092 = vmatpush2.msra.mxu0 0.0
  %5093 = vmatprep.subr.mxu0 0.0
  %5094 = vmatpush2.msra.mxu0 0.0
  %5095 = vmatprep.subr.mxu0 0.0
  %5096 = vmatpush2.msra.mxu0 0.0
  %5097 = vmatprep.subr.mxu0 0.0
  %5098 = vmatpush2.msra.mxu0 0.0
  %5099 = vmatprep.subr.mxu0 0.0
  %5100 = vmatpush2.msra.mxu0 0.0
  %5101 = vmatprep.subr.mxu0 0.0
  %5102 = vmatpush2.msra.mxu0 0.0
  %5103 = vmatprep.subr.mxu0 0.0
  %5104 = vmatpush2.msra.mxu0 0.0
  %5105 = vmatprep.subr.mxu0 0.0
  %5106 = vmatpush2.msra.mxu0 0.0
  %5107 = vmatprep.subr.mxu0 0.0
  %5108 = vmatpush2.msra.mxu0 0.0
  %5109 = vmatprep.subr.mxu0 0.0
  %5110 = vmatpush2.msra.mxu0 0.0
  %5111 = vmatprep.subr.mxu0 0.0
  %5112 = vmatpush2.msra.mxu0 0.0
  %5113 = vmatprep.subr.mxu0 0.0
  %5114 = vmatpush2.msra.mxu0 0.0
  %5115 = vmatprep.subr.mxu0 0.0
  %5116 = vmatpush2.msra.mxu0 0.0
  %5117 = vmatprep.subr.mxu0 0.0
  %5118 = vmatpush2.msra.mxu0 0.0
  %5119 = vmatprep.subr.mxu0 0.0
  %5120 = vmatpush2.msra.mxu0 0.0
  %5121 = vmatprep.mubr.f32.mxu0 0.0
  %5122 = vmatmul.mubr.f32.gmra.mxu0 %v4977
  %v5123 = vpop.f32.mrf.mxu0
  %v5124 = vadd.f32 0.0, %v5123
  %v5125 = vpop.f32.mrf.mxu0
  %5126 = vdwg.mxu0
  %v5127 = vadd.f32 %v5056, %v5124
  %v5128 = vxor.u32 %v5127, 2147483648
  %v5129 = vmul.f32 %v5128, 1.442695
  %v5130 = vpow.pop %v5129
  %v5131 = vadd.f32 %v5130, 1.0
  %v5132 = vrcp.pop %v5131
  %v5133 = vmul.f32 1.0, %v5132
  %v5134 = vld [vmem:[%s3284 + $0xa] sm:$0x3]
  %5135 = vmatprep.subr.mxu0 0.0
  %5136 = vmatpush1.msra.mxu0 0.0
  %5137 = vmatprep.subr.mxu0 0.0
  %5138 = vmatpush1.msra.mxu0 0.0
  %5139 = vmatprep.subr.mxu0 0.0
  %5140 = vmatpush1.msra.mxu0 0.0
  %5141 = vmatprep.subr.mxu0 0.0
  %5142 = vmatpush1.msra.mxu0 0.0
  %5143 = vmatprep.subr.mxu0 0.0
  %5144 = vmatpush1.msra.mxu0 0.0
  %5145 = vmatprep.subr.mxu0 0.0
  %5146 = vmatpush1.msra.mxu0 0.0
  %5147 = vmatprep.subr.mxu0 0.0
  %5148 = vmatpush1.msra.mxu0 0.0
  %5149 = vmatprep.subr.mxu0 0.0
  %5150 = vmatpush1.msra.mxu0 0.0
  %5151 = vmatprep.subr.mxu0 0.0
  %5152 = vmatpush1.msra.mxu0 0.0
  %5153 = vmatprep.subr.mxu0 0.0
  %5154 = vmatpush1.msra.mxu0 0.0
  %5155 = vmatprep.subr.mxu0 0.0
  %5156 = vmatpush1.msra.mxu0 0.0
  %5157 = vmatprep.subr.mxu0 0.0
  %5158 = vmatpush1.msra.mxu0 0.0
  %5159 = vmatprep.subr.mxu0 0.0
  %5160 = vmatpush1.msra.mxu0 %v3395
  %5161 = vmatprep.subr.mxu0 0.0
  %5162 = vmatpush1.msra.mxu0 %v3394
  %5163 = vmatprep.subr.mxu0 0.0
  %5164 = vmatpush1.msra.mxu0 %v3393
  %5165 = vmatprep.subr.mxu0 0.0
  %5166 = vmatpush1.msra.mxu0 %v3392
  %5167 = vmatprep.subr.mxu0 0.0
  %5168 = vmatpush2.msra.mxu0 0.0
  %5169 = vmatprep.subr.mxu0 0.0
  %5170 = vmatpush2.msra.mxu0 0.0
  %5171 = vmatprep.subr.mxu0 0.0
  %5172 = vmatpush2.msra.mxu0 0.0
  %5173 = vmatprep.subr.mxu0 0.0
  %5174 = vmatpush2.msra.mxu0 0.0
  %5175 = vmatprep.subr.mxu0 0.0
  %5176 = vmatpush2.msra.mxu0 0.0
  %5177 = vmatprep.subr.mxu0 0.0
  %5178 = vmatpush2.msra.mxu0 0.0
  %5179 = vmatprep.subr.mxu0 0.0
  %5180 = vmatpush2.msra.mxu0 0.0
  %5181 = vmatprep.subr.mxu0 0.0
  %5182 = vmatpush2.msra.mxu0 0.0
  %5183 = vmatprep.subr.mxu0 0.0
  %5184 = vmatpush2.msra.mxu0 0.0
  %5185 = vmatprep.subr.mxu0 0.0
  %5186 = vmatpush2.msra.mxu0 0.0
  %5187 = vmatprep.subr.mxu0 0.0
  %5188 = vmatpush2.msra.mxu0 0.0
  %5189 = vmatprep.subr.mxu0 0.0
  %5190 = vmatpush2.msra.mxu0 0.0
  %5191 = vmatprep.subr.mxu0 0.0
  %5192 = vmatpush2.msra.mxu0 0.0
  %5193 = vmatprep.subr.mxu0 0.0
  %5194 = vmatpush2.msra.mxu0 0.0
  %5195 = vmatprep.subr.mxu0 0.0
  %5196 = vmatpush2.msra.mxu0 0.0
  %5197 = vmatprep.subr.mxu0 0.0
  %5198 = vmatpush2.msra.mxu0 0.0
  %5199 = vmatprep.mubr.f32.mxu0 0.0
  %5200 = vmatmul.mubr.f32.gmra.mxu0 %v4977
  %v5201 = vpop.f32.mrf.mxu0
  %v5202 = vadd.f32 0.0, %v5201
  %v5203 = vpop.f32.mrf.mxu0
  %5204 = vdwg.mxu0
  %v5205 = vadd.f32 %v5134, %v5202
  %v5206 = vtanh.pop %v5205
  %v5207 = vld [vmem:[%s3379 + $0xa] sm:$0x3]
  %5208 = vmatprep.subr.mxu0 0.0
  %5209 = vmatpush1.msra.mxu0 0.0
  %5210 = vmatprep.subr.mxu0 0.0
  %5211 = vmatpush1.msra.mxu0 0.0
  %5212 = vmatprep.subr.mxu0 0.0
  %5213 = vmatpush1.msra.mxu0 0.0
  %5214 = vmatprep.subr.mxu0 0.0
  %5215 = vmatpush1.msra.mxu0 0.0
  %5216 = vmatprep.subr.mxu0 0.0
  %5217 = vmatpush1.msra.mxu0 0.0
  %5218 = vmatprep.subr.mxu0 0.0
  %5219 = vmatpush1.msra.mxu0 0.0
  %5220 = vmatprep.subr.mxu0 0.0
  %5221 = vmatpush1.msra.mxu0 0.0
  %5222 = vmatprep.subr.mxu0 0.0
  %5223 = vmatpush1.msra.mxu0 0.0
  %5224 = vmatprep.subr.mxu0 0.0
  %5225 = vmatpush1.msra.mxu0 0.0
  %5226 = vmatprep.subr.mxu0 0.0
  %5227 = vmatpush1.msra.mxu0 0.0
  %5228 = vmatprep.subr.mxu0 0.0
  %5229 = vmatpush1.msra.mxu0 0.0
  %5230 = vmatprep.subr.mxu0 0.0
  %5231 = vmatpush1.msra.mxu0 0.0
  %5232 = vmatprep.subr.mxu0 0.0
  %5233 = vmatpush1.msra.mxu0 %v3400
  %5234 = vmatprep.subr.mxu0 0.0
  %5235 = vmatpush1.msra.mxu0 %v3399
  %5236 = vmatprep.subr.mxu0 0.0
  %5237 = vmatpush1.msra.mxu0 %v3398
  %5238 = vmatprep.subr.mxu0 0.0
  %5239 = vmatpush1.msra.mxu0 %v3397
  %5240 = vmatprep.subr.mxu0 0.0
  %5241 = vmatpush2.msra.mxu0 0.0
  %5242 = vmatprep.subr.mxu0 0.0
  %5243 = vmatpush2.msra.mxu0 0.0
  %5244 = vmatprep.subr.mxu0 0.0
  %5245 = vmatpush2.msra.mxu0 0.0
  %5246 = vmatprep.subr.mxu0 0.0
  %5247 = vmatpush2.msra.mxu0 0.0
  %5248 = vmatprep.subr.mxu0 0.0
  %5249 = vmatpush2.msra.mxu0 0.0
  %5250 = vmatprep.subr.mxu0 0.0
  %5251 = vmatpush2.msra.mxu0 0.0
  %5252 = vmatprep.subr.mxu0 0.0
  %5253 = vmatpush2.msra.mxu0 0.0
  %5254 = vmatprep.subr.mxu0 0.0
  %5255 = vmatpush2.msra.mxu0 0.0
  %5256 = vmatprep.subr.mxu0 0.0
  %5257 = vmatpush2.msra.mxu0 0.0
  %5258 = vmatprep.subr.mxu0 0.0
  %5259 = vmatpush2.msra.mxu0 0.0
  %5260 = vmatprep.subr.mxu0 0.0
  %5261 = vmatpush2.msra.mxu0 0.0
  %5262 = vmatprep.subr.mxu0 0.0
  %5263 = vmatpush2.msra.mxu0 0.0
  %5264 = vmatprep.subr.mxu0 0.0
  %5265 = vmatpush2.msra.mxu0 0.0
  %5266 = vmatprep.subr.mxu0 0.0
  %5267 = vmatpush2.msra.mxu0 0.0
  %5268 = vmatprep.subr.mxu0 0.0
  %5269 = vmatpush2.msra.mxu0 0.0
  %5270 = vmatprep.subr.mxu0 0.0
  %5271 = vmatpush2.msra.mxu0 0.0
  %5272 = vmatprep.mubr.f32.mxu0 0.0
  %5273 = vmatmul.mubr.f32.gmra.mxu0 %v4977
  %v5274 = vpop.f32.mrf.mxu0
  %v5275 = vadd.f32 0.0, %v5274
  %v5276 = vpop.f32.mrf.mxu0
  %5277 = vdwg.mxu0
  %v5278 = vadd.f32 %v5207, %v5275
  %v5279 = vxor.u32 %v5278, 2147483648
  %v5280 = vmul.f32 %v5279, 1.442695
  %v5281 = vpow.pop %v5280
  %v5282 = vadd.f32 %v5281, 1.0
  %v5283 = vrcp.pop %v5282
  %v5284 = vmul.f32 1.0, %v5283
  %v5285 = vmul.f32 %v5133, %v4972
  %v5286 = vmul.f32 %v5055, %v5206
  %v5287 = vadd.f32 %v5285, %v5286
  %v5288 = vtanh.pop %v5287
  %v5289 = vmul.f32 %v5284, %v5288
  %v5290 = vld [vmem:[#allocation3 + $0xc] sm:$0x3]
  %v5292 = vsel %vm3094, %v5289, 0
  %5294 = vmatprep.subr.mxu0 0.0
  %5295 = vmatpush1.msra.mxu0 0.0
  %5296 = vmatprep.subr.mxu0 0.0
  %5297 = vmatpush1.msra.mxu0 0.0
  %5298 = vmatprep.subr.mxu0 0.0
  %5299 = vmatpush1.msra.mxu0 0.0
  %5300 = vmatprep.subr.mxu0 0.0
  %5301 = vmatpush1.msra.mxu0 0.0
  %5302 = vmatprep.subr.mxu0 0.0
  %5303 = vmatpush1.msra.mxu0 0.0
  %5304 = vmatprep.subr.mxu0 0.0
  %5305 = vmatpush1.msra.mxu0 0.0
  %5306 = vmatprep.subr.mxu0 0.0
  %5307 = vmatpush1.msra.mxu0 0.0
  %5308 = vmatprep.subr.mxu0 0.0
  %5309 = vmatpush1.msra.mxu0 0.0
  %5310 = vmatprep.subr.mxu0 0.0
  %5311 = vmatpush1.msra.mxu0 0.0
  %5312 = vmatprep.subr.mxu0 0.0
  %5313 = vmatpush1.msra.mxu0 0.0
  %5314 = vmatprep.subr.mxu0 0.0
  %5315 = vmatpush1.msra.mxu0 0.0
  %5316 = vmatprep.subr.mxu0 0.0
  %5317 = vmatpush1.msra.mxu0 0.0
  %5318 = vmatprep.subr.mxu0 0.0
  %5319 = vmatpush1.msra.mxu0 %v3385
  %5320 = vmatprep.subr.mxu0 0.0
  %5321 = vmatpush1.msra.mxu0 %v3384
  %5322 = vmatprep.subr.mxu0 0.0
  %5323 = vmatpush1.msra.mxu0 %v3383
  %5324 = vmatprep.subr.mxu0 0.0
  %5325 = vmatpush1.msra.mxu0 %v3382
  %5326 = vmatprep.subr.mxu0 0.0
  %5327 = vmatpush2.msra.mxu0 0.0
  %5328 = vmatprep.subr.mxu0 0.0
  %5329 = vmatpush2.msra.mxu0 0.0
  %5330 = vmatprep.subr.mxu0 0.0
  %5331 = vmatpush2.msra.mxu0 0.0
  %5332 = vmatprep.subr.mxu0 0.0
  %5333 = vmatpush2.msra.mxu0 0.0
  %5334 = vmatprep.subr.mxu0 0.0
  %5335 = vmatpush2.msra.mxu0 0.0
  %5336 = vmatprep.subr.mxu0 0.0
  %5337 = vmatpush2.msra.mxu0 0.0
  %5338 = vmatprep.subr.mxu0 0.0
  %5339 = vmatpush2.msra.mxu0 0.0
  %5340 = vmatprep.subr.mxu0 0.0
  %5341 = vmatpush2.msra.mxu0 0.0
  %5342 = vmatprep.subr.mxu0 0.0
  %5343 = vmatpush2.msra.mxu0 0.0
  %5344 = vmatprep.subr.mxu0 0.0
  %5345 = vmatpush2.msra.mxu0 0.0
  %5346 = vmatprep.subr.mxu0 0.0
  %5347 = vmatpush2.msra.mxu0 0.0
  %5348 = vmatprep.subr.mxu0 0.0
  %5349 = vmatpush2.msra.mxu0 0.0
  %5350 = vmatprep.subr.mxu0 0.0
  %5351 = vmatpush2.msra.mxu0 0.0
  %5352 = vmatprep.subr.mxu0 0.0
  %5353 = vmatpush2.msra.mxu0 0.0
  %5354 = vmatprep.subr.mxu0 0.0
  %5355 = vmatpush2.msra.mxu0 0.0
  %5356 = vmatprep.subr.mxu0 0.0
  %5357 = vmatpush2.msra.mxu0 0.0
  %5358 = vmatprep.mubr.f32.mxu0 0.0
  %5359 = vmatmul.mubr.f32.gmra.mxu0 %v5292
  %v5360 = vpop.f32.mrf.mxu0
  %v5361 = vadd.f32 0.0, %v5360
  %v5362 = vpop.f32.mrf.mxu0
  %5363 = vdwg.mxu0
  %v5364 = vadd.f32 %v5290, %v5361
  %v5365 = vxor.u32 %v5364, 2147483648
  %v5366 = vmul.f32 %v5365, 1.442695
  %v5367 = vpow.pop %v5366
  %v5368 = vadd.f32 %v5367, 1.0
  %v5369 = vrcp.pop %v5368
  %v5370 = vmul.f32 1.0, %v5369
  %v5371 = vld [vmem:[%s3189 + $0xc] sm:$0x3]
  %5372 = vmatprep.subr.mxu0 0.0
  %5373 = vmatpush1.msra.mxu0 0.0
  %5374 = vmatprep.subr.mxu0 0.0
  %5375 = vmatpush1.msra.mxu0 0.0
  %5376 = vmatprep.subr.mxu0 0.0
  %5377 = vmatpush1.msra.mxu0 0.0
  %5378 = vmatprep.subr.mxu0 0.0
  %5379 = vmatpush1.msra.mxu0 0.0
  %5380 = vmatprep.subr.mxu0 0.0
  %5381 = vmatpush1.msra.mxu0 0.0
  %5382 = vmatprep.subr.mxu0 0.0
  %5383 = vmatpush1.msra.mxu0 0.0
  %5384 = vmatprep.subr.mxu0 0.0
  %5385 = vmatpush1.msra.mxu0 0.0
  %5386 = vmatprep.subr.mxu0 0.0
  %5387 = vmatpush1.msra.mxu0 0.0
  %5388 = vmatprep.subr.mxu0 0.0
  %5389 = vmatpush1.msra.mxu0 0.0
  %5390 = vmatprep.subr.mxu0 0.0
  %5391 = vmatpush1.msra.mxu0 0.0
  %5392 = vmatprep.subr.mxu0 0.0
  %5393 = vmatpush1.msra.mxu0 0.0
  %5394 = vmatprep.subr.mxu0 0.0
  %5395 = vmatpush1.msra.mxu0 0.0
  %5396 = vmatprep.subr.mxu0 0.0
  %5397 = vmatpush1.msra.mxu0 %v3390
  %5398 = vmatprep.subr.mxu0 0.0
  %5399 = vmatpush1.msra.mxu0 %v3389
  %5400 = vmatprep.subr.mxu0 0.0
  %5401 = vmatpush1.msra.mxu0 %v3388
  %5402 = vmatprep.subr.mxu0 0.0
  %5403 = vmatpush1.msra.mxu0 %v3387
  %5404 = vmatprep.subr.mxu0 0.0
  %5405 = vmatpush2.msra.mxu0 0.0
  %5406 = vmatprep.subr.mxu0 0.0
  %5407 = vmatpush2.msra.mxu0 0.0
  %5408 = vmatprep.subr.mxu0 0.0
  %5409 = vmatpush2.msra.mxu0 0.0
  %5410 = vmatprep.subr.mxu0 0.0
  %5411 = vmatpush2.msra.mxu0 0.0
  %5412 = vmatprep.subr.mxu0 0.0
  %5413 = vmatpush2.msra.mxu0 0.0
  %5414 = vmatprep.subr.mxu0 0.0
  %5415 = vmatpush2.msra.mxu0 0.0
  %5416 = vmatprep.subr.mxu0 0.0
  %5417 = vmatpush2.msra.mxu0 0.0
  %5418 = vmatprep.subr.mxu0 0.0
  %5419 = vmatpush2.msra.mxu0 0.0
  %5420 = vmatprep.subr.mxu0 0.0
  %5421 = vmatpush2.msra.mxu0 0.0
  %5422 = vmatprep.subr.mxu0 0.0
  %5423 = vmatpush2.msra.mxu0 0.0
  %5424 = vmatprep.subr.mxu0 0.0
  %5425 = vmatpush2.msra.mxu0 0.0
  %5426 = vmatprep.subr.mxu0 0.0
  %5427 = vmatpush2.msra.mxu0 0.0
  %5428 = vmatprep.subr.mxu0 0.0
  %5429 = vmatpush2.msra.mxu0 0.0
  %5430 = vmatprep.subr.mxu0 0.0
  %5431 = vmatpush2.msra.mxu0 0.0
  %5432 = vmatprep.subr.mxu0 0.0
  %5433 = vmatpush2.msra.mxu0 0.0
  %5434 = vmatprep.subr.mxu0 0.0
  %5435 = vmatpush2.msra.mxu0 0.0
  %5436 = vmatprep.mubr.f32.mxu0 0.0
  %5437 = vmatmul.mubr.f32.gmra.mxu0 %v5292
  %v5438 = vpop.f32.mrf.mxu0
  %v5439 = vadd.f32 0.0, %v5438
  %v5440 = vpop.f32.mrf.mxu0
  %5441 = vdwg.mxu0
  %v5442 = vadd.f32 %v5371, %v5439
  %v5443 = vxor.u32 %v5442, 2147483648
  %v5444 = vmul.f32 %v5443, 1.442695
  %v5445 = vpow.pop %v5444
  %v5446 = vadd.f32 %v5445, 1.0
  %v5447 = vrcp.pop %v5446
  %v5448 = vmul.f32 1.0, %v5447
  %v5449 = vld [vmem:[%s3284 + $0xc] sm:$0x3]
  %5450 = vmatprep.subr.mxu0 0.0
  %5451 = vmatpush1.msra.mxu0 0.0
  %5452 = vmatprep.subr.mxu0 0.0
  %5453 = vmatpush1.msra.mxu0 0.0
  %5454 = vmatprep.subr.mxu0 0.0
  %5455 = vmatpush1.msra.mxu0 0.0
  %5456 = vmatprep.subr.mxu0 0.0
  %5457 = vmatpush1.msra.mxu0 0.0
  %5458 = vmatprep.subr.mxu0 0.0
  %5459 = vmatpush1.msra.mxu0 0.0
  %5460 = vmatprep.subr.mxu0 0.0
  %5461 = vmatpush1.msra.mxu0 0.0
  %5462 = vmatprep.subr.mxu0 0.0
  %5463 = vmatpush1.msra.mxu0 0.0
  %5464 = vmatprep.subr.mxu0 0.0
  %5465 = vmatpush1.msra.mxu0 0.0
  %5466 = vmatprep.subr.mxu0 0.0
  %5467 = vmatpush1.msra.mxu0 0.0
  %5468 = vmatprep.subr.mxu0 0.0
  %5469 = vmatpush1.msra.mxu0 0.0
  %5470 = vmatprep.subr.mxu0 0.0
  %5471 = vmatpush1.msra.mxu0 0.0
  %5472 = vmatprep.subr.mxu0 0.0
  %5473 = vmatpush1.msra.mxu0 0.0
  %5474 = vmatprep.subr.mxu0 0.0
  %5475 = vmatpush1.msra.mxu0 %v3395
  %5476 = vmatprep.subr.mxu0 0.0
  %5477 = vmatpush1.msra.mxu0 %v3394
  %5478 = vmatprep.subr.mxu0 0.0
  %5479 = vmatpush1.msra.mxu0 %v3393
  %5480 = vmatprep.subr.mxu0 0.0
  %5481 = vmatpush1.msra.mxu0 %v3392
  %5482 = vmatprep.subr.mxu0 0.0
  %5483 = vmatpush2.msra.mxu0 0.0
  %5484 = vmatprep.subr.mxu0 0.0
  %5485 = vmatpush2.msra.mxu0 0.0
  %5486 = vmatprep.subr.mxu0 0.0
  %5487 = vmatpush2.msra.mxu0 0.0
  %5488 = vmatprep.subr.mxu0 0.0
  %5489 = vmatpush2.msra.mxu0 0.0
  %5490 = vmatprep.subr.mxu0 0.0
  %5491 = vmatpush2.msra.mxu0 0.0
  %5492 = vmatprep.subr.mxu0 0.0
  %5493 = vmatpush2.msra.mxu0 0.0
  %5494 = vmatprep.subr.mxu0 0.0
  %5495 = vmatpush2.msra.mxu0 0.0
  %5496 = vmatprep.subr.mxu0 0.0
  %5497 = vmatpush2.msra.mxu0 0.0
  %5498 = vmatprep.subr.mxu0 0.0
  %5499 = vmatpush2.msra.mxu0 0.0
  %5500 = vmatprep.subr.mxu0 0.0
  %5501 = vmatpush2.msra.mxu0 0.0
  %5502 = vmatprep.subr.mxu0 0.0
  %5503 = vmatpush2.msra.mxu0 0.0
  %5504 = vmatprep.subr.mxu0 0.0
  %5505 = vmatpush2.msra.mxu0 0.0
  %5506 = vmatprep.subr.mxu0 0.0
  %5507 = vmatpush2.msra.mxu0 0.0
  %5508 = vmatprep.subr.mxu0 0.0
  %5509 = vmatpush2.msra.mxu0 0.0
  %5510 = vmatprep.subr.mxu0 0.0
  %5511 = vmatpush2.msra.mxu0 0.0
  %5512 = vmatprep.subr.mxu0 0.0
  %5513 = vmatpush2.msra.mxu0 0.0
  %5514 = vmatprep.mubr.f32.mxu0 0.0
  %5515 = vmatmul.mubr.f32.gmra.mxu0 %v5292
  %v5516 = vpop.f32.mrf.mxu0
  %v5517 = vadd.f32 0.0, %v5516
  %v5518 = vpop.f32.mrf.mxu0
  %5519 = vdwg.mxu0
  %v5520 = vadd.f32 %v5449, %v5517
  %v5521 = vtanh.pop %v5520
  %v5522 = vld [vmem:[%s3379 + $0xc] sm:$0x3]
  %5523 = vmatprep.subr.mxu0 0.0
  %5524 = vmatpush1.msra.mxu0 0.0
  %5525 = vmatprep.subr.mxu0 0.0
  %5526 = vmatpush1.msra.mxu0 0.0
  %5527 = vmatprep.subr.mxu0 0.0
  %5528 = vmatpush1.msra.mxu0 0.0
  %5529 = vmatprep.subr.mxu0 0.0
  %5530 = vmatpush1.msra.mxu0 0.0
  %5531 = vmatprep.subr.mxu0 0.0
  %5532 = vmatpush1.msra.mxu0 0.0
  %5533 = vmatprep.subr.mxu0 0.0
  %5534 = vmatpush1.msra.mxu0 0.0
  %5535 = vmatprep.subr.mxu0 0.0
  %5536 = vmatpush1.msra.mxu0 0.0
  %5537 = vmatprep.subr.mxu0 0.0
  %5538 = vmatpush1.msra.mxu0 0.0
  %5539 = vmatprep.subr.mxu0 0.0
  %5540 = vmatpush1.msra.mxu0 0.0
  %5541 = vmatprep.subr.mxu0 0.0
  %5542 = vmatpush1.msra.mxu0 0.0
  %5543 = vmatprep.subr.mxu0 0.0
  %5544 = vmatpush1.msra.mxu0 0.0
  %5545 = vmatprep.subr.mxu0 0.0
  %5546 = vmatpush1.msra.mxu0 0.0
  %5547 = vmatprep.subr.mxu0 0.0
  %5548 = vmatpush1.msra.mxu0 %v3400
  %5549 = vmatprep.subr.mxu0 0.0
  %5550 = vmatpush1.msra.mxu0 %v3399
  %5551 = vmatprep.subr.mxu0 0.0
  %5552 = vmatpush1.msra.mxu0 %v3398
  %5553 = vmatprep.subr.mxu0 0.0
  %5554 = vmatpush1.msra.mxu0 %v3397
  %5555 = vmatprep.subr.mxu0 0.0
  %5556 = vmatpush2.msra.mxu0 0.0
  %5557 = vmatprep.subr.mxu0 0.0
  %5558 = vmatpush2.msra.mxu0 0.0
  %5559 = vmatprep.subr.mxu0 0.0
  %5560 = vmatpush2.msra.mxu0 0.0
  %5561 = vmatprep.subr.mxu0 0.0
  %5562 = vmatpush2.msra.mxu0 0.0
  %5563 = vmatprep.subr.mxu0 0.0
  %5564 = vmatpush2.msra.mxu0 0.0
  %5565 = vmatprep.subr.mxu0 0.0
  %5566 = vmatpush2.msra.mxu0 0.0
  %5567 = vmatprep.subr.mxu0 0.0
  %5568 = vmatpush2.msra.mxu0 0.0
  %5569 = vmatprep.subr.mxu0 0.0
  %5570 = vmatpush2.msra.mxu0 0.0
  %5571 = vmatprep.subr.mxu0 0.0
  %5572 = vmatpush2.msra.mxu0 0.0
  %5573 = vmatprep.subr.mxu0 0.0
  %5574 = vmatpush2.msra.mxu0 0.0
  %5575 = vmatprep.subr.mxu0 0.0
  %5576 = vmatpush2.msra.mxu0 0.0
  %5577 = vmatprep.subr.mxu0 0.0
  %5578 = vmatpush2.msra.mxu0 0.0
  %5579 = vmatprep.subr.mxu0 0.0
  %5580 = vmatpush2.msra.mxu0 0.0
  %5581 = vmatprep.subr.mxu0 0.0
  %5582 = vmatpush2.msra.mxu0 0.0
  %5583 = vmatprep.subr.mxu0 0.0
  %5584 = vmatpush2.msra.mxu0 0.0
  %5585 = vmatprep.subr.mxu0 0.0
  %5586 = vmatpush2.msra.mxu0 0.0
  %5587 = vmatprep.mubr.f32.mxu0 0.0
  %5588 = vmatmul.mubr.f32.gmra.mxu0 %v5292
  %v5589 = vpop.f32.mrf.mxu0
  %v5590 = vadd.f32 0.0, %v5589
  %v5591 = vpop.f32.mrf.mxu0
  %5592 = vdwg.mxu0
  %v5593 = vadd.f32 %v5522, %v5590
  %v5594 = vxor.u32 %v5593, 2147483648
  %v5595 = vmul.f32 %v5594, 1.442695
  %v5596 = vpow.pop %v5595
  %v5597 = vadd.f32 %v5596, 1.0
  %v5598 = vrcp.pop %v5597
  %v5599 = vmul.f32 1.0, %v5598
  %v5600 = vmul.f32 %v5448, %v5287
  %v5601 = vmul.f32 %v5370, %v5521
  %v5602 = vadd.f32 %v5600, %v5601
  %v5603 = vtanh.pop %v5602
  %v5604 = vmul.f32 %v5599, %v5603
  %v5605 = vld [vmem:[#allocation3 + $0xe] sm:$0x3]
  %v5607 = vsel %vm3094, %v5604, 0
  %5609 = vmatprep.subr.mxu0 0.0
  %5610 = vmatpush1.msra.mxu0 0.0
  %5611 = vmatprep.subr.mxu0 0.0
  %5612 = vmatpush1.msra.mxu0 0.0
  %5613 = vmatprep.subr.mxu0 0.0
  %5614 = vmatpush1.msra.mxu0 0.0
  %5615 = vmatprep.subr.mxu0 0.0
  %5616 = vmatpush1.msra.mxu0 0.0
  %5617 = vmatprep.subr.mxu0 0.0
  %5618 = vmatpush1.msra.mxu0 0.0
  %5619 = vmatprep.subr.mxu0 0.0
  %5620 = vmatpush1.msra.mxu0 0.0
  %5621 = vmatprep.subr.mxu0 0.0
  %5622 = vmatpush1.msra.mxu0 0.0
  %5623 = vmatprep.subr.mxu0 0.0
  %5624 = vmatpush1.msra.mxu0 0.0
  %5625 = vmatprep.subr.mxu0 0.0
  %5626 = vmatpush1.msra.mxu0 0.0
  %5627 = vmatprep.subr.mxu0 0.0
  %5628 = vmatpush1.msra.mxu0 0.0
  %5629 = vmatprep.subr.mxu0 0.0
  %5630 = vmatpush1.msra.mxu0 0.0
  %5631 = vmatprep.subr.mxu0 0.0
  %5632 = vmatpush1.msra.mxu0 0.0
  %5633 = vmatprep.subr.mxu0 0.0
  %5634 = vmatpush1.msra.mxu0 %v3385
  %5635 = vmatprep.subr.mxu0 0.0
  %5636 = vmatpush1.msra.mxu0 %v3384
  %5637 = vmatprep.subr.mxu0 0.0
  %5638 = vmatpush1.msra.mxu0 %v3383
  %5639 = vmatprep.subr.mxu0 0.0
  %5640 = vmatpush1.msra.mxu0 %v3382
  %5641 = vmatprep.subr.mxu0 0.0
  %5642 = vmatpush2.msra.mxu0 0.0
  %5643 = vmatprep.subr.mxu0 0.0
  %5644 = vmatpush2.msra.mxu0 0.0
  %5645 = vmatprep.subr.mxu0 0.0
  %5646 = vmatpush2.msra.mxu0 0.0
  %5647 = vmatprep.subr.mxu0 0.0
  %5648 = vmatpush2.msra.mxu0 0.0
  %5649 = vmatprep.subr.mxu0 0.0
  %5650 = vmatpush2.msra.mxu0 0.0
  %5651 = vmatprep.subr.mxu0 0.0
  %5652 = vmatpush2.msra.mxu0 0.0
  %5653 = vmatprep.subr.mxu0 0.0
  %5654 = vmatpush2.msra.mxu0 0.0
  %5655 = vmatprep.subr.mxu0 0.0
  %5656 = vmatpush2.msra.mxu0 0.0
  %5657 = vmatprep.subr.mxu0 0.0
  %5658 = vmatpush2.msra.mxu0 0.0
  %5659 = vmatprep.subr.mxu0 0.0
  %5660 = vmatpush2.msra.mxu0 0.0
  %5661 = vmatprep.subr.mxu0 0.0
  %5662 = vmatpush2.msra.mxu0 0.0
  %5663 = vmatprep.subr.mxu0 0.0
  %5664 = vmatpush2.msra.mxu0 0.0
  %5665 = vmatprep.subr.mxu0 0.0
  %5666 = vmatpush2.msra.mxu0 0.0
  %5667 = vmatprep.subr.mxu0 0.0
  %5668 = vmatpush2.msra.mxu0 0.0
  %5669 = vmatprep.subr.mxu0 0.0
  %5670 = vmatpush2.msra.mxu0 0.0
  %5671 = vmatprep.subr.mxu0 0.0
  %5672 = vmatpush2.msra.mxu0 0.0
  %5673 = vmatprep.mubr.f32.mxu0 0.0
  %5674 = vmatmul.mubr.f32.gmra.mxu0 %v5607
  %v5675 = vpop.f32.mrf.mxu0
  %v5676 = vadd.f32 0.0, %v5675
  %v5677 = vpop.f32.mrf.mxu0
  %5678 = vdwg.mxu0
  %v5679 = vadd.f32 %v5605, %v5676
  %v5680 = vxor.u32 %v5679, 2147483648
  %v5681 = vmul.f32 %v5680, 1.442695
  %v5682 = vpow.pop %v5681
  %v5683 = vadd.f32 %v5682, 1.0
  %v5684 = vrcp.pop %v5683
  %v5685 = vmul.f32 1.0, %v5684
  %v5686 = vld [vmem:[%s3189 + $0xe] sm:$0x3]
  %5687 = vmatprep.subr.mxu0 0.0
  %5688 = vmatpush1.msra.mxu0 0.0
  %5689 = vmatprep.subr.mxu0 0.0
  %5690 = vmatpush1.msra.mxu0 0.0
  %5691 = vmatprep.subr.mxu0 0.0
  %5692 = vmatpush1.msra.mxu0 0.0
  %5693 = vmatprep.subr.mxu0 0.0
  %5694 = vmatpush1.msra.mxu0 0.0
  %5695 = vmatprep.subr.mxu0 0.0
  %5696 = vmatpush1.msra.mxu0 0.0
  %5697 = vmatprep.subr.mxu0 0.0
  %5698 = vmatpush1.msra.mxu0 0.0
  %5699 = vmatprep.subr.mxu0 0.0
  %5700 = vmatpush1.msra.mxu0 0.0
  %5701 = vmatprep.subr.mxu0 0.0
  %5702 = vmatpush1.msra.mxu0 0.0
  %5703 = vmatprep.subr.mxu0 0.0
  %5704 = vmatpush1.msra.mxu0 0.0
  %5705 = vmatprep.subr.mxu0 0.0
  %5706 = vmatpush1.msra.mxu0 0.0
  %5707 = vmatprep.subr.mxu0 0.0
  %5708 = vmatpush1.msra.mxu0 0.0
  %5709 = vmatprep.subr.mxu0 0.0
  %5710 = vmatpush1.msra.mxu0 0.0
  %5711 = vmatprep.subr.mxu0 0.0
  %5712 = vmatpush1.msra.mxu0 %v3390
  %5713 = vmatprep.subr.mxu0 0.0
  %5714 = vmatpush1.msra.mxu0 %v3389
  %5715 = vmatprep.subr.mxu0 0.0
  %5716 = vmatpush1.msra.mxu0 %v3388
  %5717 = vmatprep.subr.mxu0 0.0
  %5718 = vmatpush1.msra.mxu0 %v3387
  %5719 = vmatprep.subr.mxu0 0.0
  %5720 = vmatpush2.msra.mxu0 0.0
  %5721 = vmatprep.subr.mxu0 0.0
  %5722 = vmatpush2.msra.mxu0 0.0
  %5723 = vmatprep.subr.mxu0 0.0
  %5724 = vmatpush2.msra.mxu0 0.0
  %5725 = vmatprep.subr.mxu0 0.0
  %5726 = vmatpush2.msra.mxu0 0.0
  %5727 = vmatprep.subr.mxu0 0.0
  %5728 = vmatpush2.msra.mxu0 0.0
  %5729 = vmatprep.subr.mxu0 0.0
  %5730 = vmatpush2.msra.mxu0 0.0
  %5731 = vmatprep.subr.mxu0 0.0
  %5732 = vmatpush2.msra.mxu0 0.0
  %5733 = vmatprep.subr.mxu0 0.0
  %5734 = vmatpush2.msra.mxu0 0.0
  %5735 = vmatprep.subr.mxu0 0.0
  %5736 = vmatpush2.msra.mxu0 0.0
  %5737 = vmatprep.subr.mxu0 0.0
  %5738 = vmatpush2.msra.mxu0 0.0
  %5739 = vmatprep.subr.mxu0 0.0
  %5740 = vmatpush2.msra.mxu0 0.0
  %5741 = vmatprep.subr.mxu0 0.0
  %5742 = vmatpush2.msra.mxu0 0.0
  %5743 = vmatprep.subr.mxu0 0.0
  %5744 = vmatpush2.msra.mxu0 0.0
  %5745 = vmatprep.subr.mxu0 0.0
  %5746 = vmatpush2.msra.mxu0 0.0
  %5747 = vmatprep.subr.mxu0 0.0
  %5748 = vmatpush2.msra.mxu0 0.0
  %5749 = vmatprep.subr.mxu0 0.0
  %5750 = vmatpush2.msra.mxu0 0.0
  %5751 = vmatprep.mubr.f32.mxu0 0.0
  %5752 = vmatmul.mubr.f32.gmra.mxu0 %v5607
  %v5753 = vpop.f32.mrf.mxu0
  %v5754 = vadd.f32 0.0, %v5753
  %v5755 = vpop.f32.mrf.mxu0
  %5756 = vdwg.mxu0
  %v5757 = vadd.f32 %v5686, %v5754
  %v5758 = vxor.u32 %v5757, 2147483648
  %v5759 = vmul.f32 %v5758, 1.442695
  %v5760 = vpow.pop %v5759
  %v5761 = vadd.f32 %v5760, 1.0
  %v5762 = vrcp.pop %v5761
  %v5763 = vmul.f32 1.0, %v5762
  %v5764 = vld [vmem:[%s3284 + $0xe] sm:$0x3]
  %5765 = vmatprep.subr.mxu0 0.0
  %5766 = vmatpush1.msra.mxu0 0.0
  %5767 = vmatprep.subr.mxu0 0.0
  %5768 = vmatpush1.msra.mxu0 0.0
  %5769 = vmatprep.subr.mxu0 0.0
  %5770 = vmatpush1.msra.mxu0 0.0
  %5771 = vmatprep.subr.mxu0 0.0
  %5772 = vmatpush1.msra.mxu0 0.0
  %5773 = vmatprep.subr.mxu0 0.0
  %5774 = vmatpush1.msra.mxu0 0.0
  %5775 = vmatprep.subr.mxu0 0.0
  %5776 = vmatpush1.msra.mxu0 0.0
  %5777 = vmatprep.subr.mxu0 0.0
  %5778 = vmatpush1.msra.mxu0 0.0
  %5779 = vmatprep.subr.mxu0 0.0
  %5780 = vmatpush1.msra.mxu0 0.0
  %5781 = vmatprep.subr.mxu0 0.0
  %5782 = vmatpush1.msra.mxu0 0.0
  %5783 = vmatprep.subr.mxu0 0.0
  %5784 = vmatpush1.msra.mxu0 0.0
  %5785 = vmatprep.subr.mxu0 0.0
  %5786 = vmatpush1.msra.mxu0 0.0
  %5787 = vmatprep.subr.mxu0 0.0
  %5788 = vmatpush1.msra.mxu0 0.0
  %5789 = vmatprep.subr.mxu0 0.0
  %5790 = vmatpush1.msra.mxu0 %v3395
  %5791 = vmatprep.subr.mxu0 0.0
  %5792 = vmatpush1.msra.mxu0 %v3394
  %5793 = vmatprep.subr.mxu0 0.0
  %5794 = vmatpush1.msra.mxu0 %v3393
  %5795 = vmatprep.subr.mxu0 0.0
  %5796 = vmatpush1.msra.mxu0 %v3392
  %5797 = vmatprep.subr.mxu0 0.0
  %5798 = vmatpush2.msra.mxu0 0.0
  %5799 = vmatprep.subr.mxu0 0.0
  %5800 = vmatpush2.msra.mxu0 0.0
  %5801 = vmatprep.subr.mxu0 0.0
  %5802 = vmatpush2.msra.mxu0 0.0
  %5803 = vmatprep.subr.mxu0 0.0
  %5804 = vmatpush2.msra.mxu0 0.0
  %5805 = vmatprep.subr.mxu0 0.0
  %5806 = vmatpush2.msra.mxu0 0.0
  %5807 = vmatprep.subr.mxu0 0.0
  %5808 = vmatpush2.msra.mxu0 0.0
  %5809 = vmatprep.subr.mxu0 0.0
  %5810 = vmatpush2.msra.mxu0 0.0
  %5811 = vmatprep.subr.mxu0 0.0
  %5812 = vmatpush2.msra.mxu0 0.0
  %5813 = vmatprep.subr.mxu0 0.0
  %5814 = vmatpush2.msra.mxu0 0.0
  %5815 = vmatprep.subr.mxu0 0.0
  %5816 = vmatpush2.msra.mxu0 0.0
  %5817 = vmatprep.subr.mxu0 0.0
  %5818 = vmatpush2.msra.mxu0 0.0
  %5819 = vmatprep.subr.mxu0 0.0
  %5820 = vmatpush2.msra.mxu0 0.0
  %5821 = vmatprep.subr.mxu0 0.0
  %5822 = vmatpush2.msra.mxu0 0.0
  %5823 = vmatprep.subr.mxu0 0.0
  %5824 = vmatpush2.msra.mxu0 0.0
  %5825 = vmatprep.subr.mxu0 0.0
  %5826 = vmatpush2.msra.mxu0 0.0
  %5827 = vmatprep.subr.mxu0 0.0
  %5828 = vmatpush2.msra.mxu0 0.0
  %5829 = vmatprep.mubr.f32.mxu0 0.0
  %5830 = vmatmul.mubr.f32.gmra.mxu0 %v5607
  %v5831 = vpop.f32.mrf.mxu0
  %v5832 = vadd.f32 0.0, %v5831
  %v5833 = vpop.f32.mrf.mxu0
  %5834 = vdwg.mxu0
  %v5835 = vadd.f32 %v5764, %v5832
  %v5836 = vtanh.pop %v5835
  %v5837 = vld [vmem:[%s3379 + $0xe] sm:$0x3]
  %5838 = vmatprep.subr.mxu0 0.0
  %5839 = vmatpush1.msra.mxu0 0.0
  %5840 = vmatprep.subr.mxu0 0.0
  %5841 = vmatpush1.msra.mxu0 0.0
  %5842 = vmatprep.subr.mxu0 0.0
  %5843 = vmatpush1.msra.mxu0 0.0
  %5844 = vmatprep.subr.mxu0 0.0
  %5845 = vmatpush1.msra.mxu0 0.0
  %5846 = vmatprep.subr.mxu0 0.0
  %5847 = vmatpush1.msra.mxu0 0.0
  %5848 = vmatprep.subr.mxu0 0.0
  %5849 = vmatpush1.msra.mxu0 0.0
  %5850 = vmatprep.subr.mxu0 0.0
  %5851 = vmatpush1.msra.mxu0 0.0
  %5852 = vmatprep.subr.mxu0 0.0
  %5853 = vmatpush1.msra.mxu0 0.0
  %5854 = vmatprep.subr.mxu0 0.0
  %5855 = vmatpush1.msra.mxu0 0.0
  %5856 = vmatprep.subr.mxu0 0.0
  %5857 = vmatpush1.msra.mxu0 0.0
  %5858 = vmatprep.subr.mxu0 0.0
  %5859 = vmatpush1.msra.mxu0 0.0
  %5860 = vmatprep.subr.mxu0 0.0
  %5861 = vmatpush1.msra.mxu0 0.0
  %5862 = vmatprep.subr.mxu0 0.0
  %5863 = vmatpush1.msra.mxu0 %v3400
  %5864 = vmatprep.subr.mxu0 0.0
  %5865 = vmatpush1.msra.mxu0 %v3399
  %5866 = vmatprep.subr.mxu0 0.0
  %5867 = vmatpush1.msra.mxu0 %v3398
  %5868 = vmatprep.subr.mxu0 0.0
  %5869 = vmatpush1.msra.mxu0 %v3397
  %5870 = vmatprep.subr.mxu0 0.0
  %5871 = vmatpush2.msra.mxu0 0.0
  %5872 = vmatprep.subr.mxu0 0.0
  %5873 = vmatpush2.msra.mxu0 0.0
  %5874 = vmatprep.subr.mxu0 0.0
  %5875 = vmatpush2.msra.mxu0 0.0
  %5876 = vmatprep.subr.mxu0 0.0
  %5877 = vmatpush2.msra.mxu0 0.0
  %5878 = vmatprep.subr.mxu0 0.0
  %5879 = vmatpush2.msra.mxu0 0.0
  %5880 = vmatprep.subr.mxu0 0.0
  %5881 = vmatpush2.msra.mxu0 0.0
  %5882 = vmatprep.subr.mxu0 0.0
  %5883 = vmatpush2.msra.mxu0 0.0
  %5884 = vmatprep.subr.mxu0 0.0
  %5885 = vmatpush2.msra.mxu0 0.0
  %5886 = vmatprep.subr.mxu0 0.0
  %5887 = vmatpush2.msra.mxu0 0.0
  %5888 = vmatprep.subr.mxu0 0.0
  %5889 = vmatpush2.msra.mxu0 0.0
  %5890 = vmatprep.subr.mxu0 0.0
  %5891 = vmatpush2.msra.mxu0 0.0
  %5892 = vmatprep.subr.mxu0 0.0
  %5893 = vmatpush2.msra.mxu0 0.0
  %5894 = vmatprep.subr.mxu0 0.0
  %5895 = vmatpush2.msra.mxu0 0.0
  %5896 = vmatprep.subr.mxu0 0.0
  %5897 = vmatpush2.msra.mxu0 0.0
  %5898 = vmatprep.subr.mxu0 0.0
  %5899 = vmatpush2.msra.mxu0 0.0
  %5900 = vmatprep.subr.mxu0 0.0
  %5901 = vmatpush2.msra.mxu0 0.0
  %5902 = vmatprep.mubr.f32.mxu0 0.0
  %5903 = vmatmul.mubr.f32.gmra.mxu0 %v5607
  %v5904 = vpop.f32.mrf.mxu0
  %v5905 = vadd.f32 0.0, %v5904
  %v5906 = vpop.f32.mrf.mxu0
  %5907 = vdwg.mxu0
  %v5908 = vadd.f32 %v5837, %v5905
  %v5909 = vxor.u32 %v5908, 2147483648
  %v5910 = vmul.f32 %v5909, 1.442695
  %v5911 = vpow.pop %v5910
  %v5912 = vadd.f32 %v5911, 1.0
  %v5913 = vrcp.pop %v5912
  %v5914 = vmul.f32 1.0, %v5913
  %v5915 = vmul.f32 %v5763, %v5602
  %v5916 = vmul.f32 %v5685, %v5836
  %v5917 = vadd.f32 %v5915, %v5916
  %v5918 = vtanh.pop %v5917
  %v5919 = vmul.f32 %v5914, %v5918
  %v5920 = vrot.slane %v4029, 6
  %v5922 = vrot.slane %v4344, 4
  %v5924 = vrot.slane %v4659, 2
  %v5926 = vrot.slane %v5289, 6
  %v5928 = vrot.slane %v5604, 4
  %v5931 = vrot.slane %v5919, 2
  %v5933 = vsel %vm2989, %v3714, %v5920
  %v5934 = vsel %vm2991, %v5933, %v5922
  %v5935 = vsel %vm2993, %v5934, %v5924
  %v5936 = vsel %vm2989, %v4974, %v5926
  %v5937 = vsel %vm2991, %v5936, %v5928
  %v5938 = vsel %vm2993, %v5937, %v5931
  %v5939 = vld [vmem:[%s7] sm:$0xff]
  %v5940 = vld [vmem:[%s7 + $0x8] sm:$0xff]
  %v5941 = vld [vmem:[%s7 + $0x10] sm:$0xff]
  %v5942 = vld [vmem:[%s7 + $0x18] sm:$0xff]
  %v5943 = vld [vmem:[%s9] sm:$0x1]
  %v5945 = vlaneseq
  %v5946 = vshrl.u32 %v5945, 7
  %v5947 = vsub.s32 0, %v5946
  %v5948 = vrot.slane %v5943, %v5947
  %v5951 = vsel %vm3094, %v5935, 0
  %v5954 = vsel %vm3094, %v5938, 0
  %5956 = vmatprep.subr.mxu0 0.0
  %5957 = vmatpush1.msra.mxu0 0.0
  %5958 = vmatprep.subr.mxu0 0.0
  %5959 = vmatpush1.msra.mxu0 0.0
  %5960 = vmatprep.subr.mxu0 0.0
  %5961 = vmatpush1.msra.mxu0 0.0
  %5962 = vmatprep.subr.mxu0 0.0
  %5963 = vmatpush1.msra.mxu0 0.0
  %5964 = vmatprep.subr.mxu0 0.0
  %5965 = vmatpush1.msra.mxu0 0.0
  %5966 = vmatprep.subr.mxu0 0.0
  %5967 = vmatpush1.msra.mxu0 0.0
  %5968 = vmatprep.subr.mxu0 0.0
  %5969 = vmatpush1.msra.mxu0 0.0
  %5970 = vmatprep.subr.mxu0 0.0
  %5971 = vmatpush1.msra.mxu0 0.0
  %5972 = vmatprep.subr.mxu0 0.0
  %5973 = vmatpush1.msra.mxu0 0.0
  %5974 = vmatprep.subr.mxu0 0.0
  %5975 = vmatpush1.msra.mxu0 0.0
  %5976 = vmatprep.subr.mxu0 0.0
  %5977 = vmatpush1.msra.mxu0 0.0
  %5978 = vmatprep.subr.mxu0 0.0
  %5979 = vmatpush1.msra.mxu0 0.0
  %5980 = vmatprep.subr.mxu0 0.0
  %5981 = vmatpush1.msra.mxu0 %v5942
  %5982 = vmatprep.subr.mxu0 0.0
  %5983 = vmatpush1.msra.mxu0 %v5941
  %5984 = vmatprep.subr.mxu0 0.0
  %5985 = vmatpush1.msra.mxu0 %v5940
  %5986 = vmatprep.subr.mxu0 0.0
  %5987 = vmatpush1.msra.mxu0 %v5939
  %5988 = vmatprep.subr.mxu0 0.0
  %5989 = vmatpush2.msra.mxu0 0.0
  %5990 = vmatprep.subr.mxu0 0.0
  %5991 = vmatpush2.msra.mxu0 0.0
  %5992 = vmatprep.subr.mxu0 0.0
  %5993 = vmatpush2.msra.mxu0 0.0
  %5994 = vmatprep.subr.mxu0 0.0
  %5995 = vmatpush2.msra.mxu0 0.0
  %5996 = vmatprep.subr.mxu0 0.0
  %5997 = vmatpush2.msra.mxu0 0.0
  %5998 = vmatprep.subr.mxu0 0.0
  %5999 = vmatpush2.msra.mxu0 0.0
  %6000 = vmatprep.subr.mxu0 0.0
  %6001 = vmatpush2.msra.mxu0 0.0
  %6002 = vmatprep.subr.mxu0 0.0
  %6003 = vmatpush2.msra.mxu0 0.0
  %6004 = vmatprep.subr.mxu0 0.0
  %6005 = vmatpush2.msra.mxu0 0.0
  %6006 = vmatprep.subr.mxu0 0.0
  %6007 = vmatpush2.msra.mxu0 0.0
  %6008 = vmatprep.subr.mxu0 0.0
  %6009 = vmatpush2.msra.mxu0 0.0
  %6010 = vmatprep.subr.mxu0 0.0
  %6011 = vmatpush2.msra.mxu0 0.0
  %6012 = vmatprep.subr.mxu0 0.0
  %6013 = vmatpush2.msra.mxu0 0.0
  %6014 = vmatprep.subr.mxu0 0.0
  %6015 = vmatpush2.msra.mxu0 0.0
  %6016 = vmatprep.subr.mxu0 0.0
  %6017 = vmatpush2.msra.mxu0 0.0
  %6018 = vmatprep.subr.mxu0 0.0
  %6019 = vmatpush2.msra.mxu0 0.0
  %6020 = vmatprep.mubr.f32.mxu0 0.0
  %6021 = vmatmul.mubr.f32.gmra.mxu0 %v5951
  %v6022 = vpop.f32.mrf.mxu0
  %v6023 = vadd.f32 %v5948, %v6022
  %v6024 = vpop.f32.mrf.mxu0
  %6025 = vmatprep.mubr.f32.mxu0 0.0
  %6026 = vmatmul.mubr.f32.gmra.mxu0 %v5954
  %v6027 = vpop.f32.mrf.mxu0
  %v6028 = vadd.f32 %v5948, %v6027
  %v6029 = vpop.f32.mrf.mxu0
  %6030 = vdwg.mxu0
  %vm6031 = vcmask 130048
  %6032 = vst.msk [vmem:[#allocation4] sm:$0xff] %vm6031, %v6023
  %6033 = vst.msk [vmem:[#allocation4 + $0x8] sm:$0xff] %vm6031, %v6028
  %s6034 = scalar_lea.vmem %s7, 32
  %v6035 = vld [vmem:[%s6034] sm:$0xff]
  %v6036 = vld [vmem:[%s6034 + $0x8] sm:$0xff]
  %v6037 = vld [vmem:[%s6034 + $0x10] sm:$0xff]
  %v6038 = vld [vmem:[%s6034 + $0x18] sm:$0xff]
  %s6039 = scalar_lea.vmem %s9, 1
  %v6040 = vld [vmem:[%s6039] sm:$0x1]
  %v6042 = vlaneseq
  %v6043 = vshrl.u32 %v6042, 7
  %v6044 = vsub.s32 0, %v6043
  %v6045 = vrot.slane %v6040, %v6044
  %6047 = vmatprep.subr.mxu0 0.0
  %6048 = vmatpush1.msra.mxu0 0.0
  %6049 = vmatprep.subr.mxu0 0.0
  %6050 = vmatpush1.msra.mxu0 0.0
  %6051 = vmatprep.subr.mxu0 0.0
  %6052 = vmatpush1.msra.mxu0 0.0
  %6053 = vmatprep.subr.mxu0 0.0
  %6054 = vmatpush1.msra.mxu0 0.0
  %6055 = vmatprep.subr.mxu0 0.0
  %6056 = vmatpush1.msra.mxu0 0.0
  %6057 = vmatprep.subr.mxu0 0.0
  %6058 = vmatpush1.msra.mxu0 0.0
  %6059 = vmatprep.subr.mxu0 0.0
  %6060 = vmatpush1.msra.mxu0 0.0
  %6061 = vmatprep.subr.mxu0 0.0
  %6062 = vmatpush1.msra.mxu0 0.0
  %6063 = vmatprep.subr.mxu0 0.0
  %6064 = vmatpush1.msra.mxu0 0.0
  %6065 = vmatprep.subr.mxu0 0.0
  %6066 = vmatpush1.msra.mxu0 0.0
  %6067 = vmatprep.subr.mxu0 0.0
  %6068 = vmatpush1.msra.mxu0 0.0
  %6069 = vmatprep.subr.mxu0 0.0
  %6070 = vmatpush1.msra.mxu0 0.0
  %6071 = vmatprep.subr.mxu0 0.0
  %6072 = vmatpush1.msra.mxu0 %v6038
  %6073 = vmatprep.subr.mxu0 0.0
  %6074 = vmatpush1.msra.mxu0 %v6037
  %6075 = vmatprep.subr.mxu0 0.0
  %6076 = vmatpush1.msra.mxu0 %v6036
  %6077 = vmatprep.subr.mxu0 0.0
  %6078 = vmatpush1.msra.mxu0 %v6035
  %6079 = vmatprep.subr.mxu0 0.0
  %6080 = vmatpush2.msra.mxu0 0.0
  %6081 = vmatprep.subr.mxu0 0.0
  %6082 = vmatpush2.msra.mxu0 0.0
  %6083 = vmatprep.subr.mxu0 0.0
  %6084 = vmatpush2.msra.mxu0 0.0
  %6085 = vmatprep.subr.mxu0 0.0
  %6086 = vmatpush2.msra.mxu0 0.0
  %6087 = vmatprep.subr.mxu0 0.0
  %6088 = vmatpush2.msra.mxu0 0.0
  %6089 = vmatprep.subr.mxu0 0.0
  %6090 = vmatpush2.msra.mxu0 0.0
  %6091 = vmatprep.subr.mxu0 0.0
  %6092 = vmatpush2.msra.mxu0 0.0
  %6093 = vmatprep.subr.mxu0 0.0
  %6094 = vmatpush2.msra.mxu0 0.0
  %6095 = vmatprep.subr.mxu0 0.0
  %6096 = vmatpush2.msra.mxu0 0.0
  %6097 = vmatprep.subr.mxu0 0.0
  %6098 = vmatpush2.msra.mxu0 0.0
  %6099 = vmatprep.subr.mxu0 0.0
  %6100 = vmatpush2.msra.mxu0 0.0
  %6101 = vmatprep.subr.mxu0 0.0
  %6102 = vmatpush2.msra.mxu0 0.0
  %6103 = vmatprep.subr.mxu0 0.0
  %6104 = vmatpush2.msra.mxu0 0.0
  %6105 = vmatprep.subr.mxu0 0.0
  %6106 = vmatpush2.msra.mxu0 0.0
  %6107 = vmatprep.subr.mxu0 0.0
  %6108 = vmatpush2.msra.mxu0 0.0
  %6109 = vmatprep.subr.mxu0 0.0
  %6110 = vmatpush2.msra.mxu0 0.0
  %6111 = vmatprep.mubr.f32.mxu0 0.0
  %6112 = vmatmul.mubr.f32.gmra.mxu0 %v5951
  %v6113 = vpop.f32.mrf.mxu0
  %v6114 = vadd.f32 %v6045, %v6113
  %v6115 = vpop.f32.mrf.mxu0
  %6116 = vmatprep.mubr.f32.mxu0 0.0
  %6117 = vmatmul.mubr.f32.gmra.mxu0 %v5954
  %v6118 = vpop.f32.mrf.mxu0
  %v6119 = vadd.f32 %v6045, %v6118
  %v6120 = vpop.f32.mrf.mxu0
  %6121 = vdwg.mxu0
  %s6122 = scalar_lea.vmem [#allocation4], 16
  %6123 = vst.msk [vmem:[%s6122] sm:$0xff] %vm6031, %v6114
  %6124 = vst.msk [vmem:[%s6122 + $0x8] sm:$0xff] %vm6031, %v6119
  %s6125 = scalar_lea.vmem %s7, 64
  %v6126 = vld [vmem:[%s6125] sm:$0xff]
  %v6127 = vld [vmem:[%s6125 + $0x8] sm:$0xff]
  %v6128 = vld [vmem:[%s6125 + $0x10] sm:$0xff]
  %v6129 = vld [vmem:[%s6125 + $0x18] sm:$0xff]
  %s6130 = scalar_lea.vmem %s9, 2
  %v6131 = vld [vmem:[%s6130] sm:$0x1]
  %v6133 = vlaneseq
  %v6134 = vshrl.u32 %v6133, 7
  %v6135 = vsub.s32 0, %v6134
  %v6136 = vrot.slane %v6131, %v6135
  %6138 = vmatprep.subr.mxu0 0.0
  %6139 = vmatpush1.msra.mxu0 0.0
  %6140 = vmatprep.subr.mxu0 0.0
  %6141 = vmatpush1.msra.mxu0 0.0
  %6142 = vmatprep.subr.mxu0 0.0
  %6143 = vmatpush1.msra.mxu0 0.0
  %6144 = vmatprep.subr.mxu0 0.0
  %6145 = vmatpush1.msra.mxu0 0.0
  %6146 = vmatprep.subr.mxu0 0.0
  %6147 = vmatpush1.msra.mxu0 0.0
  %6148 = vmatprep.subr.mxu0 0.0
  %6149 = vmatpush1.msra.mxu0 0.0
  %6150 = vmatprep.subr.mxu0 0.0
  %6151 = vmatpush1.msra.mxu0 0.0
  %6152 = vmatprep.subr.mxu0 0.0
  %6153 = vmatpush1.msra.mxu0 0.0
  %6154 = vmatprep.subr.mxu0 0.0
  %6155 = vmatpush1.msra.mxu0 0.0
  %6156 = vmatprep.subr.mxu0 0.0
  %6157 = vmatpush1.msra.mxu0 0.0
  %6158 = vmatprep.subr.mxu0 0.0
  %6159 = vmatpush1.msra.mxu0 0.0
  %6160 = vmatprep.subr.mxu0 0.0
  %6161 = vmatpush1.msra.mxu0 0.0
  %6162 = vmatprep.subr.mxu0 0.0
  %6163 = vmatpush1.msra.mxu0 %v6129
  %6164 = vmatprep.subr.mxu0 0.0
  %6165 = vmatpush1.msra.mxu0 %v6128
  %6166 = vmatprep.subr.mxu0 0.0
  %6167 = vmatpush1.msra.mxu0 %v6127
  %6168 = vmatprep.subr.mxu0 0.0
  %6169 = vmatpush1.msra.mxu0 %v6126
  %6170 = vmatprep.subr.mxu0 0.0
  %6171 = vmatpush2.msra.mxu0 0.0
  %6172 = vmatprep.subr.mxu0 0.0
  %6173 = vmatpush2.msra.mxu0 0.0
  %6174 = vmatprep.subr.mxu0 0.0
  %6175 = vmatpush2.msra.mxu0 0.0
  %6176 = vmatprep.subr.mxu0 0.0
  %6177 = vmatpush2.msra.mxu0 0.0
  %6178 = vmatprep.subr.mxu0 0.0
  %6179 = vmatpush2.msra.mxu0 0.0
  %6180 = vmatprep.subr.mxu0 0.0
  %6181 = vmatpush2.msra.mxu0 0.0
  %6182 = vmatprep.subr.mxu0 0.0
  %6183 = vmatpush2.msra.mxu0 0.0
  %6184 = vmatprep.subr.mxu0 0.0
  %6185 = vmatpush2.msra.mxu0 0.0
  %6186 = vmatprep.subr.mxu0 0.0
  %6187 = vmatpush2.msra.mxu0 0.0
  %6188 = vmatprep.subr.mxu0 0.0
  %6189 = vmatpush2.msra.mxu0 0.0
  %6190 = vmatprep.subr.mxu0 0.0
  %6191 = vmatpush2.msra.mxu0 0.0
  %6192 = vmatprep.subr.mxu0 0.0
  %6193 = vmatpush2.msra.mxu0 0.0
  %6194 = vmatprep.subr.mxu0 0.0
  %6195 = vmatpush2.msra.mxu0 0.0
  %6196 = vmatprep.subr.mxu0 0.0
  %6197 = vmatpush2.msra.mxu0 0.0
  %6198 = vmatprep.subr.mxu0 0.0
  %6199 = vmatpush2.msra.mxu0 0.0
  %6200 = vmatprep.subr.mxu0 0.0
  %6201 = vmatpush2.msra.mxu0 0.0
  %6202 = vmatprep.mubr.f32.mxu0 0.0
  %6203 = vmatmul.mubr.f32.gmra.mxu0 %v5951
  %v6204 = vpop.f32.mrf.mxu0
  %v6205 = vadd.f32 %v6136, %v6204
  %v6206 = vpop.f32.mrf.mxu0
  %6207 = vmatprep.mubr.f32.mxu0 0.0
  %6208 = vmatmul.mubr.f32.gmra.mxu0 %v5954
  %v6209 = vpop.f32.mrf.mxu0
  %v6210 = vadd.f32 %v6136, %v6209
  %v6211 = vpop.f32.mrf.mxu0
  %6212 = vdwg.mxu0
  %s6213 = scalar_lea.vmem [#allocation4], 32
  %6214 = vst.msk [vmem:[%s6213] sm:$0xff] %vm6031, %v6205
  %6215 = vst.msk [vmem:[%s6213 + $0x8] sm:$0xff] %vm6031, %v6210
  %s6216 = scalar_lea.vmem %s7, 96
  %v6217 = vld [vmem:[%s6216] sm:$0xff]
  %v6218 = vld [vmem:[%s6216 + $0x8] sm:$0xff]
  %v6219 = vld [vmem:[%s6216 + $0x10] sm:$0xff]
  %v6220 = vld [vmem:[%s6216 + $0x18] sm:$0xff]
  %s6221 = scalar_lea.vmem %s9, 3
  %v6222 = vld [vmem:[%s6221] sm:$0x1]
  %v6224 = vlaneseq
  %v6225 = vshrl.u32 %v6224, 7
  %v6226 = vsub.s32 0, %v6225
  %v6227 = vrot.slane %v6222, %v6226
  %6229 = vmatprep.subr.mxu0 0.0
  %6230 = vmatpush1.msra.mxu0 0.0
  %6231 = vmatprep.subr.mxu0 0.0
  %6232 = vmatpush1.msra.mxu0 0.0
  %6233 = vmatprep.subr.mxu0 0.0
  %6234 = vmatpush1.msra.mxu0 0.0
  %6235 = vmatprep.subr.mxu0 0.0
  %6236 = vmatpush1.msra.mxu0 0.0
  %6237 = vmatprep.subr.mxu0 0.0
  %6238 = vmatpush1.msra.mxu0 0.0
  %6239 = vmatprep.subr.mxu0 0.0
  %6240 = vmatpush1.msra.mxu0 0.0
  %6241 = vmatprep.subr.mxu0 0.0
  %6242 = vmatpush1.msra.mxu0 0.0
  %6243 = vmatprep.subr.mxu0 0.0
  %6244 = vmatpush1.msra.mxu0 0.0
  %6245 = vmatprep.subr.mxu0 0.0
  %6246 = vmatpush1.msra.mxu0 0.0
  %6247 = vmatprep.subr.mxu0 0.0
  %6248 = vmatpush1.msra.mxu0 0.0
  %6249 = vmatprep.subr.mxu0 0.0
  %6250 = vmatpush1.msra.mxu0 0.0
  %6251 = vmatprep.subr.mxu0 0.0
  %6252 = vmatpush1.msra.mxu0 0.0
  %6253 = vmatprep.subr.mxu0 0.0
  %6254 = vmatpush1.msra.mxu0 %v6220
  %6255 = vmatprep.subr.mxu0 0.0
  %6256 = vmatpush1.msra.mxu0 %v6219
  %6257 = vmatprep.subr.mxu0 0.0
  %6258 = vmatpush1.msra.mxu0 %v6218
  %6259 = vmatprep.subr.mxu0 0.0
  %6260 = vmatpush1.msra.mxu0 %v6217
  %6261 = vmatprep.subr.mxu0 0.0
  %6262 = vmatpush2.msra.mxu0 0.0
  %6263 = vmatprep.subr.mxu0 0.0
  %6264 = vmatpush2.msra.mxu0 0.0
  %6265 = vmatprep.subr.mxu0 0.0
  %6266 = vmatpush2.msra.mxu0 0.0
  %6267 = vmatprep.subr.mxu0 0.0
  %6268 = vmatpush2.msra.mxu0 0.0
  %6269 = vmatprep.subr.mxu0 0.0
  %6270 = vmatpush2.msra.mxu0 0.0
  %6271 = vmatprep.subr.mxu0 0.0
  %6272 = vmatpush2.msra.mxu0 0.0
  %6273 = vmatprep.subr.mxu0 0.0
  %6274 = vmatpush2.msra.mxu0 0.0
  %6275 = vmatprep.subr.mxu0 0.0
  %6276 = vmatpush2.msra.mxu0 0.0
  %6277 = vmatprep.subr.mxu0 0.0
  %6278 = vmatpush2.msra.mxu0 0.0
  %6279 = vmatprep.subr.mxu0 0.0
  %6280 = vmatpush2.msra.mxu0 0.0
  %6281 = vmatprep.subr.mxu0 0.0
  %6282 = vmatpush2.msra.mxu0 0.0
  %6283 = vmatprep.subr.mxu0 0.0
  %6284 = vmatpush2.msra.mxu0 0.0
  %6285 = vmatprep.subr.mxu0 0.0
  %6286 = vmatpush2.msra.mxu0 0.0
  %6287 = vmatprep.subr.mxu0 0.0
  %6288 = vmatpush2.msra.mxu0 0.0
  %6289 = vmatprep.subr.mxu0 0.0
  %6290 = vmatpush2.msra.mxu0 0.0
  %6291 = vmatprep.subr.mxu0 0.0
  %6292 = vmatpush2.msra.mxu0 0.0
  %6293 = vmatprep.mubr.f32.mxu0 0.0
  %6294 = vmatmul.mubr.f32.gmra.mxu0 %v5951
  %v6295 = vpop.f32.mrf.mxu0
  %v6296 = vadd.f32 %v6227, %v6295
  %v6297 = vpop.f32.mrf.mxu0
  %6298 = vmatprep.mubr.f32.mxu0 0.0
  %6299 = vmatmul.mubr.f32.gmra.mxu0 %v5954
  %v6300 = vpop.f32.mrf.mxu0
  %v6301 = vadd.f32 %v6227, %v6300
  %v6302 = vpop.f32.mrf.mxu0
  %6303 = vdwg.mxu0
  %s6304 = scalar_lea.vmem [#allocation4], 48
  %6305 = vst.msk [vmem:[%s6304] sm:$0xff] %vm6031, %v6296
  %6306 = vst.msk [vmem:[%s6304 + $0x8] sm:$0xff] %vm6031, %v6301
  %v6307 = vld [vmem:[%s8] sm:$0xff]
  %v6308 = vld [vmem:[%s8 + $0x8] sm:$0xff]
  %s6309 = scalar_lea.vmem %s8, 16
  %v6310 = vld [vmem:[%s6309] sm:$0xff]
  %v6311 = vld [vmem:[%s6309 + $0x8] sm:$0xff]
  %s6312 = scalar_lea.vmem %s8, 32
  %v6313 = vld [vmem:[%s6312] sm:$0xff]
  %v6314 = vld [vmem:[%s6312 + $0x8] sm:$0xff]
  %s6315 = scalar_lea.vmem %s8, 48
  %v6316 = vld [vmem:[%s6315] sm:$0xff]
  %v6317 = vld [vmem:[%s6315 + $0x8] sm:$0xff]
  %v6318 = vld [vmem:[#allocation4] sm:$0x3]
  %v6319 = vsel %vm6031, 0.0, 0
  %6321 = vmatprep.subr.mxu0 0.0
  %6322 = vmatpush1.msra.mxu0 0.0
  %6323 = vmatprep.subr.mxu0 0.0
  %6324 = vmatpush1.msra.mxu0 0.0
  %6325 = vmatprep.subr.mxu0 0.0
  %6326 = vmatpush1.msra.mxu0 0.0
  %6327 = vmatprep.subr.mxu0 0.0
  %6328 = vmatpush1.msra.mxu0 0.0
  %6329 = vmatprep.subr.mxu0 0.0
  %6330 = vmatpush1.msra.mxu0 0.0
  %6331 = vmatprep.subr.mxu0 0.0
  %6332 = vmatpush1.msra.mxu0 0.0
  %6333 = vmatprep.subr.mxu0 0.0
  %6334 = vmatpush1.msra.mxu0 0.0
  %6335 = vmatprep.subr.mxu0 0.0
  %6336 = vmatpush1.msra.mxu0 0.0
  %6337 = vmatprep.subr.mxu0 0.0
  %6338 = vmatpush1.msra.mxu0 0.0
  %6339 = vmatprep.subr.mxu0 0.0
  %6340 = vmatpush1.msra.mxu0 0.0
  %6341 = vmatprep.subr.mxu0 0.0
  %6342 = vmatpush1.msra.mxu0 0.0
  %6343 = vmatprep.subr.mxu0 0.0
  %6344 = vmatpush1.msra.mxu0 0.0
  %6345 = vmatprep.subr.mxu0 0.0
  %6346 = vmatpush1.msra.mxu0 0.0
  %6347 = vmatprep.subr.mxu0 0.0
  %6348 = vmatpush1.msra.mxu0 0.0
  %6349 = vmatprep.subr.mxu0 0.0
  %6350 = vmatpush1.msra.mxu0 %v6308
  %6351 = vmatprep.subr.mxu0 0.0
  %6352 = vmatpush1.msra.mxu0 %v6307
  %6353 = vmatprep.subr.mxu0 0.0
  %6354 = vmatpush2.msra.mxu0 0.0
  %6355 = vmatprep.subr.mxu0 0.0
  %6356 = vmatpush2.msra.mxu0 0.0
  %6357 = vmatprep.subr.mxu0 0.0
  %6358 = vmatpush2.msra.mxu0 0.0
  %6359 = vmatprep.subr.mxu0 0.0
  %6360 = vmatpush2.msra.mxu0 0.0
  %6361 = vmatprep.subr.mxu0 0.0
  %6362 = vmatpush2.msra.mxu0 0.0
  %6363 = vmatprep.subr.mxu0 0.0
  %6364 = vmatpush2.msra.mxu0 0.0
  %6365 = vmatprep.subr.mxu0 0.0
  %6366 = vmatpush2.msra.mxu0 0.0
  %6367 = vmatprep.subr.mxu0 0.0
  %6368 = vmatpush2.msra.mxu0 0.0
  %6369 = vmatprep.subr.mxu0 0.0
  %6370 = vmatpush2.msra.mxu0 0.0
  %6371 = vmatprep.subr.mxu0 0.0
  %6372 = vmatpush2.msra.mxu0 0.0
  %6373 = vmatprep.subr.mxu0 0.0
  %6374 = vmatpush2.msra.mxu0 0.0
  %6375 = vmatprep.subr.mxu0 0.0
  %6376 = vmatpush2.msra.mxu0 0.0
  %6377 = vmatprep.subr.mxu0 0.0
  %6378 = vmatpush2.msra.mxu0 0.0
  %6379 = vmatprep.subr.mxu0 0.0
  %6380 = vmatpush2.msra.mxu0 0.0
  %6381 = vmatprep.subr.mxu0 0.0
  %6382 = vmatpush2.msra.mxu0 0.0
  %6383 = vmatprep.subr.mxu0 0.0
  %6384 = vmatpush2.msra.mxu0 0.0
  %6385 = vmatprep.mubr.f32.mxu0 0.0
  %6386 = vmatmul.mubr.f32.gmra.mxu0 %v6319
  %v6387 = vpop.f32.mrf.mxu0
  %v6388 = vadd.f32 0.0, %v6387
  %v6389 = vpop.f32.mrf.mxu0
  %6390 = vdwg.mxu0
  %v6391 = vadd.f32 %v6318, %v6388
  %v6392 = vxor.u32 %v6391, 2147483648
  %v6393 = vmul.f32 %v6392, 1.442695
  %v6394 = vpow.pop %v6393
  %v6395 = vadd.f32 %v6394, 1.0
  %v6396 = vrcp.pop %v6395
  %v6397 = vmul.f32 1.0, %v6396
  %v6398 = vld [vmem:[%s6122] sm:$0x3]
  %6399 = vmatprep.subr.mxu0 0.0
  %6400 = vmatpush1.msra.mxu0 0.0
  %6401 = vmatprep.subr.mxu0 0.0
  %6402 = vmatpush1.msra.mxu0 0.0
  %6403 = vmatprep.subr.mxu0 0.0
  %6404 = vmatpush1.msra.mxu0 0.0
  %6405 = vmatprep.subr.mxu0 0.0
  %6406 = vmatpush1.msra.mxu0 0.0
  %6407 = vmatprep.subr.mxu0 0.0
  %6408 = vmatpush1.msra.mxu0 0.0
  %6409 = vmatprep.subr.mxu0 0.0
  %6410 = vmatpush1.msra.mxu0 0.0
  %6411 = vmatprep.subr.mxu0 0.0
  %6412 = vmatpush1.msra.mxu0 0.0
  %6413 = vmatprep.subr.mxu0 0.0
  %6414 = vmatpush1.msra.mxu0 0.0
  %6415 = vmatprep.subr.mxu0 0.0
  %6416 = vmatpush1.msra.mxu0 0.0
  %6417 = vmatprep.subr.mxu0 0.0
  %6418 = vmatpush1.msra.mxu0 0.0
  %6419 = vmatprep.subr.mxu0 0.0
  %6420 = vmatpush1.msra.mxu0 0.0
  %6421 = vmatprep.subr.mxu0 0.0
  %6422 = vmatpush1.msra.mxu0 0.0
  %6423 = vmatprep.subr.mxu0 0.0
  %6424 = vmatpush1.msra.mxu0 0.0
  %6425 = vmatprep.subr.mxu0 0.0
  %6426 = vmatpush1.msra.mxu0 0.0
  %6427 = vmatprep.subr.mxu0 0.0
  %6428 = vmatpush1.msra.mxu0 %v6311
  %6429 = vmatprep.subr.mxu0 0.0
  %6430 = vmatpush1.msra.mxu0 %v6310
  %6431 = vmatprep.subr.mxu0 0.0
  %6432 = vmatpush2.msra.mxu0 0.0
  %6433 = vmatprep.subr.mxu0 0.0
  %6434 = vmatpush2.msra.mxu0 0.0
  %6435 = vmatprep.subr.mxu0 0.0
  %6436 = vmatpush2.msra.mxu0 0.0
  %6437 = vmatprep.subr.mxu0 0.0
  %6438 = vmatpush2.msra.mxu0 0.0
  %6439 = vmatprep.subr.mxu0 0.0
  %6440 = vmatpush2.msra.mxu0 0.0
  %6441 = vmatprep.subr.mxu0 0.0
  %6442 = vmatpush2.msra.mxu0 0.0
  %6443 = vmatprep.subr.mxu0 0.0
  %6444 = vmatpush2.msra.mxu0 0.0
  %6445 = vmatprep.subr.mxu0 0.0
  %6446 = vmatpush2.msra.mxu0 0.0
  %6447 = vmatprep.subr.mxu0 0.0
  %6448 = vmatpush2.msra.mxu0 0.0
  %6449 = vmatprep.subr.mxu0 0.0
  %6450 = vmatpush2.msra.mxu0 0.0
  %6451 = vmatprep.subr.mxu0 0.0
  %6452 = vmatpush2.msra.mxu0 0.0
  %6453 = vmatprep.subr.mxu0 0.0
  %6454 = vmatpush2.msra.mxu0 0.0
  %6455 = vmatprep.subr.mxu0 0.0
  %6456 = vmatpush2.msra.mxu0 0.0
  %6457 = vmatprep.subr.mxu0 0.0
  %6458 = vmatpush2.msra.mxu0 0.0
  %6459 = vmatprep.subr.mxu0 0.0
  %6460 = vmatpush2.msra.mxu0 0.0
  %6461 = vmatprep.subr.mxu0 0.0
  %6462 = vmatpush2.msra.mxu0 0.0
  %6463 = vmatprep.mubr.f32.mxu0 0.0
  %6464 = vmatmul.mubr.f32.gmra.mxu0 %v6319
  %v6465 = vpop.f32.mrf.mxu0
  %v6466 = vadd.f32 0.0, %v6465
  %v6467 = vpop.f32.mrf.mxu0
  %6468 = vdwg.mxu0
  %v6469 = vadd.f32 %v6398, %v6466
  %v6470 = vxor.u32 %v6469, 2147483648
  %v6471 = vmul.f32 %v6470, 1.442695
  %v6472 = vpow.pop %v6471
  %v6473 = vadd.f32 %v6472, 1.0
  %v6474 = vrcp.pop %v6473
  %v6475 = vmul.f32 1.0, %v6474
  %v6476 = vld [vmem:[%s6213] sm:$0x3]
  %6477 = vmatprep.subr.mxu0 0.0
  %6478 = vmatpush1.msra.mxu0 0.0
  %6479 = vmatprep.subr.mxu0 0.0
  %6480 = vmatpush1.msra.mxu0 0.0
  %6481 = vmatprep.subr.mxu0 0.0
  %6482 = vmatpush1.msra.mxu0 0.0
  %6483 = vmatprep.subr.mxu0 0.0
  %6484 = vmatpush1.msra.mxu0 0.0
  %6485 = vmatprep.subr.mxu0 0.0
  %6486 = vmatpush1.msra.mxu0 0.0
  %6487 = vmatprep.subr.mxu0 0.0
  %6488 = vmatpush1.msra.mxu0 0.0
  %6489 = vmatprep.subr.mxu0 0.0
  %6490 = vmatpush1.msra.mxu0 0.0
  %6491 = vmatprep.subr.mxu0 0.0
  %6492 = vmatpush1.msra.mxu0 0.0
  %6493 = vmatprep.subr.mxu0 0.0
  %6494 = vmatpush1.msra.mxu0 0.0
  %6495 = vmatprep.subr.mxu0 0.0
  %6496 = vmatpush1.msra.mxu0 0.0
  %6497 = vmatprep.subr.mxu0 0.0
  %6498 = vmatpush1.msra.mxu0 0.0
  %6499 = vmatprep.subr.mxu0 0.0
  %6500 = vmatpush1.msra.mxu0 0.0
  %6501 = vmatprep.subr.mxu0 0.0
  %6502 = vmatpush1.msra.mxu0 0.0
  %6503 = vmatprep.subr.mxu0 0.0
  %6504 = vmatpush1.msra.mxu0 0.0
  %6505 = vmatprep.subr.mxu0 0.0
  %6506 = vmatpush1.msra.mxu0 %v6314
  %6507 = vmatprep.subr.mxu0 0.0
  %6508 = vmatpush1.msra.mxu0 %v6313
  %6509 = vmatprep.subr.mxu0 0.0
  %6510 = vmatpush2.msra.mxu0 0.0
  %6511 = vmatprep.subr.mxu0 0.0
  %6512 = vmatpush2.msra.mxu0 0.0
  %6513 = vmatprep.subr.mxu0 0.0
  %6514 = vmatpush2.msra.mxu0 0.0
  %6515 = vmatprep.subr.mxu0 0.0
  %6516 = vmatpush2.msra.mxu0 0.0
  %6517 = vmatprep.subr.mxu0 0.0
  %6518 = vmatpush2.msra.mxu0 0.0
  %6519 = vmatprep.subr.mxu0 0.0
  %6520 = vmatpush2.msra.mxu0 0.0
  %6521 = vmatprep.subr.mxu0 0.0
  %6522 = vmatpush2.msra.mxu0 0.0
  %6523 = vmatprep.subr.mxu0 0.0
  %6524 = vmatpush2.msra.mxu0 0.0
  %6525 = vmatprep.subr.mxu0 0.0
  %6526 = vmatpush2.msra.mxu0 0.0
  %6527 = vmatprep.subr.mxu0 0.0
  %6528 = vmatpush2.msra.mxu0 0.0
  %6529 = vmatprep.subr.mxu0 0.0
  %6530 = vmatpush2.msra.mxu0 0.0
  %6531 = vmatprep.subr.mxu0 0.0
  %6532 = vmatpush2.msra.mxu0 0.0
  %6533 = vmatprep.subr.mxu0 0.0
  %6534 = vmatpush2.msra.mxu0 0.0
  %6535 = vmatprep.subr.mxu0 0.0
  %6536 = vmatpush2.msra.mxu0 0.0
  %6537 = vmatprep.subr.mxu0 0.0
  %6538 = vmatpush2.msra.mxu0 0.0
  %6539 = vmatprep.subr.mxu0 0.0
  %6540 = vmatpush2.msra.mxu0 0.0
  %6541 = vmatprep.mubr.f32.mxu0 0.0
  %6542 = vmatmul.mubr.f32.gmra.mxu0 %v6319
  %v6543 = vpop.f32.mrf.mxu0
  %v6544 = vadd.f32 0.0, %v6543
  %v6545 = vpop.f32.mrf.mxu0
  %6546 = vdwg.mxu0
  %v6547 = vadd.f32 %v6476, %v6544
  %v6548 = vtanh.pop %v6547
  %v6549 = vld [vmem:[%s6304] sm:$0x3]
  %6550 = vmatprep.subr.mxu0 0.0
  %6551 = vmatpush1.msra.mxu0 0.0
  %6552 = vmatprep.subr.mxu0 0.0
  %6553 = vmatpush1.msra.mxu0 0.0
  %6554 = vmatprep.subr.mxu0 0.0
  %6555 = vmatpush1.msra.mxu0 0.0
  %6556 = vmatprep.subr.mxu0 0.0
  %6557 = vmatpush1.msra.mxu0 0.0
  %6558 = vmatprep.subr.mxu0 0.0
  %6559 = vmatpush1.msra.mxu0 0.0
  %6560 = vmatprep.subr.mxu0 0.0
  %6561 = vmatpush1.msra.mxu0 0.0
  %6562 = vmatprep.subr.mxu0 0.0
  %6563 = vmatpush1.msra.mxu0 0.0
  %6564 = vmatprep.subr.mxu0 0.0
  %6565 = vmatpush1.msra.mxu0 0.0
  %6566 = vmatprep.subr.mxu0 0.0
  %6567 = vmatpush1.msra.mxu0 0.0
  %6568 = vmatprep.subr.mxu0 0.0
  %6569 = vmatpush1.msra.mxu0 0.0
  %6570 = vmatprep.subr.mxu0 0.0
  %6571 = vmatpush1.msra.mxu0 0.0
  %6572 = vmatprep.subr.mxu0 0.0
  %6573 = vmatpush1.msra.mxu0 0.0
  %6574 = vmatprep.subr.mxu0 0.0
  %6575 = vmatpush1.msra.mxu0 0.0
  %6576 = vmatprep.subr.mxu0 0.0
  %6577 = vmatpush1.msra.mxu0 0.0
  %6578 = vmatprep.subr.mxu0 0.0
  %6579 = vmatpush1.msra.mxu0 %v6317
  %6580 = vmatprep.subr.mxu0 0.0
  %6581 = vmatpush1.msra.mxu0 %v6316
  %6582 = vmatprep.subr.mxu0 0.0
  %6583 = vmatpush2.msra.mxu0 0.0
  %6584 = vmatprep.subr.mxu0 0.0
  %6585 = vmatpush2.msra.mxu0 0.0
  %6586 = vmatprep.subr.mxu0 0.0
  %6587 = vmatpush2.msra.mxu0 0.0
  %6588 = vmatprep.subr.mxu0 0.0
  %6589 = vmatpush2.msra.mxu0 0.0
  %6590 = vmatprep.subr.mxu0 0.0
  %6591 = vmatpush2.msra.mxu0 0.0
  %6592 = vmatprep.subr.mxu0 0.0
  %6593 = vmatpush2.msra.mxu0 0.0
  %6594 = vmatprep.subr.mxu0 0.0
  %6595 = vmatpush2.msra.mxu0 0.0
  %6596 = vmatprep.subr.mxu0 0.0
  %6597 = vmatpush2.msra.mxu0 0.0
  %6598 = vmatprep.subr.mxu0 0.0
  %6599 = vmatpush2.msra.mxu0 0.0
  %6600 = vmatprep.subr.mxu0 0.0
  %6601 = vmatpush2.msra.mxu0 0.0
  %6602 = vmatprep.subr.mxu0 0.0
  %6603 = vmatpush2.msra.mxu0 0.0
  %6604 = vmatprep.subr.mxu0 0.0
  %6605 = vmatpush2.msra.mxu0 0.0
  %6606 = vmatprep.subr.mxu0 0.0
  %6607 = vmatpush2.msra.mxu0 0.0
  %6608 = vmatprep.subr.mxu0 0.0
  %6609 = vmatpush2.msra.mxu0 0.0
  %6610 = vmatprep.subr.mxu0 0.0
  %6611 = vmatpush2.msra.mxu0 0.0
  %6612 = vmatprep.subr.mxu0 0.0
  %6613 = vmatpush2.msra.mxu0 0.0
  %6614 = vmatprep.mubr.f32.mxu0 0.0
  %6615 = vmatmul.mubr.f32.gmra.mxu0 %v6319
  %v6616 = vpop.f32.mrf.mxu0
  %v6617 = vadd.f32 0.0, %v6616
  %v6618 = vpop.f32.mrf.mxu0
  %6619 = vdwg.mxu0
  %v6620 = vadd.f32 %v6549, %v6617
  %v6621 = vxor.u32 %v6620, 2147483648
  %v6622 = vmul.f32 %v6621, 1.442695
  %v6623 = vpow.pop %v6622
  %v6624 = vadd.f32 %v6623, 1.0
  %v6625 = vrcp.pop %v6624
  %v6626 = vmul.f32 1.0, %v6625
  %v6627 = vmul.f32 %v6475, 0.0
  %v6628 = vmul.f32 %v6397, %v6548
  %v6629 = vadd.f32 %v6627, %v6628
  %v6630 = vtanh.pop %v6629
  %v6631 = vmul.f32 %v6626, %v6630
  %v6632 = vld [vmem:[#allocation4 + $0x2] sm:$0x3]
  %v6634 = vsel %vm6031, %v6631, 0
  %6636 = vmatprep.subr.mxu0 0.0
  %6637 = vmatpush1.msra.mxu0 0.0
  %6638 = vmatprep.subr.mxu0 0.0
  %6639 = vmatpush1.msra.mxu0 0.0
  %6640 = vmatprep.subr.mxu0 0.0
  %6641 = vmatpush1.msra.mxu0 0.0
  %6642 = vmatprep.subr.mxu0 0.0
  %6643 = vmatpush1.msra.mxu0 0.0
  %6644 = vmatprep.subr.mxu0 0.0
  %6645 = vmatpush1.msra.mxu0 0.0
  %6646 = vmatprep.subr.mxu0 0.0
  %6647 = vmatpush1.msra.mxu0 0.0
  %6648 = vmatprep.subr.mxu0 0.0
  %6649 = vmatpush1.msra.mxu0 0.0
  %6650 = vmatprep.subr.mxu0 0.0
  %6651 = vmatpush1.msra.mxu0 0.0
  %6652 = vmatprep.subr.mxu0 0.0
  %6653 = vmatpush1.msra.mxu0 0.0
  %6654 = vmatprep.subr.mxu0 0.0
  %6655 = vmatpush1.msra.mxu0 0.0
  %6656 = vmatprep.subr.mxu0 0.0
  %6657 = vmatpush1.msra.mxu0 0.0
  %6658 = vmatprep.subr.mxu0 0.0
  %6659 = vmatpush1.msra.mxu0 0.0
  %6660 = vmatprep.subr.mxu0 0.0
  %6661 = vmatpush1.msra.mxu0 0.0
  %6662 = vmatprep.subr.mxu0 0.0
  %6663 = vmatpush1.msra.mxu0 0.0
  %6664 = vmatprep.subr.mxu0 0.0
  %6665 = vmatpush1.msra.mxu0 %v6308
  %6666 = vmatprep.subr.mxu0 0.0
  %6667 = vmatpush1.msra.mxu0 %v6307
  %6668 = vmatprep.subr.mxu0 0.0
  %6669 = vmatpush2.msra.mxu0 0.0
  %6670 = vmatprep.subr.mxu0 0.0
  %6671 = vmatpush2.msra.mxu0 0.0
  %6672 = vmatprep.subr.mxu0 0.0
  %6673 = vmatpush2.msra.mxu0 0.0
  %6674 = vmatprep.subr.mxu0 0.0
  %6675 = vmatpush2.msra.mxu0 0.0
  %6676 = vmatprep.subr.mxu0 0.0
  %6677 = vmatpush2.msra.mxu0 0.0
  %6678 = vmatprep.subr.mxu0 0.0
  %6679 = vmatpush2.msra.mxu0 0.0
  %6680 = vmatprep.subr.mxu0 0.0
  %6681 = vmatpush2.msra.mxu0 0.0
  %6682 = vmatprep.subr.mxu0 0.0
  %6683 = vmatpush2.msra.mxu0 0.0
  %6684 = vmatprep.subr.mxu0 0.0
  %6685 = vmatpush2.msra.mxu0 0.0
  %6686 = vmatprep.subr.mxu0 0.0
  %6687 = vmatpush2.msra.mxu0 0.0
  %6688 = vmatprep.subr.mxu0 0.0
  %6689 = vmatpush2.msra.mxu0 0.0
  %6690 = vmatprep.subr.mxu0 0.0
  %6691 = vmatpush2.msra.mxu0 0.0
  %6692 = vmatprep.subr.mxu0 0.0
  %6693 = vmatpush2.msra.mxu0 0.0
  %6694 = vmatprep.subr.mxu0 0.0
  %6695 = vmatpush2.msra.mxu0 0.0
  %6696 = vmatprep.subr.mxu0 0.0
  %6697 = vmatpush2.msra.mxu0 0.0
  %6698 = vmatprep.subr.mxu0 0.0
  %6699 = vmatpush2.msra.mxu0 0.0
  %6700 = vmatprep.mubr.f32.mxu0 0.0
  %6701 = vmatmul.mubr.f32.gmra.mxu0 %v6634
  %v6702 = vpop.f32.mrf.mxu0
  %v6703 = vadd.f32 0.0, %v6702
  %v6704 = vpop.f32.mrf.mxu0
  %6705 = vdwg.mxu0
  %v6706 = vadd.f32 %v6632, %v6703
  %v6707 = vxor.u32 %v6706, 2147483648
  %v6708 = vmul.f32 %v6707, 1.442695
  %v6709 = vpow.pop %v6708
  %v6710 = vadd.f32 %v6709, 1.0
  %v6711 = vrcp.pop %v6710
  %v6712 = vmul.f32 1.0, %v6711
  %v6713 = vld [vmem:[%s6122 + $0x2] sm:$0x3]
  %6714 = vmatprep.subr.mxu0 0.0
  %6715 = vmatpush1.msra.mxu0 0.0
  %6716 = vmatprep.subr.mxu0 0.0
  %6717 = vmatpush1.msra.mxu0 0.0
  %6718 = vmatprep.subr.mxu0 0.0
  %6719 = vmatpush1.msra.mxu0 0.0
  %6720 = vmatprep.subr.mxu0 0.0
  %6721 = vmatpush1.msra.mxu0 0.0
  %6722 = vmatprep.subr.mxu0 0.0
  %6723 = vmatpush1.msra.mxu0 0.0
  %6724 = vmatprep.subr.mxu0 0.0
  %6725 = vmatpush1.msra.mxu0 0.0
  %6726 = vmatprep.subr.mxu0 0.0
  %6727 = vmatpush1.msra.mxu0 0.0
  %6728 = vmatprep.subr.mxu0 0.0
  %6729 = vmatpush1.msra.mxu0 0.0
  %6730 = vmatprep.subr.mxu0 0.0
  %6731 = vmatpush1.msra.mxu0 0.0
  %6732 = vmatprep.subr.mxu0 0.0
  %6733 = vmatpush1.msra.mxu0 0.0
  %6734 = vmatprep.subr.mxu0 0.0
  %6735 = vmatpush1.msra.mxu0 0.0
  %6736 = vmatprep.subr.mxu0 0.0
  %6737 = vmatpush1.msra.mxu0 0.0
  %6738 = vmatprep.subr.mxu0 0.0
  %6739 = vmatpush1.msra.mxu0 0.0
  %6740 = vmatprep.subr.mxu0 0.0
  %6741 = vmatpush1.msra.mxu0 0.0
  %6742 = vmatprep.subr.mxu0 0.0
  %6743 = vmatpush1.msra.mxu0 %v6311
  %6744 = vmatprep.subr.mxu0 0.0
  %6745 = vmatpush1.msra.mxu0 %v6310
  %6746 = vmatprep.subr.mxu0 0.0
  %6747 = vmatpush2.msra.mxu0 0.0
  %6748 = vmatprep.subr.mxu0 0.0
  %6749 = vmatpush2.msra.mxu0 0.0
  %6750 = vmatprep.subr.mxu0 0.0
  %6751 = vmatpush2.msra.mxu0 0.0
  %6752 = vmatprep.subr.mxu0 0.0
  %6753 = vmatpush2.msra.mxu0 0.0
  %6754 = vmatprep.subr.mxu0 0.0
  %6755 = vmatpush2.msra.mxu0 0.0
  %6756 = vmatprep.subr.mxu0 0.0
  %6757 = vmatpush2.msra.mxu0 0.0
  %6758 = vmatprep.subr.mxu0 0.0
  %6759 = vmatpush2.msra.mxu0 0.0
  %6760 = vmatprep.subr.mxu0 0.0
  %6761 = vmatpush2.msra.mxu0 0.0
  %6762 = vmatprep.subr.mxu0 0.0
  %6763 = vmatpush2.msra.mxu0 0.0
  %6764 = vmatprep.subr.mxu0 0.0
  %6765 = vmatpush2.msra.mxu0 0.0
  %6766 = vmatprep.subr.mxu0 0.0
  %6767 = vmatpush2.msra.mxu0 0.0
  %6768 = vmatprep.subr.mxu0 0.0
  %6769 = vmatpush2.msra.mxu0 0.0
  %6770 = vmatprep.subr.mxu0 0.0
  %6771 = vmatpush2.msra.mxu0 0.0
  %6772 = vmatprep.subr.mxu0 0.0
  %6773 = vmatpush2.msra.mxu0 0.0
  %6774 = vmatprep.subr.mxu0 0.0
  %6775 = vmatpush2.msra.mxu0 0.0
  %6776 = vmatprep.subr.mxu0 0.0
  %6777 = vmatpush2.msra.mxu0 0.0
  %6778 = vmatprep.mubr.f32.mxu0 0.0
  %6779 = vmatmul.mubr.f32.gmra.mxu0 %v6634
  %v6780 = vpop.f32.mrf.mxu0
  %v6781 = vadd.f32 0.0, %v6780
  %v6782 = vpop.f32.mrf.mxu0
  %6783 = vdwg.mxu0
  %v6784 = vadd.f32 %v6713, %v6781
  %v6785 = vxor.u32 %v6784, 2147483648
  %v6786 = vmul.f32 %v6785, 1.442695
  %v6787 = vpow.pop %v6786
  %v6788 = vadd.f32 %v6787, 1.0
  %v6789 = vrcp.pop %v6788
  %v6790 = vmul.f32 1.0, %v6789
  %v6791 = vld [vmem:[%s6213 + $0x2] sm:$0x3]
  %6792 = vmatprep.subr.mxu0 0.0
  %6793 = vmatpush1.msra.mxu0 0.0
  %6794 = vmatprep.subr.mxu0 0.0
  %6795 = vmatpush1.msra.mxu0 0.0
  %6796 = vmatprep.subr.mxu0 0.0
  %6797 = vmatpush1.msra.mxu0 0.0
  %6798 = vmatprep.subr.mxu0 0.0
  %6799 = vmatpush1.msra.mxu0 0.0
  %6800 = vmatprep.subr.mxu0 0.0
  %6801 = vmatpush1.msra.mxu0 0.0
  %6802 = vmatprep.subr.mxu0 0.0
  %6803 = vmatpush1.msra.mxu0 0.0
  %6804 = vmatprep.subr.mxu0 0.0
  %6805 = vmatpush1.msra.mxu0 0.0
  %6806 = vmatprep.subr.mxu0 0.0
  %6807 = vmatpush1.msra.mxu0 0.0
  %6808 = vmatprep.subr.mxu0 0.0
  %6809 = vmatpush1.msra.mxu0 0.0
  %6810 = vmatprep.subr.mxu0 0.0
  %6811 = vmatpush1.msra.mxu0 0.0
  %6812 = vmatprep.subr.mxu0 0.0
  %6813 = vmatpush1.msra.mxu0 0.0
  %6814 = vmatprep.subr.mxu0 0.0
  %6815 = vmatpush1.msra.mxu0 0.0
  %6816 = vmatprep.subr.mxu0 0.0
  %6817 = vmatpush1.msra.mxu0 0.0
  %6818 = vmatprep.subr.mxu0 0.0
  %6819 = vmatpush1.msra.mxu0 0.0
  %6820 = vmatprep.subr.mxu0 0.0
  %6821 = vmatpush1.msra.mxu0 %v6314
  %6822 = vmatprep.subr.mxu0 0.0
  %6823 = vmatpush1.msra.mxu0 %v6313
  %6824 = vmatprep.subr.mxu0 0.0
  %6825 = vmatpush2.msra.mxu0 0.0
  %6826 = vmatprep.subr.mxu0 0.0
  %6827 = vmatpush2.msra.mxu0 0.0
  %6828 = vmatprep.subr.mxu0 0.0
  %6829 = vmatpush2.msra.mxu0 0.0
  %6830 = vmatprep.subr.mxu0 0.0
  %6831 = vmatpush2.msra.mxu0 0.0
  %6832 = vmatprep.subr.mxu0 0.0
  %6833 = vmatpush2.msra.mxu0 0.0
  %6834 = vmatprep.subr.mxu0 0.0
  %6835 = vmatpush2.msra.mxu0 0.0
  %6836 = vmatprep.subr.mxu0 0.0
  %6837 = vmatpush2.msra.mxu0 0.0
  %6838 = vmatprep.subr.mxu0 0.0
  %6839 = vmatpush2.msra.mxu0 0.0
  %6840 = vmatprep.subr.mxu0 0.0
  %6841 = vmatpush2.msra.mxu0 0.0
  %6842 = vmatprep.subr.mxu0 0.0
  %6843 = vmatpush2.msra.mxu0 0.0
  %6844 = vmatprep.subr.mxu0 0.0
  %6845 = vmatpush2.msra.mxu0 0.0
  %6846 = vmatprep.subr.mxu0 0.0
  %6847 = vmatpush2.msra.mxu0 0.0
  %6848 = vmatprep.subr.mxu0 0.0
  %6849 = vmatpush2.msra.mxu0 0.0
  %6850 = vmatprep.subr.mxu0 0.0
  %6851 = vmatpush2.msra.mxu0 0.0
  %6852 = vmatprep.subr.mxu0 0.0
  %6853 = vmatpush2.msra.mxu0 0.0
  %6854 = vmatprep.subr.mxu0 0.0
  %6855 = vmatpush2.msra.mxu0 0.0
  %6856 = vmatprep.mubr.f32.mxu0 0.0
  %6857 = vmatmul.mubr.f32.gmra.mxu0 %v6634
  %v6858 = vpop.f32.mrf.mxu0
  %v6859 = vadd.f32 0.0, %v6858
  %v6860 = vpop.f32.mrf.mxu0
  %6861 = vdwg.mxu0
  %v6862 = vadd.f32 %v6791, %v6859
  %v6863 = vtanh.pop %v6862
  %v6864 = vld [vmem:[%s6304 + $0x2] sm:$0x3]
  %6865 = vmatprep.subr.mxu0 0.0
  %6866 = vmatpush1.msra.mxu0 0.0
  %6867 = vmatprep.subr.mxu0 0.0
  %6868 = vmatpush1.msra.mxu0 0.0
  %6869 = vmatprep.subr.mxu0 0.0
  %6870 = vmatpush1.msra.mxu0 0.0
  %6871 = vmatprep.subr.mxu0 0.0
  %6872 = vmatpush1.msra.mxu0 0.0
  %6873 = vmatprep.subr.mxu0 0.0
  %6874 = vmatpush1.msra.mxu0 0.0
  %6875 = vmatprep.subr.mxu0 0.0
  %6876 = vmatpush1.msra.mxu0 0.0
  %6877 = vmatprep.subr.mxu0 0.0
  %6878 = vmatpush1.msra.mxu0 0.0
  %6879 = vmatprep.subr.mxu0 0.0
  %6880 = vmatpush1.msra.mxu0 0.0
  %6881 = vmatprep.subr.mxu0 0.0
  %6882 = vmatpush1.msra.mxu0 0.0
  %6883 = vmatprep.subr.mxu0 0.0
  %6884 = vmatpush1.msra.mxu0 0.0
  %6885 = vmatprep.subr.mxu0 0.0
  %6886 = vmatpush1.msra.mxu0 0.0
  %6887 = vmatprep.subr.mxu0 0.0
  %6888 = vmatpush1.msra.mxu0 0.0
  %6889 = vmatprep.subr.mxu0 0.0
  %6890 = vmatpush1.msra.mxu0 0.0
  %6891 = vmatprep.subr.mxu0 0.0
  %6892 = vmatpush1.msra.mxu0 0.0
  %6893 = vmatprep.subr.mxu0 0.0
  %6894 = vmatpush1.msra.mxu0 %v6317
  %6895 = vmatprep.subr.mxu0 0.0
  %6896 = vmatpush1.msra.mxu0 %v6316
  %6897 = vmatprep.subr.mxu0 0.0
  %6898 = vmatpush2.msra.mxu0 0.0
  %6899 = vmatprep.subr.mxu0 0.0
  %6900 = vmatpush2.msra.mxu0 0.0
  %6901 = vmatprep.subr.mxu0 0.0
  %6902 = vmatpush2.msra.mxu0 0.0
  %6903 = vmatprep.subr.mxu0 0.0
  %6904 = vmatpush2.msra.mxu0 0.0
  %6905 = vmatprep.subr.mxu0 0.0
  %6906 = vmatpush2.msra.mxu0 0.0
  %6907 = vmatprep.subr.mxu0 0.0
  %6908 = vmatpush2.msra.mxu0 0.0
  %6909 = vmatprep.subr.mxu0 0.0
  %6910 = vmatpush2.msra.mxu0 0.0
  %6911 = vmatprep.subr.mxu0 0.0
  %6912 = vmatpush2.msra.mxu0 0.0
  %6913 = vmatprep.subr.mxu0 0.0
  %6914 = vmatpush2.msra.mxu0 0.0
  %6915 = vmatprep.subr.mxu0 0.0
  %6916 = vmatpush2.msra.mxu0 0.0
  %6917 = vmatprep.subr.mxu0 0.0
  %6918 = vmatpush2.msra.mxu0 0.0
  %6919 = vmatprep.subr.mxu0 0.0
  %6920 = vmatpush2.msra.mxu0 0.0
  %6921 = vmatprep.subr.mxu0 0.0
  %6922 = vmatpush2.msra.mxu0 0.0
  %6923 = vmatprep.subr.mxu0 0.0
  %6924 = vmatpush2.msra.mxu0 0.0
  %6925 = vmatprep.subr.mxu0 0.0
  %6926 = vmatpush2.msra.mxu0 0.0
  %6927 = vmatprep.subr.mxu0 0.0
  %6928 = vmatpush2.msra.mxu0 0.0
  %6929 = vmatprep.mubr.f32.mxu0 0.0
  %6930 = vmatmul.mubr.f32.gmra.mxu0 %v6634
  %v6931 = vpop.f32.mrf.mxu0
  %v6932 = vadd.f32 0.0, %v6931
  %v6933 = vpop.f32.mrf.mxu0
  %6934 = vdwg.mxu0
  %v6935 = vadd.f32 %v6864, %v6932
  %v6936 = vxor.u32 %v6935, 2147483648
  %v6937 = vmul.f32 %v6936, 1.442695
  %v6938 = vpow.pop %v6937
  %v6939 = vadd.f32 %v6938, 1.0
  %v6940 = vrcp.pop %v6939
  %v6941 = vmul.f32 1.0, %v6940
  %v6942 = vmul.f32 %v6790, %v6629
  %v6943 = vmul.f32 %v6712, %v6863
  %v6944 = vadd.f32 %v6942, %v6943
  %v6945 = vtanh.pop %v6944
  %v6946 = vmul.f32 %v6941, %v6945
  %v6947 = vld [vmem:[#allocation4 + $0x4] sm:$0x3]
  %v6949 = vsel %vm6031, %v6946, 0
  %6951 = vmatprep.subr.mxu0 0.0
  %6952 = vmatpush1.msra.mxu0 0.0
  %6953 = vmatprep.subr.mxu0 0.0
  %6954 = vmatpush1.msra.mxu0 0.0
  %6955 = vmatprep.subr.mxu0 0.0
  %6956 = vmatpush1.msra.mxu0 0.0
  %6957 = vmatprep.subr.mxu0 0.0
  %6958 = vmatpush1.msra.mxu0 0.0
  %6959 = vmatprep.subr.mxu0 0.0
  %6960 = vmatpush1.msra.mxu0 0.0
  %6961 = vmatprep.subr.mxu0 0.0
  %6962 = vmatpush1.msra.mxu0 0.0
  %6963 = vmatprep.subr.mxu0 0.0
  %6964 = vmatpush1.msra.mxu0 0.0
  %6965 = vmatprep.subr.mxu0 0.0
  %6966 = vmatpush1.msra.mxu0 0.0
  %6967 = vmatprep.subr.mxu0 0.0
  %6968 = vmatpush1.msra.mxu0 0.0
  %6969 = vmatprep.subr.mxu0 0.0
  %6970 = vmatpush1.msra.mxu0 0.0
  %6971 = vmatprep.subr.mxu0 0.0
  %6972 = vmatpush1.msra.mxu0 0.0
  %6973 = vmatprep.subr.mxu0 0.0
  %6974 = vmatpush1.msra.mxu0 0.0
  %6975 = vmatprep.subr.mxu0 0.0
  %6976 = vmatpush1.msra.mxu0 0.0
  %6977 = vmatprep.subr.mxu0 0.0
  %6978 = vmatpush1.msra.mxu0 0.0
  %6979 = vmatprep.subr.mxu0 0.0
  %6980 = vmatpush1.msra.mxu0 %v6308
  %6981 = vmatprep.subr.mxu0 0.0
  %6982 = vmatpush1.msra.mxu0 %v6307
  %6983 = vmatprep.subr.mxu0 0.0
  %6984 = vmatpush2.msra.mxu0 0.0
  %6985 = vmatprep.subr.mxu0 0.0
  %6986 = vmatpush2.msra.mxu0 0.0
  %6987 = vmatprep.subr.mxu0 0.0
  %6988 = vmatpush2.msra.mxu0 0.0
  %6989 = vmatprep.subr.mxu0 0.0
  %6990 = vmatpush2.msra.mxu0 0.0
  %6991 = vmatprep.subr.mxu0 0.0
  %6992 = vmatpush2.msra.mxu0 0.0
  %6993 = vmatprep.subr.mxu0 0.0
  %6994 = vmatpush2.msra.mxu0 0.0
  %6995 = vmatprep.subr.mxu0 0.0
  %6996 = vmatpush2.msra.mxu0 0.0
  %6997 = vmatprep.subr.mxu0 0.0
  %6998 = vmatpush2.msra.mxu0 0.0
  %6999 = vmatprep.subr.mxu0 0.0
  %7000 = vmatpush2.msra.mxu0 0.0
  %7001 = vmatprep.subr.mxu0 0.0
  %7002 = vmatpush2.msra.mxu0 0.0
  %7003 = vmatprep.subr.mxu0 0.0
  %7004 = vmatpush2.msra.mxu0 0.0
  %7005 = vmatprep.subr.mxu0 0.0
  %7006 = vmatpush2.msra.mxu0 0.0
  %7007 = vmatprep.subr.mxu0 0.0
  %7008 = vmatpush2.msra.mxu0 0.0
  %7009 = vmatprep.subr.mxu0 0.0
  %7010 = vmatpush2.msra.mxu0 0.0
  %7011 = vmatprep.subr.mxu0 0.0
  %7012 = vmatpush2.msra.mxu0 0.0
  %7013 = vmatprep.subr.mxu0 0.0
  %7014 = vmatpush2.msra.mxu0 0.0
  %7015 = vmatprep.mubr.f32.mxu0 0.0
  %7016 = vmatmul.mubr.f32.gmra.mxu0 %v6949
  %v7017 = vpop.f32.mrf.mxu0
  %v7018 = vadd.f32 0.0, %v7017
  %v7019 = vpop.f32.mrf.mxu0
  %7020 = vdwg.mxu0
  %v7021 = vadd.f32 %v6947, %v7018
  %v7022 = vxor.u32 %v7021, 2147483648
  %v7023 = vmul.f32 %v7022, 1.442695
  %v7024 = vpow.pop %v7023
  %v7025 = vadd.f32 %v7024, 1.0
  %v7026 = vrcp.pop %v7025
  %v7027 = vmul.f32 1.0, %v7026
  %v7028 = vld [vmem:[%s6122 + $0x4] sm:$0x3]
  %7029 = vmatprep.subr.mxu0 0.0
  %7030 = vmatpush1.msra.mxu0 0.0
  %7031 = vmatprep.subr.mxu0 0.0
  %7032 = vmatpush1.msra.mxu0 0.0
  %7033 = vmatprep.subr.mxu0 0.0
  %7034 = vmatpush1.msra.mxu0 0.0
  %7035 = vmatprep.subr.mxu0 0.0
  %7036 = vmatpush1.msra.mxu0 0.0
  %7037 = vmatprep.subr.mxu0 0.0
  %7038 = vmatpush1.msra.mxu0 0.0
  %7039 = vmatprep.subr.mxu0 0.0
  %7040 = vmatpush1.msra.mxu0 0.0
  %7041 = vmatprep.subr.mxu0 0.0
  %7042 = vmatpush1.msra.mxu0 0.0
  %7043 = vmatprep.subr.mxu0 0.0
  %7044 = vmatpush1.msra.mxu0 0.0
  %7045 = vmatprep.subr.mxu0 0.0
  %7046 = vmatpush1.msra.mxu0 0.0
  %7047 = vmatprep.subr.mxu0 0.0
  %7048 = vmatpush1.msra.mxu0 0.0
  %7049 = vmatprep.subr.mxu0 0.0
  %7050 = vmatpush1.msra.mxu0 0.0
  %7051 = vmatprep.subr.mxu0 0.0
  %7052 = vmatpush1.msra.mxu0 0.0
  %7053 = vmatprep.subr.mxu0 0.0
  %7054 = vmatpush1.msra.mxu0 0.0
  %7055 = vmatprep.subr.mxu0 0.0
  %7056 = vmatpush1.msra.mxu0 0.0
  %7057 = vmatprep.subr.mxu0 0.0
  %7058 = vmatpush1.msra.mxu0 %v6311
  %7059 = vmatprep.subr.mxu0 0.0
  %7060 = vmatpush1.msra.mxu0 %v6310
  %7061 = vmatprep.subr.mxu0 0.0
  %7062 = vmatpush2.msra.mxu0 0.0
  %7063 = vmatprep.subr.mxu0 0.0
  %7064 = vmatpush2.msra.mxu0 0.0
  %7065 = vmatprep.subr.mxu0 0.0
  %7066 = vmatpush2.msra.mxu0 0.0
  %7067 = vmatprep.subr.mxu0 0.0
  %7068 = vmatpush2.msra.mxu0 0.0
  %7069 = vmatprep.subr.mxu0 0.0
  %7070 = vmatpush2.msra.mxu0 0.0
  %7071 = vmatprep.subr.mxu0 0.0
  %7072 = vmatpush2.msra.mxu0 0.0
  %7073 = vmatprep.subr.mxu0 0.0
  %7074 = vmatpush2.msra.mxu0 0.0
  %7075 = vmatprep.subr.mxu0 0.0
  %7076 = vmatpush2.msra.mxu0 0.0
  %7077 = vmatprep.subr.mxu0 0.0
  %7078 = vmatpush2.msra.mxu0 0.0
  %7079 = vmatprep.subr.mxu0 0.0
  %7080 = vmatpush2.msra.mxu0 0.0
  %7081 = vmatprep.subr.mxu0 0.0
  %7082 = vmatpush2.msra.mxu0 0.0
  %7083 = vmatprep.subr.mxu0 0.0
  %7084 = vmatpush2.msra.mxu0 0.0
  %7085 = vmatprep.subr.mxu0 0.0
  %7086 = vmatpush2.msra.mxu0 0.0
  %7087 = vmatprep.subr.mxu0 0.0
  %7088 = vmatpush2.msra.mxu0 0.0
  %7089 = vmatprep.subr.mxu0 0.0
  %7090 = vmatpush2.msra.mxu0 0.0
  %7091 = vmatprep.subr.mxu0 0.0
  %7092 = vmatpush2.msra.mxu0 0.0
  %7093 = vmatprep.mubr.f32.mxu0 0.0
  %7094 = vmatmul.mubr.f32.gmra.mxu0 %v6949
  %v7095 = vpop.f32.mrf.mxu0
  %v7096 = vadd.f32 0.0, %v7095
  %v7097 = vpop.f32.mrf.mxu0
  %7098 = vdwg.mxu0
  %v7099 = vadd.f32 %v7028, %v7096
  %v7100 = vxor.u32 %v7099, 2147483648
  %v7101 = vmul.f32 %v7100, 1.442695
  %v7102 = vpow.pop %v7101
  %v7103 = vadd.f32 %v7102, 1.0
  %v7104 = vrcp.pop %v7103
  %v7105 = vmul.f32 1.0, %v7104
  %v7106 = vld [vmem:[%s6213 + $0x4] sm:$0x3]
  %7107 = vmatprep.subr.mxu0 0.0
  %7108 = vmatpush1.msra.mxu0 0.0
  %7109 = vmatprep.subr.mxu0 0.0
  %7110 = vmatpush1.msra.mxu0 0.0
  %7111 = vmatprep.subr.mxu0 0.0
  %7112 = vmatpush1.msra.mxu0 0.0
  %7113 = vmatprep.subr.mxu0 0.0
  %7114 = vmatpush1.msra.mxu0 0.0
  %7115 = vmatprep.subr.mxu0 0.0
  %7116 = vmatpush1.msra.mxu0 0.0
  %7117 = vmatprep.subr.mxu0 0.0
  %7118 = vmatpush1.msra.mxu0 0.0
  %7119 = vmatprep.subr.mxu0 0.0
  %7120 = vmatpush1.msra.mxu0 0.0
  %7121 = vmatprep.subr.mxu0 0.0
  %7122 = vmatpush1.msra.mxu0 0.0
  %7123 = vmatprep.subr.mxu0 0.0
  %7124 = vmatpush1.msra.mxu0 0.0
  %7125 = vmatprep.subr.mxu0 0.0
  %7126 = vmatpush1.msra.mxu0 0.0
  %7127 = vmatprep.subr.mxu0 0.0
  %7128 = vmatpush1.msra.mxu0 0.0
  %7129 = vmatprep.subr.mxu0 0.0
  %7130 = vmatpush1.msra.mxu0 0.0
  %7131 = vmatprep.subr.mxu0 0.0
  %7132 = vmatpush1.msra.mxu0 0.0
  %7133 = vmatprep.subr.mxu0 0.0
  %7134 = vmatpush1.msra.mxu0 0.0
  %7135 = vmatprep.subr.mxu0 0.0
  %7136 = vmatpush1.msra.mxu0 %v6314
  %7137 = vmatprep.subr.mxu0 0.0
  %7138 = vmatpush1.msra.mxu0 %v6313
  %7139 = vmatprep.subr.mxu0 0.0
  %7140 = vmatpush2.msra.mxu0 0.0
  %7141 = vmatprep.subr.mxu0 0.0
  %7142 = vmatpush2.msra.mxu0 0.0
  %7143 = vmatprep.subr.mxu0 0.0
  %7144 = vmatpush2.msra.mxu0 0.0
  %7145 = vmatprep.subr.mxu0 0.0
  %7146 = vmatpush2.msra.mxu0 0.0
  %7147 = vmatprep.subr.mxu0 0.0
  %7148 = vmatpush2.msra.mxu0 0.0
  %7149 = vmatprep.subr.mxu0 0.0
  %7150 = vmatpush2.msra.mxu0 0.0
  %7151 = vmatprep.subr.mxu0 0.0
  %7152 = vmatpush2.msra.mxu0 0.0
  %7153 = vmatprep.subr.mxu0 0.0
  %7154 = vmatpush2.msra.mxu0 0.0
  %7155 = vmatprep.subr.mxu0 0.0
  %7156 = vmatpush2.msra.mxu0 0.0
  %7157 = vmatprep.subr.mxu0 0.0
  %7158 = vmatpush2.msra.mxu0 0.0
  %7159 = vmatprep.subr.mxu0 0.0
  %7160 = vmatpush2.msra.mxu0 0.0
  %7161 = vmatprep.subr.mxu0 0.0
  %7162 = vmatpush2.msra.mxu0 0.0
  %7163 = vmatprep.subr.mxu0 0.0
  %7164 = vmatpush2.msra.mxu0 0.0
  %7165 = vmatprep.subr.mxu0 0.0
  %7166 = vmatpush2.msra.mxu0 0.0
  %7167 = vmatprep.subr.mxu0 0.0
  %7168 = vmatpush2.msra.mxu0 0.0
  %7169 = vmatprep.subr.mxu0 0.0
  %7170 = vmatpush2.msra.mxu0 0.0
  %7171 = vmatprep.mubr.f32.mxu0 0.0
  %7172 = vmatmul.mubr.f32.gmra.mxu0 %v6949
  %v7173 = vpop.f32.mrf.mxu0
  %v7174 = vadd.f32 0.0, %v7173
  %v7175 = vpop.f32.mrf.mxu0
  %7176 = vdwg.mxu0
  %v7177 = vadd.f32 %v7106, %v7174
  %v7178 = vtanh.pop %v7177
  %v7179 = vld [vmem:[%s6304 + $0x4] sm:$0x3]
  %7180 = vmatprep.subr.mxu0 0.0
  %7181 = vmatpush1.msra.mxu0 0.0
  %7182 = vmatprep.subr.mxu0 0.0
  %7183 = vmatpush1.msra.mxu0 0.0
  %7184 = vmatprep.subr.mxu0 0.0
  %7185 = vmatpush1.msra.mxu0 0.0
  %7186 = vmatprep.subr.mxu0 0.0
  %7187 = vmatpush1.msra.mxu0 0.0
  %7188 = vmatprep.subr.mxu0 0.0
  %7189 = vmatpush1.msra.mxu0 0.0
  %7190 = vmatprep.subr.mxu0 0.0
  %7191 = vmatpush1.msra.mxu0 0.0
  %7192 = vmatprep.subr.mxu0 0.0
  %7193 = vmatpush1.msra.mxu0 0.0
  %7194 = vmatprep.subr.mxu0 0.0
  %7195 = vmatpush1.msra.mxu0 0.0
  %7196 = vmatprep.subr.mxu0 0.0
  %7197 = vmatpush1.msra.mxu0 0.0
  %7198 = vmatprep.subr.mxu0 0.0
  %7199 = vmatpush1.msra.mxu0 0.0
  %7200 = vmatprep.subr.mxu0 0.0
  %7201 = vmatpush1.msra.mxu0 0.0
  %7202 = vmatprep.subr.mxu0 0.0
  %7203 = vmatpush1.msra.mxu0 0.0
  %7204 = vmatprep.subr.mxu0 0.0
  %7205 = vmatpush1.msra.mxu0 0.0
  %7206 = vmatprep.subr.mxu0 0.0
  %7207 = vmatpush1.msra.mxu0 0.0
  %7208 = vmatprep.subr.mxu0 0.0
  %7209 = vmatpush1.msra.mxu0 %v6317
  %7210 = vmatprep.subr.mxu0 0.0
  %7211 = vmatpush1.msra.mxu0 %v6316
  %7212 = vmatprep.subr.mxu0 0.0
  %7213 = vmatpush2.msra.mxu0 0.0
  %7214 = vmatprep.subr.mxu0 0.0
  %7215 = vmatpush2.msra.mxu0 0.0
  %7216 = vmatprep.subr.mxu0 0.0
  %7217 = vmatpush2.msra.mxu0 0.0
  %7218 = vmatprep.subr.mxu0 0.0
  %7219 = vmatpush2.msra.mxu0 0.0
  %7220 = vmatprep.subr.mxu0 0.0
  %7221 = vmatpush2.msra.mxu0 0.0
  %7222 = vmatprep.subr.mxu0 0.0
  %7223 = vmatpush2.msra.mxu0 0.0
  %7224 = vmatprep.subr.mxu0 0.0
  %7225 = vmatpush2.msra.mxu0 0.0
  %7226 = vmatprep.subr.mxu0 0.0
  %7227 = vmatpush2.msra.mxu0 0.0
  %7228 = vmatprep.subr.mxu0 0.0
  %7229 = vmatpush2.msra.mxu0 0.0
  %7230 = vmatprep.subr.mxu0 0.0
  %7231 = vmatpush2.msra.mxu0 0.0
  %7232 = vmatprep.subr.mxu0 0.0
  %7233 = vmatpush2.msra.mxu0 0.0
  %7234 = vmatprep.subr.mxu0 0.0
  %7235 = vmatpush2.msra.mxu0 0.0
  %7236 = vmatprep.subr.mxu0 0.0
  %7237 = vmatpush2.msra.mxu0 0.0
  %7238 = vmatprep.subr.mxu0 0.0
  %7239 = vmatpush2.msra.mxu0 0.0
  %7240 = vmatprep.subr.mxu0 0.0
  %7241 = vmatpush2.msra.mxu0 0.0
  %7242 = vmatprep.subr.mxu0 0.0
  %7243 = vmatpush2.msra.mxu0 0.0
  %7244 = vmatprep.mubr.f32.mxu0 0.0
  %7245 = vmatmul.mubr.f32.gmra.mxu0 %v6949
  %v7246 = vpop.f32.mrf.mxu0
  %v7247 = vadd.f32 0.0, %v7246
  %v7248 = vpop.f32.mrf.mxu0
  %7249 = vdwg.mxu0
  %v7250 = vadd.f32 %v7179, %v7247
  %v7251 = vxor.u32 %v7250, 2147483648
  %v7252 = vmul.f32 %v7251, 1.442695
  %v7253 = vpow.pop %v7252
  %v7254 = vadd.f32 %v7253, 1.0
  %v7255 = vrcp.pop %v7254
  %v7256 = vmul.f32 1.0, %v7255
  %v7257 = vmul.f32 %v7105, %v6944
  %v7258 = vmul.f32 %v7027, %v7178
  %v7259 = vadd.f32 %v7257, %v7258
  %v7260 = vtanh.pop %v7259
  %v7261 = vmul.f32 %v7256, %v7260
  %v7262 = vld [vmem:[#allocation4 + $0x6] sm:$0x3]
  %v7264 = vsel %vm6031, %v7261, 0
  %7266 = vmatprep.subr.mxu0 0.0
  %7267 = vmatpush1.msra.mxu0 0.0
  %7268 = vmatprep.subr.mxu0 0.0
  %7269 = vmatpush1.msra.mxu0 0.0
  %7270 = vmatprep.subr.mxu0 0.0
  %7271 = vmatpush1.msra.mxu0 0.0
  %7272 = vmatprep.subr.mxu0 0.0
  %7273 = vmatpush1.msra.mxu0 0.0
  %7274 = vmatprep.subr.mxu0 0.0
  %7275 = vmatpush1.msra.mxu0 0.0
  %7276 = vmatprep.subr.mxu0 0.0
  %7277 = vmatpush1.msra.mxu0 0.0
  %7278 = vmatprep.subr.mxu0 0.0
  %7279 = vmatpush1.msra.mxu0 0.0
  %7280 = vmatprep.subr.mxu0 0.0
  %7281 = vmatpush1.msra.mxu0 0.0
  %7282 = vmatprep.subr.mxu0 0.0
  %7283 = vmatpush1.msra.mxu0 0.0
  %7284 = vmatprep.subr.mxu0 0.0
  %7285 = vmatpush1.msra.mxu0 0.0
  %7286 = vmatprep.subr.mxu0 0.0
  %7287 = vmatpush1.msra.mxu0 0.0
  %7288 = vmatprep.subr.mxu0 0.0
  %7289 = vmatpush1.msra.mxu0 0.0
  %7290 = vmatprep.subr.mxu0 0.0
  %7291 = vmatpush1.msra.mxu0 0.0
  %7292 = vmatprep.subr.mxu0 0.0
  %7293 = vmatpush1.msra.mxu0 0.0
  %7294 = vmatprep.subr.mxu0 0.0
  %7295 = vmatpush1.msra.mxu0 %v6308
  %7296 = vmatprep.subr.mxu0 0.0
  %7297 = vmatpush1.msra.mxu0 %v6307
  %7298 = vmatprep.subr.mxu0 0.0
  %7299 = vmatpush2.msra.mxu0 0.0
  %7300 = vmatprep.subr.mxu0 0.0
  %7301 = vmatpush2.msra.mxu0 0.0
  %7302 = vmatprep.subr.mxu0 0.0
  %7303 = vmatpush2.msra.mxu0 0.0
  %7304 = vmatprep.subr.mxu0 0.0
  %7305 = vmatpush2.msra.mxu0 0.0
  %7306 = vmatprep.subr.mxu0 0.0
  %7307 = vmatpush2.msra.mxu0 0.0
  %7308 = vmatprep.subr.mxu0 0.0
  %7309 = vmatpush2.msra.mxu0 0.0
  %7310 = vmatprep.subr.mxu0 0.0
  %7311 = vmatpush2.msra.mxu0 0.0
  %7312 = vmatprep.subr.mxu0 0.0
  %7313 = vmatpush2.msra.mxu0 0.0
  %7314 = vmatprep.subr.mxu0 0.0
  %7315 = vmatpush2.msra.mxu0 0.0
  %7316 = vmatprep.subr.mxu0 0.0
  %7317 = vmatpush2.msra.mxu0 0.0
  %7318 = vmatprep.subr.mxu0 0.0
  %7319 = vmatpush2.msra.mxu0 0.0
  %7320 = vmatprep.subr.mxu0 0.0
  %7321 = vmatpush2.msra.mxu0 0.0
  %7322 = vmatprep.subr.mxu0 0.0
  %7323 = vmatpush2.msra.mxu0 0.0
  %7324 = vmatprep.subr.mxu0 0.0
  %7325 = vmatpush2.msra.mxu0 0.0
  %7326 = vmatprep.subr.mxu0 0.0
  %7327 = vmatpush2.msra.mxu0 0.0
  %7328 = vmatprep.subr.mxu0 0.0
  %7329 = vmatpush2.msra.mxu0 0.0
  %7330 = vmatprep.mubr.f32.mxu0 0.0
  %7331 = vmatmul.mubr.f32.gmra.mxu0 %v7264
  %v7332 = vpop.f32.mrf.mxu0
  %v7333 = vadd.f32 0.0, %v7332
  %v7334 = vpop.f32.mrf.mxu0
  %7335 = vdwg.mxu0
  %v7336 = vadd.f32 %v7262, %v7333
  %v7337 = vxor.u32 %v7336, 2147483648
  %v7338 = vmul.f32 %v7337, 1.442695
  %v7339 = vpow.pop %v7338
  %v7340 = vadd.f32 %v7339, 1.0
  %v7341 = vrcp.pop %v7340
  %v7342 = vmul.f32 1.0, %v7341
  %v7343 = vld [vmem:[%s6122 + $0x6] sm:$0x3]
  %7344 = vmatprep.subr.mxu0 0.0
  %7345 = vmatpush1.msra.mxu0 0.0
  %7346 = vmatprep.subr.mxu0 0.0
  %7347 = vmatpush1.msra.mxu0 0.0
  %7348 = vmatprep.subr.mxu0 0.0
  %7349 = vmatpush1.msra.mxu0 0.0
  %7350 = vmatprep.subr.mxu0 0.0
  %7351 = vmatpush1.msra.mxu0 0.0
  %7352 = vmatprep.subr.mxu0 0.0
  %7353 = vmatpush1.msra.mxu0 0.0
  %7354 = vmatprep.subr.mxu0 0.0
  %7355 = vmatpush1.msra.mxu0 0.0
  %7356 = vmatprep.subr.mxu0 0.0
  %7357 = vmatpush1.msra.mxu0 0.0
  %7358 = vmatprep.subr.mxu0 0.0
  %7359 = vmatpush1.msra.mxu0 0.0
  %7360 = vmatprep.subr.mxu0 0.0
  %7361 = vmatpush1.msra.mxu0 0.0
  %7362 = vmatprep.subr.mxu0 0.0
  %7363 = vmatpush1.msra.mxu0 0.0
  %7364 = vmatprep.subr.mxu0 0.0
  %7365 = vmatpush1.msra.mxu0 0.0
  %7366 = vmatprep.subr.mxu0 0.0
  %7367 = vmatpush1.msra.mxu0 0.0
  %7368 = vmatprep.subr.mxu0 0.0
  %7369 = vmatpush1.msra.mxu0 0.0
  %7370 = vmatprep.subr.mxu0 0.0
  %7371 = vmatpush1.msra.mxu0 0.0
  %7372 = vmatprep.subr.mxu0 0.0
  %7373 = vmatpush1.msra.mxu0 %v6311
  %7374 = vmatprep.subr.mxu0 0.0
  %7375 = vmatpush1.msra.mxu0 %v6310
  %7376 = vmatprep.subr.mxu0 0.0
  %7377 = vmatpush2.msra.mxu0 0.0
  %7378 = vmatprep.subr.mxu0 0.0
  %7379 = vmatpush2.msra.mxu0 0.0
  %7380 = vmatprep.subr.mxu0 0.0
  %7381 = vmatpush2.msra.mxu0 0.0
  %7382 = vmatprep.subr.mxu0 0.0
  %7383 = vmatpush2.msra.mxu0 0.0
  %7384 = vmatprep.subr.mxu0 0.0
  %7385 = vmatpush2.msra.mxu0 0.0
  %7386 = vmatprep.subr.mxu0 0.0
  %7387 = vmatpush2.msra.mxu0 0.0
  %7388 = vmatprep.subr.mxu0 0.0
  %7389 = vmatpush2.msra.mxu0 0.0
  %7390 = vmatprep.subr.mxu0 0.0
  %7391 = vmatpush2.msra.mxu0 0.0
  %7392 = vmatprep.subr.mxu0 0.0
  %7393 = vmatpush2.msra.mxu0 0.0
  %7394 = vmatprep.subr.mxu0 0.0
  %7395 = vmatpush2.msra.mxu0 0.0
  %7396 = vmatprep.subr.mxu0 0.0
  %7397 = vmatpush2.msra.mxu0 0.0
  %7398 = vmatprep.subr.mxu0 0.0
  %7399 = vmatpush2.msra.mxu0 0.0
  %7400 = vmatprep.subr.mxu0 0.0
  %7401 = vmatpush2.msra.mxu0 0.0
  %7402 = vmatprep.subr.mxu0 0.0
  %7403 = vmatpush2.msra.mxu0 0.0
  %7404 = vmatprep.subr.mxu0 0.0
  %7405 = vmatpush2.msra.mxu0 0.0
  %7406 = vmatprep.subr.mxu0 0.0
  %7407 = vmatpush2.msra.mxu0 0.0
  %7408 = vmatprep.mubr.f32.mxu0 0.0
  %7409 = vmatmul.mubr.f32.gmra.mxu0 %v7264
  %v7410 = vpop.f32.mrf.mxu0
  %v7411 = vadd.f32 0.0, %v7410
  %v7412 = vpop.f32.mrf.mxu0
  %7413 = vdwg.mxu0
  %v7414 = vadd.f32 %v7343, %v7411
  %v7415 = vxor.u32 %v7414, 2147483648
  %v7416 = vmul.f32 %v7415, 1.442695
  %v7417 = vpow.pop %v7416
  %v7418 = vadd.f32 %v7417, 1.0
  %v7419 = vrcp.pop %v7418
  %v7420 = vmul.f32 1.0, %v7419
  %v7421 = vld [vmem:[%s6213 + $0x6] sm:$0x3]
  %7422 = vmatprep.subr.mxu0 0.0
  %7423 = vmatpush1.msra.mxu0 0.0
  %7424 = vmatprep.subr.mxu0 0.0
  %7425 = vmatpush1.msra.mxu0 0.0
  %7426 = vmatprep.subr.mxu0 0.0
  %7427 = vmatpush1.msra.mxu0 0.0
  %7428 = vmatprep.subr.mxu0 0.0
  %7429 = vmatpush1.msra.mxu0 0.0
  %7430 = vmatprep.subr.mxu0 0.0
  %7431 = vmatpush1.msra.mxu0 0.0
  %7432 = vmatprep.subr.mxu0 0.0
  %7433 = vmatpush1.msra.mxu0 0.0
  %7434 = vmatprep.subr.mxu0 0.0
  %7435 = vmatpush1.msra.mxu0 0.0
  %7436 = vmatprep.subr.mxu0 0.0
  %7437 = vmatpush1.msra.mxu0 0.0
  %7438 = vmatprep.subr.mxu0 0.0
  %7439 = vmatpush1.msra.mxu0 0.0
  %7440 = vmatprep.subr.mxu0 0.0
  %7441 = vmatpush1.msra.mxu0 0.0
  %7442 = vmatprep.subr.mxu0 0.0
  %7443 = vmatpush1.msra.mxu0 0.0
  %7444 = vmatprep.subr.mxu0 0.0
  %7445 = vmatpush1.msra.mxu0 0.0
  %7446 = vmatprep.subr.mxu0 0.0
  %7447 = vmatpush1.msra.mxu0 0.0
  %7448 = vmatprep.subr.mxu0 0.0
  %7449 = vmatpush1.msra.mxu0 0.0
  %7450 = vmatprep.subr.mxu0 0.0
  %7451 = vmatpush1.msra.mxu0 %v6314
  %7452 = vmatprep.subr.mxu0 0.0
  %7453 = vmatpush1.msra.mxu0 %v6313
  %7454 = vmatprep.subr.mxu0 0.0
  %7455 = vmatpush2.msra.mxu0 0.0
  %7456 = vmatprep.subr.mxu0 0.0
  %7457 = vmatpush2.msra.mxu0 0.0
  %7458 = vmatprep.subr.mxu0 0.0
  %7459 = vmatpush2.msra.mxu0 0.0
  %7460 = vmatprep.subr.mxu0 0.0
  %7461 = vmatpush2.msra.mxu0 0.0
  %7462 = vmatprep.subr.mxu0 0.0
  %7463 = vmatpush2.msra.mxu0 0.0
  %7464 = vmatprep.subr.mxu0 0.0
  %7465 = vmatpush2.msra.mxu0 0.0
  %7466 = vmatprep.subr.mxu0 0.0
  %7467 = vmatpush2.msra.mxu0 0.0
  %7468 = vmatprep.subr.mxu0 0.0
  %7469 = vmatpush2.msra.mxu0 0.0
  %7470 = vmatprep.subr.mxu0 0.0
  %7471 = vmatpush2.msra.mxu0 0.0
  %7472 = vmatprep.subr.mxu0 0.0
  %7473 = vmatpush2.msra.mxu0 0.0
  %7474 = vmatprep.subr.mxu0 0.0
  %7475 = vmatpush2.msra.mxu0 0.0
  %7476 = vmatprep.subr.mxu0 0.0
  %7477 = vmatpush2.msra.mxu0 0.0
  %7478 = vmatprep.subr.mxu0 0.0
  %7479 = vmatpush2.msra.mxu0 0.0
  %7480 = vmatprep.subr.mxu0 0.0
  %7481 = vmatpush2.msra.mxu0 0.0
  %7482 = vmatprep.subr.mxu0 0.0
  %7483 = vmatpush2.msra.mxu0 0.0
  %7484 = vmatprep.subr.mxu0 0.0
  %7485 = vmatpush2.msra.mxu0 0.0
  %7486 = vmatprep.mubr.f32.mxu0 0.0
  %7487 = vmatmul.mubr.f32.gmra.mxu0 %v7264
  %v7488 = vpop.f32.mrf.mxu0
  %v7489 = vadd.f32 0.0, %v7488
  %v7490 = vpop.f32.mrf.mxu0
  %7491 = vdwg.mxu0
  %v7492 = vadd.f32 %v7421, %v7489
  %v7493 = vtanh.pop %v7492
  %v7494 = vld [vmem:[%s6304 + $0x6] sm:$0x3]
  %7495 = vmatprep.subr.mxu0 0.0
  %7496 = vmatpush1.msra.mxu0 0.0
  %7497 = vmatprep.subr.mxu0 0.0
  %7498 = vmatpush1.msra.mxu0 0.0
  %7499 = vmatprep.subr.mxu0 0.0
  %7500 = vmatpush1.msra.mxu0 0.0
  %7501 = vmatprep.subr.mxu0 0.0
  %7502 = vmatpush1.msra.mxu0 0.0
  %7503 = vmatprep.subr.mxu0 0.0
  %7504 = vmatpush1.msra.mxu0 0.0
  %7505 = vmatprep.subr.mxu0 0.0
  %7506 = vmatpush1.msra.mxu0 0.0
  %7507 = vmatprep.subr.mxu0 0.0
  %7508 = vmatpush1.msra.mxu0 0.0
  %7509 = vmatprep.subr.mxu0 0.0
  %7510 = vmatpush1.msra.mxu0 0.0
  %7511 = vmatprep.subr.mxu0 0.0
  %7512 = vmatpush1.msra.mxu0 0.0
  %7513 = vmatprep.subr.mxu0 0.0
  %7514 = vmatpush1.msra.mxu0 0.0
  %7515 = vmatprep.subr.mxu0 0.0
  %7516 = vmatpush1.msra.mxu0 0.0
  %7517 = vmatprep.subr.mxu0 0.0
  %7518 = vmatpush1.msra.mxu0 0.0
  %7519 = vmatprep.subr.mxu0 0.0
  %7520 = vmatpush1.msra.mxu0 0.0
  %7521 = vmatprep.subr.mxu0 0.0
  %7522 = vmatpush1.msra.mxu0 0.0
  %7523 = vmatprep.subr.mxu0 0.0
  %7524 = vmatpush1.msra.mxu0 %v6317
  %7525 = vmatprep.subr.mxu0 0.0
  %7526 = vmatpush1.msra.mxu0 %v6316
  %7527 = vmatprep.subr.mxu0 0.0
  %7528 = vmatpush2.msra.mxu0 0.0
  %7529 = vmatprep.subr.mxu0 0.0
  %7530 = vmatpush2.msra.mxu0 0.0
  %7531 = vmatprep.subr.mxu0 0.0
  %7532 = vmatpush2.msra.mxu0 0.0
  %7533 = vmatprep.subr.mxu0 0.0
  %7534 = vmatpush2.msra.mxu0 0.0
  %7535 = vmatprep.subr.mxu0 0.0
  %7536 = vmatpush2.msra.mxu0 0.0
  %7537 = vmatprep.subr.mxu0 0.0
  %7538 = vmatpush2.msra.mxu0 0.0
  %7539 = vmatprep.subr.mxu0 0.0
  %7540 = vmatpush2.msra.mxu0 0.0
  %7541 = vmatprep.subr.mxu0 0.0
  %7542 = vmatpush2.msra.mxu0 0.0
  %7543 = vmatprep.subr.mxu0 0.0
  %7544 = vmatpush2.msra.mxu0 0.0
  %7545 = vmatprep.subr.mxu0 0.0
  %7546 = vmatpush2.msra.mxu0 0.0
  %7547 = vmatprep.subr.mxu0 0.0
  %7548 = vmatpush2.msra.mxu0 0.0
  %7549 = vmatprep.subr.mxu0 0.0
  %7550 = vmatpush2.msra.mxu0 0.0
  %7551 = vmatprep.subr.mxu0 0.0
  %7552 = vmatpush2.msra.mxu0 0.0
  %7553 = vmatprep.subr.mxu0 0.0
  %7554 = vmatpush2.msra.mxu0 0.0
  %7555 = vmatprep.subr.mxu0 0.0
  %7556 = vmatpush2.msra.mxu0 0.0
  %7557 = vmatprep.subr.mxu0 0.0
  %7558 = vmatpush2.msra.mxu0 0.0
  %7559 = vmatprep.mubr.f32.mxu0 0.0
  %7560 = vmatmul.mubr.f32.gmra.mxu0 %v7264
  %v7561 = vpop.f32.mrf.mxu0
  %v7562 = vadd.f32 0.0, %v7561
  %v7563 = vpop.f32.mrf.mxu0
  %7564 = vdwg.mxu0
  %v7565 = vadd.f32 %v7494, %v7562
  %v7566 = vxor.u32 %v7565, 2147483648
  %v7567 = vmul.f32 %v7566, 1.442695
  %v7568 = vpow.pop %v7567
  %v7569 = vadd.f32 %v7568, 1.0
  %v7570 = vrcp.pop %v7569
  %v7571 = vmul.f32 1.0, %v7570
  %v7572 = vmul.f32 %v7420, %v7259
  %v7573 = vmul.f32 %v7342, %v7493
  %v7574 = vadd.f32 %v7572, %v7573
  %v7575 = vtanh.pop %v7574
  %v7576 = vmul.f32 %v7571, %v7575
  %v7577 = vld [vmem:[#allocation4 + $0x8] sm:$0x3]
  %v7579 = vsel %vm6031, %v7576, 0
  %7581 = vmatprep.subr.mxu0 0.0
  %7582 = vmatpush1.msra.mxu0 0.0
  %7583 = vmatprep.subr.mxu0 0.0
  %7584 = vmatpush1.msra.mxu0 0.0
  %7585 = vmatprep.subr.mxu0 0.0
  %7586 = vmatpush1.msra.mxu0 0.0
  %7587 = vmatprep.subr.mxu0 0.0
  %7588 = vmatpush1.msra.mxu0 0.0
  %7589 = vmatprep.subr.mxu0 0.0
  %7590 = vmatpush1.msra.mxu0 0.0
  %7591 = vmatprep.subr.mxu0 0.0
  %7592 = vmatpush1.msra.mxu0 0.0
  %7593 = vmatprep.subr.mxu0 0.0
  %7594 = vmatpush1.msra.mxu0 0.0
  %7595 = vmatprep.subr.mxu0 0.0
  %7596 = vmatpush1.msra.mxu0 0.0
  %7597 = vmatprep.subr.mxu0 0.0
  %7598 = vmatpush1.msra.mxu0 0.0
  %7599 = vmatprep.subr.mxu0 0.0
  %7600 = vmatpush1.msra.mxu0 0.0
  %7601 = vmatprep.subr.mxu0 0.0
  %7602 = vmatpush1.msra.mxu0 0.0
  %7603 = vmatprep.subr.mxu0 0.0
  %7604 = vmatpush1.msra.mxu0 0.0
  %7605 = vmatprep.subr.mxu0 0.0
  %7606 = vmatpush1.msra.mxu0 0.0
  %7607 = vmatprep.subr.mxu0 0.0
  %7608 = vmatpush1.msra.mxu0 0.0
  %7609 = vmatprep.subr.mxu0 0.0
  %7610 = vmatpush1.msra.mxu0 %v6308
  %7611 = vmatprep.subr.mxu0 0.0
  %7612 = vmatpush1.msra.mxu0 %v6307
  %7613 = vmatprep.subr.mxu0 0.0
  %7614 = vmatpush2.msra.mxu0 0.0
  %7615 = vmatprep.subr.mxu0 0.0
  %7616 = vmatpush2.msra.mxu0 0.0
  %7617 = vmatprep.subr.mxu0 0.0
  %7618 = vmatpush2.msra.mxu0 0.0
  %7619 = vmatprep.subr.mxu0 0.0
  %7620 = vmatpush2.msra.mxu0 0.0
  %7621 = vmatprep.subr.mxu0 0.0
  %7622 = vmatpush2.msra.mxu0 0.0
  %7623 = vmatprep.subr.mxu0 0.0
  %7624 = vmatpush2.msra.mxu0 0.0
  %7625 = vmatprep.subr.mxu0 0.0
  %7626 = vmatpush2.msra.mxu0 0.0
  %7627 = vmatprep.subr.mxu0 0.0
  %7628 = vmatpush2.msra.mxu0 0.0
  %7629 = vmatprep.subr.mxu0 0.0
  %7630 = vmatpush2.msra.mxu0 0.0
  %7631 = vmatprep.subr.mxu0 0.0
  %7632 = vmatpush2.msra.mxu0 0.0
  %7633 = vmatprep.subr.mxu0 0.0
  %7634 = vmatpush2.msra.mxu0 0.0
  %7635 = vmatprep.subr.mxu0 0.0
  %7636 = vmatpush2.msra.mxu0 0.0
  %7637 = vmatprep.subr.mxu0 0.0
  %7638 = vmatpush2.msra.mxu0 0.0
  %7639 = vmatprep.subr.mxu0 0.0
  %7640 = vmatpush2.msra.mxu0 0.0
  %7641 = vmatprep.subr.mxu0 0.0
  %7642 = vmatpush2.msra.mxu0 0.0
  %7643 = vmatprep.subr.mxu0 0.0
  %7644 = vmatpush2.msra.mxu0 0.0
  %7645 = vmatprep.mubr.f32.mxu0 0.0
  %7646 = vmatmul.mubr.f32.gmra.mxu0 %v7579
  %v7647 = vpop.f32.mrf.mxu0
  %v7648 = vadd.f32 0.0, %v7647
  %v7649 = vpop.f32.mrf.mxu0
  %7650 = vdwg.mxu0
  %v7651 = vadd.f32 %v7577, %v7648
  %v7652 = vxor.u32 %v7651, 2147483648
  %v7653 = vmul.f32 %v7652, 1.442695
  %v7654 = vpow.pop %v7653
  %v7655 = vadd.f32 %v7654, 1.0
  %v7656 = vrcp.pop %v7655
  %v7657 = vmul.f32 1.0, %v7656
  %v7658 = vld [vmem:[%s6122 + $0x8] sm:$0x3]
  %7659 = vmatprep.subr.mxu0 0.0
  %7660 = vmatpush1.msra.mxu0 0.0
  %7661 = vmatprep.subr.mxu0 0.0
  %7662 = vmatpush1.msra.mxu0 0.0
  %7663 = vmatprep.subr.mxu0 0.0
  %7664 = vmatpush1.msra.mxu0 0.0
  %7665 = vmatprep.subr.mxu0 0.0
  %7666 = vmatpush1.msra.mxu0 0.0
  %7667 = vmatprep.subr.mxu0 0.0
  %7668 = vmatpush1.msra.mxu0 0.0
  %7669 = vmatprep.subr.mxu0 0.0
  %7670 = vmatpush1.msra.mxu0 0.0
  %7671 = vmatprep.subr.mxu0 0.0
  %7672 = vmatpush1.msra.mxu0 0.0
  %7673 = vmatprep.subr.mxu0 0.0
  %7674 = vmatpush1.msra.mxu0 0.0
  %7675 = vmatprep.subr.mxu0 0.0
  %7676 = vmatpush1.msra.mxu0 0.0
  %7677 = vmatprep.subr.mxu0 0.0
  %7678 = vmatpush1.msra.mxu0 0.0
  %7679 = vmatprep.subr.mxu0 0.0
  %7680 = vmatpush1.msra.mxu0 0.0
  %7681 = vmatprep.subr.mxu0 0.0
  %7682 = vmatpush1.msra.mxu0 0.0
  %7683 = vmatprep.subr.mxu0 0.0
  %7684 = vmatpush1.msra.mxu0 0.0
  %7685 = vmatprep.subr.mxu0 0.0
  %7686 = vmatpush1.msra.mxu0 0.0
  %7687 = vmatprep.subr.mxu0 0.0
  %7688 = vmatpush1.msra.mxu0 %v6311
  %7689 = vmatprep.subr.mxu0 0.0
  %7690 = vmatpush1.msra.mxu0 %v6310
  %7691 = vmatprep.subr.mxu0 0.0
  %7692 = vmatpush2.msra.mxu0 0.0
  %7693 = vmatprep.subr.mxu0 0.0
  %7694 = vmatpush2.msra.mxu0 0.0
  %7695 = vmatprep.subr.mxu0 0.0
  %7696 = vmatpush2.msra.mxu0 0.0
  %7697 = vmatprep.subr.mxu0 0.0
  %7698 = vmatpush2.msra.mxu0 0.0
  %7699 = vmatprep.subr.mxu0 0.0
  %7700 = vmatpush2.msra.mxu0 0.0
  %7701 = vmatprep.subr.mxu0 0.0
  %7702 = vmatpush2.msra.mxu0 0.0
  %7703 = vmatprep.subr.mxu0 0.0
  %7704 = vmatpush2.msra.mxu0 0.0
  %7705 = vmatprep.subr.mxu0 0.0
  %7706 = vmatpush2.msra.mxu0 0.0
  %7707 = vmatprep.subr.mxu0 0.0
  %7708 = vmatpush2.msra.mxu0 0.0
  %7709 = vmatprep.subr.mxu0 0.0
  %7710 = vmatpush2.msra.mxu0 0.0
  %7711 = vmatprep.subr.mxu0 0.0
  %7712 = vmatpush2.msra.mxu0 0.0
  %7713 = vmatprep.subr.mxu0 0.0
  %7714 = vmatpush2.msra.mxu0 0.0
  %7715 = vmatprep.subr.mxu0 0.0
  %7716 = vmatpush2.msra.mxu0 0.0
  %7717 = vmatprep.subr.mxu0 0.0
  %7718 = vmatpush2.msra.mxu0 0.0
  %7719 = vmatprep.subr.mxu0 0.0
  %7720 = vmatpush2.msra.mxu0 0.0
  %7721 = vmatprep.subr.mxu0 0.0
  %7722 = vmatpush2.msra.mxu0 0.0
  %7723 = vmatprep.mubr.f32.mxu0 0.0
  %7724 = vmatmul.mubr.f32.gmra.mxu0 %v7579
  %v7725 = vpop.f32.mrf.mxu0
  %v7726 = vadd.f32 0.0, %v7725
  %v7727 = vpop.f32.mrf.mxu0
  %7728 = vdwg.mxu0
  %v7729 = vadd.f32 %v7658, %v7726
  %v7730 = vxor.u32 %v7729, 2147483648
  %v7731 = vmul.f32 %v7730, 1.442695
  %v7732 = vpow.pop %v7731
  %v7733 = vadd.f32 %v7732, 1.0
  %v7734 = vrcp.pop %v7733
  %v7735 = vmul.f32 1.0, %v7734
  %v7736 = vld [vmem:[%s6213 + $0x8] sm:$0x3]
  %7737 = vmatprep.subr.mxu0 0.0
  %7738 = vmatpush1.msra.mxu0 0.0
  %7739 = vmatprep.subr.mxu0 0.0
  %7740 = vmatpush1.msra.mxu0 0.0
  %7741 = vmatprep.subr.mxu0 0.0
  %7742 = vmatpush1.msra.mxu0 0.0
  %7743 = vmatprep.subr.mxu0 0.0
  %7744 = vmatpush1.msra.mxu0 0.0
  %7745 = vmatprep.subr.mxu0 0.0
  %7746 = vmatpush1.msra.mxu0 0.0
  %7747 = vmatprep.subr.mxu0 0.0
  %7748 = vmatpush1.msra.mxu0 0.0
  %7749 = vmatprep.subr.mxu0 0.0
  %7750 = vmatpush1.msra.mxu0 0.0
  %7751 = vmatprep.subr.mxu0 0.0
  %7752 = vmatpush1.msra.mxu0 0.0
  %7753 = vmatprep.subr.mxu0 0.0
  %7754 = vmatpush1.msra.mxu0 0.0
  %7755 = vmatprep.subr.mxu0 0.0
  %7756 = vmatpush1.msra.mxu0 0.0
  %7757 = vmatprep.subr.mxu0 0.0
  %7758 = vmatpush1.msra.mxu0 0.0
  %7759 = vmatprep.subr.mxu0 0.0
  %7760 = vmatpush1.msra.mxu0 0.0
  %7761 = vmatprep.subr.mxu0 0.0
  %7762 = vmatpush1.msra.mxu0 0.0
  %7763 = vmatprep.subr.mxu0 0.0
  %7764 = vmatpush1.msra.mxu0 0.0
  %7765 = vmatprep.subr.mxu0 0.0
  %7766 = vmatpush1.msra.mxu0 %v6314
  %7767 = vmatprep.subr.mxu0 0.0
  %7768 = vmatpush1.msra.mxu0 %v6313
  %7769 = vmatprep.subr.mxu0 0.0
  %7770 = vmatpush2.msra.mxu0 0.0
  %7771 = vmatprep.subr.mxu0 0.0
  %7772 = vmatpush2.msra.mxu0 0.0
  %7773 = vmatprep.subr.mxu0 0.0
  %7774 = vmatpush2.msra.mxu0 0.0
  %7775 = vmatprep.subr.mxu0 0.0
  %7776 = vmatpush2.msra.mxu0 0.0
  %7777 = vmatprep.subr.mxu0 0.0
  %7778 = vmatpush2.msra.mxu0 0.0
  %7779 = vmatprep.subr.mxu0 0.0
  %7780 = vmatpush2.msra.mxu0 0.0
  %7781 = vmatprep.subr.mxu0 0.0
  %7782 = vmatpush2.msra.mxu0 0.0
  %7783 = vmatprep.subr.mxu0 0.0
  %7784 = vmatpush2.msra.mxu0 0.0
  %7785 = vmatprep.subr.mxu0 0.0
  %7786 = vmatpush2.msra.mxu0 0.0
  %7787 = vmatprep.subr.mxu0 0.0
  %7788 = vmatpush2.msra.mxu0 0.0
  %7789 = vmatprep.subr.mxu0 0.0
  %7790 = vmatpush2.msra.mxu0 0.0
  %7791 = vmatprep.subr.mxu0 0.0
  %7792 = vmatpush2.msra.mxu0 0.0
  %7793 = vmatprep.subr.mxu0 0.0
  %7794 = vmatpush2.msra.mxu0 0.0
  %7795 = vmatprep.subr.mxu0 0.0
  %7796 = vmatpush2.msra.mxu0 0.0
  %7797 = vmatprep.subr.mxu0 0.0
  %7798 = vmatpush2.msra.mxu0 0.0
  %7799 = vmatprep.subr.mxu0 0.0
  %7800 = vmatpush2.msra.mxu0 0.0
  %7801 = vmatprep.mubr.f32.mxu0 0.0
  %7802 = vmatmul.mubr.f32.gmra.mxu0 %v7579
  %v7803 = vpop.f32.mrf.mxu0
  %v7804 = vadd.f32 0.0, %v7803
  %v7805 = vpop.f32.mrf.mxu0
  %7806 = vdwg.mxu0
  %v7807 = vadd.f32 %v7736, %v7804
  %v7808 = vtanh.pop %v7807
  %v7809 = vld [vmem:[%s6304 + $0x8] sm:$0x3]
  %7810 = vmatprep.subr.mxu0 0.0
  %7811 = vmatpush1.msra.mxu0 0.0
  %7812 = vmatprep.subr.mxu0 0.0
  %7813 = vmatpush1.msra.mxu0 0.0
  %7814 = vmatprep.subr.mxu0 0.0
  %7815 = vmatpush1.msra.mxu0 0.0
  %7816 = vmatprep.subr.mxu0 0.0
  %7817 = vmatpush1.msra.mxu0 0.0
  %7818 = vmatprep.subr.mxu0 0.0
  %7819 = vmatpush1.msra.mxu0 0.0
  %7820 = vmatprep.subr.mxu0 0.0
  %7821 = vmatpush1.msra.mxu0 0.0
  %7822 = vmatprep.subr.mxu0 0.0
  %7823 = vmatpush1.msra.mxu0 0.0
  %7824 = vmatprep.subr.mxu0 0.0
  %7825 = vmatpush1.msra.mxu0 0.0
  %7826 = vmatprep.subr.mxu0 0.0
  %7827 = vmatpush1.msra.mxu0 0.0
  %7828 = vmatprep.subr.mxu0 0.0
  %7829 = vmatpush1.msra.mxu0 0.0
  %7830 = vmatprep.subr.mxu0 0.0
  %7831 = vmatpush1.msra.mxu0 0.0
  %7832 = vmatprep.subr.mxu0 0.0
  %7833 = vmatpush1.msra.mxu0 0.0
  %7834 = vmatprep.subr.mxu0 0.0
  %7835 = vmatpush1.msra.mxu0 0.0
  %7836 = vmatprep.subr.mxu0 0.0
  %7837 = vmatpush1.msra.mxu0 0.0
  %7838 = vmatprep.subr.mxu0 0.0
  %7839 = vmatpush1.msra.mxu0 %v6317
  %7840 = vmatprep.subr.mxu0 0.0
  %7841 = vmatpush1.msra.mxu0 %v6316
  %7842 = vmatprep.subr.mxu0 0.0
  %7843 = vmatpush2.msra.mxu0 0.0
  %7844 = vmatprep.subr.mxu0 0.0
  %7845 = vmatpush2.msra.mxu0 0.0
  %7846 = vmatprep.subr.mxu0 0.0
  %7847 = vmatpush2.msra.mxu0 0.0
  %7848 = vmatprep.subr.mxu0 0.0
  %7849 = vmatpush2.msra.mxu0 0.0
  %7850 = vmatprep.subr.mxu0 0.0
  %7851 = vmatpush2.msra.mxu0 0.0
  %7852 = vmatprep.subr.mxu0 0.0
  %7853 = vmatpush2.msra.mxu0 0.0
  %7854 = vmatprep.subr.mxu0 0.0
  %7855 = vmatpush2.msra.mxu0 0.0
  %7856 = vmatprep.subr.mxu0 0.0
  %7857 = vmatpush2.msra.mxu0 0.0
  %7858 = vmatprep.subr.mxu0 0.0
  %7859 = vmatpush2.msra.mxu0 0.0
  %7860 = vmatprep.subr.mxu0 0.0
  %7861 = vmatpush2.msra.mxu0 0.0
  %7862 = vmatprep.subr.mxu0 0.0
  %7863 = vmatpush2.msra.mxu0 0.0
  %7864 = vmatprep.subr.mxu0 0.0
  %7865 = vmatpush2.msra.mxu0 0.0
  %7866 = vmatprep.subr.mxu0 0.0
  %7867 = vmatpush2.msra.mxu0 0.0
  %7868 = vmatprep.subr.mxu0 0.0
  %7869 = vmatpush2.msra.mxu0 0.0
  %7870 = vmatprep.subr.mxu0 0.0
  %7871 = vmatpush2.msra.mxu0 0.0
  %7872 = vmatprep.subr.mxu0 0.0
  %7873 = vmatpush2.msra.mxu0 0.0
  %7874 = vmatprep.mubr.f32.mxu0 0.0
  %7875 = vmatmul.mubr.f32.gmra.mxu0 %v7579
  %v7876 = vpop.f32.mrf.mxu0
  %v7877 = vadd.f32 0.0, %v7876
  %v7878 = vpop.f32.mrf.mxu0
  %7879 = vdwg.mxu0
  %v7880 = vadd.f32 %v7809, %v7877
  %v7881 = vxor.u32 %v7880, 2147483648
  %v7882 = vmul.f32 %v7881, 1.442695
  %v7883 = vpow.pop %v7882
  %v7884 = vadd.f32 %v7883, 1.0
  %v7885 = vrcp.pop %v7884
  %v7886 = vmul.f32 1.0, %v7885
  %v7887 = vmul.f32 %v7735, %v7574
  %v7888 = vmul.f32 %v7657, %v7808
  %v7889 = vadd.f32 %v7887, %v7888
  %v7890 = vtanh.pop %v7889
  %v7891 = vmul.f32 %v7886, %v7890
  %v7892 = vld [vmem:[#allocation4 + $0xa] sm:$0x3]
  %v7894 = vsel %vm6031, %v7891, 0
  %7896 = vmatprep.subr.mxu0 0.0
  %7897 = vmatpush1.msra.mxu0 0.0
  %7898 = vmatprep.subr.mxu0 0.0
  %7899 = vmatpush1.msra.mxu0 0.0
  %7900 = vmatprep.subr.mxu0 0.0
  %7901 = vmatpush1.msra.mxu0 0.0
  %7902 = vmatprep.subr.mxu0 0.0
  %7903 = vmatpush1.msra.mxu0 0.0
  %7904 = vmatprep.subr.mxu0 0.0
  %7905 = vmatpush1.msra.mxu0 0.0
  %7906 = vmatprep.subr.mxu0 0.0
  %7907 = vmatpush1.msra.mxu0 0.0
  %7908 = vmatprep.subr.mxu0 0.0
  %7909 = vmatpush1.msra.mxu0 0.0
  %7910 = vmatprep.subr.mxu0 0.0
  %7911 = vmatpush1.msra.mxu0 0.0
  %7912 = vmatprep.subr.mxu0 0.0
  %7913 = vmatpush1.msra.mxu0 0.0
  %7914 = vmatprep.subr.mxu0 0.0
  %7915 = vmatpush1.msra.mxu0 0.0
  %7916 = vmatprep.subr.mxu0 0.0
  %7917 = vmatpush1.msra.mxu0 0.0
  %7918 = vmatprep.subr.mxu0 0.0
  %7919 = vmatpush1.msra.mxu0 0.0
  %7920 = vmatprep.subr.mxu0 0.0
  %7921 = vmatpush1.msra.mxu0 0.0
  %7922 = vmatprep.subr.mxu0 0.0
  %7923 = vmatpush1.msra.mxu0 0.0
  %7924 = vmatprep.subr.mxu0 0.0
  %7925 = vmatpush1.msra.mxu0 %v6308
  %7926 = vmatprep.subr.mxu0 0.0
  %7927 = vmatpush1.msra.mxu0 %v6307
  %7928 = vmatprep.subr.mxu0 0.0
  %7929 = vmatpush2.msra.mxu0 0.0
  %7930 = vmatprep.subr.mxu0 0.0
  %7931 = vmatpush2.msra.mxu0 0.0
  %7932 = vmatprep.subr.mxu0 0.0
  %7933 = vmatpush2.msra.mxu0 0.0
  %7934 = vmatprep.subr.mxu0 0.0
  %7935 = vmatpush2.msra.mxu0 0.0
  %7936 = vmatprep.subr.mxu0 0.0
  %7937 = vmatpush2.msra.mxu0 0.0
  %7938 = vmatprep.subr.mxu0 0.0
  %7939 = vmatpush2.msra.mxu0 0.0
  %7940 = vmatprep.subr.mxu0 0.0
  %7941 = vmatpush2.msra.mxu0 0.0
  %7942 = vmatprep.subr.mxu0 0.0
  %7943 = vmatpush2.msra.mxu0 0.0
  %7944 = vmatprep.subr.mxu0 0.0
  %7945 = vmatpush2.msra.mxu0 0.0
  %7946 = vmatprep.subr.mxu0 0.0
  %7947 = vmatpush2.msra.mxu0 0.0
  %7948 = vmatprep.subr.mxu0 0.0
  %7949 = vmatpush2.msra.mxu0 0.0
  %7950 = vmatprep.subr.mxu0 0.0
  %7951 = vmatpush2.msra.mxu0 0.0
  %7952 = vmatprep.subr.mxu0 0.0
  %7953 = vmatpush2.msra.mxu0 0.0
  %7954 = vmatprep.subr.mxu0 0.0
  %7955 = vmatpush2.msra.mxu0 0.0
  %7956 = vmatprep.subr.mxu0 0.0
  %7957 = vmatpush2.msra.mxu0 0.0
  %7958 = vmatprep.subr.mxu0 0.0
  %7959 = vmatpush2.msra.mxu0 0.0
  %7960 = vmatprep.mubr.f32.mxu0 0.0
  %7961 = vmatmul.mubr.f32.gmra.mxu0 %v7894
  %v7962 = vpop.f32.mrf.mxu0
  %v7963 = vadd.f32 0.0, %v7962
  %v7964 = vpop.f32.mrf.mxu0
  %7965 = vdwg.mxu0
  %v7966 = vadd.f32 %v7892, %v7963
  %v7967 = vxor.u32 %v7966, 2147483648
  %v7968 = vmul.f32 %v7967, 1.442695
  %v7969 = vpow.pop %v7968
  %v7970 = vadd.f32 %v7969, 1.0
  %v7971 = vrcp.pop %v7970
  %v7972 = vmul.f32 1.0, %v7971
  %v7973 = vld [vmem:[%s6122 + $0xa] sm:$0x3]
  %7974 = vmatprep.subr.mxu0 0.0
  %7975 = vmatpush1.msra.mxu0 0.0
  %7976 = vmatprep.subr.mxu0 0.0
  %7977 = vmatpush1.msra.mxu0 0.0
  %7978 = vmatprep.subr.mxu0 0.0
  %7979 = vmatpush1.msra.mxu0 0.0
  %7980 = vmatprep.subr.mxu0 0.0
  %7981 = vmatpush1.msra.mxu0 0.0
  %7982 = vmatprep.subr.mxu0 0.0
  %7983 = vmatpush1.msra.mxu0 0.0
  %7984 = vmatprep.subr.mxu0 0.0
  %7985 = vmatpush1.msra.mxu0 0.0
  %7986 = vmatprep.subr.mxu0 0.0
  %7987 = vmatpush1.msra.mxu0 0.0
  %7988 = vmatprep.subr.mxu0 0.0
  %7989 = vmatpush1.msra.mxu0 0.0
  %7990 = vmatprep.subr.mxu0 0.0
  %7991 = vmatpush1.msra.mxu0 0.0
  %7992 = vmatprep.subr.mxu0 0.0
  %7993 = vmatpush1.msra.mxu0 0.0
  %7994 = vmatprep.subr.mxu0 0.0
  %7995 = vmatpush1.msra.mxu0 0.0
  %7996 = vmatprep.subr.mxu0 0.0
  %7997 = vmatpush1.msra.mxu0 0.0
  %7998 = vmatprep.subr.mxu0 0.0
  %7999 = vmatpush1.msra.mxu0 0.0
  %8000 = vmatprep.subr.mxu0 0.0
  %8001 = vmatpush1.msra.mxu0 0.0
  %8002 = vmatprep.subr.mxu0 0.0
  %8003 = vmatpush1.msra.mxu0 %v6311
  %8004 = vmatprep.subr.mxu0 0.0
  %8005 = vmatpush1.msra.mxu0 %v6310
  %8006 = vmatprep.subr.mxu0 0.0
  %8007 = vmatpush2.msra.mxu0 0.0
  %8008 = vmatprep.subr.mxu0 0.0
  %8009 = vmatpush2.msra.mxu0 0.0
  %8010 = vmatprep.subr.mxu0 0.0
  %8011 = vmatpush2.msra.mxu0 0.0
  %8012 = vmatprep.subr.mxu0 0.0
  %8013 = vmatpush2.msra.mxu0 0.0
  %8014 = vmatprep.subr.mxu0 0.0
  %8015 = vmatpush2.msra.mxu0 0.0
  %8016 = vmatprep.subr.mxu0 0.0
  %8017 = vmatpush2.msra.mxu0 0.0
  %8018 = vmatprep.subr.mxu0 0.0
  %8019 = vmatpush2.msra.mxu0 0.0
  %8020 = vmatprep.subr.mxu0 0.0
  %8021 = vmatpush2.msra.mxu0 0.0
  %8022 = vmatprep.subr.mxu0 0.0
  %8023 = vmatpush2.msra.mxu0 0.0
  %8024 = vmatprep.subr.mxu0 0.0
  %8025 = vmatpush2.msra.mxu0 0.0
  %8026 = vmatprep.subr.mxu0 0.0
  %8027 = vmatpush2.msra.mxu0 0.0
  %8028 = vmatprep.subr.mxu0 0.0
  %8029 = vmatpush2.msra.mxu0 0.0
  %8030 = vmatprep.subr.mxu0 0.0
  %8031 = vmatpush2.msra.mxu0 0.0
  %8032 = vmatprep.subr.mxu0 0.0
  %8033 = vmatpush2.msra.mxu0 0.0
  %8034 = vmatprep.subr.mxu0 0.0
  %8035 = vmatpush2.msra.mxu0 0.0
  %8036 = vmatprep.subr.mxu0 0.0
  %8037 = vmatpush2.msra.mxu0 0.0
  %8038 = vmatprep.mubr.f32.mxu0 0.0
  %8039 = vmatmul.mubr.f32.gmra.mxu0 %v7894
  %v8040 = vpop.f32.mrf.mxu0
  %v8041 = vadd.f32 0.0, %v8040
  %v8042 = vpop.f32.mrf.mxu0
  %8043 = vdwg.mxu0
  %v8044 = vadd.f32 %v7973, %v8041
  %v8045 = vxor.u32 %v8044, 2147483648
  %v8046 = vmul.f32 %v8045, 1.442695
  %v8047 = vpow.pop %v8046
  %v8048 = vadd.f32 %v8047, 1.0
  %v8049 = vrcp.pop %v8048
  %v8050 = vmul.f32 1.0, %v8049
  %v8051 = vld [vmem:[%s6213 + $0xa] sm:$0x3]
  %8052 = vmatprep.subr.mxu0 0.0
  %8053 = vmatpush1.msra.mxu0 0.0
  %8054 = vmatprep.subr.mxu0 0.0
  %8055 = vmatpush1.msra.mxu0 0.0
  %8056 = vmatprep.subr.mxu0 0.0
  %8057 = vmatpush1.msra.mxu0 0.0
  %8058 = vmatprep.subr.mxu0 0.0
  %8059 = vmatpush1.msra.mxu0 0.0
  %8060 = vmatprep.subr.mxu0 0.0
  %8061 = vmatpush1.msra.mxu0 0.0
  %8062 = vmatprep.subr.mxu0 0.0
  %8063 = vmatpush1.msra.mxu0 0.0
  %8064 = vmatprep.subr.mxu0 0.0
  %8065 = vmatpush1.msra.mxu0 0.0
  %8066 = vmatprep.subr.mxu0 0.0
  %8067 = vmatpush1.msra.mxu0 0.0
  %8068 = vmatprep.subr.mxu0 0.0
  %8069 = vmatpush1.msra.mxu0 0.0
  %8070 = vmatprep.subr.mxu0 0.0
  %8071 = vmatpush1.msra.mxu0 0.0
  %8072 = vmatprep.subr.mxu0 0.0
  %8073 = vmatpush1.msra.mxu0 0.0
  %8074 = vmatprep.subr.mxu0 0.0
  %8075 = vmatpush1.msra.mxu0 0.0
  %8076 = vmatprep.subr.mxu0 0.0
  %8077 = vmatpush1.msra.mxu0 0.0
  %8078 = vmatprep.subr.mxu0 0.0
  %8079 = vmatpush1.msra.mxu0 0.0
  %8080 = vmatprep.subr.mxu0 0.0
  %8081 = vmatpush1.msra.mxu0 %v6314
  %8082 = vmatprep.subr.mxu0 0.0
  %8083 = vmatpush1.msra.mxu0 %v6313
  %8084 = vmatprep.subr.mxu0 0.0
  %8085 = vmatpush2.msra.mxu0 0.0
  %8086 = vmatprep.subr.mxu0 0.0
  %8087 = vmatpush2.msra.mxu0 0.0
  %8088 = vmatprep.subr.mxu0 0.0
  %8089 = vmatpush2.msra.mxu0 0.0
  %8090 = vmatprep.subr.mxu0 0.0
  %8091 = vmatpush2.msra.mxu0 0.0
  %8092 = vmatprep.subr.mxu0 0.0
  %8093 = vmatpush2.msra.mxu0 0.0
  %8094 = vmatprep.subr.mxu0 0.0
  %8095 = vmatpush2.msra.mxu0 0.0
  %8096 = vmatprep.subr.mxu0 0.0
  %8097 = vmatpush2.msra.mxu0 0.0
  %8098 = vmatprep.subr.mxu0 0.0
  %8099 = vmatpush2.msra.mxu0 0.0
  %8100 = vmatprep.subr.mxu0 0.0
  %8101 = vmatpush2.msra.mxu0 0.0
  %8102 = vmatprep.subr.mxu0 0.0
  %8103 = vmatpush2.msra.mxu0 0.0
  %8104 = vmatprep.subr.mxu0 0.0
  %8105 = vmatpush2.msra.mxu0 0.0
  %8106 = vmatprep.subr.mxu0 0.0
  %8107 = vmatpush2.msra.mxu0 0.0
  %8108 = vmatprep.subr.mxu0 0.0
  %8109 = vmatpush2.msra.mxu0 0.0
  %8110 = vmatprep.subr.mxu0 0.0
  %8111 = vmatpush2.msra.mxu0 0.0
  %8112 = vmatprep.subr.mxu0 0.0
  %8113 = vmatpush2.msra.mxu0 0.0
  %8114 = vmatprep.subr.mxu0 0.0
  %8115 = vmatpush2.msra.mxu0 0.0
  %8116 = vmatprep.mubr.f32.mxu0 0.0
  %8117 = vmatmul.mubr.f32.gmra.mxu0 %v7894
  %v8118 = vpop.f32.mrf.mxu0
  %v8119 = vadd.f32 0.0, %v8118
  %v8120 = vpop.f32.mrf.mxu0
  %8121 = vdwg.mxu0
  %v8122 = vadd.f32 %v8051, %v8119
  %v8123 = vtanh.pop %v8122
  %v8124 = vld [vmem:[%s6304 + $0xa] sm:$0x3]
  %8125 = vmatprep.subr.mxu0 0.0
  %8126 = vmatpush1.msra.mxu0 0.0
  %8127 = vmatprep.subr.mxu0 0.0
  %8128 = vmatpush1.msra.mxu0 0.0
  %8129 = vmatprep.subr.mxu0 0.0
  %8130 = vmatpush1.msra.mxu0 0.0
  %8131 = vmatprep.subr.mxu0 0.0
  %8132 = vmatpush1.msra.mxu0 0.0
  %8133 = vmatprep.subr.mxu0 0.0
  %8134 = vmatpush1.msra.mxu0 0.0
  %8135 = vmatprep.subr.mxu0 0.0
  %8136 = vmatpush1.msra.mxu0 0.0
  %8137 = vmatprep.subr.mxu0 0.0
  %8138 = vmatpush1.msra.mxu0 0.0
  %8139 = vmatprep.subr.mxu0 0.0
  %8140 = vmatpush1.msra.mxu0 0.0
  %8141 = vmatprep.subr.mxu0 0.0
  %8142 = vmatpush1.msra.mxu0 0.0
  %8143 = vmatprep.subr.mxu0 0.0
  %8144 = vmatpush1.msra.mxu0 0.0
  %8145 = vmatprep.subr.mxu0 0.0
  %8146 = vmatpush1.msra.mxu0 0.0
  %8147 = vmatprep.subr.mxu0 0.0
  %8148 = vmatpush1.msra.mxu0 0.0
  %8149 = vmatprep.subr.mxu0 0.0
  %8150 = vmatpush1.msra.mxu0 0.0
  %8151 = vmatprep.subr.mxu0 0.0
  %8152 = vmatpush1.msra.mxu0 0.0
  %8153 = vmatprep.subr.mxu0 0.0
  %8154 = vmatpush1.msra.mxu0 %v6317
  %8155 = vmatprep.subr.mxu0 0.0
  %8156 = vmatpush1.msra.mxu0 %v6316
  %8157 = vmatprep.subr.mxu0 0.0
  %8158 = vmatpush2.msra.mxu0 0.0
  %8159 = vmatprep.subr.mxu0 0.0
  %8160 = vmatpush2.msra.mxu0 0.0
  %8161 = vmatprep.subr.mxu0 0.0
  %8162 = vmatpush2.msra.mxu0 0.0
  %8163 = vmatprep.subr.mxu0 0.0
  %8164 = vmatpush2.msra.mxu0 0.0
  %8165 = vmatprep.subr.mxu0 0.0
  %8166 = vmatpush2.msra.mxu0 0.0
  %8167 = vmatprep.subr.mxu0 0.0
  %8168 = vmatpush2.msra.mxu0 0.0
  %8169 = vmatprep.subr.mxu0 0.0
  %8170 = vmatpush2.msra.mxu0 0.0
  %8171 = vmatprep.subr.mxu0 0.0
  %8172 = vmatpush2.msra.mxu0 0.0
  %8173 = vmatprep.subr.mxu0 0.0
  %8174 = vmatpush2.msra.mxu0 0.0
  %8175 = vmatprep.subr.mxu0 0.0
  %8176 = vmatpush2.msra.mxu0 0.0
  %8177 = vmatprep.subr.mxu0 0.0
  %8178 = vmatpush2.msra.mxu0 0.0
  %8179 = vmatprep.subr.mxu0 0.0
  %8180 = vmatpush2.msra.mxu0 0.0
  %8181 = vmatprep.subr.mxu0 0.0
  %8182 = vmatpush2.msra.mxu0 0.0
  %8183 = vmatprep.subr.mxu0 0.0
  %8184 = vmatpush2.msra.mxu0 0.0
  %8185 = vmatprep.subr.mxu0 0.0
  %8186 = vmatpush2.msra.mxu0 0.0
  %8187 = vmatprep.subr.mxu0 0.0
  %8188 = vmatpush2.msra.mxu0 0.0
  %8189 = vmatprep.mubr.f32.mxu0 0.0
  %8190 = vmatmul.mubr.f32.gmra.mxu0 %v7894
  %v8191 = vpop.f32.mrf.mxu0
  %v8192 = vadd.f32 0.0, %v8191
  %v8193 = vpop.f32.mrf.mxu0
  %8194 = vdwg.mxu0
  %v8195 = vadd.f32 %v8124, %v8192
  %v8196 = vxor.u32 %v8195, 2147483648
  %v8197 = vmul.f32 %v8196, 1.442695
  %v8198 = vpow.pop %v8197
  %v8199 = vadd.f32 %v8198, 1.0
  %v8200 = vrcp.pop %v8199
  %v8201 = vmul.f32 1.0, %v8200
  %v8202 = vmul.f32 %v8050, %v7889
  %v8203 = vmul.f32 %v7972, %v8123
  %v8204 = vadd.f32 %v8202, %v8203
  %v8205 = vtanh.pop %v8204
  %v8206 = vmul.f32 %v8201, %v8205
  %v8207 = vld [vmem:[#allocation4 + $0xc] sm:$0x3]
  %v8209 = vsel %vm6031, %v8206, 0
  %8211 = vmatprep.subr.mxu0 0.0
  %8212 = vmatpush1.msra.mxu0 0.0
  %8213 = vmatprep.subr.mxu0 0.0
  %8214 = vmatpush1.msra.mxu0 0.0
  %8215 = vmatprep.subr.mxu0 0.0
  %8216 = vmatpush1.msra.mxu0 0.0
  %8217 = vmatprep.subr.mxu0 0.0
  %8218 = vmatpush1.msra.mxu0 0.0
  %8219 = vmatprep.subr.mxu0 0.0
  %8220 = vmatpush1.msra.mxu0 0.0
  %8221 = vmatprep.subr.mxu0 0.0
  %8222 = vmatpush1.msra.mxu0 0.0
  %8223 = vmatprep.subr.mxu0 0.0
  %8224 = vmatpush1.msra.mxu0 0.0
  %8225 = vmatprep.subr.mxu0 0.0
  %8226 = vmatpush1.msra.mxu0 0.0
  %8227 = vmatprep.subr.mxu0 0.0
  %8228 = vmatpush1.msra.mxu0 0.0
  %8229 = vmatprep.subr.mxu0 0.0
  %8230 = vmatpush1.msra.mxu0 0.0
  %8231 = vmatprep.subr.mxu0 0.0
  %8232 = vmatpush1.msra.mxu0 0.0
  %8233 = vmatprep.subr.mxu0 0.0
  %8234 = vmatpush1.msra.mxu0 0.0
  %8235 = vmatprep.subr.mxu0 0.0
  %8236 = vmatpush1.msra.mxu0 0.0
  %8237 = vmatprep.subr.mxu0 0.0
  %8238 = vmatpush1.msra.mxu0 0.0
  %8239 = vmatprep.subr.mxu0 0.0
  %8240 = vmatpush1.msra.mxu0 %v6308
  %8241 = vmatprep.subr.mxu0 0.0
  %8242 = vmatpush1.msra.mxu0 %v6307
  %8243 = vmatprep.subr.mxu0 0.0
  %8244 = vmatpush2.msra.mxu0 0.0
  %8245 = vmatprep.subr.mxu0 0.0
  %8246 = vmatpush2.msra.mxu0 0.0
  %8247 = vmatprep.subr.mxu0 0.0
  %8248 = vmatpush2.msra.mxu0 0.0
  %8249 = vmatprep.subr.mxu0 0.0
  %8250 = vmatpush2.msra.mxu0 0.0
  %8251 = vmatprep.subr.mxu0 0.0
  %8252 = vmatpush2.msra.mxu0 0.0
  %8253 = vmatprep.subr.mxu0 0.0
  %8254 = vmatpush2.msra.mxu0 0.0
  %8255 = vmatprep.subr.mxu0 0.0
  %8256 = vmatpush2.msra.mxu0 0.0
  %8257 = vmatprep.subr.mxu0 0.0
  %8258 = vmatpush2.msra.mxu0 0.0
  %8259 = vmatprep.subr.mxu0 0.0
  %8260 = vmatpush2.msra.mxu0 0.0
  %8261 = vmatprep.subr.mxu0 0.0
  %8262 = vmatpush2.msra.mxu0 0.0
  %8263 = vmatprep.subr.mxu0 0.0
  %8264 = vmatpush2.msra.mxu0 0.0
  %8265 = vmatprep.subr.mxu0 0.0
  %8266 = vmatpush2.msra.mxu0 0.0
  %8267 = vmatprep.subr.mxu0 0.0
  %8268 = vmatpush2.msra.mxu0 0.0
  %8269 = vmatprep.subr.mxu0 0.0
  %8270 = vmatpush2.msra.mxu0 0.0
  %8271 = vmatprep.subr.mxu0 0.0
  %8272 = vmatpush2.msra.mxu0 0.0
  %8273 = vmatprep.subr.mxu0 0.0
  %8274 = vmatpush2.msra.mxu0 0.0
  %8275 = vmatprep.mubr.f32.mxu0 0.0
  %8276 = vmatmul.mubr.f32.gmra.mxu0 %v8209
  %v8277 = vpop.f32.mrf.mxu0
  %v8278 = vadd.f32 0.0, %v8277
  %v8279 = vpop.f32.mrf.mxu0
  %8280 = vdwg.mxu0
  %v8281 = vadd.f32 %v8207, %v8278
  %v8282 = vxor.u32 %v8281, 2147483648
  %v8283 = vmul.f32 %v8282, 1.442695
  %v8284 = vpow.pop %v8283
  %v8285 = vadd.f32 %v8284, 1.0
  %v8286 = vrcp.pop %v8285
  %v8287 = vmul.f32 1.0, %v8286
  %v8288 = vld [vmem:[%s6122 + $0xc] sm:$0x3]
  %8289 = vmatprep.subr.mxu0 0.0
  %8290 = vmatpush1.msra.mxu0 0.0
  %8291 = vmatprep.subr.mxu0 0.0
  %8292 = vmatpush1.msra.mxu0 0.0
  %8293 = vmatprep.subr.mxu0 0.0
  %8294 = vmatpush1.msra.mxu0 0.0
  %8295 = vmatprep.subr.mxu0 0.0
  %8296 = vmatpush1.msra.mxu0 0.0
  %8297 = vmatprep.subr.mxu0 0.0
  %8298 = vmatpush1.msra.mxu0 0.0
  %8299 = vmatprep.subr.mxu0 0.0
  %8300 = vmatpush1.msra.mxu0 0.0
  %8301 = vmatprep.subr.mxu0 0.0
  %8302 = vmatpush1.msra.mxu0 0.0
  %8303 = vmatprep.subr.mxu0 0.0
  %8304 = vmatpush1.msra.mxu0 0.0
  %8305 = vmatprep.subr.mxu0 0.0
  %8306 = vmatpush1.msra.mxu0 0.0
  %8307 = vmatprep.subr.mxu0 0.0
  %8308 = vmatpush1.msra.mxu0 0.0
  %8309 = vmatprep.subr.mxu0 0.0
  %8310 = vmatpush1.msra.mxu0 0.0
  %8311 = vmatprep.subr.mxu0 0.0
  %8312 = vmatpush1.msra.mxu0 0.0
  %8313 = vmatprep.subr.mxu0 0.0
  %8314 = vmatpush1.msra.mxu0 0.0
  %8315 = vmatprep.subr.mxu0 0.0
  %8316 = vmatpush1.msra.mxu0 0.0
  %8317 = vmatprep.subr.mxu0 0.0
  %8318 = vmatpush1.msra.mxu0 %v6311
  %8319 = vmatprep.subr.mxu0 0.0
  %8320 = vmatpush1.msra.mxu0 %v6310
  %8321 = vmatprep.subr.mxu0 0.0
  %8322 = vmatpush2.msra.mxu0 0.0
  %8323 = vmatprep.subr.mxu0 0.0
  %8324 = vmatpush2.msra.mxu0 0.0
  %8325 = vmatprep.subr.mxu0 0.0
  %8326 = vmatpush2.msra.mxu0 0.0
  %8327 = vmatprep.subr.mxu0 0.0
  %8328 = vmatpush2.msra.mxu0 0.0
  %8329 = vmatprep.subr.mxu0 0.0
  %8330 = vmatpush2.msra.mxu0 0.0
  %8331 = vmatprep.subr.mxu0 0.0
  %8332 = vmatpush2.msra.mxu0 0.0
  %8333 = vmatprep.subr.mxu0 0.0
  %8334 = vmatpush2.msra.mxu0 0.0
  %8335 = vmatprep.subr.mxu0 0.0
  %8336 = vmatpush2.msra.mxu0 0.0
  %8337 = vmatprep.subr.mxu0 0.0
  %8338 = vmatpush2.msra.mxu0 0.0
  %8339 = vmatprep.subr.mxu0 0.0
  %8340 = vmatpush2.msra.mxu0 0.0
  %8341 = vmatprep.subr.mxu0 0.0
  %8342 = vmatpush2.msra.mxu0 0.0
  %8343 = vmatprep.subr.mxu0 0.0
  %8344 = vmatpush2.msra.mxu0 0.0
  %8345 = vmatprep.subr.mxu0 0.0
  %8346 = vmatpush2.msra.mxu0 0.0
  %8347 = vmatprep.subr.mxu0 0.0
  %8348 = vmatpush2.msra.mxu0 0.0
  %8349 = vmatprep.subr.mxu0 0.0
  %8350 = vmatpush2.msra.mxu0 0.0
  %8351 = vmatprep.subr.mxu0 0.0
  %8352 = vmatpush2.msra.mxu0 0.0
  %8353 = vmatprep.mubr.f32.mxu0 0.0
  %8354 = vmatmul.mubr.f32.gmra.mxu0 %v8209
  %v8355 = vpop.f32.mrf.mxu0
  %v8356 = vadd.f32 0.0, %v8355
  %v8357 = vpop.f32.mrf.mxu0
  %8358 = vdwg.mxu0
  %v8359 = vadd.f32 %v8288, %v8356
  %v8360 = vxor.u32 %v8359, 2147483648
  %v8361 = vmul.f32 %v8360, 1.442695
  %v8362 = vpow.pop %v8361
  %v8363 = vadd.f32 %v8362, 1.0
  %v8364 = vrcp.pop %v8363
  %v8365 = vmul.f32 1.0, %v8364
  %v8366 = vld [vmem:[%s6213 + $0xc] sm:$0x3]
  %8367 = vmatprep.subr.mxu0 0.0
  %8368 = vmatpush1.msra.mxu0 0.0
  %8369 = vmatprep.subr.mxu0 0.0
  %8370 = vmatpush1.msra.mxu0 0.0
  %8371 = vmatprep.subr.mxu0 0.0
  %8372 = vmatpush1.msra.mxu0 0.0
  %8373 = vmatprep.subr.mxu0 0.0
  %8374 = vmatpush1.msra.mxu0 0.0
  %8375 = vmatprep.subr.mxu0 0.0
  %8376 = vmatpush1.msra.mxu0 0.0
  %8377 = vmatprep.subr.mxu0 0.0
  %8378 = vmatpush1.msra.mxu0 0.0
  %8379 = vmatprep.subr.mxu0 0.0
  %8380 = vmatpush1.msra.mxu0 0.0
  %8381 = vmatprep.subr.mxu0 0.0
  %8382 = vmatpush1.msra.mxu0 0.0
  %8383 = vmatprep.subr.mxu0 0.0
  %8384 = vmatpush1.msra.mxu0 0.0
  %8385 = vmatprep.subr.mxu0 0.0
  %8386 = vmatpush1.msra.mxu0 0.0
  %8387 = vmatprep.subr.mxu0 0.0
  %8388 = vmatpush1.msra.mxu0 0.0
  %8389 = vmatprep.subr.mxu0 0.0
  %8390 = vmatpush1.msra.mxu0 0.0
  %8391 = vmatprep.subr.mxu0 0.0
  %8392 = vmatpush1.msra.mxu0 0.0
  %8393 = vmatprep.subr.mxu0 0.0
  %8394 = vmatpush1.msra.mxu0 0.0
  %8395 = vmatprep.subr.mxu0 0.0
  %8396 = vmatpush1.msra.mxu0 %v6314
  %8397 = vmatprep.subr.mxu0 0.0
  %8398 = vmatpush1.msra.mxu0 %v6313
  %8399 = vmatprep.subr.mxu0 0.0
  %8400 = vmatpush2.msra.mxu0 0.0
  %8401 = vmatprep.subr.mxu0 0.0
  %8402 = vmatpush2.msra.mxu0 0.0
  %8403 = vmatprep.subr.mxu0 0.0
  %8404 = vmatpush2.msra.mxu0 0.0
  %8405 = vmatprep.subr.mxu0 0.0
  %8406 = vmatpush2.msra.mxu0 0.0
  %8407 = vmatprep.subr.mxu0 0.0
  %8408 = vmatpush2.msra.mxu0 0.0
  %8409 = vmatprep.subr.mxu0 0.0
  %8410 = vmatpush2.msra.mxu0 0.0
  %8411 = vmatprep.subr.mxu0 0.0
  %8412 = vmatpush2.msra.mxu0 0.0
  %8413 = vmatprep.subr.mxu0 0.0
  %8414 = vmatpush2.msra.mxu0 0.0
  %8415 = vmatprep.subr.mxu0 0.0
  %8416 = vmatpush2.msra.mxu0 0.0
  %8417 = vmatprep.subr.mxu0 0.0
  %8418 = vmatpush2.msra.mxu0 0.0
  %8419 = vmatprep.subr.mxu0 0.0
  %8420 = vmatpush2.msra.mxu0 0.0
  %8421 = vmatprep.subr.mxu0 0.0
  %8422 = vmatpush2.msra.mxu0 0.0
  %8423 = vmatprep.subr.mxu0 0.0
  %8424 = vmatpush2.msra.mxu0 0.0
  %8425 = vmatprep.subr.mxu0 0.0
  %8426 = vmatpush2.msra.mxu0 0.0
  %8427 = vmatprep.subr.mxu0 0.0
  %8428 = vmatpush2.msra.mxu0 0.0
  %8429 = vmatprep.subr.mxu0 0.0
  %8430 = vmatpush2.msra.mxu0 0.0
  %8431 = vmatprep.mubr.f32.mxu0 0.0
  %8432 = vmatmul.mubr.f32.gmra.mxu0 %v8209
  %v8433 = vpop.f32.mrf.mxu0
  %v8434 = vadd.f32 0.0, %v8433
  %v8435 = vpop.f32.mrf.mxu0
  %8436 = vdwg.mxu0
  %v8437 = vadd.f32 %v8366, %v8434
  %v8438 = vtanh.pop %v8437
  %v8439 = vld [vmem:[%s6304 + $0xc] sm:$0x3]
  %8440 = vmatprep.subr.mxu0 0.0
  %8441 = vmatpush1.msra.mxu0 0.0
  %8442 = vmatprep.subr.mxu0 0.0
  %8443 = vmatpush1.msra.mxu0 0.0
  %8444 = vmatprep.subr.mxu0 0.0
  %8445 = vmatpush1.msra.mxu0 0.0
  %8446 = vmatprep.subr.mxu0 0.0
  %8447 = vmatpush1.msra.mxu0 0.0
  %8448 = vmatprep.subr.mxu0 0.0
  %8449 = vmatpush1.msra.mxu0 0.0
  %8450 = vmatprep.subr.mxu0 0.0
  %8451 = vmatpush1.msra.mxu0 0.0
  %8452 = vmatprep.subr.mxu0 0.0
  %8453 = vmatpush1.msra.mxu0 0.0
  %8454 = vmatprep.subr.mxu0 0.0
  %8455 = vmatpush1.msra.mxu0 0.0
  %8456 = vmatprep.subr.mxu0 0.0
  %8457 = vmatpush1.msra.mxu0 0.0
  %8458 = vmatprep.subr.mxu0 0.0
  %8459 = vmatpush1.msra.mxu0 0.0
  %8460 = vmatprep.subr.mxu0 0.0
  %8461 = vmatpush1.msra.mxu0 0.0
  %8462 = vmatprep.subr.mxu0 0.0
  %8463 = vmatpush1.msra.mxu0 0.0
  %8464 = vmatprep.subr.mxu0 0.0
  %8465 = vmatpush1.msra.mxu0 0.0
  %8466 = vmatprep.subr.mxu0 0.0
  %8467 = vmatpush1.msra.mxu0 0.0
  %8468 = vmatprep.subr.mxu0 0.0
  %8469 = vmatpush1.msra.mxu0 %v6317
  %8470 = vmatprep.subr.mxu0 0.0
  %8471 = vmatpush1.msra.mxu0 %v6316
  %8472 = vmatprep.subr.mxu0 0.0
  %8473 = vmatpush2.msra.mxu0 0.0
  %8474 = vmatprep.subr.mxu0 0.0
  %8475 = vmatpush2.msra.mxu0 0.0
  %8476 = vmatprep.subr.mxu0 0.0
  %8477 = vmatpush2.msra.mxu0 0.0
  %8478 = vmatprep.subr.mxu0 0.0
  %8479 = vmatpush2.msra.mxu0 0.0
  %8480 = vmatprep.subr.mxu0 0.0
  %8481 = vmatpush2.msra.mxu0 0.0
  %8482 = vmatprep.subr.mxu0 0.0
  %8483 = vmatpush2.msra.mxu0 0.0
  %8484 = vmatprep.subr.mxu0 0.0
  %8485 = vmatpush2.msra.mxu0 0.0
  %8486 = vmatprep.subr.mxu0 0.0
  %8487 = vmatpush2.msra.mxu0 0.0
  %8488 = vmatprep.subr.mxu0 0.0
  %8489 = vmatpush2.msra.mxu0 0.0
  %8490 = vmatprep.subr.mxu0 0.0
  %8491 = vmatpush2.msra.mxu0 0.0
  %8492 = vmatprep.subr.mxu0 0.0
  %8493 = vmatpush2.msra.mxu0 0.0
  %8494 = vmatprep.subr.mxu0 0.0
  %8495 = vmatpush2.msra.mxu0 0.0
  %8496 = vmatprep.subr.mxu0 0.0
  %8497 = vmatpush2.msra.mxu0 0.0
  %8498 = vmatprep.subr.mxu0 0.0
  %8499 = vmatpush2.msra.mxu0 0.0
  %8500 = vmatprep.subr.mxu0 0.0
  %8501 = vmatpush2.msra.mxu0 0.0
  %8502 = vmatprep.subr.mxu0 0.0
  %8503 = vmatpush2.msra.mxu0 0.0
  %8504 = vmatprep.mubr.f32.mxu0 0.0
  %8505 = vmatmul.mubr.f32.gmra.mxu0 %v8209
  %v8506 = vpop.f32.mrf.mxu0
  %v8507 = vadd.f32 0.0, %v8506
  %v8508 = vpop.f32.mrf.mxu0
  %8509 = vdwg.mxu0
  %v8510 = vadd.f32 %v8439, %v8507
  %v8511 = vxor.u32 %v8510, 2147483648
  %v8512 = vmul.f32 %v8511, 1.442695
  %v8513 = vpow.pop %v8512
  %v8514 = vadd.f32 %v8513, 1.0
  %v8515 = vrcp.pop %v8514
  %v8516 = vmul.f32 1.0, %v8515
  %v8517 = vmul.f32 %v8365, %v8204
  %v8518 = vmul.f32 %v8287, %v8438
  %v8519 = vadd.f32 %v8517, %v8518
  %v8520 = vtanh.pop %v8519
  %v8521 = vmul.f32 %v8516, %v8520
  %v8522 = vld [vmem:[#allocation4 + $0xe] sm:$0x3]
  %v8524 = vsel %vm6031, %v8521, 0
  %8526 = vmatprep.subr.mxu0 0.0
  %8527 = vmatpush1.msra.mxu0 0.0
  %8528 = vmatprep.subr.mxu0 0.0
  %8529 = vmatpush1.msra.mxu0 0.0
  %8530 = vmatprep.subr.mxu0 0.0
  %8531 = vmatpush1.msra.mxu0 0.0
  %8532 = vmatprep.subr.mxu0 0.0
  %8533 = vmatpush1.msra.mxu0 0.0
  %8534 = vmatprep.subr.mxu0 0.0
  %8535 = vmatpush1.msra.mxu0 0.0
  %8536 = vmatprep.subr.mxu0 0.0
  %8537 = vmatpush1.msra.mxu0 0.0
  %8538 = vmatprep.subr.mxu0 0.0
  %8539 = vmatpush1.msra.mxu0 0.0
  %8540 = vmatprep.subr.mxu0 0.0
  %8541 = vmatpush1.msra.mxu0 0.0
  %8542 = vmatprep.subr.mxu0 0.0
  %8543 = vmatpush1.msra.mxu0 0.0
  %8544 = vmatprep.subr.mxu0 0.0
  %8545 = vmatpush1.msra.mxu0 0.0
  %8546 = vmatprep.subr.mxu0 0.0
  %8547 = vmatpush1.msra.mxu0 0.0
  %8548 = vmatprep.subr.mxu0 0.0
  %8549 = vmatpush1.msra.mxu0 0.0
  %8550 = vmatprep.subr.mxu0 0.0
  %8551 = vmatpush1.msra.mxu0 0.0
  %8552 = vmatprep.subr.mxu0 0.0
  %8553 = vmatpush1.msra.mxu0 0.0
  %8554 = vmatprep.subr.mxu0 0.0
  %8555 = vmatpush1.msra.mxu0 %v6308
  %8556 = vmatprep.subr.mxu0 0.0
  %8557 = vmatpush1.msra.mxu0 %v6307
  %8558 = vmatprep.subr.mxu0 0.0
  %8559 = vmatpush2.msra.mxu0 0.0
  %8560 = vmatprep.subr.mxu0 0.0
  %8561 = vmatpush2.msra.mxu0 0.0
  %8562 = vmatprep.subr.mxu0 0.0
  %8563 = vmatpush2.msra.mxu0 0.0
  %8564 = vmatprep.subr.mxu0 0.0
  %8565 = vmatpush2.msra.mxu0 0.0
  %8566 = vmatprep.subr.mxu0 0.0
  %8567 = vmatpush2.msra.mxu0 0.0
  %8568 = vmatprep.subr.mxu0 0.0
  %8569 = vmatpush2.msra.mxu0 0.0
  %8570 = vmatprep.subr.mxu0 0.0
  %8571 = vmatpush2.msra.mxu0 0.0
  %8572 = vmatprep.subr.mxu0 0.0
  %8573 = vmatpush2.msra.mxu0 0.0
  %8574 = vmatprep.subr.mxu0 0.0
  %8575 = vmatpush2.msra.mxu0 0.0
  %8576 = vmatprep.subr.mxu0 0.0
  %8577 = vmatpush2.msra.mxu0 0.0
  %8578 = vmatprep.subr.mxu0 0.0
  %8579 = vmatpush2.msra.mxu0 0.0
  %8580 = vmatprep.subr.mxu0 0.0
  %8581 = vmatpush2.msra.mxu0 0.0
  %8582 = vmatprep.subr.mxu0 0.0
  %8583 = vmatpush2.msra.mxu0 0.0
  %8584 = vmatprep.subr.mxu0 0.0
  %8585 = vmatpush2.msra.mxu0 0.0
  %8586 = vmatprep.subr.mxu0 0.0
  %8587 = vmatpush2.msra.mxu0 0.0
  %8588 = vmatprep.subr.mxu0 0.0
  %8589 = vmatpush2.msra.mxu0 0.0
  %8590 = vmatprep.mubr.f32.mxu0 0.0
  %8591 = vmatmul.mubr.f32.gmra.mxu0 %v8524
  %v8592 = vpop.f32.mrf.mxu0
  %v8593 = vadd.f32 0.0, %v8592
  %v8594 = vpop.f32.mrf.mxu0
  %8595 = vdwg.mxu0
  %v8596 = vadd.f32 %v8522, %v8593
  %v8597 = vxor.u32 %v8596, 2147483648
  %v8598 = vmul.f32 %v8597, 1.442695
  %v8599 = vpow.pop %v8598
  %v8600 = vadd.f32 %v8599, 1.0
  %v8601 = vrcp.pop %v8600
  %v8602 = vmul.f32 1.0, %v8601
  %v8603 = vld [vmem:[%s6122 + $0xe] sm:$0x3]
  %8604 = vmatprep.subr.mxu0 0.0
  %8605 = vmatpush1.msra.mxu0 0.0
  %8606 = vmatprep.subr.mxu0 0.0
  %8607 = vmatpush1.msra.mxu0 0.0
  %8608 = vmatprep.subr.mxu0 0.0
  %8609 = vmatpush1.msra.mxu0 0.0
  %8610 = vmatprep.subr.mxu0 0.0
  %8611 = vmatpush1.msra.mxu0 0.0
  %8612 = vmatprep.subr.mxu0 0.0
  %8613 = vmatpush1.msra.mxu0 0.0
  %8614 = vmatprep.subr.mxu0 0.0
  %8615 = vmatpush1.msra.mxu0 0.0
  %8616 = vmatprep.subr.mxu0 0.0
  %8617 = vmatpush1.msra.mxu0 0.0
  %8618 = vmatprep.subr.mxu0 0.0
  %8619 = vmatpush1.msra.mxu0 0.0
  %8620 = vmatprep.subr.mxu0 0.0
  %8621 = vmatpush1.msra.mxu0 0.0
  %8622 = vmatprep.subr.mxu0 0.0
  %8623 = vmatpush1.msra.mxu0 0.0
  %8624 = vmatprep.subr.mxu0 0.0
  %8625 = vmatpush1.msra.mxu0 0.0
  %8626 = vmatprep.subr.mxu0 0.0
  %8627 = vmatpush1.msra.mxu0 0.0
  %8628 = vmatprep.subr.mxu0 0.0
  %8629 = vmatpush1.msra.mxu0 0.0
  %8630 = vmatprep.subr.mxu0 0.0
  %8631 = vmatpush1.msra.mxu0 0.0
  %8632 = vmatprep.subr.mxu0 0.0
  %8633 = vmatpush1.msra.mxu0 %v6311
  %8634 = vmatprep.subr.mxu0 0.0
  %8635 = vmatpush1.msra.mxu0 %v6310
  %8636 = vmatprep.subr.mxu0 0.0
  %8637 = vmatpush2.msra.mxu0 0.0
  %8638 = vmatprep.subr.mxu0 0.0
  %8639 = vmatpush2.msra.mxu0 0.0
  %8640 = vmatprep.subr.mxu0 0.0
  %8641 = vmatpush2.msra.mxu0 0.0
  %8642 = vmatprep.subr.mxu0 0.0
  %8643 = vmatpush2.msra.mxu0 0.0
  %8644 = vmatprep.subr.mxu0 0.0
  %8645 = vmatpush2.msra.mxu0 0.0
  %8646 = vmatprep.subr.mxu0 0.0
  %8647 = vmatpush2.msra.mxu0 0.0
  %8648 = vmatprep.subr.mxu0 0.0
  %8649 = vmatpush2.msra.mxu0 0.0
  %8650 = vmatprep.subr.mxu0 0.0
  %8651 = vmatpush2.msra.mxu0 0.0
  %8652 = vmatprep.subr.mxu0 0.0
  %8653 = vmatpush2.msra.mxu0 0.0
  %8654 = vmatprep.subr.mxu0 0.0
  %8655 = vmatpush2.msra.mxu0 0.0
  %8656 = vmatprep.subr.mxu0 0.0
  %8657 = vmatpush2.msra.mxu0 0.0
  %8658 = vmatprep.subr.mxu0 0.0
  %8659 = vmatpush2.msra.mxu0 0.0
  %8660 = vmatprep.subr.mxu0 0.0
  %8661 = vmatpush2.msra.mxu0 0.0
  %8662 = vmatprep.subr.mxu0 0.0
  %8663 = vmatpush2.msra.mxu0 0.0
  %8664 = vmatprep.subr.mxu0 0.0
  %8665 = vmatpush2.msra.mxu0 0.0
  %8666 = vmatprep.subr.mxu0 0.0
  %8667 = vmatpush2.msra.mxu0 0.0
  %8668 = vmatprep.mubr.f32.mxu0 0.0
  %8669 = vmatmul.mubr.f32.gmra.mxu0 %v8524
  %v8670 = vpop.f32.mrf.mxu0
  %v8671 = vadd.f32 0.0, %v8670
  %v8672 = vpop.f32.mrf.mxu0
  %8673 = vdwg.mxu0
  %v8674 = vadd.f32 %v8603, %v8671
  %v8675 = vxor.u32 %v8674, 2147483648
  %v8676 = vmul.f32 %v8675, 1.442695
  %v8677 = vpow.pop %v8676
  %v8678 = vadd.f32 %v8677, 1.0
  %v8679 = vrcp.pop %v8678
  %v8680 = vmul.f32 1.0, %v8679
  %v8681 = vld [vmem:[%s6213 + $0xe] sm:$0x3]
  %8682 = vmatprep.subr.mxu0 0.0
  %8683 = vmatpush1.msra.mxu0 0.0
  %8684 = vmatprep.subr.mxu0 0.0
  %8685 = vmatpush1.msra.mxu0 0.0
  %8686 = vmatprep.subr.mxu0 0.0
  %8687 = vmatpush1.msra.mxu0 0.0
  %8688 = vmatprep.subr.mxu0 0.0
  %8689 = vmatpush1.msra.mxu0 0.0
  %8690 = vmatprep.subr.mxu0 0.0
  %8691 = vmatpush1.msra.mxu0 0.0
  %8692 = vmatprep.subr.mxu0 0.0
  %8693 = vmatpush1.msra.mxu0 0.0
  %8694 = vmatprep.subr.mxu0 0.0
  %8695 = vmatpush1.msra.mxu0 0.0
  %8696 = vmatprep.subr.mxu0 0.0
  %8697 = vmatpush1.msra.mxu0 0.0
  %8698 = vmatprep.subr.mxu0 0.0
  %8699 = vmatpush1.msra.mxu0 0.0
  %8700 = vmatprep.subr.mxu0 0.0
  %8701 = vmatpush1.msra.mxu0 0.0
  %8702 = vmatprep.subr.mxu0 0.0
  %8703 = vmatpush1.msra.mxu0 0.0
  %8704 = vmatprep.subr.mxu0 0.0
  %8705 = vmatpush1.msra.mxu0 0.0
  %8706 = vmatprep.subr.mxu0 0.0
  %8707 = vmatpush1.msra.mxu0 0.0
  %8708 = vmatprep.subr.mxu0 0.0
  %8709 = vmatpush1.msra.mxu0 0.0
  %8710 = vmatprep.subr.mxu0 0.0
  %8711 = vmatpush1.msra.mxu0 %v6314
  %8712 = vmatprep.subr.mxu0 0.0
  %8713 = vmatpush1.msra.mxu0 %v6313
  %8714 = vmatprep.subr.mxu0 0.0
  %8715 = vmatpush2.msra.mxu0 0.0
  %8716 = vmatprep.subr.mxu0 0.0
  %8717 = vmatpush2.msra.mxu0 0.0
  %8718 = vmatprep.subr.mxu0 0.0
  %8719 = vmatpush2.msra.mxu0 0.0
  %8720 = vmatprep.subr.mxu0 0.0
  %8721 = vmatpush2.msra.mxu0 0.0
  %8722 = vmatprep.subr.mxu0 0.0
  %8723 = vmatpush2.msra.mxu0 0.0
  %8724 = vmatprep.subr.mxu0 0.0
  %8725 = vmatpush2.msra.mxu0 0.0
  %8726 = vmatprep.subr.mxu0 0.0
  %8727 = vmatpush2.msra.mxu0 0.0
  %8728 = vmatprep.subr.mxu0 0.0
  %8729 = vmatpush2.msra.mxu0 0.0
  %8730 = vmatprep.subr.mxu0 0.0
  %8731 = vmatpush2.msra.mxu0 0.0
  %8732 = vmatprep.subr.mxu0 0.0
  %8733 = vmatpush2.msra.mxu0 0.0
  %8734 = vmatprep.subr.mxu0 0.0
  %8735 = vmatpush2.msra.mxu0 0.0
  %8736 = vmatprep.subr.mxu0 0.0
  %8737 = vmatpush2.msra.mxu0 0.0
  %8738 = vmatprep.subr.mxu0 0.0
  %8739 = vmatpush2.msra.mxu0 0.0
  %8740 = vmatprep.subr.mxu0 0.0
  %8741 = vmatpush2.msra.mxu0 0.0
  %8742 = vmatprep.subr.mxu0 0.0
  %8743 = vmatpush2.msra.mxu0 0.0
  %8744 = vmatprep.subr.mxu0 0.0
  %8745 = vmatpush2.msra.mxu0 0.0
  %8746 = vmatprep.mubr.f32.mxu0 0.0
  %8747 = vmatmul.mubr.f32.gmra.mxu0 %v8524
  %v8748 = vpop.f32.mrf.mxu0
  %v8749 = vadd.f32 0.0, %v8748
  %v8750 = vpop.f32.mrf.mxu0
  %8751 = vdwg.mxu0
  %v8752 = vadd.f32 %v8681, %v8749
  %v8753 = vtanh.pop %v8752
  %v8754 = vld [vmem:[%s6304 + $0xe] sm:$0x3]
  %8755 = vmatprep.subr.mxu0 0.0
  %8756 = vmatpush1.msra.mxu0 0.0
  %8757 = vmatprep.subr.mxu0 0.0
  %8758 = vmatpush1.msra.mxu0 0.0
  %8759 = vmatprep.subr.mxu0 0.0
  %8760 = vmatpush1.msra.mxu0 0.0
  %8761 = vmatprep.subr.mxu0 0.0
  %8762 = vmatpush1.msra.mxu0 0.0
  %8763 = vmatprep.subr.mxu0 0.0
  %8764 = vmatpush1.msra.mxu0 0.0
  %8765 = vmatprep.subr.mxu0 0.0
  %8766 = vmatpush1.msra.mxu0 0.0
  %8767 = vmatprep.subr.mxu0 0.0
  %8768 = vmatpush1.msra.mxu0 0.0
  %8769 = vmatprep.subr.mxu0 0.0
  %8770 = vmatpush1.msra.mxu0 0.0
  %8771 = vmatprep.subr.mxu0 0.0
  %8772 = vmatpush1.msra.mxu0 0.0
  %8773 = vmatprep.subr.mxu0 0.0
  %8774 = vmatpush1.msra.mxu0 0.0
  %8775 = vmatprep.subr.mxu0 0.0
  %8776 = vmatpush1.msra.mxu0 0.0
  %8777 = vmatprep.subr.mxu0 0.0
  %8778 = vmatpush1.msra.mxu0 0.0
  %8779 = vmatprep.subr.mxu0 0.0
  %8780 = vmatpush1.msra.mxu0 0.0
  %8781 = vmatprep.subr.mxu0 0.0
  %8782 = vmatpush1.msra.mxu0 0.0
  %8783 = vmatprep.subr.mxu0 0.0
  %8784 = vmatpush1.msra.mxu0 %v6317
  %8785 = vmatprep.subr.mxu0 0.0
  %8786 = vmatpush1.msra.mxu0 %v6316
  %8787 = vmatprep.subr.mxu0 0.0
  %8788 = vmatpush2.msra.mxu0 0.0
  %8789 = vmatprep.subr.mxu0 0.0
  %8790 = vmatpush2.msra.mxu0 0.0
  %8791 = vmatprep.subr.mxu0 0.0
  %8792 = vmatpush2.msra.mxu0 0.0
  %8793 = vmatprep.subr.mxu0 0.0
  %8794 = vmatpush2.msra.mxu0 0.0
  %8795 = vmatprep.subr.mxu0 0.0
  %8796 = vmatpush2.msra.mxu0 0.0
  %8797 = vmatprep.subr.mxu0 0.0
  %8798 = vmatpush2.msra.mxu0 0.0
  %8799 = vmatprep.subr.mxu0 0.0
  %8800 = vmatpush2.msra.mxu0 0.0
  %8801 = vmatprep.subr.mxu0 0.0
  %8802 = vmatpush2.msra.mxu0 0.0
  %8803 = vmatprep.subr.mxu0 0.0
  %8804 = vmatpush2.msra.mxu0 0.0
  %8805 = vmatprep.subr.mxu0 0.0
  %8806 = vmatpush2.msra.mxu0 0.0
  %8807 = vmatprep.subr.mxu0 0.0
  %8808 = vmatpush2.msra.mxu0 0.0
  %8809 = vmatprep.subr.mxu0 0.0
  %8810 = vmatpush2.msra.mxu0 0.0
  %8811 = vmatprep.subr.mxu0 0.0
  %8812 = vmatpush2.msra.mxu0 0.0
  %8813 = vmatprep.subr.mxu0 0.0
  %8814 = vmatpush2.msra.mxu0 0.0
  %8815 = vmatprep.subr.mxu0 0.0
  %8816 = vmatpush2.msra.mxu0 0.0
  %8817 = vmatprep.subr.mxu0 0.0
  %8818 = vmatpush2.msra.mxu0 0.0
  %8819 = vmatprep.mubr.f32.mxu0 0.0
  %8820 = vmatmul.mubr.f32.gmra.mxu0 %v8524
  %v8821 = vpop.f32.mrf.mxu0
  %v8822 = vadd.f32 0.0, %v8821
  %v8823 = vpop.f32.mrf.mxu0
  %8824 = vdwg.mxu0
  %v8825 = vadd.f32 %v8754, %v8822
  %v8826 = vxor.u32 %v8825, 2147483648
  %v8827 = vmul.f32 %v8826, 1.442695
  %v8828 = vpow.pop %v8827
  %v8829 = vadd.f32 %v8828, 1.0
  %v8830 = vrcp.pop %v8829
  %v8831 = vmul.f32 1.0, %v8830
  %v8832 = vmul.f32 %v8680, %v8519
  %v8833 = vmul.f32 %v8602, %v8753
  %v8834 = vadd.f32 %v8832, %v8833
  %v8835 = vtanh.pop %v8834
  %v8836 = vmul.f32 %v8831, %v8835
  %v8838 = vrot.slane %v8836, 6
  %v8840 = vsel %vm2989, %v8521, %v8838
  %v8841 = vld [vmem:[%s10] sm:$0xff]
  %v8842 = vld [vmem:[%s10 + $0x8] sm:$0xff]
  %v8843 = vld [vmem:[%s11] sm:$0x1]
  %v8845 = vlaneseq
  %v8846 = vshrl.u32 %v8845, 7
  %v8847 = vsub.s32 0, %v8846
  %v8848 = vrot.slane %v8843, %v8847
  %v8851 = vsel %vm6031, %v8840, 0
  %8853 = vmatprep.subr.mxu0 0.0
  %8854 = vmatpush1.msra.mxu0 0.0
  %8855 = vmatprep.subr.mxu0 0.0
  %8856 = vmatpush1.msra.mxu0 0.0
  %8857 = vmatprep.subr.mxu0 0.0
  %8858 = vmatpush1.msra.mxu0 0.0
  %8859 = vmatprep.subr.mxu0 0.0
  %8860 = vmatpush1.msra.mxu0 0.0
  %8861 = vmatprep.subr.mxu0 0.0
  %8862 = vmatpush1.msra.mxu0 0.0
  %8863 = vmatprep.subr.mxu0 0.0
  %8864 = vmatpush1.msra.mxu0 0.0
  %8865 = vmatprep.subr.mxu0 0.0
  %8866 = vmatpush1.msra.mxu0 0.0
  %8867 = vmatprep.subr.mxu0 0.0
  %8868 = vmatpush1.msra.mxu0 0.0
  %8869 = vmatprep.subr.mxu0 0.0
  %8870 = vmatpush1.msra.mxu0 0.0
  %8871 = vmatprep.subr.mxu0 0.0
  %8872 = vmatpush1.msra.mxu0 0.0
  %8873 = vmatprep.subr.mxu0 0.0
  %8874 = vmatpush1.msra.mxu0 0.0
  %8875 = vmatprep.subr.mxu0 0.0
  %8876 = vmatpush1.msra.mxu0 0.0
  %8877 = vmatprep.subr.mxu0 0.0
  %8878 = vmatpush1.msra.mxu0 0.0
  %8879 = vmatprep.subr.mxu0 0.0
  %8880 = vmatpush1.msra.mxu0 0.0
  %8881 = vmatprep.subr.mxu0 0.0
  %8882 = vmatpush1.msra.mxu0 %v8842
  %8883 = vmatprep.subr.mxu0 0.0
  %8884 = vmatpush1.msra.mxu0 %v8841
  %8885 = vmatprep.subr.mxu0 0.0
  %8886 = vmatpush2.msra.mxu0 0.0
  %8887 = vmatprep.subr.mxu0 0.0
  %8888 = vmatpush2.msra.mxu0 0.0
  %8889 = vmatprep.subr.mxu0 0.0
  %8890 = vmatpush2.msra.mxu0 0.0
  %8891 = vmatprep.subr.mxu0 0.0
  %8892 = vmatpush2.msra.mxu0 0.0
  %8893 = vmatprep.subr.mxu0 0.0
  %8894 = vmatpush2.msra.mxu0 0.0
  %8895 = vmatprep.subr.mxu0 0.0
  %8896 = vmatpush2.msra.mxu0 0.0
  %8897 = vmatprep.subr.mxu0 0.0
  %8898 = vmatpush2.msra.mxu0 0.0
  %8899 = vmatprep.subr.mxu0 0.0
  %8900 = vmatpush2.msra.mxu0 0.0
  %8901 = vmatprep.subr.mxu0 0.0
  %8902 = vmatpush2.msra.mxu0 0.0
  %8903 = vmatprep.subr.mxu0 0.0
  %8904 = vmatpush2.msra.mxu0 0.0
  %8905 = vmatprep.subr.mxu0 0.0
  %8906 = vmatpush2.msra.mxu0 0.0
  %8907 = vmatprep.subr.mxu0 0.0
  %8908 = vmatpush2.msra.mxu0 0.0
  %8909 = vmatprep.subr.mxu0 0.0
  %8910 = vmatpush2.msra.mxu0 0.0
  %8911 = vmatprep.subr.mxu0 0.0
  %8912 = vmatpush2.msra.mxu0 0.0
  %8913 = vmatprep.subr.mxu0 0.0
  %8914 = vmatpush2.msra.mxu0 0.0
  %8915 = vmatprep.subr.mxu0 0.0
  %8916 = vmatpush2.msra.mxu0 0.0
  %8917 = vmatprep.mubr.f32.mxu0 0.0
  %8918 = vmatmul.mubr.f32.gmra.mxu0 %v8851
  %v8919 = vpop.f32.mrf.mxu0
  %v8920 = vadd.f32 %v8848, %v8919
  %v8921 = vpop.f32.mrf.mxu0
  %8922 = vdwg.mxu0
  %v8923 = vmax.f32 %v8920, 0.0
  %v8924 = vld [vmem:[%s12] sm:$0xff]
  %v8925 = vld [vmem:[#allocation5] sm:$0x1]
  %v8927 = vlaneseq
  %v8928 = vshrl.u32 %v8927, 7
  %v8929 = vsub.s32 0, %v8928
  %v8930 = vrot.slane %v8925, %v8929
  %vm8932 = vcmask 64512
  %v8934 = vsel %vm8932, %v8923, 0
  %8936 = vmatprep.subr.mxu0 0.0
  %8937 = vmatpush1.msra.mxu0 0.0
  %8938 = vmatprep.subr.mxu0 0.0
  %8939 = vmatpush1.msra.mxu0 0.0
  %8940 = vmatprep.subr.mxu0 0.0
  %8941 = vmatpush1.msra.mxu0 0.0
  %8942 = vmatprep.subr.mxu0 0.0
  %8943 = vmatpush1.msra.mxu0 0.0
  %8944 = vmatprep.subr.mxu0 0.0
  %8945 = vmatpush1.msra.mxu0 0.0
  %8946 = vmatprep.subr.mxu0 0.0
  %8947 = vmatpush1.msra.mxu0 0.0
  %8948 = vmatprep.subr.mxu0 0.0
  %8949 = vmatpush1.msra.mxu0 0.0
  %8950 = vmatprep.subr.mxu0 0.0
  %8951 = vmatpush1.msra.mxu0 0.0
  %8952 = vmatprep.subr.mxu0 0.0
  %8953 = vmatpush1.msra.mxu0 0.0
  %8954 = vmatprep.subr.mxu0 0.0
  %8955 = vmatpush1.msra.mxu0 0.0
  %8956 = vmatprep.subr.mxu0 0.0
  %8957 = vmatpush1.msra.mxu0 0.0
  %8958 = vmatprep.subr.mxu0 0.0
  %8959 = vmatpush1.msra.mxu0 0.0
  %8960 = vmatprep.subr.mxu0 0.0
  %8961 = vmatpush1.msra.mxu0 0.0
  %8962 = vmatprep.subr.mxu0 0.0
  %8963 = vmatpush1.msra.mxu0 0.0
  %8964 = vmatprep.subr.mxu0 0.0
  %8965 = vmatpush1.msra.mxu0 0.0
  %8966 = vmatprep.subr.mxu0 0.0
  %8967 = vmatpush1.msra.mxu0 %v8924
  %8968 = vmatprep.subr.mxu0 0.0
  %8969 = vmatpush2.msra.mxu0 0.0
  %8970 = vmatprep.subr.mxu0 0.0
  %8971 = vmatpush2.msra.mxu0 0.0
  %8972 = vmatprep.subr.mxu0 0.0
  %8973 = vmatpush2.msra.mxu0 0.0
  %8974 = vmatprep.subr.mxu0 0.0
  %8975 = vmatpush2.msra.mxu0 0.0
  %8976 = vmatprep.subr.mxu0 0.0
  %8977 = vmatpush2.msra.mxu0 0.0
  %8978 = vmatprep.subr.mxu0 0.0
  %8979 = vmatpush2.msra.mxu0 0.0
  %8980 = vmatprep.subr.mxu0 0.0
  %8981 = vmatpush2.msra.mxu0 0.0
  %8982 = vmatprep.subr.mxu0 0.0
  %8983 = vmatpush2.msra.mxu0 0.0
  %8984 = vmatprep.subr.mxu0 0.0
  %8985 = vmatpush2.msra.mxu0 0.0
  %8986 = vmatprep.subr.mxu0 0.0
  %8987 = vmatpush2.msra.mxu0 0.0
  %8988 = vmatprep.subr.mxu0 0.0
  %8989 = vmatpush2.msra.mxu0 0.0
  %8990 = vmatprep.subr.mxu0 0.0
  %8991 = vmatpush2.msra.mxu0 0.0
  %8992 = vmatprep.subr.mxu0 0.0
  %8993 = vmatpush2.msra.mxu0 0.0
  %8994 = vmatprep.subr.mxu0 0.0
  %8995 = vmatpush2.msra.mxu0 0.0
  %8996 = vmatprep.subr.mxu0 0.0
  %8997 = vmatpush2.msra.mxu0 0.0
  %8998 = vmatprep.subr.mxu0 0.0
  %8999 = vmatpush2.msra.mxu0 0.0
  %9000 = vmatprep.mubr.f32.mxu0 0.0
  %9001 = vmatmul.mubr.f32.gmra.mxu0 %v8934
  %v9002 = vpop.f32.mrf.mxu0
  %v9003 = vadd.f32 %v8930, %v9002
  %v9004 = vpop.f32.mrf.mxu0
  %9005 = vdwg.mxu0
  %vm9006 = vcmask 3072
  %9007 = vst.msk [vmem:[%s14] sm:$0xf] %vm9006, %v9003
  // Predicated region
  $region58: #{lstm_model_forward.1} parent=0 // pred_check
    _
  $region59: #{lstm_model_forward.1} parent=0 // pred_check_branch
    %9009 = sbr.rel (0) target = $region61
  $region60: #{lstm_model_forward.1} parent=0 // pred_region
    _
  $region61: #{lstm_model_forward.1} parent=0 // pred_fallthru
    _
  // Predicated region
  $region62: #{lstm_model_forward.1} parent=0 // pred_check
    _
  $region63: #{lstm_model_forward.1} parent=0 // pred_check_branch
    %9011 = sbr.rel (0) target = $region65
  $region64: #{lstm_model_forward.1} parent=0 // pred_region
    _
  $region65: #{lstm_model_forward.1} parent=0 // pred_fallthru
    _

</llo_original>
